<compile_context>
chip_gen: v5e
topology: v5e:2x2
jax: 0.10.0
libtpu: 0.0.40
codegen_flags: <defaults>
</compile_context>

<pallas_src>
import functools
import math

import jax
import jax.numpy as jnp
from jax.experimental import pallas as pl
from jax.experimental.pallas import tpu as pltpu

# ------------------------- small synthetic config -------------------------
DIM = 32
N_HEADS = 4
HEAD_DIM = DIM // N_HEADS
FFN_DIM = 64
PATCH = 8
N_ENC_LAYERS = 1
N_SYM_LAYERS = 1
N_FUSION_LAYERS = 1
N_DEC_LAYERS = 1
VOCAB = 20
MAX_SYM_LEN = 64
NEG_INF = -1e9  # safe here: no key row is ever fully masked
ATTN_SCALE = 1.0 / math.sqrt(HEAD_DIM)


# --------------------------- in-kernel math helpers ---------------------------
def _erf(x):
    # Abramowitz & Stegun 7.1.26 rational approximation (|err| <= 1.5e-7),
    # i.e. f32-accurate erf built only from ops that always lower on Mosaic.
    a1, a2, a3 = 0.254829592, -0.284496736, 1.421413741
    a4, a5, p = -1.453152027, 1.061405429, 0.3275911
    sgn = jnp.where(x >= 0.0, 1.0, -1.0)
    ax = jnp.abs(x)
    t = 1.0 / (1.0 + p * ax)
    poly = ((((a5 * t + a4) * t + a3) * t + a2) * t + a1) * t
    return sgn * (1.0 - poly * jnp.exp(-ax * ax))


def _gelu_exact(x):
    # matches PyTorch nn.GELU() default (erf formulation)
    return 0.5 * x * (1.0 + _erf(x * 0.7071067811865476))


def _ln(x, g, b):
    mean = jnp.mean(x, axis=-1, keepdims=True)
    var = jnp.mean((x - mean) ** 2, axis=-1, keepdims=True)
    return (x - mean) * jax.lax.rsqrt(var + 1e-5) * g + b


def _mh_attention(q_all, k_all, v_all, bias):
    """q_all:(Sq,D)  k_all,v_all:(Sk,D)  bias:(1,Sk) additive or None -> (Sq,D)."""
    outs = []
    for h in range(N_HEADS):
        lo = h * HEAD_DIM
        q = q_all[:, lo:lo + HEAD_DIM]
        k = k_all[:, lo:lo + HEAD_DIM]
        v = v_all[:, lo:lo + HEAD_DIM]
        # contract last dims directly -> no materialized transpose of k
        s = jax.lax.dot_general(q, k, (((1,), (1,)), ((), ())),
                                preferred_element_type=jnp.float32) * ATTN_SCALE
        if bias is not None:
            s = s + bias
        s = s - jnp.max(s, axis=-1, keepdims=True)
        e = jnp.exp(s)
        p = e / jnp.sum(e, axis=-1, keepdims=True)
        outs.append(jnp.dot(p, v, preferred_element_type=jnp.float32))
    return jnp.concatenate(outs, axis=-1)


def _time_mlp_v(t, p):
    # t: (L, 1). First linear has K=1 -> broadcast multiply on the VPU
    # (avoids a degenerate MXU matmul). Linear -> exact GELU -> Linear.
    h = t * p["w1"] + p["b1"]                      # (L,1)*(1,H) -> (L,H)
    h = _gelu_exact(h)
    return jnp.dot(h, p["w2"], preferred_element_type=jnp.float32) + p["b2"]


def _encoder_layer_v(x, bias, p):
    """Pre-LN encoder layer on values. x:(S,D), bias:(1,S) or None."""
    D = DIM
    h = _ln(x, p["ln1"]["g"], p["ln1"]["b"])
    qkv = jnp.dot(h, p["attn"]["wqkv"],
                  preferred_element_type=jnp.float32) + p["attn"]["bqkv"]
    attn = _mh_attention(qkv[:, :D], qkv[:, D:2 * D], qkv[:, 2 * D:], bias)
    x = x + jnp.dot(attn, p["attn"]["wo"],
                    preferred_element_type=jnp.float32) + p["attn"]["bo"]

    h = _ln(x, p["ln2"]["g"], p["ln2"]["b"])
    f = jnp.dot(h, p["ffn"]["w1"], preferred_element_type=jnp.float32) + p["ffn"]["b1"]
    f = _gelu_exact(f)
    x = x + jnp.dot(f, p["ffn"]["w2"],
                    preferred_element_type=jnp.float32) + p["ffn"]["b2"]
    return x


def _decoder_layer_v(x, src, cbias, p):
    """Pre-LN decoder layer on values. x:(Lq,D), src:(Lk,D), cbias:(1,Lk)."""
    D = DIM
    # self-attention (no mask)
    h = _ln(x, p["ln1"]["g"], p["ln1"]["b"])
    qkv = jnp.dot(h, p["self_attn"]["wqkv"],
                  preferred_element_type=jnp.float32) + p["self_attn"]["bqkv"]
    attn = _mh_attention(qkv[:, :D], qkv[:, D:2 * D], qkv[:, 2 * D:], None)
    x = x + jnp.dot(attn, p["self_attn"]["wo"],
                    preferred_element_type=jnp.float32) + p["self_attn"]["bo"]

    # cross-attention (fused KV projection on src)
    h = _ln(x, p["ln2"]["g"], p["ln2"]["b"])
    q = jnp.dot(h, p["cross_attn"]["wq"],
                preferred_element_type=jnp.float32) + p["cross_attn"]["bq"]
    kv = jnp.dot(src, p["cross_attn"]["wkv"],
                 preferred_element_type=jnp.float32) + p["cross_attn"]["bkv"]
    attn = _mh_attention(q, kv[:, :D], kv[:, D:], cbias)
    x = x + jnp.dot(attn, p["cross_attn"]["wo"],
                    preferred_element_type=jnp.float32) + p["cross_attn"]["bo"]

    # FFN
    h = _ln(x, p["ln3"]["g"], p["ln3"]["b"])
    f = jnp.dot(h, p["ffn"]["w1"], preferred_element_type=jnp.float32) + p["ffn"]["b1"]
    f = _gelu_exact(f)
    x = x + jnp.dot(f, p["ffn"]["w2"],
                    preferred_element_type=jnp.float32) + p["ffn"]["b2"]
    return x


# ------------------------------ the fused kernel ------------------------------
def _prose_forward_kernel(patches_ref, sym_ref, sym_bias_ref, fused_bias_ref,
                          it_ref, ot_ref, *rest,
                          treedef, input_len, pnpn, output_len):
    """One grid step = one batch element through the whole PROSE_2to1 forward."""
    out_ref = rest[-1]
    # Load every (tiny) weight once and rebuild the param pytree as values.
    w = jax.tree_util.tree_unflatten(treedef, [r[...] for r in rest[:-1]])

    # ---- Step 1: embedder.encode (patch proj + time emb + patch pos emb) ----
    x = jnp.dot(patches_ref[0], w["embed"]["proj"]["w"],
                preferred_element_type=jnp.float32) + w["embed"]["proj"]["b"]
    t_in = _time_mlp_v(it_ref[0], w["embed"]["time"])           # (input_len, DIM)
    pos = w["embed"]["pos"]                                      # (pnpn, DIM)
    rows = [x[ti * pnpn:(ti + 1) * pnpn, :] + t_in[ti:ti + 1, :] + pos
            for ti in range(input_len)]
    x = rows[0] if input_len == 1 else jnp.concatenate(rows, axis=0)

    # ---- Step 2a: data encoder (no padding mask) ----
    for lp in w["data_enc"]:
        x = _encoder_layer_v(x, None, lp)

    # ---- Step 2b: symbol encoder ----
    s = sym_ref[0]                                               # (S, DIM)
    sbias = sym_bias_ref[0]                                      # (1, S)
    for lp in w["sym_layers"]:
        s = _encoder_layer_v(s, sbias, lp)

    # ---- Step 2c: fusion (concat data + symbol streams) ----
    fused = jnp.concatenate([x, s], axis=0)                      # (Ld+S, DIM)
    fbias = fused_bias_ref[0]                                    # (1, Ld+S)
    for lp in w["fusion"]:
        fused = _encoder_layer_v(fused, fbias, lp)

    # ---- Step 3: decoder (query emb from output times, self+cross attn) ----
    t_out = _time_mlp_v(ot_ref[0], w["dec"]["time"])             # (output_len, DIM)
    qrows = [t_out[ti:ti + 1, :] + w["dec"]["query_pos"]
             for ti in range(output_len)]
    q = qrows[0] if output_len == 1 else jnp.concatenate(qrows, axis=0)
    for lp in w["dec"]["layers"]:
        q = _decoder_layer_v(q, fused, fbias, lp)

    # ---- final LayerNorm + lane-dense output projection ----
    h = _ln(q, w["dec"]["ln_f"]["g"], w["dec"]["ln_f"]["b"])
    y = jnp.dot(h, w["embed"]["out"]["w"],
                preferred_element_type=jnp.float32) + w["embed"]["out"]["b"]
    out_ref[...] = y[None].astype(out_ref.dtype)


# ------------------------------ full forward ------------------------------
def prose_2to1_fwd(params, data_input, input_times, output_times,
                   symbol_input, symbol_padding_mask):
    bs, input_len, x_num, _, data_dim = data_input.shape
    output_len = output_times.shape[1]
    pn = x_num // PATCH
    pnpn = pn * pn
    Ld = input_len * pnpn
    S = symbol_input.shape[1]
    Lq = output_len * pnpn
    PPD = PATCH * PATCH * data_dim

    # --- plain-JAX glue: patchify, embedding gather, mask -> bias ---
    patches = data_input.reshape(bs, input_len, pn, PATCH, pn, PATCH, data_dim)
    patches = patches.transpose(0, 1, 2, 4, 3, 5, 6).reshape(bs, Ld, PPD)

    sym_emb = params["sym"]["tok"][symbol_input] + params["sym"]["pos"][:S][None]

    sym_bias = (symbol_padding_mask.astype(jnp.float32) * NEG_INF)[:, None, :]  # (B,1,S)
    fused_bias = jnp.concatenate(
        [jnp.zeros((bs, 1, Ld), jnp.float32), sym_bias], axis=-1)               # (B,1,Ld+S)

    it = jnp.broadcast_to(input_times, (bs, input_len, 1)).astype(jnp.float32)
    ot = jnp.broadcast_to(output_times, (bs, output_len, 1)).astype(jnp.float32)

    # --- kernel params (exclude symbol embedding tables: gathered outside) ---
    kparams = {
        "embed": params["embed"],
        "data_enc": params["data_enc"],
        "sym_layers": params["sym"]["layers"],
        "fusion": params["fusion"],
        "dec": params["dec"],
    }
    leaves, treedef = jax.tree_util.tree_flatten(kparams)

    kernel = functools.partial(_prose_forward_kernel, treedef=treedef,
                               input_len=input_len, pnpn=pnpn,
                               output_len=output_len)

    data_specs = [
        pl.BlockSpec((1, Ld, PPD), lambda b: (b, 0, 0)),        # patches
        pl.BlockSpec((1, S, DIM), lambda b: (b, 0, 0)),         # symbol embeddings
        pl.BlockSpec((1, 1, S), lambda b: (b, 0, 0)),           # symbol mask bias
        pl.BlockSpec((1, 1, Ld + S), lambda b: (b, 0, 0)),      # fused mask bias
        pl.BlockSpec((1, input_len, 1), lambda b: (b, 0, 0)),   # input times
        pl.BlockSpec((1, output_len, 1), lambda b: (b, 0, 0)),  # output times
    ]
    # Weights: full-block, constant index map -> DMA'd once, resident in VMEM.
    w_specs = [pl.BlockSpec(l.shape, lambda b, _z=(0,) * l.ndim: _z)
               for l in leaves]

    y = pl.pallas_call(
        kernel,
        out_shape=jax.ShapeDtypeStruct((bs, Lq, PPD), jnp.float32),
        grid=(bs,),
        in_specs=data_specs + w_specs,
        out_specs=pl.BlockSpec((1, Lq, PPD), lambda b: (b, 0, 0)),
        compiler_params=pltpu.CompilerParams(dimension_semantics=("parallel",)),
    )(patches, sym_emb, sym_bias, fused_bias, it, ot, *leaves)

    # --- plain-JAX glue: un-patchify ---
    y = y.reshape(bs, output_len, pn, pn, PATCH, PATCH, data_dim)
    y = y.transpose(0, 1, 2, 4, 3, 5, 6).reshape(bs, output_len, x_num, x_num, data_dim)
    # carry_last_frame defaults to 0 in the config -> skipped.
    return y


# ------------------------------ parameter init ------------------------------
def init_params(key, x_num, data_dim):
    pn = x_num // PATCH
    keys = iter(jax.random.split(key, 128))

    def dense(d_in, d_out):
        return {"w": jax.random.normal(next(keys), (d_in, d_out), jnp.float32) * 0.02,
                "b": jnp.zeros((1, d_out), jnp.float32)}

    def ln():
        return {"g": jnp.ones((1, DIM), jnp.float32),
                "b": jnp.zeros((1, DIM), jnp.float32)}

    def ffn_p(d_in=DIM, hidden=FFN_DIM, d_out=DIM):
        a, c = dense(d_in, hidden), dense(hidden, d_out)
        return {"w1": a["w"], "b1": a["b"], "w2": c["w"], "b2": c["b"]}

    def attn_p():                     # fused QKV projection
        qkv, o = dense(DIM, 3 * DIM), dense(DIM, DIM)
        return {"wqkv": qkv["w"], "bqkv": qkv["b"], "wo": o["w"], "bo": o["b"]}

    def cross_attn_p():               # Q separate, fused KV projection
        q, kv, o = dense(DIM, DIM), dense(DIM, 2 * DIM), dense(DIM, DIM)
        return {"wq": q["w"], "bq": q["b"], "wkv": kv["w"], "bkv": kv["b"],
                "wo": o["w"], "bo": o["b"]}

    def enc_layer():
        return {"ln1": ln(), "attn": attn_p(), "ln2": ln(), "ffn": ffn_p()}

    def dec_layer():
        return {"ln1": ln(), "self_attn": attn_p(),
                "ln2": ln(), "cross_attn": cross_attn_p(),
                "ln3": ln(), "ffn": ffn_p()}

    return {
        "embed": {
            "proj": dense(PATCH * PATCH * data_dim, DIM),
            "pos": jax.random.normal(next(keys), (pn * pn, DIM), jnp.float32) * 0.02,
            "time": ffn_p(1, DIM, DIM),
            "out": dense(DIM, PATCH * PATCH * data_dim),
        },
        "data_enc": [enc_layer() for _ in range(N_ENC_LAYERS)],
        "sym": {
            "tok": jax.random.normal(next(keys), (VOCAB, DIM), jnp.float32) * 0.02,
            "pos": jax.random.normal(next(keys), (MAX_SYM_LEN, DIM), jnp.float32) * 0.02,
            "layers": [enc_layer() for _ in range(N_SYM_LAYERS)],
        },
        "fusion": [enc_layer() for _ in range(N_FUSION_LAYERS)],
        "dec": {
            "time": ffn_p(1, DIM, DIM),
            "query_pos": jax.random.normal(next(keys), (pn * pn, DIM), jnp.float32) * 0.02,
            "layers": [dec_layer() for _ in range(N_DEC_LAYERS)],
            "ln_f": ln(),
        },
    }


# ------------------------------ main ------------------------------
if __name__ == "__main__":
    key = jax.random.PRNGKey(0)
    bs, input_len, x_num, data_dim = 2, 2, 16, 4
    output_len, sym_len = 1, 8

    k1, k2, k3 = jax.random.split(key, 3)
    params = init_params(k1, x_num, data_dim)

    data_input = jax.random.normal(k2, (bs, input_len, x_num, x_num, data_dim), jnp.float32)
    input_times = jnp.linspace(0.0, 1.0, input_len, dtype=jnp.float32).reshape(1, input_len, 1)
    output_times = jnp.full((1, output_len, 1), 1.5, jnp.float32)
    symbol_input = jax.random.randint(k3, (bs, sym_len), 0, VOCAB, dtype=jnp.int32)
    # True = padding; second sample has last 2 tokens padded (never fully masked)
    symbol_padding_mask = jnp.arange(sym_len)[None, :] >= jnp.array([[sym_len], [sym_len - 2]])

    fwd = jax.jit(prose_2to1_fwd)
    out = fwd(params, data_input, input_times, output_times,
              symbol_input, symbol_padding_mask)
    jax.block_until_ready(out)
    assert out.shape == (bs, output_len, x_num, x_num, data_dim), out.shape
    assert jnp.all(jnp.isfinite(out))
    print("KERNEL_OK")
</pallas_src>

<mosaic_0001>
module attributes {stable_mosaic.version = 11 : i64} {
  func.func @_prose_forward_kernel(%arg0: i32, %arg1: memref<1x8x256xf32, #tpu.memory_space<vmem>>, %arg2: memref<1x8x32xf32, #tpu.memory_space<vmem>>, %arg3: memref<1x1x8xf32, #tpu.memory_space<vmem>>, %arg4: memref<1x1x16xf32, #tpu.memory_space<vmem>>, %arg5: memref<1x2x1xf32, #tpu.memory_space<vmem>>, %arg6: memref<1x1x1xf32, #tpu.memory_space<vmem>>, %arg7: memref<1x32xf32, #tpu.memory_space<vmem>>, %arg8: memref<1x96xf32, #tpu.memory_space<vmem>>, %arg9: memref<32x32xf32, #tpu.memory_space<vmem>>, %arg10: memref<32x96xf32, #tpu.memory_space<vmem>>, %arg11: memref<1x64xf32, #tpu.memory_space<vmem>>, %arg12: memref<1x32xf32, #tpu.memory_space<vmem>>, %arg13: memref<32x64xf32, #tpu.memory_space<vmem>>, %arg14: memref<64x32xf32, #tpu.memory_space<vmem>>, %arg15: memref<1x32xf32, #tpu.memory_space<vmem>>, %arg16: memref<1x32xf32, #tpu.memory_space<vmem>>, %arg17: memref<1x32xf32, #tpu.memory_space<vmem>>, %arg18: memref<1x32xf32, #tpu.memory_space<vmem>>, %arg19: memref<1x64xf32, #tpu.memory_space<vmem>>, %arg20: memref<1x32xf32, #tpu.memory_space<vmem>>, %arg21: memref<1x32xf32, #tpu.memory_space<vmem>>, %arg22: memref<32x64xf32, #tpu.memory_space<vmem>>, %arg23: memref<32x32xf32, #tpu.memory_space<vmem>>, %arg24: memref<32x32xf32, #tpu.memory_space<vmem>>, %arg25: memref<1x64xf32, #tpu.memory_space<vmem>>, %arg26: memref<1x32xf32, #tpu.memory_space<vmem>>, %arg27: memref<32x64xf32, #tpu.memory_space<vmem>>, %arg28: memref<64x32xf32, #tpu.memory_space<vmem>>, %arg29: memref<1x32xf32, #tpu.memory_space<vmem>>, %arg30: memref<1x32xf32, #tpu.memory_space<vmem>>, %arg31: memref<1x32xf32, #tpu.memory_space<vmem>>, %arg32: memref<1x32xf32, #tpu.memory_space<vmem>>, %arg33: memref<1x32xf32, #tpu.memory_space<vmem>>, %arg34: memref<1x32xf32, #tpu.memory_space<vmem>>, %arg35: memref<1x32xf32, #tpu.memory_space<vmem>>, %arg36: memref<1x96xf32, #tpu.memory_space<vmem>>, %arg37: memref<32x32xf32, #tpu.memory_space<vmem>>, %arg38: memref<32x96xf32, #tpu.memory_space<vmem>>, %arg39: memref<1x32xf32, #tpu.memory_space<vmem>>, %arg40: memref<1x32xf32, #tpu.memory_space<vmem>>, %arg41: memref<4x32xf32, #tpu.memory_space<vmem>>, %arg42: memref<1x32xf32, #tpu.memory_space<vmem>>, %arg43: memref<1x32xf32, #tpu.memory_space<vmem>>, %arg44: memref<1x32xf32, #tpu.memory_space<vmem>>, %arg45: memref<32x32xf32, #tpu.memory_space<vmem>>, %arg46: memref<1x256xf32, #tpu.memory_space<vmem>>, %arg47: memref<32x256xf32, #tpu.memory_space<vmem>>, %arg48: memref<4x32xf32, #tpu.memory_space<vmem>>, %arg49: memref<1x32xf32, #tpu.memory_space<vmem>>, %arg50: memref<256x32xf32, #tpu.memory_space<vmem>>, %arg51: memref<1x32xf32, #tpu.memory_space<vmem>>, %arg52: memref<1x32xf32, #tpu.memory_space<vmem>>, %arg53: memref<1x32xf32, #tpu.memory_space<vmem>>, %arg54: memref<32x32xf32, #tpu.memory_space<vmem>>, %arg55: memref<1x32xf32, #tpu.memory_space<vmem>>, %arg56: memref<1x96xf32, #tpu.memory_space<vmem>>, %arg57: memref<32x32xf32, #tpu.memory_space<vmem>>, %arg58: memref<32x96xf32, #tpu.memory_space<vmem>>, %arg59: memref<1x64xf32, #tpu.memory_space<vmem>>, %arg60: memref<1x32xf32, #tpu.memory_space<vmem>>, %arg61: memref<32x64xf32, #tpu.memory_space<vmem>>, %arg62: memref<64x32xf32, #tpu.memory_space<vmem>>, %arg63: memref<1x32xf32, #tpu.memory_space<vmem>>, %arg64: memref<1x32xf32, #tpu.memory_space<vmem>>, %arg65: memref<1x32xf32, #tpu.memory_space<vmem>>, %arg66: memref<1x32xf32, #tpu.memory_space<vmem>>, %arg67: memref<1x32xf32, #tpu.memory_space<vmem>>, %arg68: memref<1x96xf32, #tpu.memory_space<vmem>>, %arg69: memref<32x32xf32, #tpu.memory_space<vmem>>, %arg70: memref<32x96xf32, #tpu.memory_space<vmem>>, %arg71: memref<1x64xf32, #tpu.memory_space<vmem>>, %arg72: memref<1x32xf32, #tpu.memory_space<vmem>>, %arg73: memref<32x64xf32, #tpu.memory_space<vmem>>, %arg74: memref<64x32xf32, #tpu.memory_space<vmem>>, %arg75: memref<1x32xf32, #tpu.memory_space<vmem>>, %arg76: memref<1x32xf32, #tpu.memory_space<vmem>>, %arg77: memref<1x32xf32, #tpu.memory_space<vmem>>, %arg78: memref<1x32xf32, #tpu.memory_space<vmem>>, %arg79: memref<1x4x256xf32, #tpu.memory_space<vmem>>) attributes {dimension_semantics = [#tpu.dimension_semantics<parallel>], iteration_bounds = array<i64: 2>, scalar_prefetch = 0 : i64, scratch_operands = 0 : i64, tpu.core_type = #tpu.core_type<tc>, window_params = [{transform_indices = @transform_0, window_bounds = array<i64: 1, 8, 256>}, {transform_indices = @transform_1, window_bounds = array<i64: 1, 8, 32>}, {transform_indices = @transform_2, window_bounds = array<i64: 1, 1, 8>}, {transform_indices = @transform_3, window_bounds = array<i64: 1, 1, 16>}, {transform_indices = @transform_4, window_bounds = array<i64: 1, 2, 1>}, {transform_indices = @transform_5, window_bounds = array<i64: 1, 1, 1>}, {pipeline_mode = #tpu.pipeline_mode<synchronous>, transform_indices = @transform_6, window_bounds = array<i64: 1, 32>}, {pipeline_mode = #tpu.pipeline_mode<synchronous>, transform_indices = @transform_7, window_bounds = array<i64: 1, 96>}, {pipeline_mode = #tpu.pipeline_mode<synchronous>, transform_indices = @transform_8, window_bounds = array<i64: 32, 32>}, {pipeline_mode = #tpu.pipeline_mode<synchronous>, transform_indices = @transform_9, window_bounds = array<i64: 32, 96>}, {pipeline_mode = #tpu.pipeline_mode<synchronous>, transform_indices = @transform_10, window_bounds = array<i64: 1, 64>}, {pipeline_mode = #tpu.pipeline_mode<synchronous>, transform_indices = @transform_11, window_bounds = array<i64: 1, 32>}, {pipeline_mode = #tpu.pipeline_mode<synchronous>, transform_indices = @transform_12, window_bounds = array<i64: 32, 64>}, {pipeline_mode = #tpu.pipeline_mode<synchronous>, transform_indices = @transform_13, window_bounds = array<i64: 64, 32>}, {pipeline_mode = #tpu.pipeline_mode<synchronous>, transform_indices = @transform_14, window_bounds = array<i64: 1, 32>}, {pipeline_mode = #tpu.pipeline_mode<synchronous>, transform_indices = @transform_15, window_bounds = array<i64: 1, 32>}, {pipeline_mode = #tpu.pipeline_mode<synchronous>, transform_indices = @transform_16, window_bounds = array<i64: 1, 32>}, {pipeline_mode = #tpu.pipeline_mode<synchronous>, transform_indices = @transform_17, window_bounds = array<i64: 1, 32>}, {pipeline_mode = #tpu.pipeline_mode<synchronous>, transform_indices = @transform_18, window_bounds = array<i64: 1, 64>}, {pipeline_mode = #tpu.pipeline_mode<synchronous>, transform_indices = @transform_19, window_bounds = array<i64: 1, 32>}, {pipeline_mode = #tpu.pipeline_mode<synchronous>, transform_indices = @transform_20, window_bounds = array<i64: 1, 32>}, {pipeline_mode = #tpu.pipeline_mode<synchronous>, transform_indices = @transform_21, window_bounds = array<i64: 32, 64>}, {pipeline_mode = #tpu.pipeline_mode<synchronous>, transform_indices = @transform_22, window_bounds = array<i64: 32, 32>}, {pipeline_mode = #tpu.pipeline_mode<synchronous>, transform_indices = @transform_23, window_bounds = array<i64: 32, 32>}, {pipeline_mode = #tpu.pipeline_mode<synchronous>, transform_indices = @transform_24, window_bounds = array<i64: 1, 64>}, {pipeline_mode = #tpu.pipeline_mode<synchronous>, transform_indices = @transform_25, window_bounds = array<i64: 1, 32>}, {pipeline_mode = #tpu.pipeline_mode<synchronous>, transform_indices = @transform_26, window_bounds = array<i64: 32, 64>}, {pipeline_mode = #tpu.pipeline_mode<synchronous>, transform_indices = @transform_27, window_bounds = array<i64: 64, 32>}, {pipeline_mode = #tpu.pipeline_mode<synchronous>, transform_indices = @transform_28, window_bounds = array<i64: 1, 32>}, {pipeline_mode = #tpu.pipeline_mode<synchronous>, transform_indices = @transform_29, window_bounds = array<i64: 1, 32>}, {pipeline_mode = #tpu.pipeline_mode<synchronous>, transform_indices = @transform_30, window_bounds = array<i64: 1, 32>}, {pipeline_mode = #tpu.pipeline_mode<synchronous>, transform_indices = @transform_31, window_bounds = array<i64: 1, 32>}, {pipeline_mode = #tpu.pipeline_mode<synchronous>, transform_indices = @transform_32, window_bounds = array<i64: 1, 32>}, {pipeline_mode = #tpu.pipeline_mode<synchronous>, transform_indices = @transform_33, window_bounds = array<i64: 1, 32>}, {pipeline_mode = #tpu.pipeline_mode<synchronous>, transform_indices = @transform_34, window_bounds = array<i64: 1, 32>}, {pipeline_mode = #tpu.pipeline_mode<synchronous>, transform_indices = @transform_35, window_bounds = array<i64: 1, 96>}, {pipeline_mode = #tpu.pipeline_mode<synchronous>, transform_indices = @transform_36, window_bounds = array<i64: 32, 32>}, {pipeline_mode = #tpu.pipeline_mode<synchronous>, transform_indices = @transform_37, window_bounds = array<i64: 32, 96>}, {pipeline_mode = #tpu.pipeline_mode<synchronous>, transform_indices = @transform_38, window_bounds = array<i64: 1, 32>}, {pipeline_mode = #tpu.pipeline_mode<synchronous>, transform_indices = @transform_39, window_bounds = array<i64: 1, 32>}, {pipeline_mode = #tpu.pipeline_mode<synchronous>, transform_indices = @transform_40, window_bounds = array<i64: 4, 32>}, {pipeline_mode = #tpu.pipeline_mode<synchronous>, transform_indices = @transform_41, window_bounds = array<i64: 1, 32>}, {pipeline_mode = #tpu.pipeline_mode<synchronous>, transform_indices = @transform_42, window_bounds = array<i64: 1, 32>}, {pipeline_mode = #tpu.pipeline_mode<synchronous>, transform_indices = @transform_43, window_bounds = array<i64: 1, 32>}, {pipeline_mode = #tpu.pipeline_mode<synchronous>, transform_indices = @transform_44, window_bounds = array<i64: 32, 32>}, {pipeline_mode = #tpu.pipeline_mode<synchronous>, transform_indices = @transform_45, window_bounds = array<i64: 1, 256>}, {pipeline_mode = #tpu.pipeline_mode<synchronous>, transform_indices = @transform_46, window_bounds = array<i64: 32, 256>}, {pipeline_mode = #tpu.pipeline_mode<synchronous>, transform_indices = @transform_47, window_bounds = array<i64: 4, 32>}, {pipeline_mode = #tpu.pipeline_mode<synchronous>, transform_indices = @transform_48, window_bounds = array<i64: 1, 32>}, {pipeline_mode = #tpu.pipeline_mode<synchronous>, transform_indices = @transform_49, window_bounds = array<i64: 256, 32>}, {pipeline_mode = #tpu.pipeline_mode<synchronous>, transform_indices = @transform_50, window_bounds = array<i64: 1, 32>}, {pipeline_mode = #tpu.pipeline_mode<synchronous>, transform_indices = @transform_51, window_bounds = array<i64: 1, 32>}, {pipeline_mode = #tpu.pipeline_mode<synchronous>, transform_indices = @transform_52, window_bounds = array<i64: 1, 32>}, {pipeline_mode = #tpu.pipeline_mode<synchronous>, transform_indices = @transform_53, window_bounds = array<i64: 32, 32>}, {pipeline_mode = #tpu.pipeline_mode<synchronous>, transform_indices = @transform_54, window_bounds = array<i64: 1, 32>}, {pipeline_mode = #tpu.pipeline_mode<synchronous>, transform_indices = @transform_55, window_bounds = array<i64: 1, 96>}, {pipeline_mode = #tpu.pipeline_mode<synchronous>, transform_indices = @transform_56, window_bounds = array<i64: 32, 32>}, {pipeline_mode = #tpu.pipeline_mode<synchronous>, transform_indices = @transform_57, window_bounds = array<i64: 32, 96>}, {pipeline_mode = #tpu.pipeline_mode<synchronous>, transform_indices = @transform_58, window_bounds = array<i64: 1, 64>}, {pipeline_mode = #tpu.pipeline_mode<synchronous>, transform_indices = @transform_59, window_bounds = array<i64: 1, 32>}, {pipeline_mode = #tpu.pipeline_mode<synchronous>, transform_indices = @transform_60, window_bounds = array<i64: 32, 64>}, {pipeline_mode = #tpu.pipeline_mode<synchronous>, transform_indices = @transform_61, window_bounds = array<i64: 64, 32>}, {pipeline_mode = #tpu.pipeline_mode<synchronous>, transform_indices = @transform_62, window_bounds = array<i64: 1, 32>}, {pipeline_mode = #tpu.pipeline_mode<synchronous>, transform_indices = @transform_63, window_bounds = array<i64: 1, 32>}, {pipeline_mode = #tpu.pipeline_mode<synchronous>, transform_indices = @transform_64, window_bounds = array<i64: 1, 32>}, {pipeline_mode = #tpu.pipeline_mode<synchronous>, transform_indices = @transform_65, window_bounds = array<i64: 1, 32>}, {pipeline_mode = #tpu.pipeline_mode<synchronous>, transform_indices = @transform_66, window_bounds = array<i64: 1, 32>}, {pipeline_mode = #tpu.pipeline_mode<synchronous>, transform_indices = @transform_67, window_bounds = array<i64: 1, 96>}, {pipeline_mode = #tpu.pipeline_mode<synchronous>, transform_indices = @transform_68, window_bounds = array<i64: 32, 32>}, {pipeline_mode = #tpu.pipeline_mode<synchronous>, transform_indices = @transform_69, window_bounds = array<i64: 32, 96>}, {pipeline_mode = #tpu.pipeline_mode<synchronous>, transform_indices = @transform_70, window_bounds = array<i64: 1, 64>}, {pipeline_mode = #tpu.pipeline_mode<synchronous>, transform_indices = @transform_71, window_bounds = array<i64: 1, 32>}, {pipeline_mode = #tpu.pipeline_mode<synchronous>, transform_indices = @transform_72, window_bounds = array<i64: 32, 64>}, {pipeline_mode = #tpu.pipeline_mode<synchronous>, transform_indices = @transform_73, window_bounds = array<i64: 64, 32>}, {pipeline_mode = #tpu.pipeline_mode<synchronous>, transform_indices = @transform_74, window_bounds = array<i64: 1, 32>}, {pipeline_mode = #tpu.pipeline_mode<synchronous>, transform_indices = @transform_75, window_bounds = array<i64: 1, 32>}, {pipeline_mode = #tpu.pipeline_mode<synchronous>, transform_indices = @transform_76, window_bounds = array<i64: 1, 32>}, {pipeline_mode = #tpu.pipeline_mode<synchronous>, transform_indices = @transform_77, window_bounds = array<i64: 1, 32>}, {transform_indices = @transform_78, window_bounds = array<i64: 1, 4, 256>}]} {
    %c0 = arith.constant 0 : index
    %c0_0 = arith.constant 0 : index
    %0 = vector.load %arg7[%c0, %c0_0] : memref<1x32xf32, #tpu.memory_space<vmem>>, vector<1x32xf32>
    %c0_1 = arith.constant 0 : index
    %c0_2 = arith.constant 0 : index
    %1 = vector.load %arg8[%c0_1, %c0_2] : memref<1x96xf32, #tpu.memory_space<vmem>>, vector<1x96xf32>
    %c0_3 = arith.constant 0 : index
    %c0_4 = arith.constant 0 : index
    %2 = vector.load %arg9[%c0_3, %c0_4] : memref<32x32xf32, #tpu.memory_space<vmem>>, vector<32x32xf32>
    %c0_5 = arith.constant 0 : index
    %c0_6 = arith.constant 0 : index
    %3 = vector.load %arg10[%c0_5, %c0_6] : memref<32x96xf32, #tpu.memory_space<vmem>>, vector<32x96xf32>
    %c0_7 = arith.constant 0 : index
    %c0_8 = arith.constant 0 : index
    %4 = vector.load %arg11[%c0_7, %c0_8] : memref<1x64xf32, #tpu.memory_space<vmem>>, vector<1x64xf32>
    %c0_9 = arith.constant 0 : index
    %c0_10 = arith.constant 0 : index
    %5 = vector.load %arg12[%c0_9, %c0_10] : memref<1x32xf32, #tpu.memory_space<vmem>>, vector<1x32xf32>
    %c0_11 = arith.constant 0 : index
    %c0_12 = arith.constant 0 : index
    %6 = vector.load %arg13[%c0_11, %c0_12] : memref<32x64xf32, #tpu.memory_space<vmem>>, vector<32x64xf32>
    %c0_13 = arith.constant 0 : index
    %c0_14 = arith.constant 0 : index
    %7 = vector.load %arg14[%c0_13, %c0_14] : memref<64x32xf32, #tpu.memory_space<vmem>>, vector<64x32xf32>
    %c0_15 = arith.constant 0 : index
    %c0_16 = arith.constant 0 : index
    %8 = vector.load %arg15[%c0_15, %c0_16] : memref<1x32xf32, #tpu.memory_space<vmem>>, vector<1x32xf32>
    %c0_17 = arith.constant 0 : index
    %c0_18 = arith.constant 0 : index
    %9 = vector.load %arg16[%c0_17, %c0_18] : memref<1x32xf32, #tpu.memory_space<vmem>>, vector<1x32xf32>
    %c0_19 = arith.constant 0 : index
    %c0_20 = arith.constant 0 : index
    %10 = vector.load %arg17[%c0_19, %c0_20] : memref<1x32xf32, #tpu.memory_space<vmem>>, vector<1x32xf32>
    %c0_21 = arith.constant 0 : index
    %c0_22 = arith.constant 0 : index
    %11 = vector.load %arg18[%c0_21, %c0_22] : memref<1x32xf32, #tpu.memory_space<vmem>>, vector<1x32xf32>
    %c0_23 = arith.constant 0 : index
    %c0_24 = arith.constant 0 : index
    %12 = vector.load %arg19[%c0_23, %c0_24] : memref<1x64xf32, #tpu.memory_space<vmem>>, vector<1x64xf32>
    %c0_25 = arith.constant 0 : index
    %c0_26 = arith.constant 0 : index
    %13 = vector.load %arg20[%c0_25, %c0_26] : memref<1x32xf32, #tpu.memory_space<vmem>>, vector<1x32xf32>
    %c0_27 = arith.constant 0 : index
    %c0_28 = arith.constant 0 : index
    %14 = vector.load %arg21[%c0_27, %c0_28] : memref<1x32xf32, #tpu.memory_space<vmem>>, vector<1x32xf32>
    %c0_29 = arith.constant 0 : index
    %c0_30 = arith.constant 0 : index
    %15 = vector.load %arg22[%c0_29, %c0_30] : memref<32x64xf32, #tpu.memory_space<vmem>>, vector<32x64xf32>
    %c0_31 = arith.constant 0 : index
    %c0_32 = arith.constant 0 : index
    %16 = vector.load %arg23[%c0_31, %c0_32] : memref<32x32xf32, #tpu.memory_space<vmem>>, vector<32x32xf32>
    %c0_33 = arith.constant 0 : index
    %c0_34 = arith.constant 0 : index
    %17 = vector.load %arg24[%c0_33, %c0_34] : memref<32x32xf32, #tpu.memory_space<vmem>>, vector<32x32xf32>
    %c0_35 = arith.constant 0 : index
    %c0_36 = arith.constant 0 : index
    %18 = vector.load %arg25[%c0_35, %c0_36] : memref<1x64xf32, #tpu.memory_space<vmem>>, vector<1x64xf32>
    %c0_37 = arith.constant 0 : index
    %c0_38 = arith.constant 0 : index
    %19 = vector.load %arg26[%c0_37, %c0_38] : memref<1x32xf32, #tpu.memory_space<vmem>>, vector<1x32xf32>
    %c0_39 = arith.constant 0 : index
    %c0_40 = arith.constant 0 : index
    %20 = vector.load %arg27[%c0_39, %c0_40] : memref<32x64xf32, #tpu.memory_space<vmem>>, vector<32x64xf32>
    %c0_41 = arith.constant 0 : index
    %c0_42 = arith.constant 0 : index
    %21 = vector.load %arg28[%c0_41, %c0_42] : memref<64x32xf32, #tpu.memory_space<vmem>>, vector<64x32xf32>
    %c0_43 = arith.constant 0 : index
    %c0_44 = arith.constant 0 : index
    %22 = vector.load %arg29[%c0_43, %c0_44] : memref<1x32xf32, #tpu.memory_space<vmem>>, vector<1x32xf32>
    %c0_45 = arith.constant 0 : index
    %c0_46 = arith.constant 0 : index
    %23 = vector.load %arg30[%c0_45, %c0_46] : memref<1x32xf32, #tpu.memory_space<vmem>>, vector<1x32xf32>
    %c0_47 = arith.constant 0 : index
    %c0_48 = arith.constant 0 : index
    %24 = vector.load %arg31[%c0_47, %c0_48] : memref<1x32xf32, #tpu.memory_space<vmem>>, vector<1x32xf32>
    %c0_49 = arith.constant 0 : index
    %c0_50 = arith.constant 0 : index
    %25 = vector.load %arg32[%c0_49, %c0_50] : memref<1x32xf32, #tpu.memory_space<vmem>>, vector<1x32xf32>
    %c0_51 = arith.constant 0 : index
    %c0_52 = arith.constant 0 : index
    %26 = vector.load %arg33[%c0_51, %c0_52] : memref<1x32xf32, #tpu.memory_space<vmem>>, vector<1x32xf32>
    %c0_53 = arith.constant 0 : index
    %c0_54 = arith.constant 0 : index
    %27 = vector.load %arg34[%c0_53, %c0_54] : memref<1x32xf32, #tpu.memory_space<vmem>>, vector<1x32xf32>
    %c0_55 = arith.constant 0 : index
    %c0_56 = arith.constant 0 : index
    %28 = vector.load %arg35[%c0_55, %c0_56] : memref<1x32xf32, #tpu.memory_space<vmem>>, vector<1x32xf32>
    %c0_57 = arith.constant 0 : index
    %c0_58 = arith.constant 0 : index
    %29 = vector.load %arg36[%c0_57, %c0_58] : memref<1x96xf32, #tpu.memory_space<vmem>>, vector<1x96xf32>
    %c0_59 = arith.constant 0 : index
    %c0_60 = arith.constant 0 : index
    %30 = vector.load %arg37[%c0_59, %c0_60] : memref<32x32xf32, #tpu.memory_space<vmem>>, vector<32x32xf32>
    %c0_61 = arith.constant 0 : index
    %c0_62 = arith.constant 0 : index
    %31 = vector.load %arg38[%c0_61, %c0_62] : memref<32x96xf32, #tpu.memory_space<vmem>>, vector<32x96xf32>
    %c0_63 = arith.constant 0 : index
    %c0_64 = arith.constant 0 : index
    %32 = vector.load %arg39[%c0_63, %c0_64] : memref<1x32xf32, #tpu.memory_space<vmem>>, vector<1x32xf32>
    %c0_65 = arith.constant 0 : index
    %c0_66 = arith.constant 0 : index
    %33 = vector.load %arg40[%c0_65, %c0_66] : memref<1x32xf32, #tpu.memory_space<vmem>>, vector<1x32xf32>
    %c0_67 = arith.constant 0 : index
    %c0_68 = arith.constant 0 : index
    %34 = vector.load %arg41[%c0_67, %c0_68] : memref<4x32xf32, #tpu.memory_space<vmem>>, vector<4x32xf32>
    %c0_69 = arith.constant 0 : index
    %c0_70 = arith.constant 0 : index
    %35 = vector.load %arg42[%c0_69, %c0_70] : memref<1x32xf32, #tpu.memory_space<vmem>>, vector<1x32xf32>
    %c0_71 = arith.constant 0 : index
    %c0_72 = arith.constant 0 : index
    %36 = vector.load %arg43[%c0_71, %c0_72] : memref<1x32xf32, #tpu.memory_space<vmem>>, vector<1x32xf32>
    %c0_73 = arith.constant 0 : index
    %c0_74 = arith.constant 0 : index
    %37 = vector.load %arg44[%c0_73, %c0_74] : memref<1x32xf32, #tpu.memory_space<vmem>>, vector<1x32xf32>
    %c0_75 = arith.constant 0 : index
    %c0_76 = arith.constant 0 : index
    %38 = vector.load %arg45[%c0_75, %c0_76] : memref<32x32xf32, #tpu.memory_space<vmem>>, vector<32x32xf32>
    %c0_77 = arith.constant 0 : index
    %c0_78 = arith.constant 0 : index
    %39 = vector.load %arg46[%c0_77, %c0_78] : memref<1x256xf32, #tpu.memory_space<vmem>>, vector<1x256xf32>
    %c0_79 = arith.constant 0 : index
    %c0_80 = arith.constant 0 : index
    %40 = vector.load %arg47[%c0_79, %c0_80] : memref<32x256xf32, #tpu.memory_space<vmem>>, vector<32x256xf32>
    %c0_81 = arith.constant 0 : index
    %c0_82 = arith.constant 0 : index
    %41 = vector.load %arg48[%c0_81, %c0_82] : memref<4x32xf32, #tpu.memory_space<vmem>>, vector<4x32xf32>
    %c0_83 = arith.constant 0 : index
    %c0_84 = arith.constant 0 : index
    %42 = vector.load %arg49[%c0_83, %c0_84] : memref<1x32xf32, #tpu.memory_space<vmem>>, vector<1x32xf32>
    %c0_85 = arith.constant 0 : index
    %c0_86 = arith.constant 0 : index
    %43 = vector.load %arg50[%c0_85, %c0_86] : memref<256x32xf32, #tpu.memory_space<vmem>>, vector<256x32xf32>
    %c0_87 = arith.constant 0 : index
    %c0_88 = arith.constant 0 : index
    %44 = vector.load %arg51[%c0_87, %c0_88] : memref<1x32xf32, #tpu.memory_space<vmem>>, vector<1x32xf32>
    %c0_89 = arith.constant 0 : index
    %c0_90 = arith.constant 0 : index
    %45 = vector.load %arg52[%c0_89, %c0_90] : memref<1x32xf32, #tpu.memory_space<vmem>>, vector<1x32xf32>
    %c0_91 = arith.constant 0 : index
    %c0_92 = arith.constant 0 : index
    %46 = vector.load %arg53[%c0_91, %c0_92] : memref<1x32xf32, #tpu.memory_space<vmem>>, vector<1x32xf32>
    %c0_93 = arith.constant 0 : index
    %c0_94 = arith.constant 0 : index
    %47 = vector.load %arg54[%c0_93, %c0_94] : memref<32x32xf32, #tpu.memory_space<vmem>>, vector<32x32xf32>
    %c0_95 = arith.constant 0 : index
    %c0_96 = arith.constant 0 : index
    %48 = vector.load %arg55[%c0_95, %c0_96] : memref<1x32xf32, #tpu.memory_space<vmem>>, vector<1x32xf32>
    %c0_97 = arith.constant 0 : index
    %c0_98 = arith.constant 0 : index
    %49 = vector.load %arg56[%c0_97, %c0_98] : memref<1x96xf32, #tpu.memory_space<vmem>>, vector<1x96xf32>
    %c0_99 = arith.constant 0 : index
    %c0_100 = arith.constant 0 : index
    %50 = vector.load %arg57[%c0_99, %c0_100] : memref<32x32xf32, #tpu.memory_space<vmem>>, vector<32x32xf32>
    %c0_101 = arith.constant 0 : index
    %c0_102 = arith.constant 0 : index
    %51 = vector.load %arg58[%c0_101, %c0_102] : memref<32x96xf32, #tpu.memory_space<vmem>>, vector<32x96xf32>
    %c0_103 = arith.constant 0 : index
    %c0_104 = arith.constant 0 : index
    %52 = vector.load %arg59[%c0_103, %c0_104] : memref<1x64xf32, #tpu.memory_space<vmem>>, vector<1x64xf32>
    %c0_105 = arith.constant 0 : index
    %c0_106 = arith.constant 0 : index
    %53 = vector.load %arg60[%c0_105, %c0_106] : memref<1x32xf32, #tpu.memory_space<vmem>>, vector<1x32xf32>
    %c0_107 = arith.constant 0 : index
    %c0_108 = arith.constant 0 : index
    %54 = vector.load %arg61[%c0_107, %c0_108] : memref<32x64xf32, #tpu.memory_space<vmem>>, vector<32x64xf32>
    %c0_109 = arith.constant 0 : index
    %c0_110 = arith.constant 0 : index
    %55 = vector.load %arg62[%c0_109, %c0_110] : memref<64x32xf32, #tpu.memory_space<vmem>>, vector<64x32xf32>
    %c0_111 = arith.constant 0 : index
    %c0_112 = arith.constant 0 : index
    %56 = vector.load %arg63[%c0_111, %c0_112] : memref<1x32xf32, #tpu.memory_space<vmem>>, vector<1x32xf32>
    %c0_113 = arith.constant 0 : index
    %c0_114 = arith.constant 0 : index
    %57 = vector.load %arg64[%c0_113, %c0_114] : memref<1x32xf32, #tpu.memory_space<vmem>>, vector<1x32xf32>
    %c0_115 = arith.constant 0 : index
    %c0_116 = arith.constant 0 : index
    %58 = vector.load %arg65[%c0_115, %c0_116] : memref<1x32xf32, #tpu.memory_space<vmem>>, vector<1x32xf32>
    %c0_117 = arith.constant 0 : index
    %c0_118 = arith.constant 0 : index
    %59 = vector.load %arg66[%c0_117, %c0_118] : memref<1x32xf32, #tpu.memory_space<vmem>>, vector<1x32xf32>
    %c0_119 = arith.constant 0 : index
    %c0_120 = arith.constant 0 : index
    %60 = vector.load %arg67[%c0_119, %c0_120] : memref<1x32xf32, #tpu.memory_space<vmem>>, vector<1x32xf32>
    %c0_121 = arith.constant 0 : index
    %c0_122 = arith.constant 0 : index
    %61 = vector.load %arg68[%c0_121, %c0_122] : memref<1x96xf32, #tpu.memory_space<vmem>>, vector<1x96xf32>
    %c0_123 = arith.constant 0 : index
    %c0_124 = arith.constant 0 : index
    %62 = vector.load %arg69[%c0_123, %c0_124] : memref<32x32xf32, #tpu.memory_space<vmem>>, vector<32x32xf32>
    %c0_125 = arith.constant 0 : index
    %c0_126 = arith.constant 0 : index
    %63 = vector.load %arg70[%c0_125, %c0_126] : memref<32x96xf32, #tpu.memory_space<vmem>>, vector<32x96xf32>
    %c0_127 = arith.constant 0 : index
    %c0_128 = arith.constant 0 : index
    %64 = vector.load %arg71[%c0_127, %c0_128] : memref<1x64xf32, #tpu.memory_space<vmem>>, vector<1x64xf32>
    %c0_129 = arith.constant 0 : index
    %c0_130 = arith.constant 0 : index
    %65 = vector.load %arg72[%c0_129, %c0_130] : memref<1x32xf32, #tpu.memory_space<vmem>>, vector<1x32xf32>
    %c0_131 = arith.constant 0 : index
    %c0_132 = arith.constant 0 : index
    %66 = vector.load %arg73[%c0_131, %c0_132] : memref<32x64xf32, #tpu.memory_space<vmem>>, vector<32x64xf32>
    %c0_133 = arith.constant 0 : index
    %c0_134 = arith.constant 0 : index
    %67 = vector.load %arg74[%c0_133, %c0_134] : memref<64x32xf32, #tpu.memory_space<vmem>>, vector<64x32xf32>
    %c0_135 = arith.constant 0 : index
    %c0_136 = arith.constant 0 : index
    %68 = vector.load %arg75[%c0_135, %c0_136] : memref<1x32xf32, #tpu.memory_space<vmem>>, vector<1x32xf32>
    %c0_137 = arith.constant 0 : index
    %c0_138 = arith.constant 0 : index
    %69 = vector.load %arg76[%c0_137, %c0_138] : memref<1x32xf32, #tpu.memory_space<vmem>>, vector<1x32xf32>
    %c0_139 = arith.constant 0 : index
    %c0_140 = arith.constant 0 : index
    %70 = vector.load %arg77[%c0_139, %c0_140] : memref<1x32xf32, #tpu.memory_space<vmem>>, vector<1x32xf32>
    %c0_141 = arith.constant 0 : index
    %c0_142 = arith.constant 0 : index
    %71 = vector.load %arg78[%c0_141, %c0_142] : memref<1x32xf32, #tpu.memory_space<vmem>>, vector<1x32xf32>
    %c0_143 = arith.constant 0 : index
    %c0_144 = arith.constant 0 : index
    %c0_145 = arith.constant 0 : index
    %72 = vector.load %arg1[%c0_143, %c0_144, %c0_145] : memref<1x8x256xf32, #tpu.memory_space<vmem>>, vector<1x8x256xf32>
    %73 = vector.shape_cast %72 : vector<1x8x256xf32> to vector<8x256xf32>
    %cst = arith.constant dense<0.000000e+00> : vector<8x32xf32>
    %74 = tpu.matmul %73, %43, %cst {dimension_numbers = #tpu.dot_dimension_numbers<[1], [0], [0], [1], [0, 0, 1, 1], [], []>} : vector<8x256xf32>, vector<256x32xf32>, vector<8x32xf32> -> vector<8x32xf32>
    %75 = vector.broadcast %42 : vector<1x32xf32> to vector<8x32xf32>
    %76 = arith.addf %74, %75 : vector<8x32xf32>
    %c0_146 = arith.constant 0 : index
    %c0_147 = arith.constant 0 : index
    %c0_148 = arith.constant 0 : index
    %77 = vector.load %arg5[%c0_146, %c0_147, %c0_148] : memref<1x2x1xf32, #tpu.memory_space<vmem>>, vector<1x2x1xf32>
    %78 = vector.shape_cast %77 : vector<1x2x1xf32> to vector<2x1xf32>
    %79 = vector.broadcast %78 : vector<2x1xf32> to vector<2x32xf32>
    %80 = vector.broadcast %46 : vector<1x32xf32> to vector<2x32xf32>
    %81 = arith.mulf %79, %80 : vector<2x32xf32>
    %82 = vector.broadcast %44 : vector<1x32xf32> to vector<2x32xf32>
    %83 = arith.addf %81, %82 : vector<2x32xf32>
    %cst_149 = arith.constant 5.000000e-01 : f32
    %84 = vector.broadcast %cst_149 : f32 to vector<2x32xf32>
    %85 = arith.mulf %84, %83 : vector<2x32xf32>
    %cst_150 = arith.constant 0.707106769 : f32
    %86 = vector.broadcast %cst_150 : f32 to vector<2x32xf32>
    %87 = arith.mulf %83, %86 : vector<2x32xf32>
    %cst_151 = arith.constant 0.000000e+00 : f32
    %88 = vector.broadcast %cst_151 : f32 to vector<2x32xf32>
    %89 = arith.cmpf oge, %87, %88 : vector<2x32xf32>
    %cst_152 = arith.constant 1.000000e+00 : f32
    %cst_153 = arith.constant -1.000000e+00 : f32
    %90 = vector.broadcast %cst_152 : f32 to vector<2x32xf32>
    %91 = vector.broadcast %cst_153 : f32 to vector<2x32xf32>
    %92 = arith.select %89, %90, %91 : vector<2x32xi1>, vector<2x32xf32>
    %93 = math.absf %87 : vector<2x32xf32>
    %cst_154 = arith.constant 0.327591091 : f32
    %94 = vector.broadcast %cst_154 : f32 to vector<2x32xf32>
    %95 = arith.mulf %94, %93 : vector<2x32xf32>
    %cst_155 = arith.constant 1.000000e+00 : f32
    %96 = vector.broadcast %cst_155 : f32 to vector<2x32xf32>
    %97 = arith.addf %96, %95 : vector<2x32xf32>
    %cst_156 = arith.constant 1.000000e+00 : f32
    %98 = vector.broadcast %cst_156 : f32 to vector<2x32xf32>
    %99 = arith.divf %98, %97 : vector<2x32xf32>
    %cst_157 = arith.constant 1.06140542 : f32
    %100 = vector.broadcast %cst_157 : f32 to vector<2x32xf32>
    %101 = arith.mulf %100, %99 : vector<2x32xf32>
    %cst_158 = arith.constant -1.45315206 : f32
    %102 = vector.broadcast %cst_158 : f32 to vector<2x32xf32>
    %103 = arith.addf %101, %102 : vector<2x32xf32>
    %104 = arith.mulf %103, %99 : vector<2x32xf32>
    %cst_159 = arith.constant 1.42141378 : f32
    %105 = vector.broadcast %cst_159 : f32 to vector<2x32xf32>
    %106 = arith.addf %104, %105 : vector<2x32xf32>
    %107 = arith.mulf %106, %99 : vector<2x32xf32>
    %cst_160 = arith.constant -0.284496725 : f32
    %108 = vector.broadcast %cst_160 : f32 to vector<2x32xf32>
    %109 = arith.addf %107, %108 : vector<2x32xf32>
    %110 = arith.mulf %109, %99 : vector<2x32xf32>
    %cst_161 = arith.constant 0.254829586 : f32
    %111 = vector.broadcast %cst_161 : f32 to vector<2x32xf32>
    %112 = arith.addf %110, %111 : vector<2x32xf32>
    %113 = arith.mulf %112, %99 : vector<2x32xf32>
    %cst_162 = arith.constant 0.000000e+00 : f32
    %114 = vector.broadcast %cst_162 : f32 to vector<2x32xf32>
    %115 = arith.subf %114, %93 : vector<2x32xf32>
    %116 = arith.mulf %115, %93 : vector<2x32xf32>
    %117 = math.exp %116 : vector<2x32xf32>
    %118 = arith.mulf %113, %117 : vector<2x32xf32>
    %cst_163 = arith.constant 1.000000e+00 : f32
    %119 = vector.broadcast %cst_163 : f32 to vector<2x32xf32>
    %120 = arith.subf %119, %118 : vector<2x32xf32>
    %121 = arith.mulf %92, %120 : vector<2x32xf32>
    %cst_164 = arith.constant 1.000000e+00 : f32
    %122 = vector.broadcast %cst_164 : f32 to vector<2x32xf32>
    %123 = arith.addf %122, %121 : vector<2x32xf32>
    %124 = arith.mulf %85, %123 : vector<2x32xf32>
    %cst_165 = arith.constant dense<0.000000e+00> : vector<2x32xf32>
    %125 = tpu.matmul %124, %47, %cst_165 {dimension_numbers = #tpu.dot_dimension_numbers<[1], [0], [0], [1], [0, 0, 1, 1], [], []>} : vector<2x32xf32>, vector<32x32xf32>, vector<2x32xf32> -> vector<2x32xf32>
    %126 = vector.broadcast %45 : vector<1x32xf32> to vector<2x32xf32>
    %127 = arith.addf %125, %126 : vector<2x32xf32>
    %128 = vector.extract_strided_slice %76 {offsets = [0, 0], sizes = [4, 32], strides = [1, 1]} : vector<8x32xf32> to vector<4x32xf32>
    %129 = vector.extract_strided_slice %127 {offsets = [0, 0], sizes = [1, 32], strides = [1, 1]} : vector<2x32xf32> to vector<1x32xf32>
    %130 = vector.broadcast %129 : vector<1x32xf32> to vector<4x32xf32>
    %131 = arith.addf %128, %130 : vector<4x32xf32>
    %132 = arith.addf %131, %41 : vector<4x32xf32>
    %133 = vector.extract_strided_slice %76 {offsets = [4, 0], sizes = [4, 32], strides = [1, 1]} : vector<8x32xf32> to vector<4x32xf32>
    %134 = vector.extract_strided_slice %127 {offsets = [1, 0], sizes = [1, 32], strides = [1, 1]} : vector<2x32xf32> to vector<1x32xf32>
    %135 = vector.broadcast %134 : vector<1x32xf32> to vector<4x32xf32>
    %136 = arith.addf %133, %135 : vector<4x32xf32>
    %137 = arith.addf %136, %41 : vector<4x32xf32>
    %138 = tpu.concatenate %132, %137 in 0 : vector<4x32xf32>, vector<4x32xf32> -> vector<8x32xf32>
    %cst_166 = arith.constant dense<0.000000e+00> : vector<8xf32>
    %139 = vector.multi_reduction <add>, %138, %cst_166 [1] : vector<8x32xf32> to vector<8xf32>
    %140 = vector.shape_cast %139 : vector<8xf32> to vector<8x1xf32>
    %cst_167 = arith.constant 3.200000e+01 : f32
    %141 = vector.broadcast %cst_167 : f32 to vector<8x1xf32>
    %142 = arith.divf %140, %141 : vector<8x1xf32>
    %143 = vector.broadcast %142 : vector<8x1xf32> to vector<8x32xf32>
    %144 = arith.subf %138, %143 : vector<8x32xf32>
    %145 = arith.mulf %144, %144 : vector<8x32xf32>
    %cst_168 = arith.constant dense<0.000000e+00> : vector<8xf32>
    %146 = vector.multi_reduction <add>, %145, %cst_168 [1] : vector<8x32xf32> to vector<8xf32>
    %147 = vector.shape_cast %146 : vector<8xf32> to vector<8x1xf32>
    %cst_169 = arith.constant 3.200000e+01 : f32
    %148 = vector.broadcast %cst_169 : f32 to vector<8x1xf32>
    %149 = arith.divf %147, %148 : vector<8x1xf32>
    %150 = vector.broadcast %142 : vector<8x1xf32> to vector<8x32xf32>
    %151 = arith.subf %138, %150 : vector<8x32xf32>
    %cst_170 = arith.constant 9.99999974E-6 : f32
    %152 = vector.broadcast %cst_170 : f32 to vector<8x1xf32>
    %153 = arith.addf %149, %152 : vector<8x1xf32>
    %154 = math.rsqrt %153 : vector<8x1xf32>
    %155 = vector.broadcast %154 : vector<8x1xf32> to vector<8x32xf32>
    %156 = arith.mulf %151, %155 : vector<8x32xf32>
    %157 = vector.broadcast %9 : vector<1x32xf32> to vector<8x32xf32>
    %158 = arith.mulf %156, %157 : vector<8x32xf32>
    %159 = vector.broadcast %8 : vector<1x32xf32> to vector<8x32xf32>
    %160 = arith.addf %158, %159 : vector<8x32xf32>
    %cst_171 = arith.constant dense<0.000000e+00> : vector<8x96xf32>
    %161 = tpu.matmul %160, %3, %cst_171 {dimension_numbers = #tpu.dot_dimension_numbers<[1], [0], [0], [1], [0, 0, 1, 1], [], []>} : vector<8x32xf32>, vector<32x96xf32>, vector<8x96xf32> -> vector<8x96xf32>
    %162 = vector.broadcast %1 : vector<1x96xf32> to vector<8x96xf32>
    %163 = arith.addf %161, %162 : vector<8x96xf32>
    %164 = vector.extract_strided_slice %163 {offsets = [0, 0], sizes = [8, 32], strides = [1, 1]} : vector<8x96xf32> to vector<8x32xf32>
    %165 = vector.extract_strided_slice %163 {offsets = [0, 32], sizes = [8, 32], strides = [1, 1]} : vector<8x96xf32> to vector<8x32xf32>
    %166 = vector.extract_strided_slice %163 {offsets = [0, 64], sizes = [8, 32], strides = [1, 1]} : vector<8x96xf32> to vector<8x32xf32>
    %167 = vector.extract_strided_slice %164 {offsets = [0, 0], sizes = [8, 8], strides = [1, 1]} : vector<8x32xf32> to vector<8x8xf32>
    %168 = vector.extract_strided_slice %165 {offsets = [0, 0], sizes = [8, 8], strides = [1, 1]} : vector<8x32xf32> to vector<8x8xf32>
    %169 = vector.extract_strided_slice %166 {offsets = [0, 0], sizes = [8, 8], strides = [1, 1]} : vector<8x32xf32> to vector<8x8xf32>
    %cst_172 = arith.constant dense<0.000000e+00> : vector<8x8xf32>
    %170 = tpu.matmul %167, %168, %cst_172 {dimension_numbers = #tpu.dot_dimension_numbers<[1], [1], [0], [0], [0, 0, 1, 0], [], []>} : vector<8x8xf32>, vector<8x8xf32>, vector<8x8xf32> -> vector<8x8xf32>
    %cst_173 = arith.constant 0.353553385 : f32
    %171 = vector.broadcast %cst_173 : f32 to vector<8x8xf32>
    %172 = arith.mulf %170, %171 : vector<8x8xf32>
    %cst_174 = arith.constant dense<0xFF800000> : vector<8xf32>
    %173 = vector.multi_reduction <maximumf>, %172, %cst_174 [1] : vector<8x8xf32> to vector<8xf32>
    %174 = vector.shape_cast %173 : vector<8xf32> to vector<8x1xf32>
    %175 = vector.broadcast %174 : vector<8x1xf32> to vector<8x8xf32>
    %176 = arith.subf %172, %175 : vector<8x8xf32>
    %177 = math.exp %176 : vector<8x8xf32>
    %cst_175 = arith.constant dense<0.000000e+00> : vector<8xf32>
    %178 = vector.multi_reduction <add>, %177, %cst_175 [1] : vector<8x8xf32> to vector<8xf32>
    %179 = vector.shape_cast %178 : vector<8xf32> to vector<8x1xf32>
    %180 = vector.broadcast %179 : vector<8x1xf32> to vector<8x8xf32>
    %181 = arith.divf %177, %180 : vector<8x8xf32>
    %cst_176 = arith.constant dense<0.000000e+00> : vector<8x8xf32>
    %182 = tpu.matmul %181, %169, %cst_176 {dimension_numbers = #tpu.dot_dimension_numbers<[1], [0], [0], [1], [0, 0, 1, 1], [], []>} : vector<8x8xf32>, vector<8x8xf32>, vector<8x8xf32> -> vector<8x8xf32>
    %183 = vector.extract_strided_slice %164 {offsets = [0, 8], sizes = [8, 8], strides = [1, 1]} : vector<8x32xf32> to vector<8x8xf32>
    %184 = vector.extract_strided_slice %165 {offsets = [0, 8], sizes = [8, 8], strides = [1, 1]} : vector<8x32xf32> to vector<8x8xf32>
    %185 = vector.extract_strided_slice %166 {offsets = [0, 8], sizes = [8, 8], strides = [1, 1]} : vector<8x32xf32> to vector<8x8xf32>
    %cst_177 = arith.constant dense<0.000000e+00> : vector<8x8xf32>
    %186 = tpu.matmul %183, %184, %cst_177 {dimension_numbers = #tpu.dot_dimension_numbers<[1], [1], [0], [0], [0, 0, 1, 0], [], []>} : vector<8x8xf32>, vector<8x8xf32>, vector<8x8xf32> -> vector<8x8xf32>
    %cst_178 = arith.constant 0.353553385 : f32
    %187 = vector.broadcast %cst_178 : f32 to vector<8x8xf32>
    %188 = arith.mulf %186, %187 : vector<8x8xf32>
    %cst_179 = arith.constant dense<0xFF800000> : vector<8xf32>
    %189 = vector.multi_reduction <maximumf>, %188, %cst_179 [1] : vector<8x8xf32> to vector<8xf32>
    %190 = vector.shape_cast %189 : vector<8xf32> to vector<8x1xf32>
    %191 = vector.broadcast %190 : vector<8x1xf32> to vector<8x8xf32>
    %192 = arith.subf %188, %191 : vector<8x8xf32>
    %193 = math.exp %192 : vector<8x8xf32>
    %cst_180 = arith.constant dense<0.000000e+00> : vector<8xf32>
    %194 = vector.multi_reduction <add>, %193, %cst_180 [1] : vector<8x8xf32> to vector<8xf32>
    %195 = vector.shape_cast %194 : vector<8xf32> to vector<8x1xf32>
    %196 = vector.broadcast %195 : vector<8x1xf32> to vector<8x8xf32>
    %197 = arith.divf %193, %196 : vector<8x8xf32>
    %cst_181 = arith.constant dense<0.000000e+00> : vector<8x8xf32>
    %198 = tpu.matmul %197, %185, %cst_181 {dimension_numbers = #tpu.dot_dimension_numbers<[1], [0], [0], [1], [0, 0, 1, 1], [], []>} : vector<8x8xf32>, vector<8x8xf32>, vector<8x8xf32> -> vector<8x8xf32>
    %199 = vector.extract_strided_slice %164 {offsets = [0, 16], sizes = [8, 8], strides = [1, 1]} : vector<8x32xf32> to vector<8x8xf32>
    %200 = vector.extract_strided_slice %165 {offsets = [0, 16], sizes = [8, 8], strides = [1, 1]} : vector<8x32xf32> to vector<8x8xf32>
    %201 = vector.extract_strided_slice %166 {offsets = [0, 16], sizes = [8, 8], strides = [1, 1]} : vector<8x32xf32> to vector<8x8xf32>
    %cst_182 = arith.constant dense<0.000000e+00> : vector<8x8xf32>
    %202 = tpu.matmul %199, %200, %cst_182 {dimension_numbers = #tpu.dot_dimension_numbers<[1], [1], [0], [0], [0, 0, 1, 0], [], []>} : vector<8x8xf32>, vector<8x8xf32>, vector<8x8xf32> -> vector<8x8xf32>
    %cst_183 = arith.constant 0.353553385 : f32
    %203 = vector.broadcast %cst_183 : f32 to vector<8x8xf32>
    %204 = arith.mulf %202, %203 : vector<8x8xf32>
    %cst_184 = arith.constant dense<0xFF800000> : vector<8xf32>
    %205 = vector.multi_reduction <maximumf>, %204, %cst_184 [1] : vector<8x8xf32> to vector<8xf32>
    %206 = vector.shape_cast %205 : vector<8xf32> to vector<8x1xf32>
    %207 = vector.broadcast %206 : vector<8x1xf32> to vector<8x8xf32>
    %208 = arith.subf %204, %207 : vector<8x8xf32>
    %209 = math.exp %208 : vector<8x8xf32>
    %cst_185 = arith.constant dense<0.000000e+00> : vector<8xf32>
    %210 = vector.multi_reduction <add>, %209, %cst_185 [1] : vector<8x8xf32> to vector<8xf32>
    %211 = vector.shape_cast %210 : vector<8xf32> to vector<8x1xf32>
    %212 = vector.broadcast %211 : vector<8x1xf32> to vector<8x8xf32>
    %213 = arith.divf %209, %212 : vector<8x8xf32>
    %cst_186 = arith.constant dense<0.000000e+00> : vector<8x8xf32>
    %214 = tpu.matmul %213, %201, %cst_186 {dimension_numbers = #tpu.dot_dimension_numbers<[1], [0], [0], [1], [0, 0, 1, 1], [], []>} : vector<8x8xf32>, vector<8x8xf32>, vector<8x8xf32> -> vector<8x8xf32>
    %215 = vector.extract_strided_slice %164 {offsets = [0, 24], sizes = [8, 8], strides = [1, 1]} : vector<8x32xf32> to vector<8x8xf32>
    %216 = vector.extract_strided_slice %165 {offsets = [0, 24], sizes = [8, 8], strides = [1, 1]} : vector<8x32xf32> to vector<8x8xf32>
    %217 = vector.extract_strided_slice %166 {offsets = [0, 24], sizes = [8, 8], strides = [1, 1]} : vector<8x32xf32> to vector<8x8xf32>
    %cst_187 = arith.constant dense<0.000000e+00> : vector<8x8xf32>
    %218 = tpu.matmul %215, %216, %cst_187 {dimension_numbers = #tpu.dot_dimension_numbers<[1], [1], [0], [0], [0, 0, 1, 0], [], []>} : vector<8x8xf32>, vector<8x8xf32>, vector<8x8xf32> -> vector<8x8xf32>
    %cst_188 = arith.constant 0.353553385 : f32
    %219 = vector.broadcast %cst_188 : f32 to vector<8x8xf32>
    %220 = arith.mulf %218, %219 : vector<8x8xf32>
    %cst_189 = arith.constant dense<0xFF800000> : vector<8xf32>
    %221 = vector.multi_reduction <maximumf>, %220, %cst_189 [1] : vector<8x8xf32> to vector<8xf32>
    %222 = vector.shape_cast %221 : vector<8xf32> to vector<8x1xf32>
    %223 = vector.broadcast %222 : vector<8x1xf32> to vector<8x8xf32>
    %224 = arith.subf %220, %223 : vector<8x8xf32>
    %225 = math.exp %224 : vector<8x8xf32>
    %cst_190 = arith.constant dense<0.000000e+00> : vector<8xf32>
    %226 = vector.multi_reduction <add>, %225, %cst_190 [1] : vector<8x8xf32> to vector<8xf32>
    %227 = vector.shape_cast %226 : vector<8xf32> to vector<8x1xf32>
    %228 = vector.broadcast %227 : vector<8x1xf32> to vector<8x8xf32>
    %229 = arith.divf %225, %228 : vector<8x8xf32>
    %cst_191 = arith.constant dense<0.000000e+00> : vector<8x8xf32>
    %230 = tpu.matmul %229, %217, %cst_191 {dimension_numbers = #tpu.dot_dimension_numbers<[1], [0], [0], [1], [0, 0, 1, 1], [], []>} : vector<8x8xf32>, vector<8x8xf32>, vector<8x8xf32> -> vector<8x8xf32>
    %231 = tpu.concatenate %182, %198, %214, %230 in 1 : vector<8x8xf32>, vector<8x8xf32>, vector<8x8xf32>, vector<8x8xf32> -> vector<8x32xf32>
    %cst_192 = arith.constant dense<0.000000e+00> : vector<8x32xf32>
    %232 = tpu.matmul %231, %2, %cst_192 {dimension_numbers = #tpu.dot_dimension_numbers<[1], [0], [0], [1], [0, 0, 1, 1], [], []>} : vector<8x32xf32>, vector<32x32xf32>, vector<8x32xf32> -> vector<8x32xf32>
    %233 = arith.addf %138, %232 : vector<8x32xf32>
    %234 = vector.broadcast %0 : vector<1x32xf32> to vector<8x32xf32>
    %235 = arith.addf %233, %234 : vector<8x32xf32>
    %cst_193 = arith.constant dense<0.000000e+00> : vector<8xf32>
    %236 = vector.multi_reduction <add>, %235, %cst_193 [1] : vector<8x32xf32> to vector<8xf32>
    %237 = vector.shape_cast %236 : vector<8xf32> to vector<8x1xf32>
    %cst_194 = arith.constant 3.200000e+01 : f32
    %238 = vector.broadcast %cst_194 : f32 to vector<8x1xf32>
    %239 = arith.divf %237, %238 : vector<8x1xf32>
    %240 = vector.broadcast %239 : vector<8x1xf32> to vector<8x32xf32>
    %241 = arith.subf %235, %240 : vector<8x32xf32>
    %242 = arith.mulf %241, %241 : vector<8x32xf32>
    %cst_195 = arith.constant dense<0.000000e+00> : vector<8xf32>
    %243 = vector.multi_reduction <add>, %242, %cst_195 [1] : vector<8x32xf32> to vector<8xf32>
    %244 = vector.shape_cast %243 : vector<8xf32> to vector<8x1xf32>
    %cst_196 = arith.constant 3.200000e+01 : f32
    %245 = vector.broadcast %cst_196 : f32 to vector<8x1xf32>
    %246 = arith.divf %244, %245 : vector<8x1xf32>
    %247 = vector.broadcast %239 : vector<8x1xf32> to vector<8x32xf32>
    %248 = arith.subf %235, %247 : vector<8x32xf32>
    %cst_197 = arith.constant 9.99999974E-6 : f32
    %249 = vector.broadcast %cst_197 : f32 to vector<8x1xf32>
    %250 = arith.addf %246, %249 : vector<8x1xf32>
    %251 = math.rsqrt %250 : vector<8x1xf32>
    %252 = vector.broadcast %251 : vector<8x1xf32> to vector<8x32xf32>
    %253 = arith.mulf %248, %252 : vector<8x32xf32>
    %254 = vector.broadcast %11 : vector<1x32xf32> to vector<8x32xf32>
    %255 = arith.mulf %253, %254 : vector<8x32xf32>
    %256 = vector.broadcast %10 : vector<1x32xf32> to vector<8x32xf32>
    %257 = arith.addf %255, %256 : vector<8x32xf32>
    %cst_198 = arith.constant dense<0.000000e+00> : vector<8x64xf32>
    %258 = tpu.matmul %257, %6, %cst_198 {dimension_numbers = #tpu.dot_dimension_numbers<[1], [0], [0], [1], [0, 0, 1, 1], [], []>} : vector<8x32xf32>, vector<32x64xf32>, vector<8x64xf32> -> vector<8x64xf32>
    %259 = vector.broadcast %4 : vector<1x64xf32> to vector<8x64xf32>
    %260 = arith.addf %258, %259 : vector<8x64xf32>
    %cst_199 = arith.constant 5.000000e-01 : f32
    %261 = vector.broadcast %cst_199 : f32 to vector<8x64xf32>
    %262 = arith.mulf %261, %260 : vector<8x64xf32>
    %cst_200 = arith.constant 0.707106769 : f32
    %263 = vector.broadcast %cst_200 : f32 to vector<8x64xf32>
    %264 = arith.mulf %260, %263 : vector<8x64xf32>
    %cst_201 = arith.constant 0.000000e+00 : f32
    %265 = vector.broadcast %cst_201 : f32 to vector<8x64xf32>
    %266 = arith.cmpf oge, %264, %265 : vector<8x64xf32>
    %cst_202 = arith.constant 1.000000e+00 : f32
    %cst_203 = arith.constant -1.000000e+00 : f32
    %267 = vector.broadcast %cst_202 : f32 to vector<8x64xf32>
    %268 = vector.broadcast %cst_203 : f32 to vector<8x64xf32>
    %269 = arith.select %266, %267, %268 : vector<8x64xi1>, vector<8x64xf32>
    %270 = math.absf %264 : vector<8x64xf32>
    %cst_204 = arith.constant 0.327591091 : f32
    %271 = vector.broadcast %cst_204 : f32 to vector<8x64xf32>
    %272 = arith.mulf %271, %270 : vector<8x64xf32>
    %cst_205 = arith.constant 1.000000e+00 : f32
    %273 = vector.broadcast %cst_205 : f32 to vector<8x64xf32>
    %274 = arith.addf %273, %272 : vector<8x64xf32>
    %cst_206 = arith.constant 1.000000e+00 : f32
    %275 = vector.broadcast %cst_206 : f32 to vector<8x64xf32>
    %276 = arith.divf %275, %274 : vector<8x64xf32>
    %cst_207 = arith.constant 1.06140542 : f32
    %277 = vector.broadcast %cst_207 : f32 to vector<8x64xf32>
    %278 = arith.mulf %277, %276 : vector<8x64xf32>
    %cst_208 = arith.constant -1.45315206 : f32
    %279 = vector.broadcast %cst_208 : f32 to vector<8x64xf32>
    %280 = arith.addf %278, %279 : vector<8x64xf32>
    %281 = arith.mulf %280, %276 : vector<8x64xf32>
    %cst_209 = arith.constant 1.42141378 : f32
    %282 = vector.broadcast %cst_209 : f32 to vector<8x64xf32>
    %283 = arith.addf %281, %282 : vector<8x64xf32>
    %284 = arith.mulf %283, %276 : vector<8x64xf32>
    %cst_210 = arith.constant -0.284496725 : f32
    %285 = vector.broadcast %cst_210 : f32 to vector<8x64xf32>
    %286 = arith.addf %284, %285 : vector<8x64xf32>
    %287 = arith.mulf %286, %276 : vector<8x64xf32>
    %cst_211 = arith.constant 0.254829586 : f32
    %288 = vector.broadcast %cst_211 : f32 to vector<8x64xf32>
    %289 = arith.addf %287, %288 : vector<8x64xf32>
    %290 = arith.mulf %289, %276 : vector<8x64xf32>
    %cst_212 = arith.constant 0.000000e+00 : f32
    %291 = vector.broadcast %cst_212 : f32 to vector<8x64xf32>
    %292 = arith.subf %291, %270 : vector<8x64xf32>
    %293 = arith.mulf %292, %270 : vector<8x64xf32>
    %294 = math.exp %293 : vector<8x64xf32>
    %295 = arith.mulf %290, %294 : vector<8x64xf32>
    %cst_213 = arith.constant 1.000000e+00 : f32
    %296 = vector.broadcast %cst_213 : f32 to vector<8x64xf32>
    %297 = arith.subf %296, %295 : vector<8x64xf32>
    %298 = arith.mulf %269, %297 : vector<8x64xf32>
    %cst_214 = arith.constant 1.000000e+00 : f32
    %299 = vector.broadcast %cst_214 : f32 to vector<8x64xf32>
    %300 = arith.addf %299, %298 : vector<8x64xf32>
    %301 = arith.mulf %262, %300 : vector<8x64xf32>
    %cst_215 = arith.constant dense<0.000000e+00> : vector<8x32xf32>
    %302 = tpu.matmul %301, %7, %cst_215 {dimension_numbers = #tpu.dot_dimension_numbers<[1], [0], [0], [1], [0, 0, 1, 1], [], []>} : vector<8x64xf32>, vector<64x32xf32>, vector<8x32xf32> -> vector<8x32xf32>
    %303 = arith.addf %235, %302 : vector<8x32xf32>
    %304 = vector.broadcast %5 : vector<1x32xf32> to vector<8x32xf32>
    %305 = arith.addf %303, %304 : vector<8x32xf32>
    %c0_216 = arith.constant 0 : index
    %c0_217 = arith.constant 0 : index
    %c0_218 = arith.constant 0 : index
    %306 = vector.load %arg2[%c0_216, %c0_217, %c0_218] : memref<1x8x32xf32, #tpu.memory_space<vmem>>, vector<1x8x32xf32>
    %307 = vector.shape_cast %306 : vector<1x8x32xf32> to vector<8x32xf32>
    %c0_219 = arith.constant 0 : index
    %c0_220 = arith.constant 0 : index
    %c0_221 = arith.constant 0 : index
    %308 = vector.load %arg3[%c0_219, %c0_220, %c0_221] : memref<1x1x8xf32, #tpu.memory_space<vmem>>, vector<1x1x8xf32>
    %309 = vector.shape_cast %308 : vector<1x1x8xf32> to vector<1x8xf32>
    %cst_222 = arith.constant dense<0.000000e+00> : vector<8xf32>
    %310 = vector.multi_reduction <add>, %307, %cst_222 [1] : vector<8x32xf32> to vector<8xf32>
    %311 = vector.shape_cast %310 : vector<8xf32> to vector<8x1xf32>
    %cst_223 = arith.constant 3.200000e+01 : f32
    %312 = vector.broadcast %cst_223 : f32 to vector<8x1xf32>
    %313 = arith.divf %311, %312 : vector<8x1xf32>
    %314 = vector.broadcast %313 : vector<8x1xf32> to vector<8x32xf32>
    %315 = arith.subf %307, %314 : vector<8x32xf32>
    %316 = arith.mulf %315, %315 : vector<8x32xf32>
    %cst_224 = arith.constant dense<0.000000e+00> : vector<8xf32>
    %317 = vector.multi_reduction <add>, %316, %cst_224 [1] : vector<8x32xf32> to vector<8xf32>
    %318 = vector.shape_cast %317 : vector<8xf32> to vector<8x1xf32>
    %cst_225 = arith.constant 3.200000e+01 : f32
    %319 = vector.broadcast %cst_225 : f32 to vector<8x1xf32>
    %320 = arith.divf %318, %319 : vector<8x1xf32>
    %321 = vector.broadcast %313 : vector<8x1xf32> to vector<8x32xf32>
    %322 = arith.subf %307, %321 : vector<8x32xf32>
    %cst_226 = arith.constant 9.99999974E-6 : f32
    %323 = vector.broadcast %cst_226 : f32 to vector<8x1xf32>
    %324 = arith.addf %320, %323 : vector<8x1xf32>
    %325 = math.rsqrt %324 : vector<8x1xf32>
    %326 = vector.broadcast %325 : vector<8x1xf32> to vector<8x32xf32>
    %327 = arith.mulf %322, %326 : vector<8x32xf32>
    %328 = vector.broadcast %69 : vector<1x32xf32> to vector<8x32xf32>
    %329 = arith.mulf %327, %328 : vector<8x32xf32>
    %330 = vector.broadcast %68 : vector<1x32xf32> to vector<8x32xf32>
    %331 = arith.addf %329, %330 : vector<8x32xf32>
    %cst_227 = arith.constant dense<0.000000e+00> : vector<8x96xf32>
    %332 = tpu.matmul %331, %63, %cst_227 {dimension_numbers = #tpu.dot_dimension_numbers<[1], [0], [0], [1], [0, 0, 1, 1], [], []>} : vector<8x32xf32>, vector<32x96xf32>, vector<8x96xf32> -> vector<8x96xf32>
    %333 = vector.broadcast %61 : vector<1x96xf32> to vector<8x96xf32>
    %334 = arith.addf %332, %333 : vector<8x96xf32>
    %335 = vector.extract_strided_slice %334 {offsets = [0, 0], sizes = [8, 32], strides = [1, 1]} : vector<8x96xf32> to vector<8x32xf32>
    %336 = vector.extract_strided_slice %334 {offsets = [0, 32], sizes = [8, 32], strides = [1, 1]} : vector<8x96xf32> to vector<8x32xf32>
    %337 = vector.extract_strided_slice %334 {offsets = [0, 64], sizes = [8, 32], strides = [1, 1]} : vector<8x96xf32> to vector<8x32xf32>
    %338 = vector.extract_strided_slice %335 {offsets = [0, 0], sizes = [8, 8], strides = [1, 1]} : vector<8x32xf32> to vector<8x8xf32>
    %339 = vector.extract_strided_slice %336 {offsets = [0, 0], sizes = [8, 8], strides = [1, 1]} : vector<8x32xf32> to vector<8x8xf32>
    %340 = vector.extract_strided_slice %337 {offsets = [0, 0], sizes = [8, 8], strides = [1, 1]} : vector<8x32xf32> to vector<8x8xf32>
    %cst_228 = arith.constant dense<0.000000e+00> : vector<8x8xf32>
    %341 = tpu.matmul %338, %339, %cst_228 {dimension_numbers = #tpu.dot_dimension_numbers<[1], [1], [0], [0], [0, 0, 1, 0], [], []>} : vector<8x8xf32>, vector<8x8xf32>, vector<8x8xf32> -> vector<8x8xf32>
    %cst_229 = arith.constant 0.353553385 : f32
    %342 = vector.broadcast %cst_229 : f32 to vector<8x8xf32>
    %343 = arith.mulf %341, %342 : vector<8x8xf32>
    %344 = vector.broadcast %309 : vector<1x8xf32> to vector<8x8xf32>
    %345 = arith.addf %343, %344 : vector<8x8xf32>
    %cst_230 = arith.constant dense<0xFF800000> : vector<8xf32>
    %346 = vector.multi_reduction <maximumf>, %345, %cst_230 [1] : vector<8x8xf32> to vector<8xf32>
    %347 = vector.shape_cast %346 : vector<8xf32> to vector<8x1xf32>
    %348 = vector.broadcast %347 : vector<8x1xf32> to vector<8x8xf32>
    %349 = arith.subf %345, %348 : vector<8x8xf32>
    %350 = math.exp %349 : vector<8x8xf32>
    %cst_231 = arith.constant dense<0.000000e+00> : vector<8xf32>
    %351 = vector.multi_reduction <add>, %350, %cst_231 [1] : vector<8x8xf32> to vector<8xf32>
    %352 = vector.shape_cast %351 : vector<8xf32> to vector<8x1xf32>
    %353 = vector.broadcast %352 : vector<8x1xf32> to vector<8x8xf32>
    %354 = arith.divf %350, %353 : vector<8x8xf32>
    %cst_232 = arith.constant dense<0.000000e+00> : vector<8x8xf32>
    %355 = tpu.matmul %354, %340, %cst_232 {dimension_numbers = #tpu.dot_dimension_numbers<[1], [0], [0], [1], [0, 0, 1, 1], [], []>} : vector<8x8xf32>, vector<8x8xf32>, vector<8x8xf32> -> vector<8x8xf32>
    %356 = vector.extract_strided_slice %335 {offsets = [0, 8], sizes = [8, 8], strides = [1, 1]} : vector<8x32xf32> to vector<8x8xf32>
    %357 = vector.extract_strided_slice %336 {offsets = [0, 8], sizes = [8, 8], strides = [1, 1]} : vector<8x32xf32> to vector<8x8xf32>
    %358 = vector.extract_strided_slice %337 {offsets = [0, 8], sizes = [8, 8], strides = [1, 1]} : vector<8x32xf32> to vector<8x8xf32>
    %cst_233 = arith.constant dense<0.000000e+00> : vector<8x8xf32>
    %359 = tpu.matmul %356, %357, %cst_233 {dimension_numbers = #tpu.dot_dimension_numbers<[1], [1], [0], [0], [0, 0, 1, 0], [], []>} : vector<8x8xf32>, vector<8x8xf32>, vector<8x8xf32> -> vector<8x8xf32>
    %cst_234 = arith.constant 0.353553385 : f32
    %360 = vector.broadcast %cst_234 : f32 to vector<8x8xf32>
    %361 = arith.mulf %359, %360 : vector<8x8xf32>
    %362 = vector.broadcast %309 : vector<1x8xf32> to vector<8x8xf32>
    %363 = arith.addf %361, %362 : vector<8x8xf32>
    %cst_235 = arith.constant dense<0xFF800000> : vector<8xf32>
    %364 = vector.multi_reduction <maximumf>, %363, %cst_235 [1] : vector<8x8xf32> to vector<8xf32>
    %365 = vector.shape_cast %364 : vector<8xf32> to vector<8x1xf32>
    %366 = vector.broadcast %365 : vector<8x1xf32> to vector<8x8xf32>
    %367 = arith.subf %363, %366 : vector<8x8xf32>
    %368 = math.exp %367 : vector<8x8xf32>
    %cst_236 = arith.constant dense<0.000000e+00> : vector<8xf32>
    %369 = vector.multi_reduction <add>, %368, %cst_236 [1] : vector<8x8xf32> to vector<8xf32>
    %370 = vector.shape_cast %369 : vector<8xf32> to vector<8x1xf32>
    %371 = vector.broadcast %370 : vector<8x1xf32> to vector<8x8xf32>
    %372 = arith.divf %368, %371 : vector<8x8xf32>
    %cst_237 = arith.constant dense<0.000000e+00> : vector<8x8xf32>
    %373 = tpu.matmul %372, %358, %cst_237 {dimension_numbers = #tpu.dot_dimension_numbers<[1], [0], [0], [1], [0, 0, 1, 1], [], []>} : vector<8x8xf32>, vector<8x8xf32>, vector<8x8xf32> -> vector<8x8xf32>
    %374 = vector.extract_strided_slice %335 {offsets = [0, 16], sizes = [8, 8], strides = [1, 1]} : vector<8x32xf32> to vector<8x8xf32>
    %375 = vector.extract_strided_slice %336 {offsets = [0, 16], sizes = [8, 8], strides = [1, 1]} : vector<8x32xf32> to vector<8x8xf32>
    %376 = vector.extract_strided_slice %337 {offsets = [0, 16], sizes = [8, 8], strides = [1, 1]} : vector<8x32xf32> to vector<8x8xf32>
    %cst_238 = arith.constant dense<0.000000e+00> : vector<8x8xf32>
    %377 = tpu.matmul %374, %375, %cst_238 {dimension_numbers = #tpu.dot_dimension_numbers<[1], [1], [0], [0], [0, 0, 1, 0], [], []>} : vector<8x8xf32>, vector<8x8xf32>, vector<8x8xf32> -> vector<8x8xf32>
    %cst_239 = arith.constant 0.353553385 : f32
    %378 = vector.broadcast %cst_239 : f32 to vector<8x8xf32>
    %379 = arith.mulf %377, %378 : vector<8x8xf32>
    %380 = vector.broadcast %309 : vector<1x8xf32> to vector<8x8xf32>
    %381 = arith.addf %379, %380 : vector<8x8xf32>
    %cst_240 = arith.constant dense<0xFF800000> : vector<8xf32>
    %382 = vector.multi_reduction <maximumf>, %381, %cst_240 [1] : vector<8x8xf32> to vector<8xf32>
    %383 = vector.shape_cast %382 : vector<8xf32> to vector<8x1xf32>
    %384 = vector.broadcast %383 : vector<8x1xf32> to vector<8x8xf32>
    %385 = arith.subf %381, %384 : vector<8x8xf32>
    %386 = math.exp %385 : vector<8x8xf32>
    %cst_241 = arith.constant dense<0.000000e+00> : vector<8xf32>
    %387 = vector.multi_reduction <add>, %386, %cst_241 [1] : vector<8x8xf32> to vector<8xf32>
    %388 = vector.shape_cast %387 : vector<8xf32> to vector<8x1xf32>
    %389 = vector.broadcast %388 : vector<8x1xf32> to vector<8x8xf32>
    %390 = arith.divf %386, %389 : vector<8x8xf32>
    %cst_242 = arith.constant dense<0.000000e+00> : vector<8x8xf32>
    %391 = tpu.matmul %390, %376, %cst_242 {dimension_numbers = #tpu.dot_dimension_numbers<[1], [0], [0], [1], [0, 0, 1, 1], [], []>} : vector<8x8xf32>, vector<8x8xf32>, vector<8x8xf32> -> vector<8x8xf32>
    %392 = vector.extract_strided_slice %335 {offsets = [0, 24], sizes = [8, 8], strides = [1, 1]} : vector<8x32xf32> to vector<8x8xf32>
    %393 = vector.extract_strided_slice %336 {offsets = [0, 24], sizes = [8, 8], strides = [1, 1]} : vector<8x32xf32> to vector<8x8xf32>
    %394 = vector.extract_strided_slice %337 {offsets = [0, 24], sizes = [8, 8], strides = [1, 1]} : vector<8x32xf32> to vector<8x8xf32>
    %cst_243 = arith.constant dense<0.000000e+00> : vector<8x8xf32>
    %395 = tpu.matmul %392, %393, %cst_243 {dimension_numbers = #tpu.dot_dimension_numbers<[1], [1], [0], [0], [0, 0, 1, 0], [], []>} : vector<8x8xf32>, vector<8x8xf32>, vector<8x8xf32> -> vector<8x8xf32>
    %cst_244 = arith.constant 0.353553385 : f32
    %396 = vector.broadcast %cst_244 : f32 to vector<8x8xf32>
    %397 = arith.mulf %395, %396 : vector<8x8xf32>
    %398 = vector.broadcast %309 : vector<1x8xf32> to vector<8x8xf32>
    %399 = arith.addf %397, %398 : vector<8x8xf32>
    %cst_245 = arith.constant dense<0xFF800000> : vector<8xf32>
    %400 = vector.multi_reduction <maximumf>, %399, %cst_245 [1] : vector<8x8xf32> to vector<8xf32>
    %401 = vector.shape_cast %400 : vector<8xf32> to vector<8x1xf32>
    %402 = vector.broadcast %401 : vector<8x1xf32> to vector<8x8xf32>
    %403 = arith.subf %399, %402 : vector<8x8xf32>
    %404 = math.exp %403 : vector<8x8xf32>
    %cst_246 = arith.constant dense<0.000000e+00> : vector<8xf32>
    %405 = vector.multi_reduction <add>, %404, %cst_246 [1] : vector<8x8xf32> to vector<8xf32>
    %406 = vector.shape_cast %405 : vector<8xf32> to vector<8x1xf32>
    %407 = vector.broadcast %406 : vector<8x1xf32> to vector<8x8xf32>
    %408 = arith.divf %404, %407 : vector<8x8xf32>
    %cst_247 = arith.constant dense<0.000000e+00> : vector<8x8xf32>
    %409 = tpu.matmul %408, %394, %cst_247 {dimension_numbers = #tpu.dot_dimension_numbers<[1], [0], [0], [1], [0, 0, 1, 1], [], []>} : vector<8x8xf32>, vector<8x8xf32>, vector<8x8xf32> -> vector<8x8xf32>
    %410 = tpu.concatenate %355, %373, %391, %409 in 1 : vector<8x8xf32>, vector<8x8xf32>, vector<8x8xf32>, vector<8x8xf32> -> vector<8x32xf32>
    %cst_248 = arith.constant dense<0.000000e+00> : vector<8x32xf32>
    %411 = tpu.matmul %410, %62, %cst_248 {dimension_numbers = #tpu.dot_dimension_numbers<[1], [0], [0], [1], [0, 0, 1, 1], [], []>} : vector<8x32xf32>, vector<32x32xf32>, vector<8x32xf32> -> vector<8x32xf32>
    %412 = arith.addf %307, %411 : vector<8x32xf32>
    %413 = vector.broadcast %60 : vector<1x32xf32> to vector<8x32xf32>
    %414 = arith.addf %412, %413 : vector<8x32xf32>
    %cst_249 = arith.constant dense<0.000000e+00> : vector<8xf32>
    %415 = vector.multi_reduction <add>, %414, %cst_249 [1] : vector<8x32xf32> to vector<8xf32>
    %416 = vector.shape_cast %415 : vector<8xf32> to vector<8x1xf32>
    %cst_250 = arith.constant 3.200000e+01 : f32
    %417 = vector.broadcast %cst_250 : f32 to vector<8x1xf32>
    %418 = arith.divf %416, %417 : vector<8x1xf32>
    %419 = vector.broadcast %418 : vector<8x1xf32> to vector<8x32xf32>
    %420 = arith.subf %414, %419 : vector<8x32xf32>
    %421 = arith.mulf %420, %420 : vector<8x32xf32>
    %cst_251 = arith.constant dense<0.000000e+00> : vector<8xf32>
    %422 = vector.multi_reduction <add>, %421, %cst_251 [1] : vector<8x32xf32> to vector<8xf32>
    %423 = vector.shape_cast %422 : vector<8xf32> to vector<8x1xf32>
    %cst_252 = arith.constant 3.200000e+01 : f32
    %424 = vector.broadcast %cst_252 : f32 to vector<8x1xf32>
    %425 = arith.divf %423, %424 : vector<8x1xf32>
    %426 = vector.broadcast %418 : vector<8x1xf32> to vector<8x32xf32>
    %427 = arith.subf %414, %426 : vector<8x32xf32>
    %cst_253 = arith.constant 9.99999974E-6 : f32
    %428 = vector.broadcast %cst_253 : f32 to vector<8x1xf32>
    %429 = arith.addf %425, %428 : vector<8x1xf32>
    %430 = math.rsqrt %429 : vector<8x1xf32>
    %431 = vector.broadcast %430 : vector<8x1xf32> to vector<8x32xf32>
    %432 = arith.mulf %427, %431 : vector<8x32xf32>
    %433 = vector.broadcast %71 : vector<1x32xf32> to vector<8x32xf32>
    %434 = arith.mulf %432, %433 : vector<8x32xf32>
    %435 = vector.broadcast %70 : vector<1x32xf32> to vector<8x32xf32>
    %436 = arith.addf %434, %435 : vector<8x32xf32>
    %cst_254 = arith.constant dense<0.000000e+00> : vector<8x64xf32>
    %437 = tpu.matmul %436, %66, %cst_254 {dimension_numbers = #tpu.dot_dimension_numbers<[1], [0], [0], [1], [0, 0, 1, 1], [], []>} : vector<8x32xf32>, vector<32x64xf32>, vector<8x64xf32> -> vector<8x64xf32>
    %438 = vector.broadcast %64 : vector<1x64xf32> to vector<8x64xf32>
    %439 = arith.addf %437, %438 : vector<8x64xf32>
    %cst_255 = arith.constant 5.000000e-01 : f32
    %440 = vector.broadcast %cst_255 : f32 to vector<8x64xf32>
    %441 = arith.mulf %440, %439 : vector<8x64xf32>
    %cst_256 = arith.constant 0.707106769 : f32
    %442 = vector.broadcast %cst_256 : f32 to vector<8x64xf32>
    %443 = arith.mulf %439, %442 : vector<8x64xf32>
    %cst_257 = arith.constant 0.000000e+00 : f32
    %444 = vector.broadcast %cst_257 : f32 to vector<8x64xf32>
    %445 = arith.cmpf oge, %443, %444 : vector<8x64xf32>
    %cst_258 = arith.constant 1.000000e+00 : f32
    %cst_259 = arith.constant -1.000000e+00 : f32
    %446 = vector.broadcast %cst_258 : f32 to vector<8x64xf32>
    %447 = vector.broadcast %cst_259 : f32 to vector<8x64xf32>
    %448 = arith.select %445, %446, %447 : vector<8x64xi1>, vector<8x64xf32>
    %449 = math.absf %443 : vector<8x64xf32>
    %cst_260 = arith.constant 0.327591091 : f32
    %450 = vector.broadcast %cst_260 : f32 to vector<8x64xf32>
    %451 = arith.mulf %450, %449 : vector<8x64xf32>
    %cst_261 = arith.constant 1.000000e+00 : f32
    %452 = vector.broadcast %cst_261 : f32 to vector<8x64xf32>
    %453 = arith.addf %452, %451 : vector<8x64xf32>
    %cst_262 = arith.constant 1.000000e+00 : f32
    %454 = vector.broadcast %cst_262 : f32 to vector<8x64xf32>
    %455 = arith.divf %454, %453 : vector<8x64xf32>
    %cst_263 = arith.constant 1.06140542 : f32
    %456 = vector.broadcast %cst_263 : f32 to vector<8x64xf32>
    %457 = arith.mulf %456, %455 : vector<8x64xf32>
    %cst_264 = arith.constant -1.45315206 : f32
    %458 = vector.broadcast %cst_264 : f32 to vector<8x64xf32>
    %459 = arith.addf %457, %458 : vector<8x64xf32>
    %460 = arith.mulf %459, %455 : vector<8x64xf32>
    %cst_265 = arith.constant 1.42141378 : f32
    %461 = vector.broadcast %cst_265 : f32 to vector<8x64xf32>
    %462 = arith.addf %460, %461 : vector<8x64xf32>
    %463 = arith.mulf %462, %455 : vector<8x64xf32>
    %cst_266 = arith.constant -0.284496725 : f32
    %464 = vector.broadcast %cst_266 : f32 to vector<8x64xf32>
    %465 = arith.addf %463, %464 : vector<8x64xf32>
    %466 = arith.mulf %465, %455 : vector<8x64xf32>
    %cst_267 = arith.constant 0.254829586 : f32
    %467 = vector.broadcast %cst_267 : f32 to vector<8x64xf32>
    %468 = arith.addf %466, %467 : vector<8x64xf32>
    %469 = arith.mulf %468, %455 : vector<8x64xf32>
    %cst_268 = arith.constant 0.000000e+00 : f32
    %470 = vector.broadcast %cst_268 : f32 to vector<8x64xf32>
    %471 = arith.subf %470, %449 : vector<8x64xf32>
    %472 = arith.mulf %471, %449 : vector<8x64xf32>
    %473 = math.exp %472 : vector<8x64xf32>
    %474 = arith.mulf %469, %473 : vector<8x64xf32>
    %cst_269 = arith.constant 1.000000e+00 : f32
    %475 = vector.broadcast %cst_269 : f32 to vector<8x64xf32>
    %476 = arith.subf %475, %474 : vector<8x64xf32>
    %477 = arith.mulf %448, %476 : vector<8x64xf32>
    %cst_270 = arith.constant 1.000000e+00 : f32
    %478 = vector.broadcast %cst_270 : f32 to vector<8x64xf32>
    %479 = arith.addf %478, %477 : vector<8x64xf32>
    %480 = arith.mulf %441, %479 : vector<8x64xf32>
    %cst_271 = arith.constant dense<0.000000e+00> : vector<8x32xf32>
    %481 = tpu.matmul %480, %67, %cst_271 {dimension_numbers = #tpu.dot_dimension_numbers<[1], [0], [0], [1], [0, 0, 1, 1], [], []>} : vector<8x64xf32>, vector<64x32xf32>, vector<8x32xf32> -> vector<8x32xf32>
    %482 = arith.addf %414, %481 : vector<8x32xf32>
    %483 = vector.broadcast %65 : vector<1x32xf32> to vector<8x32xf32>
    %484 = arith.addf %482, %483 : vector<8x32xf32>
    %485 = tpu.concatenate %305, %484 in 0 : vector<8x32xf32>, vector<8x32xf32> -> vector<16x32xf32>
    %c0_272 = arith.constant 0 : index
    %c0_273 = arith.constant 0 : index
    %c0_274 = arith.constant 0 : index
    %486 = vector.load %arg4[%c0_272, %c0_273, %c0_274] : memref<1x1x16xf32, #tpu.memory_space<vmem>>, vector<1x1x16xf32>
    %487 = vector.shape_cast %486 : vector<1x1x16xf32> to vector<1x16xf32>
    %cst_275 = arith.constant dense<0.000000e+00> : vector<16xf32>
    %488 = vector.multi_reduction <add>, %485, %cst_275 [1] : vector<16x32xf32> to vector<16xf32>
    %489 = vector.shape_cast %488 : vector<16xf32> to vector<16x1xf32>
    %cst_276 = arith.constant 3.200000e+01 : f32
    %490 = vector.broadcast %cst_276 : f32 to vector<16x1xf32>
    %491 = arith.divf %489, %490 : vector<16x1xf32>
    %492 = vector.broadcast %491 : vector<16x1xf32> to vector<16x32xf32>
    %493 = arith.subf %485, %492 : vector<16x32xf32>
    %494 = arith.mulf %493, %493 : vector<16x32xf32>
    %cst_277 = arith.constant dense<0.000000e+00> : vector<16xf32>
    %495 = vector.multi_reduction <add>, %494, %cst_277 [1] : vector<16x32xf32> to vector<16xf32>
    %496 = vector.shape_cast %495 : vector<16xf32> to vector<16x1xf32>
    %cst_278 = arith.constant 3.200000e+01 : f32
    %497 = vector.broadcast %cst_278 : f32 to vector<16x1xf32>
    %498 = arith.divf %496, %497 : vector<16x1xf32>
    %499 = vector.broadcast %491 : vector<16x1xf32> to vector<16x32xf32>
    %500 = arith.subf %485, %499 : vector<16x32xf32>
    %cst_279 = arith.constant 9.99999974E-6 : f32
    %501 = vector.broadcast %cst_279 : f32 to vector<16x1xf32>
    %502 = arith.addf %498, %501 : vector<16x1xf32>
    %503 = math.rsqrt %502 : vector<16x1xf32>
    %504 = vector.broadcast %503 : vector<16x1xf32> to vector<16x32xf32>
    %505 = arith.mulf %500, %504 : vector<16x32xf32>
    %506 = vector.broadcast %57 : vector<1x32xf32> to vector<16x32xf32>
    %507 = arith.mulf %505, %506 : vector<16x32xf32>
    %508 = vector.broadcast %56 : vector<1x32xf32> to vector<16x32xf32>
    %509 = arith.addf %507, %508 : vector<16x32xf32>
    %cst_280 = arith.constant dense<0.000000e+00> : vector<16x96xf32>
    %510 = tpu.matmul %509, %51, %cst_280 {dimension_numbers = #tpu.dot_dimension_numbers<[1], [0], [0], [1], [0, 0, 1, 1], [], []>} : vector<16x32xf32>, vector<32x96xf32>, vector<16x96xf32> -> vector<16x96xf32>
    %511 = vector.broadcast %49 : vector<1x96xf32> to vector<16x96xf32>
    %512 = arith.addf %510, %511 : vector<16x96xf32>
    %513 = vector.extract_strided_slice %512 {offsets = [0, 0], sizes = [16, 32], strides = [1, 1]} : vector<16x96xf32> to vector<16x32xf32>
    %514 = vector.extract_strided_slice %512 {offsets = [0, 32], sizes = [16, 32], strides = [1, 1]} : vector<16x96xf32> to vector<16x32xf32>
    %515 = vector.extract_strided_slice %512 {offsets = [0, 64], sizes = [16, 32], strides = [1, 1]} : vector<16x96xf32> to vector<16x32xf32>
    %516 = vector.extract_strided_slice %513 {offsets = [0, 0], sizes = [16, 8], strides = [1, 1]} : vector<16x32xf32> to vector<16x8xf32>
    %517 = vector.extract_strided_slice %514 {offsets = [0, 0], sizes = [16, 8], strides = [1, 1]} : vector<16x32xf32> to vector<16x8xf32>
    %518 = vector.extract_strided_slice %515 {offsets = [0, 0], sizes = [16, 8], strides = [1, 1]} : vector<16x32xf32> to vector<16x8xf32>
    %cst_281 = arith.constant dense<0.000000e+00> : vector<16x16xf32>
    %519 = tpu.matmul %516, %517, %cst_281 {dimension_numbers = #tpu.dot_dimension_numbers<[1], [1], [0], [0], [0, 0, 1, 0], [], []>} : vector<16x8xf32>, vector<16x8xf32>, vector<16x16xf32> -> vector<16x16xf32>
    %cst_282 = arith.constant 0.353553385 : f32
    %520 = vector.broadcast %cst_282 : f32 to vector<16x16xf32>
    %521 = arith.mulf %519, %520 : vector<16x16xf32>
    %522 = vector.broadcast %487 : vector<1x16xf32> to vector<16x16xf32>
    %523 = arith.addf %521, %522 : vector<16x16xf32>
    %cst_283 = arith.constant dense<0xFF800000> : vector<16xf32>
    %524 = vector.multi_reduction <maximumf>, %523, %cst_283 [1] : vector<16x16xf32> to vector<16xf32>
    %525 = vector.shape_cast %524 : vector<16xf32> to vector<16x1xf32>
    %526 = vector.broadcast %525 : vector<16x1xf32> to vector<16x16xf32>
    %527 = arith.subf %523, %526 : vector<16x16xf32>
    %528 = math.exp %527 : vector<16x16xf32>
    %cst_284 = arith.constant dense<0.000000e+00> : vector<16xf32>
    %529 = vector.multi_reduction <add>, %528, %cst_284 [1] : vector<16x16xf32> to vector<16xf32>
    %530 = vector.shape_cast %529 : vector<16xf32> to vector<16x1xf32>
    %531 = vector.broadcast %530 : vector<16x1xf32> to vector<16x16xf32>
    %532 = arith.divf %528, %531 : vector<16x16xf32>
    %cst_285 = arith.constant dense<0.000000e+00> : vector<16x8xf32>
    %533 = tpu.matmul %532, %518, %cst_285 {dimension_numbers = #tpu.dot_dimension_numbers<[1], [0], [0], [1], [0, 0, 1, 1], [], []>} : vector<16x16xf32>, vector<16x8xf32>, vector<16x8xf32> -> vector<16x8xf32>
    %534 = vector.extract_strided_slice %513 {offsets = [0, 8], sizes = [16, 8], strides = [1, 1]} : vector<16x32xf32> to vector<16x8xf32>
    %535 = vector.extract_strided_slice %514 {offsets = [0, 8], sizes = [16, 8], strides = [1, 1]} : vector<16x32xf32> to vector<16x8xf32>
    %536 = vector.extract_strided_slice %515 {offsets = [0, 8], sizes = [16, 8], strides = [1, 1]} : vector<16x32xf32> to vector<16x8xf32>
    %cst_286 = arith.constant dense<0.000000e+00> : vector<16x16xf32>
    %537 = tpu.matmul %534, %535, %cst_286 {dimension_numbers = #tpu.dot_dimension_numbers<[1], [1], [0], [0], [0, 0, 1, 0], [], []>} : vector<16x8xf32>, vector<16x8xf32>, vector<16x16xf32> -> vector<16x16xf32>
    %cst_287 = arith.constant 0.353553385 : f32
    %538 = vector.broadcast %cst_287 : f32 to vector<16x16xf32>
    %539 = arith.mulf %537, %538 : vector<16x16xf32>
    %540 = vector.broadcast %487 : vector<1x16xf32> to vector<16x16xf32>
    %541 = arith.addf %539, %540 : vector<16x16xf32>
    %cst_288 = arith.constant dense<0xFF800000> : vector<16xf32>
    %542 = vector.multi_reduction <maximumf>, %541, %cst_288 [1] : vector<16x16xf32> to vector<16xf32>
    %543 = vector.shape_cast %542 : vector<16xf32> to vector<16x1xf32>
    %544 = vector.broadcast %543 : vector<16x1xf32> to vector<16x16xf32>
    %545 = arith.subf %541, %544 : vector<16x16xf32>
    %546 = math.exp %545 : vector<16x16xf32>
    %cst_289 = arith.constant dense<0.000000e+00> : vector<16xf32>
    %547 = vector.multi_reduction <add>, %546, %cst_289 [1] : vector<16x16xf32> to vector<16xf32>
    %548 = vector.shape_cast %547 : vector<16xf32> to vector<16x1xf32>
    %549 = vector.broadcast %548 : vector<16x1xf32> to vector<16x16xf32>
    %550 = arith.divf %546, %549 : vector<16x16xf32>
    %cst_290 = arith.constant dense<0.000000e+00> : vector<16x8xf32>
    %551 = tpu.matmul %550, %536, %cst_290 {dimension_numbers = #tpu.dot_dimension_numbers<[1], [0], [0], [1], [0, 0, 1, 1], [], []>} : vector<16x16xf32>, vector<16x8xf32>, vector<16x8xf32> -> vector<16x8xf32>
    %552 = vector.extract_strided_slice %513 {offsets = [0, 16], sizes = [16, 8], strides = [1, 1]} : vector<16x32xf32> to vector<16x8xf32>
    %553 = vector.extract_strided_slice %514 {offsets = [0, 16], sizes = [16, 8], strides = [1, 1]} : vector<16x32xf32> to vector<16x8xf32>
    %554 = vector.extract_strided_slice %515 {offsets = [0, 16], sizes = [16, 8], strides = [1, 1]} : vector<16x32xf32> to vector<16x8xf32>
    %cst_291 = arith.constant dense<0.000000e+00> : vector<16x16xf32>
    %555 = tpu.matmul %552, %553, %cst_291 {dimension_numbers = #tpu.dot_dimension_numbers<[1], [1], [0], [0], [0, 0, 1, 0], [], []>} : vector<16x8xf32>, vector<16x8xf32>, vector<16x16xf32> -> vector<16x16xf32>
    %cst_292 = arith.constant 0.353553385 : f32
    %556 = vector.broadcast %cst_292 : f32 to vector<16x16xf32>
    %557 = arith.mulf %555, %556 : vector<16x16xf32>
    %558 = vector.broadcast %487 : vector<1x16xf32> to vector<16x16xf32>
    %559 = arith.addf %557, %558 : vector<16x16xf32>
    %cst_293 = arith.constant dense<0xFF800000> : vector<16xf32>
    %560 = vector.multi_reduction <maximumf>, %559, %cst_293 [1] : vector<16x16xf32> to vector<16xf32>
    %561 = vector.shape_cast %560 : vector<16xf32> to vector<16x1xf32>
    %562 = vector.broadcast %561 : vector<16x1xf32> to vector<16x16xf32>
    %563 = arith.subf %559, %562 : vector<16x16xf32>
    %564 = math.exp %563 : vector<16x16xf32>
    %cst_294 = arith.constant dense<0.000000e+00> : vector<16xf32>
    %565 = vector.multi_reduction <add>, %564, %cst_294 [1] : vector<16x16xf32> to vector<16xf32>
    %566 = vector.shape_cast %565 : vector<16xf32> to vector<16x1xf32>
    %567 = vector.broadcast %566 : vector<16x1xf32> to vector<16x16xf32>
    %568 = arith.divf %564, %567 : vector<16x16xf32>
    %cst_295 = arith.constant dense<0.000000e+00> : vector<16x8xf32>
    %569 = tpu.matmul %568, %554, %cst_295 {dimension_numbers = #tpu.dot_dimension_numbers<[1], [0], [0], [1], [0, 0, 1, 1], [], []>} : vector<16x16xf32>, vector<16x8xf32>, vector<16x8xf32> -> vector<16x8xf32>
    %570 = vector.extract_strided_slice %513 {offsets = [0, 24], sizes = [16, 8], strides = [1, 1]} : vector<16x32xf32> to vector<16x8xf32>
    %571 = vector.extract_strided_slice %514 {offsets = [0, 24], sizes = [16, 8], strides = [1, 1]} : vector<16x32xf32> to vector<16x8xf32>
    %572 = vector.extract_strided_slice %515 {offsets = [0, 24], sizes = [16, 8], strides = [1, 1]} : vector<16x32xf32> to vector<16x8xf32>
    %cst_296 = arith.constant dense<0.000000e+00> : vector<16x16xf32>
    %573 = tpu.matmul %570, %571, %cst_296 {dimension_numbers = #tpu.dot_dimension_numbers<[1], [1], [0], [0], [0, 0, 1, 0], [], []>} : vector<16x8xf32>, vector<16x8xf32>, vector<16x16xf32> -> vector<16x16xf32>
    %cst_297 = arith.constant 0.353553385 : f32
    %574 = vector.broadcast %cst_297 : f32 to vector<16x16xf32>
    %575 = arith.mulf %573, %574 : vector<16x16xf32>
    %576 = vector.broadcast %487 : vector<1x16xf32> to vector<16x16xf32>
    %577 = arith.addf %575, %576 : vector<16x16xf32>
    %cst_298 = arith.constant dense<0xFF800000> : vector<16xf32>
    %578 = vector.multi_reduction <maximumf>, %577, %cst_298 [1] : vector<16x16xf32> to vector<16xf32>
    %579 = vector.shape_cast %578 : vector<16xf32> to vector<16x1xf32>
    %580 = vector.broadcast %579 : vector<16x1xf32> to vector<16x16xf32>
    %581 = arith.subf %577, %580 : vector<16x16xf32>
    %582 = math.exp %581 : vector<16x16xf32>
    %cst_299 = arith.constant dense<0.000000e+00> : vector<16xf32>
    %583 = vector.multi_reduction <add>, %582, %cst_299 [1] : vector<16x16xf32> to vector<16xf32>
    %584 = vector.shape_cast %583 : vector<16xf32> to vector<16x1xf32>
    %585 = vector.broadcast %584 : vector<16x1xf32> to vector<16x16xf32>
    %586 = arith.divf %582, %585 : vector<16x16xf32>
    %cst_300 = arith.constant dense<0.000000e+00> : vector<16x8xf32>
    %587 = tpu.matmul %586, %572, %cst_300 {dimension_numbers = #tpu.dot_dimension_numbers<[1], [0], [0], [1], [0, 0, 1, 1], [], []>} : vector<16x16xf32>, vector<16x8xf32>, vector<16x8xf32> -> vector<16x8xf32>
    %588 = tpu.concatenate %533, %551, %569, %587 in 1 : vector<16x8xf32>, vector<16x8xf32>, vector<16x8xf32>, vector<16x8xf32> -> vector<16x32xf32>
    %cst_301 = arith.constant dense<0.000000e+00> : vector<16x32xf32>
    %589 = tpu.matmul %588, %50, %cst_301 {dimension_numbers = #tpu.dot_dimension_numbers<[1], [0], [0], [1], [0, 0, 1, 1], [], []>} : vector<16x32xf32>, vector<32x32xf32>, vector<16x32xf32> -> vector<16x32xf32>
    %590 = arith.addf %485, %589 : vector<16x32xf32>
    %591 = vector.broadcast %48 : vector<1x32xf32> to vector<16x32xf32>
    %592 = arith.addf %590, %591 : vector<16x32xf32>
    %cst_302 = arith.constant dense<0.000000e+00> : vector<16xf32>
    %593 = vector.multi_reduction <add>, %592, %cst_302 [1] : vector<16x32xf32> to vector<16xf32>
    %594 = vector.shape_cast %593 : vector<16xf32> to vector<16x1xf32>
    %cst_303 = arith.constant 3.200000e+01 : f32
    %595 = vector.broadcast %cst_303 : f32 to vector<16x1xf32>
    %596 = arith.divf %594, %595 : vector<16x1xf32>
    %597 = vector.broadcast %596 : vector<16x1xf32> to vector<16x32xf32>
    %598 = arith.subf %592, %597 : vector<16x32xf32>
    %599 = arith.mulf %598, %598 : vector<16x32xf32>
    %cst_304 = arith.constant dense<0.000000e+00> : vector<16xf32>
    %600 = vector.multi_reduction <add>, %599, %cst_304 [1] : vector<16x32xf32> to vector<16xf32>
    %601 = vector.shape_cast %600 : vector<16xf32> to vector<16x1xf32>
    %cst_305 = arith.constant 3.200000e+01 : f32
    %602 = vector.broadcast %cst_305 : f32 to vector<16x1xf32>
    %603 = arith.divf %601, %602 : vector<16x1xf32>
    %604 = vector.broadcast %596 : vector<16x1xf32> to vector<16x32xf32>
    %605 = arith.subf %592, %604 : vector<16x32xf32>
    %cst_306 = arith.constant 9.99999974E-6 : f32
    %606 = vector.broadcast %cst_306 : f32 to vector<16x1xf32>
    %607 = arith.addf %603, %606 : vector<16x1xf32>
    %608 = math.rsqrt %607 : vector<16x1xf32>
    %609 = vector.broadcast %608 : vector<16x1xf32> to vector<16x32xf32>
    %610 = arith.mulf %605, %609 : vector<16x32xf32>
    %611 = vector.broadcast %59 : vector<1x32xf32> to vector<16x32xf32>
    %612 = arith.mulf %610, %611 : vector<16x32xf32>
    %613 = vector.broadcast %58 : vector<1x32xf32> to vector<16x32xf32>
    %614 = arith.addf %612, %613 : vector<16x32xf32>
    %cst_307 = arith.constant dense<0.000000e+00> : vector<16x64xf32>
    %615 = tpu.matmul %614, %54, %cst_307 {dimension_numbers = #tpu.dot_dimension_numbers<[1], [0], [0], [1], [0, 0, 1, 1], [], []>} : vector<16x32xf32>, vector<32x64xf32>, vector<16x64xf32> -> vector<16x64xf32>
    %616 = vector.broadcast %52 : vector<1x64xf32> to vector<16x64xf32>
    %617 = arith.addf %615, %616 : vector<16x64xf32>
    %cst_308 = arith.constant 5.000000e-01 : f32
    %618 = vector.broadcast %cst_308 : f32 to vector<16x64xf32>
    %619 = arith.mulf %618, %617 : vector<16x64xf32>
    %cst_309 = arith.constant 0.707106769 : f32
    %620 = vector.broadcast %cst_309 : f32 to vector<16x64xf32>
    %621 = arith.mulf %617, %620 : vector<16x64xf32>
    %cst_310 = arith.constant 0.000000e+00 : f32
    %622 = vector.broadcast %cst_310 : f32 to vector<16x64xf32>
    %623 = arith.cmpf oge, %621, %622 : vector<16x64xf32>
    %cst_311 = arith.constant 1.000000e+00 : f32
    %cst_312 = arith.constant -1.000000e+00 : f32
    %624 = vector.broadcast %cst_311 : f32 to vector<16x64xf32>
    %625 = vector.broadcast %cst_312 : f32 to vector<16x64xf32>
    %626 = arith.select %623, %624, %625 : vector<16x64xi1>, vector<16x64xf32>
    %627 = math.absf %621 : vector<16x64xf32>
    %cst_313 = arith.constant 0.327591091 : f32
    %628 = vector.broadcast %cst_313 : f32 to vector<16x64xf32>
    %629 = arith.mulf %628, %627 : vector<16x64xf32>
    %cst_314 = arith.constant 1.000000e+00 : f32
    %630 = vector.broadcast %cst_314 : f32 to vector<16x64xf32>
    %631 = arith.addf %630, %629 : vector<16x64xf32>
    %cst_315 = arith.constant 1.000000e+00 : f32
    %632 = vector.broadcast %cst_315 : f32 to vector<16x64xf32>
    %633 = arith.divf %632, %631 : vector<16x64xf32>
    %cst_316 = arith.constant 1.06140542 : f32
    %634 = vector.broadcast %cst_316 : f32 to vector<16x64xf32>
    %635 = arith.mulf %634, %633 : vector<16x64xf32>
    %cst_317 = arith.constant -1.45315206 : f32
    %636 = vector.broadcast %cst_317 : f32 to vector<16x64xf32>
    %637 = arith.addf %635, %636 : vector<16x64xf32>
    %638 = arith.mulf %637, %633 : vector<16x64xf32>
    %cst_318 = arith.constant 1.42141378 : f32
    %639 = vector.broadcast %cst_318 : f32 to vector<16x64xf32>
    %640 = arith.addf %638, %639 : vector<16x64xf32>
    %641 = arith.mulf %640, %633 : vector<16x64xf32>
    %cst_319 = arith.constant -0.284496725 : f32
    %642 = vector.broadcast %cst_319 : f32 to vector<16x64xf32>
    %643 = arith.addf %641, %642 : vector<16x64xf32>
    %644 = arith.mulf %643, %633 : vector<16x64xf32>
    %cst_320 = arith.constant 0.254829586 : f32
    %645 = vector.broadcast %cst_320 : f32 to vector<16x64xf32>
    %646 = arith.addf %644, %645 : vector<16x64xf32>
    %647 = arith.mulf %646, %633 : vector<16x64xf32>
    %cst_321 = arith.constant 0.000000e+00 : f32
    %648 = vector.broadcast %cst_321 : f32 to vector<16x64xf32>
    %649 = arith.subf %648, %627 : vector<16x64xf32>
    %650 = arith.mulf %649, %627 : vector<16x64xf32>
    %651 = math.exp %650 : vector<16x64xf32>
    %652 = arith.mulf %647, %651 : vector<16x64xf32>
    %cst_322 = arith.constant 1.000000e+00 : f32
    %653 = vector.broadcast %cst_322 : f32 to vector<16x64xf32>
    %654 = arith.subf %653, %652 : vector<16x64xf32>
    %655 = arith.mulf %626, %654 : vector<16x64xf32>
    %cst_323 = arith.constant 1.000000e+00 : f32
    %656 = vector.broadcast %cst_323 : f32 to vector<16x64xf32>
    %657 = arith.addf %656, %655 : vector<16x64xf32>
    %658 = arith.mulf %619, %657 : vector<16x64xf32>
    %cst_324 = arith.constant dense<0.000000e+00> : vector<16x32xf32>
    %659 = tpu.matmul %658, %55, %cst_324 {dimension_numbers = #tpu.dot_dimension_numbers<[1], [0], [0], [1], [0, 0, 1, 1], [], []>} : vector<16x64xf32>, vector<64x32xf32>, vector<16x32xf32> -> vector<16x32xf32>
    %660 = arith.addf %592, %659 : vector<16x32xf32>
    %661 = vector.broadcast %53 : vector<1x32xf32> to vector<16x32xf32>
    %662 = arith.addf %660, %661 : vector<16x32xf32>
    %c0_325 = arith.constant 0 : index
    %c0_326 = arith.constant 0 : index
    %c0_327 = arith.constant 0 : index
    %663 = vector.load %arg6[%c0_325, %c0_326, %c0_327] : memref<1x1x1xf32, #tpu.memory_space<vmem>>, vector<1x1x1xf32>
    %664 = vector.shape_cast %663 : vector<1x1x1xf32> to vector<1x1xf32>
    %665 = vector.broadcast %664 : vector<1x1xf32> to vector<1x32xf32>
    %666 = arith.mulf %665, %37 : vector<1x32xf32>
    %667 = arith.addf %666, %35 : vector<1x32xf32>
    %cst_328 = arith.constant 5.000000e-01 : f32
    %668 = vector.broadcast %cst_328 : f32 to vector<1x32xf32>
    %669 = arith.mulf %668, %667 : vector<1x32xf32>
    %cst_329 = arith.constant 0.707106769 : f32
    %670 = vector.broadcast %cst_329 : f32 to vector<1x32xf32>
    %671 = arith.mulf %667, %670 : vector<1x32xf32>
    %cst_330 = arith.constant 0.000000e+00 : f32
    %672 = vector.broadcast %cst_330 : f32 to vector<1x32xf32>
    %673 = arith.cmpf oge, %671, %672 : vector<1x32xf32>
    %cst_331 = arith.constant 1.000000e+00 : f32
    %cst_332 = arith.constant -1.000000e+00 : f32
    %674 = vector.broadcast %cst_331 : f32 to vector<1x32xf32>
    %675 = vector.broadcast %cst_332 : f32 to vector<1x32xf32>
    %676 = arith.select %673, %674, %675 : vector<1x32xi1>, vector<1x32xf32>
    %677 = math.absf %671 : vector<1x32xf32>
    %cst_333 = arith.constant 0.327591091 : f32
    %678 = vector.broadcast %cst_333 : f32 to vector<1x32xf32>
    %679 = arith.mulf %678, %677 : vector<1x32xf32>
    %cst_334 = arith.constant 1.000000e+00 : f32
    %680 = vector.broadcast %cst_334 : f32 to vector<1x32xf32>
    %681 = arith.addf %680, %679 : vector<1x32xf32>
    %cst_335 = arith.constant 1.000000e+00 : f32
    %682 = vector.broadcast %cst_335 : f32 to vector<1x32xf32>
    %683 = arith.divf %682, %681 : vector<1x32xf32>
    %cst_336 = arith.constant 1.06140542 : f32
    %684 = vector.broadcast %cst_336 : f32 to vector<1x32xf32>
    %685 = arith.mulf %684, %683 : vector<1x32xf32>
    %cst_337 = arith.constant -1.45315206 : f32
    %686 = vector.broadcast %cst_337 : f32 to vector<1x32xf32>
    %687 = arith.addf %685, %686 : vector<1x32xf32>
    %688 = arith.mulf %687, %683 : vector<1x32xf32>
    %cst_338 = arith.constant 1.42141378 : f32
    %689 = vector.broadcast %cst_338 : f32 to vector<1x32xf32>
    %690 = arith.addf %688, %689 : vector<1x32xf32>
    %691 = arith.mulf %690, %683 : vector<1x32xf32>
    %cst_339 = arith.constant -0.284496725 : f32
    %692 = vector.broadcast %cst_339 : f32 to vector<1x32xf32>
    %693 = arith.addf %691, %692 : vector<1x32xf32>
    %694 = arith.mulf %693, %683 : vector<1x32xf32>
    %cst_340 = arith.constant 0.254829586 : f32
    %695 = vector.broadcast %cst_340 : f32 to vector<1x32xf32>
    %696 = arith.addf %694, %695 : vector<1x32xf32>
    %697 = arith.mulf %696, %683 : vector<1x32xf32>
    %cst_341 = arith.constant 0.000000e+00 : f32
    %698 = vector.broadcast %cst_341 : f32 to vector<1x32xf32>
    %699 = arith.subf %698, %677 : vector<1x32xf32>
    %700 = arith.mulf %699, %677 : vector<1x32xf32>
    %701 = math.exp %700 : vector<1x32xf32>
    %702 = arith.mulf %697, %701 : vector<1x32xf32>
    %cst_342 = arith.constant 1.000000e+00 : f32
    %703 = vector.broadcast %cst_342 : f32 to vector<1x32xf32>
    %704 = arith.subf %703, %702 : vector<1x32xf32>
    %705 = arith.mulf %676, %704 : vector<1x32xf32>
    %cst_343 = arith.constant 1.000000e+00 : f32
    %706 = vector.broadcast %cst_343 : f32 to vector<1x32xf32>
    %707 = arith.addf %706, %705 : vector<1x32xf32>
    %708 = arith.mulf %669, %707 : vector<1x32xf32>
    %cst_344 = arith.constant dense<0.000000e+00> : vector<1x32xf32>
    %709 = tpu.matmul %708, %38, %cst_344 {dimension_numbers = #tpu.dot_dimension_numbers<[1], [0], [0], [1], [0, 0, 1, 1], [], []>} : vector<1x32xf32>, vector<32x32xf32>, vector<1x32xf32> -> vector<1x32xf32>
    %710 = arith.addf %709, %36 : vector<1x32xf32>
    %711 = vector.broadcast %710 : vector<1x32xf32> to vector<4x32xf32>
    %712 = arith.addf %711, %34 : vector<4x32xf32>
    %cst_345 = arith.constant dense<0.000000e+00> : vector<4xf32>
    %713 = vector.multi_reduction <add>, %712, %cst_345 [1] : vector<4x32xf32> to vector<4xf32>
    %714 = vector.shape_cast %713 : vector<4xf32> to vector<4x1xf32>
    %cst_346 = arith.constant 3.200000e+01 : f32
    %715 = vector.broadcast %cst_346 : f32 to vector<4x1xf32>
    %716 = arith.divf %714, %715 : vector<4x1xf32>
    %717 = vector.broadcast %716 : vector<4x1xf32> to vector<4x32xf32>
    %718 = arith.subf %712, %717 : vector<4x32xf32>
    %719 = arith.mulf %718, %718 : vector<4x32xf32>
    %cst_347 = arith.constant dense<0.000000e+00> : vector<4xf32>
    %720 = vector.multi_reduction <add>, %719, %cst_347 [1] : vector<4x32xf32> to vector<4xf32>
    %721 = vector.shape_cast %720 : vector<4xf32> to vector<4x1xf32>
    %cst_348 = arith.constant 3.200000e+01 : f32
    %722 = vector.broadcast %cst_348 : f32 to vector<4x1xf32>
    %723 = arith.divf %721, %722 : vector<4x1xf32>
    %724 = vector.broadcast %716 : vector<4x1xf32> to vector<4x32xf32>
    %725 = arith.subf %712, %724 : vector<4x32xf32>
    %cst_349 = arith.constant 9.99999974E-6 : f32
    %726 = vector.broadcast %cst_349 : f32 to vector<4x1xf32>
    %727 = arith.addf %723, %726 : vector<4x1xf32>
    %728 = math.rsqrt %727 : vector<4x1xf32>
    %729 = vector.broadcast %728 : vector<4x1xf32> to vector<4x32xf32>
    %730 = arith.mulf %725, %729 : vector<4x32xf32>
    %731 = vector.broadcast %23 : vector<1x32xf32> to vector<4x32xf32>
    %732 = arith.mulf %730, %731 : vector<4x32xf32>
    %733 = vector.broadcast %22 : vector<1x32xf32> to vector<4x32xf32>
    %734 = arith.addf %732, %733 : vector<4x32xf32>
    %cst_350 = arith.constant dense<0.000000e+00> : vector<4x96xf32>
    %735 = tpu.matmul %734, %31, %cst_350 {dimension_numbers = #tpu.dot_dimension_numbers<[1], [0], [0], [1], [0, 0, 1, 1], [], []>} : vector<4x32xf32>, vector<32x96xf32>, vector<4x96xf32> -> vector<4x96xf32>
    %736 = vector.broadcast %29 : vector<1x96xf32> to vector<4x96xf32>
    %737 = arith.addf %735, %736 : vector<4x96xf32>
    %738 = vector.extract_strided_slice %737 {offsets = [0, 0], sizes = [4, 32], strides = [1, 1]} : vector<4x96xf32> to vector<4x32xf32>
    %739 = vector.extract_strided_slice %737 {offsets = [0, 32], sizes = [4, 32], strides = [1, 1]} : vector<4x96xf32> to vector<4x32xf32>
    %740 = vector.extract_strided_slice %737 {offsets = [0, 64], sizes = [4, 32], strides = [1, 1]} : vector<4x96xf32> to vector<4x32xf32>
    %741 = vector.extract_strided_slice %738 {offsets = [0, 0], sizes = [4, 8], strides = [1, 1]} : vector<4x32xf32> to vector<4x8xf32>
    %742 = vector.extract_strided_slice %739 {offsets = [0, 0], sizes = [4, 8], strides = [1, 1]} : vector<4x32xf32> to vector<4x8xf32>
    %743 = vector.extract_strided_slice %740 {offsets = [0, 0], sizes = [4, 8], strides = [1, 1]} : vector<4x32xf32> to vector<4x8xf32>
    %cst_351 = arith.constant dense<0.000000e+00> : vector<4x4xf32>
    %744 = tpu.matmul %741, %742, %cst_351 {dimension_numbers = #tpu.dot_dimension_numbers<[1], [1], [0], [0], [0, 0, 1, 0], [], []>} : vector<4x8xf32>, vector<4x8xf32>, vector<4x4xf32> -> vector<4x4xf32>
    %cst_352 = arith.constant 0.353553385 : f32
    %745 = vector.broadcast %cst_352 : f32 to vector<4x4xf32>
    %746 = arith.mulf %744, %745 : vector<4x4xf32>
    %cst_353 = arith.constant dense<0xFF800000> : vector<4xf32>
    %747 = vector.multi_reduction <maximumf>, %746, %cst_353 [1] : vector<4x4xf32> to vector<4xf32>
    %748 = vector.shape_cast %747 : vector<4xf32> to vector<4x1xf32>
    %749 = vector.broadcast %748 : vector<4x1xf32> to vector<4x4xf32>
    %750 = arith.subf %746, %749 : vector<4x4xf32>
    %751 = math.exp %750 : vector<4x4xf32>
    %cst_354 = arith.constant dense<0.000000e+00> : vector<4xf32>
    %752 = vector.multi_reduction <add>, %751, %cst_354 [1] : vector<4x4xf32> to vector<4xf32>
    %753 = vector.shape_cast %752 : vector<4xf32> to vector<4x1xf32>
    %754 = vector.broadcast %753 : vector<4x1xf32> to vector<4x4xf32>
    %755 = arith.divf %751, %754 : vector<4x4xf32>
    %cst_355 = arith.constant dense<0.000000e+00> : vector<4x8xf32>
    %756 = tpu.matmul %755, %743, %cst_355 {dimension_numbers = #tpu.dot_dimension_numbers<[1], [0], [0], [1], [0, 0, 1, 1], [], []>} : vector<4x4xf32>, vector<4x8xf32>, vector<4x8xf32> -> vector<4x8xf32>
    %757 = vector.extract_strided_slice %738 {offsets = [0, 8], sizes = [4, 8], strides = [1, 1]} : vector<4x32xf32> to vector<4x8xf32>
    %758 = vector.extract_strided_slice %739 {offsets = [0, 8], sizes = [4, 8], strides = [1, 1]} : vector<4x32xf32> to vector<4x8xf32>
    %759 = vector.extract_strided_slice %740 {offsets = [0, 8], sizes = [4, 8], strides = [1, 1]} : vector<4x32xf32> to vector<4x8xf32>
    %cst_356 = arith.constant dense<0.000000e+00> : vector<4x4xf32>
    %760 = tpu.matmul %757, %758, %cst_356 {dimension_numbers = #tpu.dot_dimension_numbers<[1], [1], [0], [0], [0, 0, 1, 0], [], []>} : vector<4x8xf32>, vector<4x8xf32>, vector<4x4xf32> -> vector<4x4xf32>
    %cst_357 = arith.constant 0.353553385 : f32
    %761 = vector.broadcast %cst_357 : f32 to vector<4x4xf32>
    %762 = arith.mulf %760, %761 : vector<4x4xf32>
    %cst_358 = arith.constant dense<0xFF800000> : vector<4xf32>
    %763 = vector.multi_reduction <maximumf>, %762, %cst_358 [1] : vector<4x4xf32> to vector<4xf32>
    %764 = vector.shape_cast %763 : vector<4xf32> to vector<4x1xf32>
    %765 = vector.broadcast %764 : vector<4x1xf32> to vector<4x4xf32>
    %766 = arith.subf %762, %765 : vector<4x4xf32>
    %767 = math.exp %766 : vector<4x4xf32>
    %cst_359 = arith.constant dense<0.000000e+00> : vector<4xf32>
    %768 = vector.multi_reduction <add>, %767, %cst_359 [1] : vector<4x4xf32> to vector<4xf32>
    %769 = vector.shape_cast %768 : vector<4xf32> to vector<4x1xf32>
    %770 = vector.broadcast %769 : vector<4x1xf32> to vector<4x4xf32>
    %771 = arith.divf %767, %770 : vector<4x4xf32>
    %cst_360 = arith.constant dense<0.000000e+00> : vector<4x8xf32>
    %772 = tpu.matmul %771, %759, %cst_360 {dimension_numbers = #tpu.dot_dimension_numbers<[1], [0], [0], [1], [0, 0, 1, 1], [], []>} : vector<4x4xf32>, vector<4x8xf32>, vector<4x8xf32> -> vector<4x8xf32>
    %773 = vector.extract_strided_slice %738 {offsets = [0, 16], sizes = [4, 8], strides = [1, 1]} : vector<4x32xf32> to vector<4x8xf32>
    %774 = vector.extract_strided_slice %739 {offsets = [0, 16], sizes = [4, 8], strides = [1, 1]} : vector<4x32xf32> to vector<4x8xf32>
    %775 = vector.extract_strided_slice %740 {offsets = [0, 16], sizes = [4, 8], strides = [1, 1]} : vector<4x32xf32> to vector<4x8xf32>
    %cst_361 = arith.constant dense<0.000000e+00> : vector<4x4xf32>
    %776 = tpu.matmul %773, %774, %cst_361 {dimension_numbers = #tpu.dot_dimension_numbers<[1], [1], [0], [0], [0, 0, 1, 0], [], []>} : vector<4x8xf32>, vector<4x8xf32>, vector<4x4xf32> -> vector<4x4xf32>
    %cst_362 = arith.constant 0.353553385 : f32
    %777 = vector.broadcast %cst_362 : f32 to vector<4x4xf32>
    %778 = arith.mulf %776, %777 : vector<4x4xf32>
    %cst_363 = arith.constant dense<0xFF800000> : vector<4xf32>
    %779 = vector.multi_reduction <maximumf>, %778, %cst_363 [1] : vector<4x4xf32> to vector<4xf32>
    %780 = vector.shape_cast %779 : vector<4xf32> to vector<4x1xf32>
    %781 = vector.broadcast %780 : vector<4x1xf32> to vector<4x4xf32>
    %782 = arith.subf %778, %781 : vector<4x4xf32>
    %783 = math.exp %782 : vector<4x4xf32>
    %cst_364 = arith.constant dense<0.000000e+00> : vector<4xf32>
    %784 = vector.multi_reduction <add>, %783, %cst_364 [1] : vector<4x4xf32> to vector<4xf32>
    %785 = vector.shape_cast %784 : vector<4xf32> to vector<4x1xf32>
    %786 = vector.broadcast %785 : vector<4x1xf32> to vector<4x4xf32>
    %787 = arith.divf %783, %786 : vector<4x4xf32>
    %cst_365 = arith.constant dense<0.000000e+00> : vector<4x8xf32>
    %788 = tpu.matmul %787, %775, %cst_365 {dimension_numbers = #tpu.dot_dimension_numbers<[1], [0], [0], [1], [0, 0, 1, 1], [], []>} : vector<4x4xf32>, vector<4x8xf32>, vector<4x8xf32> -> vector<4x8xf32>
    %789 = vector.extract_strided_slice %738 {offsets = [0, 24], sizes = [4, 8], strides = [1, 1]} : vector<4x32xf32> to vector<4x8xf32>
    %790 = vector.extract_strided_slice %739 {offsets = [0, 24], sizes = [4, 8], strides = [1, 1]} : vector<4x32xf32> to vector<4x8xf32>
    %791 = vector.extract_strided_slice %740 {offsets = [0, 24], sizes = [4, 8], strides = [1, 1]} : vector<4x32xf32> to vector<4x8xf32>
    %cst_366 = arith.constant dense<0.000000e+00> : vector<4x4xf32>
    %792 = tpu.matmul %789, %790, %cst_366 {dimension_numbers = #tpu.dot_dimension_numbers<[1], [1], [0], [0], [0, 0, 1, 0], [], []>} : vector<4x8xf32>, vector<4x8xf32>, vector<4x4xf32> -> vector<4x4xf32>
    %cst_367 = arith.constant 0.353553385 : f32
    %793 = vector.broadcast %cst_367 : f32 to vector<4x4xf32>
    %794 = arith.mulf %792, %793 : vector<4x4xf32>
    %cst_368 = arith.constant dense<0xFF800000> : vector<4xf32>
    %795 = vector.multi_reduction <maximumf>, %794, %cst_368 [1] : vector<4x4xf32> to vector<4xf32>
    %796 = vector.shape_cast %795 : vector<4xf32> to vector<4x1xf32>
    %797 = vector.broadcast %796 : vector<4x1xf32> to vector<4x4xf32>
    %798 = arith.subf %794, %797 : vector<4x4xf32>
    %799 = math.exp %798 : vector<4x4xf32>
    %cst_369 = arith.constant dense<0.000000e+00> : vector<4xf32>
    %800 = vector.multi_reduction <add>, %799, %cst_369 [1] : vector<4x4xf32> to vector<4xf32>
    %801 = vector.shape_cast %800 : vector<4xf32> to vector<4x1xf32>
    %802 = vector.broadcast %801 : vector<4x1xf32> to vector<4x4xf32>
    %803 = arith.divf %799, %802 : vector<4x4xf32>
    %cst_370 = arith.constant dense<0.000000e+00> : vector<4x8xf32>
    %804 = tpu.matmul %803, %791, %cst_370 {dimension_numbers = #tpu.dot_dimension_numbers<[1], [0], [0], [1], [0, 0, 1, 1], [], []>} : vector<4x4xf32>, vector<4x8xf32>, vector<4x8xf32> -> vector<4x8xf32>
    %805 = tpu.concatenate %756, %772, %788, %804 in 1 : vector<4x8xf32>, vector<4x8xf32>, vector<4x8xf32>, vector<4x8xf32> -> vector<4x32xf32>
    %cst_371 = arith.constant dense<0.000000e+00> : vector<4x32xf32>
    %806 = tpu.matmul %805, %30, %cst_371 {dimension_numbers = #tpu.dot_dimension_numbers<[1], [0], [0], [1], [0, 0, 1, 1], [], []>} : vector<4x32xf32>, vector<32x32xf32>, vector<4x32xf32> -> vector<4x32xf32>
    %807 = arith.addf %712, %806 : vector<4x32xf32>
    %808 = vector.broadcast %28 : vector<1x32xf32> to vector<4x32xf32>
    %809 = arith.addf %807, %808 : vector<4x32xf32>
    %cst_372 = arith.constant dense<0.000000e+00> : vector<4xf32>
    %810 = vector.multi_reduction <add>, %809, %cst_372 [1] : vector<4x32xf32> to vector<4xf32>
    %811 = vector.shape_cast %810 : vector<4xf32> to vector<4x1xf32>
    %cst_373 = arith.constant 3.200000e+01 : f32
    %812 = vector.broadcast %cst_373 : f32 to vector<4x1xf32>
    %813 = arith.divf %811, %812 : vector<4x1xf32>
    %814 = vector.broadcast %813 : vector<4x1xf32> to vector<4x32xf32>
    %815 = arith.subf %809, %814 : vector<4x32xf32>
    %816 = arith.mulf %815, %815 : vector<4x32xf32>
    %cst_374 = arith.constant dense<0.000000e+00> : vector<4xf32>
    %817 = vector.multi_reduction <add>, %816, %cst_374 [1] : vector<4x32xf32> to vector<4xf32>
    %818 = vector.shape_cast %817 : vector<4xf32> to vector<4x1xf32>
    %cst_375 = arith.constant 3.200000e+01 : f32
    %819 = vector.broadcast %cst_375 : f32 to vector<4x1xf32>
    %820 = arith.divf %818, %819 : vector<4x1xf32>
    %821 = vector.broadcast %813 : vector<4x1xf32> to vector<4x32xf32>
    %822 = arith.subf %809, %821 : vector<4x32xf32>
    %cst_376 = arith.constant 9.99999974E-6 : f32
    %823 = vector.broadcast %cst_376 : f32 to vector<4x1xf32>
    %824 = arith.addf %820, %823 : vector<4x1xf32>
    %825 = math.rsqrt %824 : vector<4x1xf32>
    %826 = vector.broadcast %825 : vector<4x1xf32> to vector<4x32xf32>
    %827 = arith.mulf %822, %826 : vector<4x32xf32>
    %828 = vector.broadcast %25 : vector<1x32xf32> to vector<4x32xf32>
    %829 = arith.mulf %827, %828 : vector<4x32xf32>
    %830 = vector.broadcast %24 : vector<1x32xf32> to vector<4x32xf32>
    %831 = arith.addf %829, %830 : vector<4x32xf32>
    %cst_377 = arith.constant dense<0.000000e+00> : vector<4x32xf32>
    %832 = tpu.matmul %831, %17, %cst_377 {dimension_numbers = #tpu.dot_dimension_numbers<[1], [0], [0], [1], [0, 0, 1, 1], [], []>} : vector<4x32xf32>, vector<32x32xf32>, vector<4x32xf32> -> vector<4x32xf32>
    %833 = vector.broadcast %14 : vector<1x32xf32> to vector<4x32xf32>
    %834 = arith.addf %832, %833 : vector<4x32xf32>
    %cst_378 = arith.constant dense<0.000000e+00> : vector<16x64xf32>
    %835 = tpu.matmul %662, %15, %cst_378 {dimension_numbers = #tpu.dot_dimension_numbers<[1], [0], [0], [1], [0, 0, 1, 1], [], []>} : vector<16x32xf32>, vector<32x64xf32>, vector<16x64xf32> -> vector<16x64xf32>
    %836 = vector.broadcast %12 : vector<1x64xf32> to vector<16x64xf32>
    %837 = arith.addf %835, %836 : vector<16x64xf32>
    %838 = vector.extract_strided_slice %837 {offsets = [0, 0], sizes = [16, 32], strides = [1, 1]} : vector<16x64xf32> to vector<16x32xf32>
    %839 = vector.extract_strided_slice %837 {offsets = [0, 32], sizes = [16, 32], strides = [1, 1]} : vector<16x64xf32> to vector<16x32xf32>
    %840 = vector.extract_strided_slice %834 {offsets = [0, 0], sizes = [4, 8], strides = [1, 1]} : vector<4x32xf32> to vector<4x8xf32>
    %841 = vector.extract_strided_slice %838 {offsets = [0, 0], sizes = [16, 8], strides = [1, 1]} : vector<16x32xf32> to vector<16x8xf32>
    %842 = vector.extract_strided_slice %839 {offsets = [0, 0], sizes = [16, 8], strides = [1, 1]} : vector<16x32xf32> to vector<16x8xf32>
    %cst_379 = arith.constant dense<0.000000e+00> : vector<4x16xf32>
    %843 = tpu.matmul %840, %841, %cst_379 {dimension_numbers = #tpu.dot_dimension_numbers<[1], [1], [0], [0], [0, 0, 1, 0], [], []>} : vector<4x8xf32>, vector<16x8xf32>, vector<4x16xf32> -> vector<4x16xf32>
    %cst_380 = arith.constant 0.353553385 : f32
    %844 = vector.broadcast %cst_380 : f32 to vector<4x16xf32>
    %845 = arith.mulf %843, %844 : vector<4x16xf32>
    %846 = vector.broadcast %487 : vector<1x16xf32> to vector<4x16xf32>
    %847 = arith.addf %845, %846 : vector<4x16xf32>
    %cst_381 = arith.constant dense<0xFF800000> : vector<4xf32>
    %848 = vector.multi_reduction <maximumf>, %847, %cst_381 [1] : vector<4x16xf32> to vector<4xf32>
    %849 = vector.shape_cast %848 : vector<4xf32> to vector<4x1xf32>
    %850 = vector.broadcast %849 : vector<4x1xf32> to vector<4x16xf32>
    %851 = arith.subf %847, %850 : vector<4x16xf32>
    %852 = math.exp %851 : vector<4x16xf32>
    %cst_382 = arith.constant dense<0.000000e+00> : vector<4xf32>
    %853 = vector.multi_reduction <add>, %852, %cst_382 [1] : vector<4x16xf32> to vector<4xf32>
    %854 = vector.shape_cast %853 : vector<4xf32> to vector<4x1xf32>
    %855 = vector.broadcast %854 : vector<4x1xf32> to vector<4x16xf32>
    %856 = arith.divf %852, %855 : vector<4x16xf32>
    %cst_383 = arith.constant dense<0.000000e+00> : vector<4x8xf32>
    %857 = tpu.matmul %856, %842, %cst_383 {dimension_numbers = #tpu.dot_dimension_numbers<[1], [0], [0], [1], [0, 0, 1, 1], [], []>} : vector<4x16xf32>, vector<16x8xf32>, vector<4x8xf32> -> vector<4x8xf32>
    %858 = vector.extract_strided_slice %834 {offsets = [0, 8], sizes = [4, 8], strides = [1, 1]} : vector<4x32xf32> to vector<4x8xf32>
    %859 = vector.extract_strided_slice %838 {offsets = [0, 8], sizes = [16, 8], strides = [1, 1]} : vector<16x32xf32> to vector<16x8xf32>
    %860 = vector.extract_strided_slice %839 {offsets = [0, 8], sizes = [16, 8], strides = [1, 1]} : vector<16x32xf32> to vector<16x8xf32>
    %cst_384 = arith.constant dense<0.000000e+00> : vector<4x16xf32>
    %861 = tpu.matmul %858, %859, %cst_384 {dimension_numbers = #tpu.dot_dimension_numbers<[1], [1], [0], [0], [0, 0, 1, 0], [], []>} : vector<4x8xf32>, vector<16x8xf32>, vector<4x16xf32> -> vector<4x16xf32>
    %cst_385 = arith.constant 0.353553385 : f32
    %862 = vector.broadcast %cst_385 : f32 to vector<4x16xf32>
    %863 = arith.mulf %861, %862 : vector<4x16xf32>
    %864 = vector.broadcast %487 : vector<1x16xf32> to vector<4x16xf32>
    %865 = arith.addf %863, %864 : vector<4x16xf32>
    %cst_386 = arith.constant dense<0xFF800000> : vector<4xf32>
    %866 = vector.multi_reduction <maximumf>, %865, %cst_386 [1] : vector<4x16xf32> to vector<4xf32>
    %867 = vector.shape_cast %866 : vector<4xf32> to vector<4x1xf32>
    %868 = vector.broadcast %867 : vector<4x1xf32> to vector<4x16xf32>
    %869 = arith.subf %865, %868 : vector<4x16xf32>
    %870 = math.exp %869 : vector<4x16xf32>
    %cst_387 = arith.constant dense<0.000000e+00> : vector<4xf32>
    %871 = vector.multi_reduction <add>, %870, %cst_387 [1] : vector<4x16xf32> to vector<4xf32>
    %872 = vector.shape_cast %871 : vector<4xf32> to vector<4x1xf32>
    %873 = vector.broadcast %872 : vector<4x1xf32> to vector<4x16xf32>
    %874 = arith.divf %870, %873 : vector<4x16xf32>
    %cst_388 = arith.constant dense<0.000000e+00> : vector<4x8xf32>
    %875 = tpu.matmul %874, %860, %cst_388 {dimension_numbers = #tpu.dot_dimension_numbers<[1], [0], [0], [1], [0, 0, 1, 1], [], []>} : vector<4x16xf32>, vector<16x8xf32>, vector<4x8xf32> -> vector<4x8xf32>
    %876 = vector.extract_strided_slice %834 {offsets = [0, 16], sizes = [4, 8], strides = [1, 1]} : vector<4x32xf32> to vector<4x8xf32>
    %877 = vector.extract_strided_slice %838 {offsets = [0, 16], sizes = [16, 8], strides = [1, 1]} : vector<16x32xf32> to vector<16x8xf32>
    %878 = vector.extract_strided_slice %839 {offsets = [0, 16], sizes = [16, 8], strides = [1, 1]} : vector<16x32xf32> to vector<16x8xf32>
    %cst_389 = arith.constant dense<0.000000e+00> : vector<4x16xf32>
    %879 = tpu.matmul %876, %877, %cst_389 {dimension_numbers = #tpu.dot_dimension_numbers<[1], [1], [0], [0], [0, 0, 1, 0], [], []>} : vector<4x8xf32>, vector<16x8xf32>, vector<4x16xf32> -> vector<4x16xf32>
    %cst_390 = arith.constant 0.353553385 : f32
    %880 = vector.broadcast %cst_390 : f32 to vector<4x16xf32>
    %881 = arith.mulf %879, %880 : vector<4x16xf32>
    %882 = vector.broadcast %487 : vector<1x16xf32> to vector<4x16xf32>
    %883 = arith.addf %881, %882 : vector<4x16xf32>
    %cst_391 = arith.constant dense<0xFF800000> : vector<4xf32>
    %884 = vector.multi_reduction <maximumf>, %883, %cst_391 [1] : vector<4x16xf32> to vector<4xf32>
    %885 = vector.shape_cast %884 : vector<4xf32> to vector<4x1xf32>
    %886 = vector.broadcast %885 : vector<4x1xf32> to vector<4x16xf32>
    %887 = arith.subf %883, %886 : vector<4x16xf32>
    %888 = math.exp %887 : vector<4x16xf32>
    %cst_392 = arith.constant dense<0.000000e+00> : vector<4xf32>
    %889 = vector.multi_reduction <add>, %888, %cst_392 [1] : vector<4x16xf32> to vector<4xf32>
    %890 = vector.shape_cast %889 : vector<4xf32> to vector<4x1xf32>
    %891 = vector.broadcast %890 : vector<4x1xf32> to vector<4x16xf32>
    %892 = arith.divf %888, %891 : vector<4x16xf32>
    %cst_393 = arith.constant dense<0.000000e+00> : vector<4x8xf32>
    %893 = tpu.matmul %892, %878, %cst_393 {dimension_numbers = #tpu.dot_dimension_numbers<[1], [0], [0], [1], [0, 0, 1, 1], [], []>} : vector<4x16xf32>, vector<16x8xf32>, vector<4x8xf32> -> vector<4x8xf32>
    %894 = vector.extract_strided_slice %834 {offsets = [0, 24], sizes = [4, 8], strides = [1, 1]} : vector<4x32xf32> to vector<4x8xf32>
    %895 = vector.extract_strided_slice %838 {offsets = [0, 24], sizes = [16, 8], strides = [1, 1]} : vector<16x32xf32> to vector<16x8xf32>
    %896 = vector.extract_strided_slice %839 {offsets = [0, 24], sizes = [16, 8], strides = [1, 1]} : vector<16x32xf32> to vector<16x8xf32>
    %cst_394 = arith.constant dense<0.000000e+00> : vector<4x16xf32>
    %897 = tpu.matmul %894, %895, %cst_394 {dimension_numbers = #tpu.dot_dimension_numbers<[1], [1], [0], [0], [0, 0, 1, 0], [], []>} : vector<4x8xf32>, vector<16x8xf32>, vector<4x16xf32> -> vector<4x16xf32>
    %cst_395 = arith.constant 0.353553385 : f32
    %898 = vector.broadcast %cst_395 : f32 to vector<4x16xf32>
    %899 = arith.mulf %897, %898 : vector<4x16xf32>
    %900 = vector.broadcast %487 : vector<1x16xf32> to vector<4x16xf32>
    %901 = arith.addf %899, %900 : vector<4x16xf32>
    %cst_396 = arith.constant dense<0xFF800000> : vector<4xf32>
    %902 = vector.multi_reduction <maximumf>, %901, %cst_396 [1] : vector<4x16xf32> to vector<4xf32>
    %903 = vector.shape_cast %902 : vector<4xf32> to vector<4x1xf32>
    %904 = vector.broadcast %903 : vector<4x1xf32> to vector<4x16xf32>
    %905 = arith.subf %901, %904 : vector<4x16xf32>
    %906 = math.exp %905 : vector<4x16xf32>
    %cst_397 = arith.constant dense<0.000000e+00> : vector<4xf32>
    %907 = vector.multi_reduction <add>, %906, %cst_397 [1] : vector<4x16xf32> to vector<4xf32>
    %908 = vector.shape_cast %907 : vector<4xf32> to vector<4x1xf32>
    %909 = vector.broadcast %908 : vector<4x1xf32> to vector<4x16xf32>
    %910 = arith.divf %906, %909 : vector<4x16xf32>
    %cst_398 = arith.constant dense<0.000000e+00> : vector<4x8xf32>
    %911 = tpu.matmul %910, %896, %cst_398 {dimension_numbers = #tpu.dot_dimension_numbers<[1], [0], [0], [1], [0, 0, 1, 1], [], []>} : vector<4x16xf32>, vector<16x8xf32>, vector<4x8xf32> -> vector<4x8xf32>
    %912 = tpu.concatenate %857, %875, %893, %911 in 1 : vector<4x8xf32>, vector<4x8xf32>, vector<4x8xf32>, vector<4x8xf32> -> vector<4x32xf32>
    %cst_399 = arith.constant dense<0.000000e+00> : vector<4x32xf32>
    %913 = tpu.matmul %912, %16, %cst_399 {dimension_numbers = #tpu.dot_dimension_numbers<[1], [0], [0], [1], [0, 0, 1, 1], [], []>} : vector<4x32xf32>, vector<32x32xf32>, vector<4x32xf32> -> vector<4x32xf32>
    %914 = arith.addf %809, %913 : vector<4x32xf32>
    %915 = vector.broadcast %13 : vector<1x32xf32> to vector<4x32xf32>
    %916 = arith.addf %914, %915 : vector<4x32xf32>
    %cst_400 = arith.constant dense<0.000000e+00> : vector<4xf32>
    %917 = vector.multi_reduction <add>, %916, %cst_400 [1] : vector<4x32xf32> to vector<4xf32>
    %918 = vector.shape_cast %917 : vector<4xf32> to vector<4x1xf32>
    %cst_401 = arith.constant 3.200000e+01 : f32
    %919 = vector.broadcast %cst_401 : f32 to vector<4x1xf32>
    %920 = arith.divf %918, %919 : vector<4x1xf32>
    %921 = vector.broadcast %920 : vector<4x1xf32> to vector<4x32xf32>
    %922 = arith.subf %916, %921 : vector<4x32xf32>
    %923 = arith.mulf %922, %922 : vector<4x32xf32>
    %cst_402 = arith.constant dense<0.000000e+00> : vector<4xf32>
    %924 = vector.multi_reduction <add>, %923, %cst_402 [1] : vector<4x32xf32> to vector<4xf32>
    %925 = vector.shape_cast %924 : vector<4xf32> to vector<4x1xf32>
    %cst_403 = arith.constant 3.200000e+01 : f32
    %926 = vector.broadcast %cst_403 : f32 to vector<4x1xf32>
    %927 = arith.divf %925, %926 : vector<4x1xf32>
    %928 = vector.broadcast %920 : vector<4x1xf32> to vector<4x32xf32>
    %929 = arith.subf %916, %928 : vector<4x32xf32>
    %cst_404 = arith.constant 9.99999974E-6 : f32
    %930 = vector.broadcast %cst_404 : f32 to vector<4x1xf32>
    %931 = arith.addf %927, %930 : vector<4x1xf32>
    %932 = math.rsqrt %931 : vector<4x1xf32>
    %933 = vector.broadcast %932 : vector<4x1xf32> to vector<4x32xf32>
    %934 = arith.mulf %929, %933 : vector<4x32xf32>
    %935 = vector.broadcast %27 : vector<1x32xf32> to vector<4x32xf32>
    %936 = arith.mulf %934, %935 : vector<4x32xf32>
    %937 = vector.broadcast %26 : vector<1x32xf32> to vector<4x32xf32>
    %938 = arith.addf %936, %937 : vector<4x32xf32>
    %cst_405 = arith.constant dense<0.000000e+00> : vector<4x64xf32>
    %939 = tpu.matmul %938, %20, %cst_405 {dimension_numbers = #tpu.dot_dimension_numbers<[1], [0], [0], [1], [0, 0, 1, 1], [], []>} : vector<4x32xf32>, vector<32x64xf32>, vector<4x64xf32> -> vector<4x64xf32>
    %940 = vector.broadcast %18 : vector<1x64xf32> to vector<4x64xf32>
    %941 = arith.addf %939, %940 : vector<4x64xf32>
    %cst_406 = arith.constant 5.000000e-01 : f32
    %942 = vector.broadcast %cst_406 : f32 to vector<4x64xf32>
    %943 = arith.mulf %942, %941 : vector<4x64xf32>
    %cst_407 = arith.constant 0.707106769 : f32
    %944 = vector.broadcast %cst_407 : f32 to vector<4x64xf32>
    %945 = arith.mulf %941, %944 : vector<4x64xf32>
    %cst_408 = arith.constant 0.000000e+00 : f32
    %946 = vector.broadcast %cst_408 : f32 to vector<4x64xf32>
    %947 = arith.cmpf oge, %945, %946 : vector<4x64xf32>
    %cst_409 = arith.constant 1.000000e+00 : f32
    %cst_410 = arith.constant -1.000000e+00 : f32
    %948 = vector.broadcast %cst_409 : f32 to vector<4x64xf32>
    %949 = vector.broadcast %cst_410 : f32 to vector<4x64xf32>
    %950 = arith.select %947, %948, %949 : vector<4x64xi1>, vector<4x64xf32>
    %951 = math.absf %945 : vector<4x64xf32>
    %cst_411 = arith.constant 0.327591091 : f32
    %952 = vector.broadcast %cst_411 : f32 to vector<4x64xf32>
    %953 = arith.mulf %952, %951 : vector<4x64xf32>
    %cst_412 = arith.constant 1.000000e+00 : f32
    %954 = vector.broadcast %cst_412 : f32 to vector<4x64xf32>
    %955 = arith.addf %954, %953 : vector<4x64xf32>
    %cst_413 = arith.constant 1.000000e+00 : f32
    %956 = vector.broadcast %cst_413 : f32 to vector<4x64xf32>
    %957 = arith.divf %956, %955 : vector<4x64xf32>
    %cst_414 = arith.constant 1.06140542 : f32
    %958 = vector.broadcast %cst_414 : f32 to vector<4x64xf32>
    %959 = arith.mulf %958, %957 : vector<4x64xf32>
    %cst_415 = arith.constant -1.45315206 : f32
    %960 = vector.broadcast %cst_415 : f32 to vector<4x64xf32>
    %961 = arith.addf %959, %960 : vector<4x64xf32>
    %962 = arith.mulf %961, %957 : vector<4x64xf32>
    %cst_416 = arith.constant 1.42141378 : f32
    %963 = vector.broadcast %cst_416 : f32 to vector<4x64xf32>
    %964 = arith.addf %962, %963 : vector<4x64xf32>
    %965 = arith.mulf %964, %957 : vector<4x64xf32>
    %cst_417 = arith.constant -0.284496725 : f32
    %966 = vector.broadcast %cst_417 : f32 to vector<4x64xf32>
    %967 = arith.addf %965, %966 : vector<4x64xf32>
    %968 = arith.mulf %967, %957 : vector<4x64xf32>
    %cst_418 = arith.constant 0.254829586 : f32
    %969 = vector.broadcast %cst_418 : f32 to vector<4x64xf32>
    %970 = arith.addf %968, %969 : vector<4x64xf32>
    %971 = arith.mulf %970, %957 : vector<4x64xf32>
    %cst_419 = arith.constant 0.000000e+00 : f32
    %972 = vector.broadcast %cst_419 : f32 to vector<4x64xf32>
    %973 = arith.subf %972, %951 : vector<4x64xf32>
    %974 = arith.mulf %973, %951 : vector<4x64xf32>
    %975 = math.exp %974 : vector<4x64xf32>
    %976 = arith.mulf %971, %975 : vector<4x64xf32>
    %cst_420 = arith.constant 1.000000e+00 : f32
    %977 = vector.broadcast %cst_420 : f32 to vector<4x64xf32>
    %978 = arith.subf %977, %976 : vector<4x64xf32>
    %979 = arith.mulf %950, %978 : vector<4x64xf32>
    %cst_421 = arith.constant 1.000000e+00 : f32
    %980 = vector.broadcast %cst_421 : f32 to vector<4x64xf32>
    %981 = arith.addf %980, %979 : vector<4x64xf32>
    %982 = arith.mulf %943, %981 : vector<4x64xf32>
    %cst_422 = arith.constant dense<0.000000e+00> : vector<4x32xf32>
    %983 = tpu.matmul %982, %21, %cst_422 {dimension_numbers = #tpu.dot_dimension_numbers<[1], [0], [0], [1], [0, 0, 1, 1], [], []>} : vector<4x64xf32>, vector<64x32xf32>, vector<4x32xf32> -> vector<4x32xf32>
    %984 = arith.addf %916, %983 : vector<4x32xf32>
    %985 = vector.broadcast %19 : vector<1x32xf32> to vector<4x32xf32>
    %986 = arith.addf %984, %985 : vector<4x32xf32>
    %cst_423 = arith.constant dense<0.000000e+00> : vector<4xf32>
    %987 = vector.multi_reduction <add>, %986, %cst_423 [1] : vector<4x32xf32> to vector<4xf32>
    %988 = vector.shape_cast %987 : vector<4xf32> to vector<4x1xf32>
    %cst_424 = arith.constant 3.200000e+01 : f32
    %989 = vector.broadcast %cst_424 : f32 to vector<4x1xf32>
    %990 = arith.divf %988, %989 : vector<4x1xf32>
    %991 = vector.broadcast %990 : vector<4x1xf32> to vector<4x32xf32>
    %992 = arith.subf %986, %991 : vector<4x32xf32>
    %993 = arith.mulf %992, %992 : vector<4x32xf32>
    %cst_425 = arith.constant dense<0.000000e+00> : vector<4xf32>
    %994 = vector.multi_reduction <add>, %993, %cst_425 [1] : vector<4x32xf32> to vector<4xf32>
    %995 = vector.shape_cast %994 : vector<4xf32> to vector<4x1xf32>
    %cst_426 = arith.constant 3.200000e+01 : f32
    %996 = vector.broadcast %cst_426 : f32 to vector<4x1xf32>
    %997 = arith.divf %995, %996 : vector<4x1xf32>
    %998 = vector.broadcast %990 : vector<4x1xf32> to vector<4x32xf32>
    %999 = arith.subf %986, %998 : vector<4x32xf32>
    %cst_427 = arith.constant 9.99999974E-6 : f32
    %1000 = vector.broadcast %cst_427 : f32 to vector<4x1xf32>
    %1001 = arith.addf %997, %1000 : vector<4x1xf32>
    %1002 = math.rsqrt %1001 : vector<4x1xf32>
    %1003 = vector.broadcast %1002 : vector<4x1xf32> to vector<4x32xf32>
    %1004 = arith.mulf %999, %1003 : vector<4x32xf32>
    %1005 = vector.broadcast %33 : vector<1x32xf32> to vector<4x32xf32>
    %1006 = arith.mulf %1004, %1005 : vector<4x32xf32>
    %1007 = vector.broadcast %32 : vector<1x32xf32> to vector<4x32xf32>
    %1008 = arith.addf %1006, %1007 : vector<4x32xf32>
    %cst_428 = arith.constant dense<0.000000e+00> : vector<4x256xf32>
    %1009 = tpu.matmul %1008, %40, %cst_428 {dimension_numbers = #tpu.dot_dimension_numbers<[1], [0], [0], [1], [0, 0, 1, 1], [], []>} : vector<4x32xf32>, vector<32x256xf32>, vector<4x256xf32> -> vector<4x256xf32>
    %1010 = vector.broadcast %39 : vector<1x256xf32> to vector<4x256xf32>
    %1011 = arith.addf %1009, %1010 : vector<4x256xf32>
    %1012 = vector.shape_cast %1011 : vector<4x256xf32> to vector<1x4x256xf32>
    %c0_429 = arith.constant 0 : index
    %c0_430 = arith.constant 0 : index
    %c0_431 = arith.constant 0 : index
    %1013 = vector.load %arg79[%c0_429, %c0_430, %c0_431] : memref<1x4x256xf32, #tpu.memory_space<vmem>>, vector<1x4x256xf32>
    tpu.vector_store %arg79[%c0_429, %c0_430, %c0_431], %1012 {strides = array<i32>} : memref<1x4x256xf32, #tpu.memory_space<vmem>>, vector<1x4x256xf32>,
    return
  }
  func.func @transform_0(%arg0: i32) -> (i32, i32, i32) {
    %c0_i32 = arith.constant 0 : i32
    %c0_i32_0 = arith.constant 0 : i32
    %c0_i32_1 = arith.constant 0 : i32
    return %arg0, %c0_i32, %c0_i32_0 : i32, i32, i32
  }
  func.func @transform_1(%arg0: i32) -> (i32, i32, i32) {
    %c0_i32 = arith.constant 0 : i32
    %c0_i32_0 = arith.constant 0 : i32
    %c0_i32_1 = arith.constant 0 : i32
    return %arg0, %c0_i32, %c0_i32_0 : i32, i32, i32
  }
  func.func @transform_2(%arg0: i32) -> (i32, i32, i32) {
    %c0_i32 = arith.constant 0 : i32
    %c0_i32_0 = arith.constant 0 : i32
    %c0_i32_1 = arith.constant 0 : i32
    return %arg0, %c0_i32, %c0_i32_0 : i32, i32, i32
  }
  func.func @transform_3(%arg0: i32) -> (i32, i32, i32) {
    %c0_i32 = arith.constant 0 : i32
    %c0_i32_0 = arith.constant 0 : i32
    %c0_i32_1 = arith.constant 0 : i32
    return %arg0, %c0_i32, %c0_i32_0 : i32, i32, i32
  }
  func.func @transform_4(%arg0: i32) -> (i32, i32, i32) {
    %c0_i32 = arith.constant 0 : i32
    %c0_i32_0 = arith.constant 0 : i32
    %c0_i32_1 = arith.constant 0 : i32
    return %arg0, %c0_i32, %c0_i32_0 : i32, i32, i32
  }
  func.func @transform_5(%arg0: i32) -> (i32, i32, i32) {
    %c0_i32 = arith.constant 0 : i32
    %c0_i32_0 = arith.constant 0 : i32
    %c0_i32_1 = arith.constant 0 : i32
    return %arg0, %c0_i32, %c0_i32_0 : i32, i32, i32
  }
  func.func @transform_6(%arg0: i32) -> (i32, i32) {
    %c0_i32 = arith.constant 0 : i32
    %c0_i32_0 = arith.constant 0 : i32
    %c0_i32_1 = arith.constant 0 : i32
    return %c0_i32, %c0_i32_0 : i32, i32
  }
  func.func @transform_7(%arg0: i32) -> (i32, i32) {
    %c0_i32 = arith.constant 0 : i32
    %c0_i32_0 = arith.constant 0 : i32
    %c0_i32_1 = arith.constant 0 : i32
    return %c0_i32, %c0_i32_0 : i32, i32
  }
  func.func @transform_8(%arg0: i32) -> (i32, i32) {
    %c0_i32 = arith.constant 0 : i32
    %c0_i32_0 = arith.constant 0 : i32
    %c0_i32_1 = arith.constant 0 : i32
    return %c0_i32, %c0_i32_0 : i32, i32
  }
  func.func @transform_9(%arg0: i32) -> (i32, i32) {
    %c0_i32 = arith.constant 0 : i32
    %c0_i32_0 = arith.constant 0 : i32
    %c0_i32_1 = arith.constant 0 : i32
    return %c0_i32, %c0_i32_0 : i32, i32
  }
  func.func @transform_10(%arg0: i32) -> (i32, i32) {
    %c0_i32 = arith.constant 0 : i32
    %c0_i32_0 = arith.constant 0 : i32
    %c0_i32_1 = arith.constant 0 : i32
    return %c0_i32, %c0_i32_0 : i32, i32
  }
  func.func @transform_11(%arg0: i32) -> (i32, i32) {
    %c0_i32 = arith.constant 0 : i32
    %c0_i32_0 = arith.constant 0 : i32
    %c0_i32_1 = arith.constant 0 : i32
    return %c0_i32, %c0_i32_0 : i32, i32
  }
  func.func @transform_12(%arg0: i32) -> (i32, i32) {
    %c0_i32 = arith.constant 0 : i32
    %c0_i32_0 = arith.constant 0 : i32
    %c0_i32_1 = arith.constant 0 : i32
    return %c0_i32, %c0_i32_0 : i32, i32
  }
  func.func @transform_13(%arg0: i32) -> (i32, i32) {
    %c0_i32 = arith.constant 0 : i32
    %c0_i32_0 = arith.constant 0 : i32
    %c0_i32_1 = arith.constant 0 : i32
    return %c0_i32, %c0_i32_0 : i32, i32
  }
  func.func @transform_14(%arg0: i32) -> (i32, i32) {
    %c0_i32 = arith.constant 0 : i32
    %c0_i32_0 = arith.constant 0 : i32
    %c0_i32_1 = arith.constant 0 : i32
    return %c0_i32, %c0_i32_0 : i32, i32
  }
  func.func @transform_15(%arg0: i32) -> (i32, i32) {
    %c0_i32 = arith.constant 0 : i32
    %c0_i32_0 = arith.constant 0 : i32
    %c0_i32_1 = arith.constant 0 : i32
    return %c0_i32, %c0_i32_0 : i32, i32
  }
  func.func @transform_16(%arg0: i32) -> (i32, i32) {
    %c0_i32 = arith.constant 0 : i32
    %c0_i32_0 = arith.constant 0 : i32
    %c0_i32_1 = arith.constant 0 : i32
    return %c0_i32, %c0_i32_0 : i32, i32
  }
  func.func @transform_17(%arg0: i32) -> (i32, i32) {
    %c0_i32 = arith.constant 0 : i32
    %c0_i32_0 = arith.constant 0 : i32
    %c0_i32_1 = arith.constant 0 : i32
    return %c0_i32, %c0_i32_0 : i32, i32
  }
  func.func @transform_18(%arg0: i32) -> (i32, i32) {
    %c0_i32 = arith.constant 0 : i32
    %c0_i32_0 = arith.constant 0 : i32
    %c0_i32_1 = arith.constant 0 : i32
    return %c0_i32, %c0_i32_0 : i32, i32
  }
  func.func @transform_19(%arg0: i32) -> (i32, i32) {
    %c0_i32 = arith.constant 0 : i32
    %c0_i32_0 = arith.constant 0 : i32
    %c0_i32_1 = arith.constant 0 : i32
    return %c0_i32, %c0_i32_0 : i32, i32
  }
  func.func @transform_20(%arg0: i32) -> (i32, i32) {
    %c0_i32 = arith.constant 0 : i32
    %c0_i32_0 = arith.constant 0 : i32
    %c0_i32_1 = arith.constant 0 : i32
    return %c0_i32, %c0_i32_0 : i32, i32
  }
  func.func @transform_21(%arg0: i32) -> (i32, i32) {
    %c0_i32 = arith.constant 0 : i32
    %c0_i32_0 = arith.constant 0 : i32
    %c0_i32_1 = arith.constant 0 : i32
    return %c0_i32, %c0_i32_0 : i32, i32
  }
  func.func @transform_22(%arg0: i32) -> (i32, i32) {
    %c0_i32 = arith.constant 0 : i32
    %c0_i32_0 = arith.constant 0 : i32
    %c0_i32_1 = arith.constant 0 : i32
    return %c0_i32, %c0_i32_0 : i32, i32
  }
  func.func @transform_23(%arg0: i32) -> (i32, i32) {
    %c0_i32 = arith.constant 0 : i32
    %c0_i32_0 = arith.constant 0 : i32
    %c0_i32_1 = arith.constant 0 : i32
    return %c0_i32, %c0_i32_0 : i32, i32
  }
  func.func @transform_24(%arg0: i32) -> (i32, i32) {
    %c0_i32 = arith.constant 0 : i32
    %c0_i32_0 = arith.constant 0 : i32
    %c0_i32_1 = arith.constant 0 : i32
    return %c0_i32, %c0_i32_0 : i32, i32
  }
  func.func @transform_25(%arg0: i32) -> (i32, i32) {
    %c0_i32 = arith.constant 0 : i32
    %c0_i32_0 = arith.constant 0 : i32
    %c0_i32_1 = arith.constant 0 : i32
    return %c0_i32, %c0_i32_0 : i32, i32
  }
  func.func @transform_26(%arg0: i32) -> (i32, i32) {
    %c0_i32 = arith.constant 0 : i32
    %c0_i32_0 = arith.constant 0 : i32
    %c0_i32_1 = arith.constant 0 : i32
    return %c0_i32, %c0_i32_0 : i32, i32
  }
  func.func @transform_27(%arg0: i32) -> (i32, i32) {
    %c0_i32 = arith.constant 0 : i32
    %c0_i32_0 = arith.constant 0 : i32
    %c0_i32_1 = arith.constant 0 : i32
    return %c0_i32, %c0_i32_0 : i32, i32
  }
  func.func @transform_28(%arg0: i32) -> (i32, i32) {
    %c0_i32 = arith.constant 0 : i32
    %c0_i32_0 = arith.constant 0 : i32
    %c0_i32_1 = arith.constant 0 : i32
    return %c0_i32, %c0_i32_0 : i32, i32
  }
  func.func @transform_29(%arg0: i32) -> (i32, i32) {
    %c0_i32 = arith.constant 0 : i32
    %c0_i32_0 = arith.constant 0 : i32
    %c0_i32_1 = arith.constant 0 : i32
    return %c0_i32, %c0_i32_0 : i32, i32
  }
  func.func @transform_30(%arg0: i32) -> (i32, i32) {
    %c0_i32 = arith.constant 0 : i32
    %c0_i32_0 = arith.constant 0 : i32
    %c0_i32_1 = arith.constant 0 : i32
    return %c0_i32, %c0_i32_0 : i32, i32
  }
  func.func @transform_31(%arg0: i32) -> (i32, i32) {
    %c0_i32 = arith.constant 0 : i32
    %c0_i32_0 = arith.constant 0 : i32
    %c0_i32_1 = arith.constant 0 : i32
    return %c0_i32, %c0_i32_0 : i32, i32
  }
  func.func @transform_32(%arg0: i32) -> (i32, i32) {
    %c0_i32 = arith.constant 0 : i32
    %c0_i32_0 = arith.constant 0 : i32
    %c0_i32_1 = arith.constant 0 : i32
    return %c0_i32, %c0_i32_0 : i32, i32
  }
  func.func @transform_33(%arg0: i32) -> (i32, i32) {
    %c0_i32 = arith.constant 0 : i32
    %c0_i32_0 = arith.constant 0 : i32
    %c0_i32_1 = arith.constant 0 : i32
    return %c0_i32, %c0_i32_0 : i32, i32
  }
  func.func @transform_34(%arg0: i32) -> (i32, i32) {
    %c0_i32 = arith.constant 0 : i32
    %c0_i32_0 = arith.constant 0 : i32
    %c0_i32_1 = arith.constant 0 : i32
    return %c0_i32, %c0_i32_0 : i32, i32
  }
  func.func @transform_35(%arg0: i32) -> (i32, i32) {
    %c0_i32 = arith.constant 0 : i32
    %c0_i32_0 = arith.constant 0 : i32
    %c0_i32_1 = arith.constant 0 : i32
    return %c0_i32, %c0_i32_0 : i32, i32
  }
  func.func @transform_36(%arg0: i32) -> (i32, i32) {
    %c0_i32 = arith.constant 0 : i32
    %c0_i32_0 = arith.constant 0 : i32
    %c0_i32_1 = arith.constant 0 : i32
    return %c0_i32, %c0_i32_0 : i32, i32
  }
  func.func @transform_37(%arg0: i32) -> (i32, i32) {
    %c0_i32 = arith.constant 0 : i32
    %c0_i32_0 = arith.constant 0 : i32
    %c0_i32_1 = arith.constant 0 : i32
    return %c0_i32, %c0_i32_0 : i32, i32
  }
  func.func @transform_38(%arg0: i32) -> (i32, i32) {
    %c0_i32 = arith.constant 0 : i32
    %c0_i32_0 = arith.constant 0 : i32
    %c0_i32_1 = arith.constant 0 : i32
    return %c0_i32, %c0_i32_0 : i32, i32
  }
  func.func @transform_39(%arg0: i32) -> (i32, i32) {
    %c0_i32 = arith.constant 0 : i32
    %c0_i32_0 = arith.constant 0 : i32
    %c0_i32_1 = arith.constant 0 : i32
    return %c0_i32, %c0_i32_0 : i32, i32
  }
  func.func @transform_40(%arg0: i32) -> (i32, i32) {
    %c0_i32 = arith.constant 0 : i32
    %c0_i32_0 = arith.constant 0 : i32
    %c0_i32_1 = arith.constant 0 : i32
    return %c0_i32, %c0_i32_0 : i32, i32
  }
  func.func @transform_41(%arg0: i32) -> (i32, i32) {
    %c0_i32 = arith.constant 0 : i32
    %c0_i32_0 = arith.constant 0 : i32
    %c0_i32_1 = arith.constant 0 : i32
    return %c0_i32, %c0_i32_0 : i32, i32
  }
  func.func @transform_42(%arg0: i32) -> (i32, i32) {
    %c0_i32 = arith.constant 0 : i32
    %c0_i32_0 = arith.constant 0 : i32
    %c0_i32_1 = arith.constant 0 : i32
    return %c0_i32, %c0_i32_0 : i32, i32
  }
  func.func @transform_43(%arg0: i32) -> (i32, i32) {
    %c0_i32 = arith.constant 0 : i32
    %c0_i32_0 = arith.constant 0 : i32
    %c0_i32_1 = arith.constant 0 : i32
    return %c0_i32, %c0_i32_0 : i32, i32
  }
  func.func @transform_44(%arg0: i32) -> (i32, i32) {
    %c0_i32 = arith.constant 0 : i32
    %c0_i32_0 = arith.constant 0 : i32
    %c0_i32_1 = arith.constant 0 : i32
    return %c0_i32, %c0_i32_0 : i32, i32
  }
  func.func @transform_45(%arg0: i32) -> (i32, i32) {
    %c0_i32 = arith.constant 0 : i32
    %c0_i32_0 = arith.constant 0 : i32
    %c0_i32_1 = arith.constant 0 : i32
    return %c0_i32, %c0_i32_0 : i32, i32
  }
  func.func @transform_46(%arg0: i32) -> (i32, i32) {
    %c0_i32 = arith.constant 0 : i32
    %c0_i32_0 = arith.constant 0 : i32
    %c0_i32_1 = arith.constant 0 : i32
    return %c0_i32, %c0_i32_0 : i32, i32
  }
  func.func @transform_47(%arg0: i32) -> (i32, i32) {
    %c0_i32 = arith.constant 0 : i32
    %c0_i32_0 = arith.constant 0 : i32
    %c0_i32_1 = arith.constant 0 : i32
    return %c0_i32, %c0_i32_0 : i32, i32
  }
  func.func @transform_48(%arg0: i32) -> (i32, i32) {
    %c0_i32 = arith.constant 0 : i32
    %c0_i32_0 = arith.constant 0 : i32
    %c0_i32_1 = arith.constant 0 : i32
    return %c0_i32, %c0_i32_0 : i32, i32
  }
  func.func @transform_49(%arg0: i32) -> (i32, i32) {
    %c0_i32 = arith.constant 0 : i32
    %c0_i32_0 = arith.constant 0 : i32
    %c0_i32_1 = arith.constant 0 : i32
    return %c0_i32, %c0_i32_0 : i32, i32
  }
  func.func @transform_50(%arg0: i32) -> (i32, i32) {
    %c0_i32 = arith.constant 0 : i32
    %c0_i32_0 = arith.constant 0 : i32
    %c0_i32_1 = arith.constant 0 : i32
    return %c0_i32, %c0_i32_0 : i32, i32
  }
  func.func @transform_51(%arg0: i32) -> (i32, i32) {
    %c0_i32 = arith.constant 0 : i32
    %c0_i32_0 = arith.constant 0 : i32
    %c0_i32_1 = arith.constant 0 : i32
    return %c0_i32, %c0_i32_0 : i32, i32
  }
  func.func @transform_52(%arg0: i32) -> (i32, i32) {
    %c0_i32 = arith.constant 0 : i32
    %c0_i32_0 = arith.constant 0 : i32
    %c0_i32_1 = arith.constant 0 : i32
    return %c0_i32, %c0_i32_0 : i32, i32
  }
  func.func @transform_53(%arg0: i32) -> (i32, i32) {
    %c0_i32 = arith.constant 0 : i32
    %c0_i32_0 = arith.constant 0 : i32
    %c0_i32_1 = arith.constant 0 : i32
    return %c0_i32, %c0_i32_0 : i32, i32
  }
  func.func @transform_54(%arg0: i32) -> (i32, i32) {
    %c0_i32 = arith.constant 0 : i32
    %c0_i32_0 = arith.constant 0 : i32
    %c0_i32_1 = arith.constant 0 : i32
    return %c0_i32, %c0_i32_0 : i32, i32
  }
  func.func @transform_55(%arg0: i32) -> (i32, i32) {
    %c0_i32 = arith.constant 0 : i32
    %c0_i32_0 = arith.constant 0 : i32
    %c0_i32_1 = arith.constant 0 : i32
    return %c0_i32, %c0_i32_0 : i32, i32
  }
  func.func @transform_56(%arg0: i32) -> (i32, i32) {
    %c0_i32 = arith.constant 0 : i32
    %c0_i32_0 = arith.constant 0 : i32
    %c0_i32_1 = arith.constant 0 : i32
    return %c0_i32, %c0_i32_0 : i32, i32
  }
  func.func @transform_57(%arg0: i32) -> (i32, i32) {
    %c0_i32 = arith.constant 0 : i32
    %c0_i32_0 = arith.constant 0 : i32
    %c0_i32_1 = arith.constant 0 : i32
    return %c0_i32, %c0_i32_0 : i32, i32
  }
  func.func @transform_58(%arg0: i32) -> (i32, i32) {
    %c0_i32 = arith.constant 0 : i32
    %c0_i32_0 = arith.constant 0 : i32
    %c0_i32_1 = arith.constant 0 : i32
    return %c0_i32, %c0_i32_0 : i32, i32
  }
  func.func @transform_59(%arg0: i32) -> (i32, i32) {
    %c0_i32 = arith.constant 0 : i32
    %c0_i32_0 = arith.constant 0 : i32
    %c0_i32_1 = arith.constant 0 : i32
    return %c0_i32, %c0_i32_0 : i32, i32
  }
  func.func @transform_60(%arg0: i32) -> (i32, i32) {
    %c0_i32 = arith.constant 0 : i32
    %c0_i32_0 = arith.constant 0 : i32
    %c0_i32_1 = arith.constant 0 : i32
    return %c0_i32, %c0_i32_0 : i32, i32
  }
  func.func @transform_61(%arg0: i32) -> (i32, i32) {
    %c0_i32 = arith.constant 0 : i32
    %c0_i32_0 = arith.constant 0 : i32
    %c0_i32_1 = arith.constant 0 : i32
    return %c0_i32, %c0_i32_0 : i32, i32
  }
  func.func @transform_62(%arg0: i32) -> (i32, i32) {
    %c0_i32 = arith.constant 0 : i32
    %c0_i32_0 = arith.constant 0 : i32
    %c0_i32_1 = arith.constant 0 : i32
    return %c0_i32, %c0_i32_0 : i32, i32
  }
  func.func @transform_63(%arg0: i32) -> (i32, i32) {
    %c0_i32 = arith.constant 0 : i32
    %c0_i32_0 = arith.constant 0 : i32
    %c0_i32_1 = arith.constant 0 : i32
    return %c0_i32, %c0_i32_0 : i32, i32
  }
  func.func @transform_64(%arg0: i32) -> (i32, i32) {
    %c0_i32 = arith.constant 0 : i32
    %c0_i32_0 = arith.constant 0 : i32
    %c0_i32_1 = arith.constant 0 : i32
    return %c0_i32, %c0_i32_0 : i32, i32
  }
  func.func @transform_65(%arg0: i32) -> (i32, i32) {
    %c0_i32 = arith.constant 0 : i32
    %c0_i32_0 = arith.constant 0 : i32
    %c0_i32_1 = arith.constant 0 : i32
    return %c0_i32, %c0_i32_0 : i32, i32
  }
  func.func @transform_66(%arg0: i32) -> (i32, i32) {
    %c0_i32 = arith.constant 0 : i32
    %c0_i32_0 = arith.constant 0 : i32
    %c0_i32_1 = arith.constant 0 : i32
    return %c0_i32, %c0_i32_0 : i32, i32
  }
  func.func @transform_67(%arg0: i32) -> (i32, i32) {
    %c0_i32 = arith.constant 0 : i32
    %c0_i32_0 = arith.constant 0 : i32
    %c0_i32_1 = arith.constant 0 : i32
    return %c0_i32, %c0_i32_0 : i32, i32
  }
  func.func @transform_68(%arg0: i32) -> (i32, i32) {
    %c0_i32 = arith.constant 0 : i32
    %c0_i32_0 = arith.constant 0 : i32
    %c0_i32_1 = arith.constant 0 : i32
    return %c0_i32, %c0_i32_0 : i32, i32
  }
  func.func @transform_69(%arg0: i32) -> (i32, i32) {
    %c0_i32 = arith.constant 0 : i32
    %c0_i32_0 = arith.constant 0 : i32
    %c0_i32_1 = arith.constant 0 : i32
    return %c0_i32, %c0_i32_0 : i32, i32
  }
  func.func @transform_70(%arg0: i32) -> (i32, i32) {
    %c0_i32 = arith.constant 0 : i32
    %c0_i32_0 = arith.constant 0 : i32
    %c0_i32_1 = arith.constant 0 : i32
    return %c0_i32, %c0_i32_0 : i32, i32
  }
  func.func @transform_71(%arg0: i32) -> (i32, i32) {
    %c0_i32 = arith.constant 0 : i32
    %c0_i32_0 = arith.constant 0 : i32
    %c0_i32_1 = arith.constant 0 : i32
    return %c0_i32, %c0_i32_0 : i32, i32
  }
  func.func @transform_72(%arg0: i32) -> (i32, i32) {
    %c0_i32 = arith.constant 0 : i32
    %c0_i32_0 = arith.constant 0 : i32
    %c0_i32_1 = arith.constant 0 : i32
    return %c0_i32, %c0_i32_0 : i32, i32
  }
  func.func @transform_73(%arg0: i32) -> (i32, i32) {
    %c0_i32 = arith.constant 0 : i32
    %c0_i32_0 = arith.constant 0 : i32
    %c0_i32_1 = arith.constant 0 : i32
    return %c0_i32, %c0_i32_0 : i32, i32
  }
  func.func @transform_74(%arg0: i32) -> (i32, i32) {
    %c0_i32 = arith.constant 0 : i32
    %c0_i32_0 = arith.constant 0 : i32
    %c0_i32_1 = arith.constant 0 : i32
    return %c0_i32, %c0_i32_0 : i32, i32
  }
  func.func @transform_75(%arg0: i32) -> (i32, i32) {
    %c0_i32 = arith.constant 0 : i32
    %c0_i32_0 = arith.constant 0 : i32
    %c0_i32_1 = arith.constant 0 : i32
    return %c0_i32, %c0_i32_0 : i32, i32
  }
  func.func @transform_76(%arg0: i32) -> (i32, i32) {
    %c0_i32 = arith.constant 0 : i32
    %c0_i32_0 = arith.constant 0 : i32
    %c0_i32_1 = arith.constant 0 : i32
    return %c0_i32, %c0_i32_0 : i32, i32
  }
  func.func @transform_77(%arg0: i32) -> (i32, i32) {
    %c0_i32 = arith.constant 0 : i32
    %c0_i32_0 = arith.constant 0 : i32
    %c0_i32_1 = arith.constant 0 : i32
    return %c0_i32, %c0_i32_0 : i32, i32
  }
  func.func @transform_78(%arg0: i32) -> (i32, i32, i32) {
    %c0_i32 = arith.constant 0 : i32
    %c0_i32_0 = arith.constant 0 : i32
    %c0_i32_1 = arith.constant 0 : i32
    return %arg0, %c0_i32, %c0_i32_0 : i32, i32, i32
  }
}

</mosaic_0001>

<llo_original>
// kernel: prose_2to1_fwd.1
$region0: #{prose_2to1_fwd.1}
  #allocation0 [shape = 'u32[]', space=smem, size = 0x4, offset = 0x4, fixed_abs, tag = 'smem constant byte address 0x4 - core index']
  #allocation1 [shape = 'u32[72,128]{1,0:T(1,128)}', space=vmem, size = 0x9000, scoped, tag = 'internal scratch']
  %s0 = inlined_call_operand.smem [shape: u32[79], index: -1, kind: input, shape index: {}]
  %s1 = sld [smem:[%s0]]
  %s2 = scalar_lea.smem %s0, 1
  %s3 = sld [smem:[%s2]]
  %s4 = scalar_lea.smem %s0, 2
  %s5 = sld [smem:[%s4]]
  %s6 = scalar_lea.smem %s0, 3
  %s7 = sld [smem:[%s6]]
  %s8 = scalar_lea.smem %s0, 4
  %s9 = sld [smem:[%s8]]
  %s10 = scalar_lea.smem %s0, 5
  %s11 = sld [smem:[%s10]]
  %s12 = scalar_lea.smem %s0, 6
  %s13 = sld [smem:[%s12]]
  %s14 = scalar_lea.smem %s0, 7
  %s15 = sld [smem:[%s14]]
  %s16 = scalar_lea.smem %s0, 8
  %s17 = sld [smem:[%s16]]
  %s18 = scalar_lea.smem %s0, 9
  %s19 = sld [smem:[%s18]]
  %s20 = scalar_lea.smem %s0, 10
  %s21 = sld [smem:[%s20]]
  %s22 = scalar_lea.smem %s0, 11
  %s23 = sld [smem:[%s22]]
  %s24 = scalar_lea.smem %s0, 12
  %s25 = sld [smem:[%s24]]
  %s26 = scalar_lea.smem %s0, 13
  %s27 = sld [smem:[%s26]]
  %s28 = scalar_lea.smem %s0, 14
  %s29 = sld [smem:[%s28]]
  %s30 = scalar_lea.smem %s0, 15
  %s31 = sld [smem:[%s30]]
  %s32 = scalar_lea.smem %s0, 16
  %s33 = sld [smem:[%s32]]
  %s34 = scalar_lea.smem %s0, 17
  %s35 = sld [smem:[%s34]]
  %s36 = scalar_lea.smem %s0, 18
  %s37 = sld [smem:[%s36]]
  %s38 = scalar_lea.smem %s0, 19
  %s39 = sld [smem:[%s38]]
  %s40 = scalar_lea.smem %s0, 20
  %s41 = sld [smem:[%s40]]
  %s42 = scalar_lea.smem %s0, 21
  %s43 = sld [smem:[%s42]]
  %s44 = scalar_lea.smem %s0, 22
  %s45 = sld [smem:[%s44]]
  %s46 = scalar_lea.smem %s0, 23
  %s47 = sld [smem:[%s46]]
  %s48 = scalar_lea.smem %s0, 24
  %s49 = sld [smem:[%s48]]
  %s50 = scalar_lea.smem %s0, 25
  %s51 = sld [smem:[%s50]]
  %s52 = scalar_lea.smem %s0, 26
  %s53 = sld [smem:[%s52]]
  %s54 = scalar_lea.smem %s0, 27
  %s55 = sld [smem:[%s54]]
  %s56 = scalar_lea.smem %s0, 28
  %s57 = sld [smem:[%s56]]
  %s58 = scalar_lea.smem %s0, 29
  %s59 = sld [smem:[%s58]]
  %s60 = scalar_lea.smem %s0, 30
  %s61 = sld [smem:[%s60]]
  %s62 = scalar_lea.smem %s0, 31
  %s63 = sld [smem:[%s62]]
  %s64 = scalar_lea.smem %s0, 32
  %s65 = sld [smem:[%s64]]
  %s66 = scalar_lea.smem %s0, 33
  %s67 = sld [smem:[%s66]]
  %s68 = scalar_lea.smem %s0, 34
  %s69 = sld [smem:[%s68]]
  %s70 = scalar_lea.smem %s0, 35
  %s71 = sld [smem:[%s70]]
  %s72 = scalar_lea.smem %s0, 36
  %s73 = sld [smem:[%s72]]
  %s74 = scalar_lea.smem %s0, 37
  %s75 = sld [smem:[%s74]]
  %s76 = scalar_lea.smem %s0, 38
  %s77 = sld [smem:[%s76]]
  %s78 = scalar_lea.smem %s0, 39
  %s79 = sld [smem:[%s78]]
  %s80 = scalar_lea.smem %s0, 40
  %s81 = sld [smem:[%s80]]
  %s82 = scalar_lea.smem %s0, 41
  %s83 = sld [smem:[%s82]]
  %s84 = scalar_lea.smem %s0, 42
  %s85 = sld [smem:[%s84]]
  %s86 = scalar_lea.smem %s0, 43
  %s87 = sld [smem:[%s86]]
  %s88 = scalar_lea.smem %s0, 44
  %s89 = sld [smem:[%s88]]
  %s90 = scalar_lea.smem %s0, 45
  %s91 = sld [smem:[%s90]]
  %s92 = scalar_lea.smem %s0, 46
  %s93 = sld [smem:[%s92]]
  %s94 = scalar_lea.smem %s0, 47
  %s95 = sld [smem:[%s94]]
  %s96 = scalar_lea.smem %s0, 48
  %s97 = sld [smem:[%s96]]
  %s98 = scalar_lea.smem %s0, 49
  %s99 = sld [smem:[%s98]]
  %s100 = scalar_lea.smem %s0, 50
  %s101 = sld [smem:[%s100]]
  %s102 = scalar_lea.smem %s0, 51
  %s103 = sld [smem:[%s102]]
  %s104 = scalar_lea.smem %s0, 52
  %s105 = sld [smem:[%s104]]
  %s106 = scalar_lea.smem %s0, 53
  %s107 = sld [smem:[%s106]]
  %s108 = scalar_lea.smem %s0, 54
  %s109 = sld [smem:[%s108]]
  %s110 = scalar_lea.smem %s0, 55
  %s111 = sld [smem:[%s110]]
  %s112 = scalar_lea.smem %s0, 56
  %s113 = sld [smem:[%s112]]
  %s114 = scalar_lea.smem %s0, 57
  %s115 = sld [smem:[%s114]]
  %s116 = scalar_lea.smem %s0, 58
  %s117 = sld [smem:[%s116]]
  %s118 = scalar_lea.smem %s0, 59
  %s119 = sld [smem:[%s118]]
  %s120 = scalar_lea.smem %s0, 60
  %s121 = sld [smem:[%s120]]
  %s122 = scalar_lea.smem %s0, 61
  %s123 = sld [smem:[%s122]]
  %s124 = scalar_lea.smem %s0, 62
  %s125 = sld [smem:[%s124]]
  %s126 = scalar_lea.smem %s0, 63
  %s127 = sld [smem:[%s126]]
  %s128 = scalar_lea.smem %s0, 64
  %s129 = sld [smem:[%s128]]
  %s130 = scalar_lea.smem %s0, 65
  %s131 = sld [smem:[%s130]]
  %s132 = scalar_lea.smem %s0, 66
  %s133 = sld [smem:[%s132]]
  %s134 = scalar_lea.smem %s0, 67
  %s135 = sld [smem:[%s134]]
  %s136 = scalar_lea.smem %s0, 68
  %s137 = sld [smem:[%s136]]
  %s138 = scalar_lea.smem %s0, 69
  %s139 = sld [smem:[%s138]]
  %s140 = scalar_lea.smem %s0, 70
  %s141 = sld [smem:[%s140]]
  %s142 = scalar_lea.smem %s0, 71
  %s143 = sld [smem:[%s142]]
  %s144 = scalar_lea.smem %s0, 72
  %s145 = sld [smem:[%s144]]
  %s146 = scalar_lea.smem %s0, 73
  %s147 = sld [smem:[%s146]]
  %s148 = scalar_lea.smem %s0, 74
  %s149 = sld [smem:[%s148]]
  %s150 = scalar_lea.smem %s0, 75
  %s151 = sld [smem:[%s150]]
  %s152 = scalar_lea.smem %s0, 76
  %s153 = sld [smem:[%s152]]
  %s154 = scalar_lea.smem %s0, 77
  %s155 = sld [smem:[%s154]]
  %s156 = scalar_lea.smem %s0, 78
  %s157 = sld [smem:[%s156]]
  %s158 = sld [smem:[#allocation0]]
  $region485: #{prose_2to1_fwd.1} parent=0
    _
  %s160 = ssub.s32 1, %s158
  %s161 = scalar_select 0, %s160, %s158
  $region1: #{prose_2to1_fwd.1} parent=0
    #allocation2 [shape = 'u8[512]{0}', space=vmem, size = 0x400, scoped, tag = 'input window, operand 24, single buffered']
    #allocation3 [shape = 's32[2]{0}', space=sflag, size = 0x8, scoped, tag = 'scoped memory for prose_2to1_fwd.1']
    #allocation4 [shape = 'u8[512]{0}', space=vmem, size = 0x400, scoped, tag = 'input window, operand 25, single buffered']
    #allocation5 [shape = 's32[1]{0}', space=sflag, size = 0x4, scoped, tag = 'scoped memory for prose_2to1_fwd.1']
    #allocation6 [shape = 'u8[512]{0}', space=vmem, size = 0x400, scoped, tag = 'input window, operand 28, single buffered']
    #allocation7 [shape = 'u8[512]{0}', space=vmem, size = 0x400, scoped, tag = 'input window, operand 29, single buffered']
    #allocation8 [shape = 's32[1]{0}', space=sflag, size = 0x4, scoped, tag = 'scoped memory for prose_2to1_fwd.1']
    #allocation9 [shape = 'u8[512]{0}', space=vmem, size = 0x400, scoped, tag = 'input window, operand 30, single buffered']
    #allocation10 [shape = 'u8[512]{0}', space=vmem, size = 0x400, scoped, tag = 'input window, operand 31, single buffered']
    #allocation11 [shape = 's32[1]{0}', space=sflag, size = 0x4, scoped, tag = 'scoped memory for prose_2to1_fwd.1']
    #allocation12 [shape = 'u8[512]{0}', space=vmem, size = 0x400, scoped, tag = 'input window, operand 32, single buffered']
    #allocation13 [shape = 'u8[512]{0}', space=vmem, size = 0x400, scoped, tag = 'input window, operand 33, single buffered']
    #allocation14 [shape = 's32[1]{0}', space=sflag, size = 0x4, scoped, tag = 'scoped memory for prose_2to1_fwd.1']
    #allocation15 [shape = 'u8[512]{0}', space=vmem, size = 0x400, scoped, tag = 'input window, operand 34, single buffered']
    #allocation16 [shape = 'u8[512]{0}', space=vmem, size = 0x400, scoped, tag = 'input window, operand 35, single buffered']
    #allocation17 [shape = 's32[1]{0}', space=sflag, size = 0x4, scoped, tag = 'scoped memory for prose_2to1_fwd.1']
    #allocation18 [shape = 'u8[512]{0}', space=vmem, size = 0x400, scoped, tag = 'input window, operand 38, single buffered']
    #allocation19 [shape = 'u8[512]{0}', space=vmem, size = 0x400, scoped, tag = 'input window, operand 39, single buffered']
    #allocation20 [shape = 's32[1]{0}', space=sflag, size = 0x4, scoped, tag = 'scoped memory for prose_2to1_fwd.1']
    #allocation21 [shape = 'u8[512]{0}', space=vmem, size = 0x400, scoped, tag = 'input window, operand 41, single buffered']
    #allocation22 [shape = 'u8[512]{0}', space=vmem, size = 0x400, scoped, tag = 'input window, operand 42, single buffered']
    #allocation23 [shape = 's32[1]{0}', space=sflag, size = 0x4, scoped, tag = 'scoped memory for prose_2to1_fwd.1']
    #allocation24 [shape = 'u8[512]{0}', space=vmem, size = 0x400, scoped, tag = 'input window, operand 43, single buffered']
    #allocation25 [shape = 'u8[512]{0}', space=vmem, size = 0x400, scoped, tag = 'input window, operand 48, single buffered']
    #allocation26 [shape = 's32[1]{0}', space=sflag, size = 0x4, scoped, tag = 'scoped memory for prose_2to1_fwd.1']
    #allocation27 [shape = 'u8[512]{0}', space=vmem, size = 0x400, scoped, tag = 'input window, operand 50, single buffered']
    #allocation28 [shape = 'u8[512]{0}', space=vmem, size = 0x400, scoped, tag = 'input window, operand 51, single buffered']
    #allocation29 [shape = 's32[1]{0}', space=sflag, size = 0x4, scoped, tag = 'scoped memory for prose_2to1_fwd.1']
    #allocation30 [shape = 'u8[512]{0}', space=vmem, size = 0x400, scoped, tag = 'input window, operand 52, single buffered']
    #allocation31 [shape = 'u8[512]{0}', space=vmem, size = 0x400, scoped, tag = 'input window, operand 54, single buffered']
    #allocation32 [shape = 's32[1]{0}', space=sflag, size = 0x4, scoped, tag = 'scoped memory for prose_2to1_fwd.1']
    #allocation33 [shape = 'u8[512]{0}', space=vmem, size = 0x400, scoped, tag = 'input window, operand 55, single buffered']
    #allocation34 [shape = 'u8[512]{0}', space=vmem, size = 0x400, scoped, tag = 'input window, operand 58, single buffered']
    #allocation35 [shape = 's32[1]{0}', space=sflag, size = 0x4, scoped, tag = 'scoped memory for prose_2to1_fwd.1']
    #allocation36 [shape = 'u8[512]{0}', space=vmem, size = 0x400, scoped, tag = 'input window, operand 59, single buffered']
    #allocation37 [shape = 'u8[512]{0}', space=vmem, size = 0x400, scoped, tag = 'input window, operand 62, single buffered']
    #allocation38 [shape = 's32[1]{0}', space=sflag, size = 0x4, scoped, tag = 'scoped memory for prose_2to1_fwd.1']
    #allocation39 [shape = 'u8[512]{0}', space=vmem, size = 0x400, scoped, tag = 'input window, operand 63, single buffered']
    #allocation40 [shape = 'u8[512]{0}', space=vmem, size = 0x400, scoped, tag = 'input window, operand 64, single buffered']
    #allocation41 [shape = 's32[1]{0}', space=sflag, size = 0x4, scoped, tag = 'scoped memory for prose_2to1_fwd.1']
    #allocation42 [shape = 'u8[512]{0}', space=vmem, size = 0x400, scoped, tag = 'input window, operand 65, single buffered']
    #allocation43 [shape = 'u8[512]{0}', space=vmem, size = 0x400, scoped, tag = 'input window, operand 66, single buffered']
    #allocation44 [shape = 's32[1]{0}', space=sflag, size = 0x4, scoped, tag = 'scoped memory for prose_2to1_fwd.1']
    #allocation45 [shape = 'u8[512]{0}', space=vmem, size = 0x400, scoped, tag = 'input window, operand 67, single buffered']
    #allocation46 [shape = 'u8[512]{0}', space=vmem, size = 0x400, scoped, tag = 'input window, operand 70, single buffered']
    #allocation47 [shape = 's32[1]{0}', space=sflag, size = 0x4, scoped, tag = 'scoped memory for prose_2to1_fwd.1']
    #allocation48 [shape = 'u8[512]{0}', space=vmem, size = 0x400, scoped, tag = 'input window, operand 71, single buffered']
    #allocation49 [shape = 'u8[512]{0}', space=vmem, size = 0x400, scoped, tag = 'input window, operand 74, single buffered']
    #allocation50 [shape = 's32[1]{0}', space=sflag, size = 0x4, scoped, tag = 'scoped memory for prose_2to1_fwd.1']
    #allocation51 [shape = 'u8[512]{0}', space=vmem, size = 0x400, scoped, tag = 'input window, operand 75, single buffered']
    #allocation52 [shape = 'u8[512]{0}', space=vmem, size = 0x400, scoped, tag = 'input window, operand 76, single buffered']
    #allocation53 [shape = 's32[1]{0}', space=sflag, size = 0x4, scoped, tag = 'scoped memory for prose_2to1_fwd.1']
    #allocation54 [shape = 'u8[512]{0}', space=vmem, size = 0x400, scoped, tag = 'input window, operand 77, single buffered']
    %162 = vsyncpa [#allocation3], 0
    %163 = vsyncpa [#allocation5], 0
    %164 = vsyncpa [#allocation8], 0
    %165 = vsyncpa [#allocation11], 0
    %166 = vsyncpa [#allocation14], 0
    %167 = vsyncpa [#allocation17], 0
    %168 = vsyncpa [#allocation20], 0
    %169 = vsyncpa [#allocation23], 0
    %170 = vsyncpa [#allocation26], 0
    %171 = vsyncpa [#allocation29], 0
    %172 = vsyncpa [#allocation32], 0
    %173 = vsyncpa [#allocation35], 0
    %174 = vsyncpa [#allocation38], 0
    %175 = vsyncpa [#allocation41], 0
    %176 = vsyncpa [#allocation44], 0
    %177 = vsyncpa [#allocation47], 0
    %178 = vsyncpa [#allocation50], 0
    %179 = vsyncpa [#allocation53], 0
    loop: start=0, step=1, limit=4
    $region2: #{prose_2to1_fwd.1} parent=1 // loop_pre_header
      _
    $region3: #{prose_2to1_fwd.1} parent=1 // loop_header
      %s181 = sphi 0, %s185
      %p182 = scmp.ge.s32.totalorder %s181, 4
      %s191 = sphi 0, %s193
      %s194 = sphi 0, %s191
      %s195 = sphi 0, %s194
      %s211 = sphi 0, %s195
      %s217 = sphi 0, %s219
      %s220 = sphi 0, %s217
      %s221 = sphi 0, %s220
      %s237 = sphi 0, %s221
      %s243 = sphi 0, %s245
      %s246 = sphi 0, %s243
      %s247 = sphi 0, %s246
      %s263 = sphi 0, %s247
      %s269 = sphi 0, %s271
      %s272 = sphi 0, %s269
      %s273 = sphi 0, %s272
      %s289 = sphi 0, %s273
      %s295 = sphi 0, %s297
      %s298 = sphi 0, %s295
      %s299 = sphi 0, %s298
      %s315 = sphi 0, %s299
      %s321 = sphi 0, %s323
      %s324 = sphi 0, %s321
      %s325 = sphi 0, %s324
      %s341 = sphi 0, %s325
      %s345 = sphi 0, %s345
      %s347 = sphi 0, %s345
      %s348 = sphi 0, %s347
      %s362 = sphi 0, %s348
      %s366 = sphi 0, %s366
      %s368 = sphi 0, %s366
      %s369 = sphi 0, %s368
      %s383 = sphi 0, %s369
      %s387 = sphi 0, %s387
      %s389 = sphi 0, %s387
      %s390 = sphi 0, %s389
      %s404 = sphi 0, %s390
      %s408 = sphi 0, %s408
      %s410 = sphi 0, %s408
      %s411 = sphi 0, %s410
      %s425 = sphi 0, %s411
      %s429 = sphi 0, %s429
      %s431 = sphi 0, %s429
      %s432 = sphi 0, %s431
      %s446 = sphi 0, %s432
      %s450 = sphi 0, %s450
      %s452 = sphi 0, %s450
      %s453 = sphi 0, %s452
      %s467 = sphi 0, %s453
      %s471 = sphi 0, %s471
      %s473 = sphi 0, %s471
      %s474 = sphi 0, %s473
      %s488 = sphi 0, %s474
      %s492 = sphi 0, %s492
      %s494 = sphi 0, %s492
      %s495 = sphi 0, %s494
      %s509 = sphi 0, %s495
      %s513 = sphi 0, %s513
      %s515 = sphi 0, %s513
      %s516 = sphi 0, %s515
      %s530 = sphi 0, %s516
      %s534 = sphi 0, %s534
      %s536 = sphi 0, %s534
      %s537 = sphi 0, %s536
      %s551 = sphi 0, %s537
      %s555 = sphi 0, %s555
      %s557 = sphi 0, %s555
      %s558 = sphi 0, %s557
      %s572 = sphi 0, %s558
      %s576 = sphi 0, %s576
      %s578 = sphi 0, %s576
      %s579 = sphi 0, %s578
      %s593 = sphi 0, %s579
      %s597 = sphi 0, %s597
      %s599 = sphi 0, %s597
      %s600 = sphi 0, %s599
      %s614 = sphi 0, %s600
      %s618 = sphi 0, %s618
      %s620 = sphi 0, %s618
      %s621 = sphi 0, %s620
      %s635 = sphi 0, %s621
      %s639 = sphi 0, %s639
      %s641 = sphi 0, %s639
      %s642 = sphi 0, %s641
      %s656 = sphi 0, %s642
      %s660 = sphi 0, %s660
      %s662 = sphi 0, %s660
      %s663 = sphi 0, %s662
      %s677 = sphi 0, %s663
      %s681 = sphi 0, %s681
      %s683 = sphi 0, %s681
      %s684 = sphi 0, %s683
      %s698 = sphi 0, %s684
      %s702 = sphi 0, %s702
      %s704 = sphi 0, %s702
      %s705 = sphi 0, %s704
      %s719 = sphi 0, %s705
      %s723 = sphi 0, %s723
      %s725 = sphi 0, %s723
      %s726 = sphi 0, %s725
      %s740 = sphi 0, %s726
      %s744 = sphi 0, %s744
      %s746 = sphi 0, %s744
      %s747 = sphi 0, %s746
      %s761 = sphi 0, %s747
      %s765 = sphi 0, %s765
      %s767 = sphi 0, %s765
      %s768 = sphi 0, %s767
      %s782 = sphi 0, %s768
      %s786 = sphi 0, %s786
      %s788 = sphi 0, %s786
      %s789 = sphi 0, %s788
      %s803 = sphi 0, %s789
      %s807 = sphi 0, %s807
      %s809 = sphi 0, %s807
      %s810 = sphi 0, %s809
      %s824 = sphi 0, %s810
      %s828 = sphi 0, %s828
      %s830 = sphi 0, %s828
      %s831 = sphi 0, %s830
      %s845 = sphi 0, %s831
      %s849 = sphi 0, %s849
      %s851 = sphi 0, %s849
      %s852 = sphi 0, %s851
      %s866 = sphi 0, %s852
      %s870 = sphi 0, %s870
      %s872 = sphi 0, %s870
      %s873 = sphi 0, %s872
      %s887 = sphi 0, %s873
      %s891 = sphi 0, %s891
      %s893 = sphi 0, %s891
      %s894 = sphi 0, %s893
      %s908 = sphi 0, %s894
      %s912 = sphi 0, %s912
      %s914 = sphi 0, %s912
      %s915 = sphi 0, %s914
      %s929 = sphi 0, %s915
      %s933 = sphi 0, %s933
      %s935 = sphi 0, %s933
      %s936 = sphi 0, %s935
      %s950 = sphi 0, %s936
      %s954 = sphi 0, %s954
      %s956 = sphi 0, %s954
      %s957 = sphi 0, %s956
      %s971 = sphi 0, %s957
      %s975 = sphi 0, %s975
      %s977 = sphi 0, %s975
      %s978 = sphi 0, %s977
      %s992 = sphi 0, %s978
      %s996 = sphi 0, %s996
      %s998 = sphi 0, %s996
      %s999 = sphi 0, %s998
      %s1013 = sphi 0, %s999
      %s1017 = sphi 0, %s1017
      %s1019 = sphi 0, %s1017
      %s1020 = sphi 0, %s1019
      %s1034 = sphi 0, %s1020
      %s1038 = sphi 0, %s1038
      %s1040 = sphi 0, %s1038
      %s1041 = sphi 0, %s1040
      %s1055 = sphi 0, %s1041
      %s1059 = sphi 0, %s1059
      %s1061 = sphi 0, %s1059
      %s1062 = sphi 0, %s1061
      %s1076 = sphi 0, %s1062
      %s1080 = sphi 0, %s1080
      %s1082 = sphi 0, %s1080
      %s1083 = sphi 0, %s1082
      %s1097 = sphi 0, %s1083
      %s1101 = sphi 0, %s1101
      %s1103 = sphi 0, %s1101
      %s1104 = sphi 0, %s1103
      %s1118 = sphi 0, %s1104
      %s1122 = sphi 0, %s1122
      %s1124 = sphi 0, %s1122
      %s1125 = sphi 0, %s1124
      %s1139 = sphi 0, %s1125
      %s1143 = sphi 0, %s1143
      %s1145 = sphi 0, %s1143
      %s1146 = sphi 0, %s1145
      %s1160 = sphi 0, %s1146
      %s1164 = sphi 0, %s1164
      %s1166 = sphi 0, %s1164
      %s1167 = sphi 0, %s1166
      %s1181 = sphi 0, %s1167
      %s1185 = sphi 0, %s1185
      %s1187 = sphi 0, %s1185
      %s1188 = sphi 0, %s1187
      %s1202 = sphi 0, %s1188
      %s1206 = sphi 0, %s1206
      %s1208 = sphi 0, %s1206
      %s1209 = sphi 0, %s1208
      %s1223 = sphi 0, %s1209
      %s1227 = sphi 0, %s1227
      %s1229 = sphi 0, %s1227
      %s1230 = sphi 0, %s1229
      %s1244 = sphi 0, %s1230
      %s1248 = sphi 0, %s1248
      %s1250 = sphi 0, %s1248
      %s1251 = sphi 0, %s1250
      %s1265 = sphi 0, %s1251
      %s1269 = sphi 0, %s1269
      %s1271 = sphi 0, %s1269
      %s1272 = sphi 0, %s1271
      %s1286 = sphi 0, %s1272
      %s1290 = sphi 0, %s1290
      %s1292 = sphi 0, %s1290
      %s1293 = sphi 0, %s1292
      %s1307 = sphi 0, %s1293
      %s1311 = sphi 0, %s1311
      %s1313 = sphi 0, %s1311
      %s1314 = sphi 0, %s1313
      %s1328 = sphi 0, %s1314
      %s1332 = sphi 0, %s1332
      %s1334 = sphi 0, %s1332
      %s1335 = sphi 0, %s1334
      %s1349 = sphi 0, %s1335
      %s1353 = sphi 0, %s1353
      %s1355 = sphi 0, %s1353
      %s1356 = sphi 0, %s1355
      %s1370 = sphi 0, %s1356
      %s1374 = sphi 0, %s1374
      %s1376 = sphi 0, %s1374
      %s1377 = sphi 0, %s1376
      %s1391 = sphi 0, %s1377
      %s1395 = sphi 0, %s1395
      %s1397 = sphi 0, %s1395
      %s1398 = sphi 0, %s1397
      %s1412 = sphi 0, %s1398
      %s1416 = sphi 0, %s1416
      %s1418 = sphi 0, %s1416
      %s1419 = sphi 0, %s1418
      %s1433 = sphi 0, %s1419
      %s1437 = sphi 0, %s1437
      %s1439 = sphi 0, %s1437
      %s1440 = sphi 0, %s1439
      %s1454 = sphi 0, %s1440
      %s1458 = sphi 0, %s1458
      %s1460 = sphi 0, %s1458
      %s1461 = sphi 0, %s1460
      %s1475 = sphi 0, %s1461
      %s1479 = sphi 0, %s1479
      %s1481 = sphi 0, %s1479
      %s1482 = sphi 0, %s1481
      %s1496 = sphi 0, %s1482
      %s1500 = sphi 0, %s1500
      %s1502 = sphi 0, %s1500
      %s1503 = sphi 0, %s1502
      %s1517 = sphi 0, %s1503
      %s1521 = sphi 0, %s1521
      %s1523 = sphi 0, %s1521
      %s1524 = sphi 0, %s1523
      %s1538 = sphi 0, %s1524
      %s1542 = sphi 0, %s1542
      %s1544 = sphi 0, %s1542
      %s1545 = sphi 0, %s1544
      %s1559 = sphi 0, %s1545
      %s1563 = sphi 0, %s1563
      %s1565 = sphi 0, %s1563
      %s1566 = sphi 0, %s1565
      %s1580 = sphi 0, %s1566
      %s1584 = sphi 0, %s1584
      %s1586 = sphi 0, %s1584
      %s1587 = sphi 0, %s1586
      %s1601 = sphi 0, %s1587
      %s1605 = sphi 0, %s1605
      %s1607 = sphi 0, %s1605
      %s1608 = sphi 0, %s1607
      %s1622 = sphi 0, %s1608
      %s1626 = sphi 0, %s1626
      %s1628 = sphi 0, %s1626
      %s1629 = sphi 0, %s1628
      %s1643 = sphi 0, %s1629
      %s1647 = sphi 0, %s1647
      %s1649 = sphi 0, %s1647
      %s1650 = sphi 0, %s1649
      %s1664 = sphi 0, %s1650
      %s1668 = sphi 0, %s1668
      %s1670 = sphi 0, %s1668
      %s1671 = sphi 0, %s1670
      %s1685 = sphi 0, %s1671
      %s1689 = sphi 0, %s1689
      %s1691 = sphi 0, %s1689
      %s1692 = sphi 0, %s1691
      %s1706 = sphi 0, %s1692
      %s1710 = sphi 0, %s1710
      %s1712 = sphi 0, %s1710
      %s1713 = sphi 0, %s1712
      %s1727 = sphi 0, %s1713
      %s1731 = sphi 0, %s1731
      %s1733 = sphi 0, %s1731
      %s1734 = sphi 0, %s1733
      %s1748 = sphi 0, %s1734
      %s1752 = sphi 0, %s1752
      %s1754 = sphi 0, %s1752
      %s1755 = sphi 0, %s1754
      %s1769 = sphi 0, %s1755
      %s1773 = sphi 0, %s1773
      %s1775 = sphi 0, %s1773
      %s1776 = sphi 0, %s1775
      %s1790 = sphi 0, %s1776
      %s1794 = sphi 0, %s1794
      %s1796 = sphi 0, %s1794
      %s1797 = sphi 0, %s1796
      %s1811 = sphi 0, %s1797
      %s1815 = sphi 0, %s1815
      %s1817 = sphi 0, %s1815
      %s1818 = sphi 0, %s1817
      %s1832 = sphi 0, %s1818
      %s1836 = sphi 0, %s1836
      %s1838 = sphi 0, %s1836
      %s1839 = sphi 0, %s1838
      %s1853 = sphi 0, %s1839
      %s1859 = sphi 0, %s1861
      %s1862 = sphi 0, %s1859
      %s1863 = sphi 0, %s1862
      %s1879 = sphi 0, %s1863
    $region4: #{prose_2to1_fwd.1} parent=1 // loop_header_branch
      %184 = sbr.rel (%p182) target = $region8
    $region5: #{prose_2to1_fwd.1} parent=1 // loop_body
      %s186 = ssub.s32 %s181, 1
      %s187 = ssub.s32 %s181, 2
      %s188 = sadd.s32 %s181, 1
      %s189 = ssub.s32 %s181, %s188
      %p190 = scmp.eq.s32.totalorder %s189, 0
      %s192 = sadd.s32 %s191, 1
      %s193 = scalar_select %p190, %s191, %s192
      %p196 = pneg %p190
      %p197 = scmp.eq.s32.totalorder %s181, 1
      %p198 = por %p196, %p197
      %p199 = scmp.ne.s32.totalorder %s191, %s194
      %p200 = scmp.eq.s32.totalorder %s181, 0
      %p201 = por %p199, %p200
      %p202 = scmp.ne.s32.totalorder %s191, %s194
      %p203 = scmp.eq.s32.totalorder %s186, 1
      %p204 = por %p202, %p203
      %p205 = scmp.ne.s32.totalorder %s194, %s195
      %p206 = scmp.eq.s32.totalorder %s186, 0
      %p207 = por %p205, %p206
      %p208 = scmp.ne.s32.totalorder %s194, %s195
      %p209 = scmp.eq.s32.totalorder %s187, 1
      %p210 = por %p208, %p209
      %p212 = scmp.ne.s32.totalorder %s195, %s211
      %p213 = scmp.eq.s32.totalorder %s187, 0
      %p214 = por %p212, %p213
      %s215 = ssub.s32 %s181, %s188
      %p216 = scmp.eq.s32.totalorder %s215, 0
      %s218 = sadd.s32 %s217, 1
      %s219 = scalar_select %p216, %s217, %s218
      %p222 = pneg %p216
      %p223 = scmp.eq.s32.totalorder %s181, 1
      %p224 = por %p222, %p223
      %p225 = scmp.ne.s32.totalorder %s217, %s220
      %p226 = scmp.eq.s32.totalorder %s181, 0
      %p227 = por %p225, %p226
      %p228 = scmp.ne.s32.totalorder %s217, %s220
      %p229 = scmp.eq.s32.totalorder %s186, 1
      %p230 = por %p228, %p229
      %p231 = scmp.ne.s32.totalorder %s220, %s221
      %p232 = scmp.eq.s32.totalorder %s186, 0
      %p233 = por %p231, %p232
      %p234 = scmp.ne.s32.totalorder %s220, %s221
      %p235 = scmp.eq.s32.totalorder %s187, 1
      %p236 = por %p234, %p235
      %p238 = scmp.ne.s32.totalorder %s221, %s237
      %p239 = scmp.eq.s32.totalorder %s187, 0
      %p240 = por %p238, %p239
      %s241 = ssub.s32 %s181, %s188
      %p242 = scmp.eq.s32.totalorder %s241, 0
      %s244 = sadd.s32 %s243, 1
      %s245 = scalar_select %p242, %s243, %s244
      %p248 = pneg %p242
      %p249 = scmp.eq.s32.totalorder %s181, 1
      %p250 = por %p248, %p249
      %p251 = scmp.ne.s32.totalorder %s243, %s246
      %p252 = scmp.eq.s32.totalorder %s181, 0
      %p253 = por %p251, %p252
      %p254 = scmp.ne.s32.totalorder %s243, %s246
      %p255 = scmp.eq.s32.totalorder %s186, 1
      %p256 = por %p254, %p255
      %p257 = scmp.ne.s32.totalorder %s246, %s247
      %p258 = scmp.eq.s32.totalorder %s186, 0
      %p259 = por %p257, %p258
      %p260 = scmp.ne.s32.totalorder %s246, %s247
      %p261 = scmp.eq.s32.totalorder %s187, 1
      %p262 = por %p260, %p261
      %p264 = scmp.ne.s32.totalorder %s247, %s263
      %p265 = scmp.eq.s32.totalorder %s187, 0
      %p266 = por %p264, %p265
      %s267 = ssub.s32 %s181, %s188
      %p268 = scmp.eq.s32.totalorder %s267, 0
      %s270 = sadd.s32 %s269, 1
      %s271 = scalar_select %p268, %s269, %s270
      %p274 = pneg %p268
      %p275 = scmp.eq.s32.totalorder %s181, 1
      %p276 = por %p274, %p275
      %p277 = scmp.ne.s32.totalorder %s269, %s272
      %p278 = scmp.eq.s32.totalorder %s181, 0
      %p279 = por %p277, %p278
      %p280 = scmp.ne.s32.totalorder %s269, %s272
      %p281 = scmp.eq.s32.totalorder %s186, 1
      %p282 = por %p280, %p281
      %p283 = scmp.ne.s32.totalorder %s272, %s273
      %p284 = scmp.eq.s32.totalorder %s186, 0
      %p285 = por %p283, %p284
      %p286 = scmp.ne.s32.totalorder %s272, %s273
      %p287 = scmp.eq.s32.totalorder %s187, 1
      %p288 = por %p286, %p287
      %p290 = scmp.ne.s32.totalorder %s273, %s289
      %p291 = scmp.eq.s32.totalorder %s187, 0
      %p292 = por %p290, %p291
      %s293 = ssub.s32 %s181, %s188
      %p294 = scmp.eq.s32.totalorder %s293, 0
      %s296 = sadd.s32 %s295, 1
      %s297 = scalar_select %p294, %s295, %s296
      %p300 = pneg %p294
      %p301 = scmp.eq.s32.totalorder %s181, 1
      %p302 = por %p300, %p301
      %p303 = scmp.ne.s32.totalorder %s295, %s298
      %p304 = scmp.eq.s32.totalorder %s181, 0
      %p305 = por %p303, %p304
      %p306 = scmp.ne.s32.totalorder %s295, %s298
      %p307 = scmp.eq.s32.totalorder %s186, 1
      %p308 = por %p306, %p307
      %p309 = scmp.ne.s32.totalorder %s298, %s299
      %p310 = scmp.eq.s32.totalorder %s186, 0
      %p311 = por %p309, %p310
      %p312 = scmp.ne.s32.totalorder %s298, %s299
      %p313 = scmp.eq.s32.totalorder %s187, 1
      %p314 = por %p312, %p313
      %p316 = scmp.ne.s32.totalorder %s299, %s315
      %p317 = scmp.eq.s32.totalorder %s187, 0
      %p318 = por %p316, %p317
      %s319 = ssub.s32 %s181, %s188
      %p320 = scmp.eq.s32.totalorder %s319, 0
      %s322 = sadd.s32 %s321, 1
      %s323 = scalar_select %p320, %s321, %s322
      %p326 = pneg %p320
      %p327 = scmp.eq.s32.totalorder %s181, 1
      %p328 = por %p326, %p327
      %p329 = scmp.ne.s32.totalorder %s321, %s324
      %p330 = scmp.eq.s32.totalorder %s181, 0
      %p331 = por %p329, %p330
      %p332 = scmp.ne.s32.totalorder %s321, %s324
      %p333 = scmp.eq.s32.totalorder %s186, 1
      %p334 = por %p332, %p333
      %p335 = scmp.ne.s32.totalorder %s324, %s325
      %p336 = scmp.eq.s32.totalorder %s186, 0
      %p337 = por %p335, %p336
      %p338 = scmp.ne.s32.totalorder %s324, %s325
      %p339 = scmp.eq.s32.totalorder %s187, 1
      %p340 = por %p338, %p339
      %p342 = scmp.ne.s32.totalorder %s325, %s341
      %p343 = scmp.eq.s32.totalorder %s187, 0
      %p344 = por %p342, %p343
      %s346 = sadd.s32 %s345, 1
      %p349 = scmp.eq.s32.totalorder %s181, 1
      %p350 = scmp.ne.s32.totalorder %s345, %s347
      %p351 = scmp.eq.s32.totalorder %s181, 0
      %p352 = por %p350, %p351
      %p353 = scmp.ne.s32.totalorder %s345, %s347
      %p354 = scmp.eq.s32.totalorder %s186, 1
      %p355 = por %p353, %p354
      %p356 = scmp.ne.s32.totalorder %s347, %s348
      %p357 = scmp.eq.s32.totalorder %s186, 0
      %p358 = por %p356, %p357
      %p359 = scmp.ne.s32.totalorder %s347, %s348
      %p360 = scmp.eq.s32.totalorder %s187, 1
      %p361 = por %p359, %p360
      %p363 = scmp.ne.s32.totalorder %s348, %s362
      %p364 = scmp.eq.s32.totalorder %s187, 0
      %p365 = por %p363, %p364
      %s367 = sadd.s32 %s366, 1
      %p370 = scmp.eq.s32.totalorder %s181, 1
      %p371 = scmp.ne.s32.totalorder %s366, %s368
      %p372 = scmp.eq.s32.totalorder %s181, 0
      %p373 = por %p371, %p372
      %p374 = scmp.ne.s32.totalorder %s366, %s368
      %p375 = scmp.eq.s32.totalorder %s186, 1
      %p376 = por %p374, %p375
      %p377 = scmp.ne.s32.totalorder %s368, %s369
      %p378 = scmp.eq.s32.totalorder %s186, 0
      %p379 = por %p377, %p378
      %p380 = scmp.ne.s32.totalorder %s368, %s369
      %p381 = scmp.eq.s32.totalorder %s187, 1
      %p382 = por %p380, %p381
      %p384 = scmp.ne.s32.totalorder %s369, %s383
      %p385 = scmp.eq.s32.totalorder %s187, 0
      %p386 = por %p384, %p385
      %s388 = sadd.s32 %s387, 1
      %p391 = scmp.eq.s32.totalorder %s181, 1
      %p392 = scmp.ne.s32.totalorder %s387, %s389
      %p393 = scmp.eq.s32.totalorder %s181, 0
      %p394 = por %p392, %p393
      %p395 = scmp.ne.s32.totalorder %s387, %s389
      %p396 = scmp.eq.s32.totalorder %s186, 1
      %p397 = por %p395, %p396
      %p398 = scmp.ne.s32.totalorder %s389, %s390
      %p399 = scmp.eq.s32.totalorder %s186, 0
      %p400 = por %p398, %p399
      %p401 = scmp.ne.s32.totalorder %s389, %s390
      %p402 = scmp.eq.s32.totalorder %s187, 1
      %p403 = por %p401, %p402
      %p405 = scmp.ne.s32.totalorder %s390, %s404
      %p406 = scmp.eq.s32.totalorder %s187, 0
      %p407 = por %p405, %p406
      %s409 = sadd.s32 %s408, 1
      %p412 = scmp.eq.s32.totalorder %s181, 1
      %p413 = scmp.ne.s32.totalorder %s408, %s410
      %p414 = scmp.eq.s32.totalorder %s181, 0
      %p415 = por %p413, %p414
      %p416 = scmp.ne.s32.totalorder %s408, %s410
      %p417 = scmp.eq.s32.totalorder %s186, 1
      %p418 = por %p416, %p417
      %p419 = scmp.ne.s32.totalorder %s410, %s411
      %p420 = scmp.eq.s32.totalorder %s186, 0
      %p421 = por %p419, %p420
      %p422 = scmp.ne.s32.totalorder %s410, %s411
      %p423 = scmp.eq.s32.totalorder %s187, 1
      %p424 = por %p422, %p423
      %p426 = scmp.ne.s32.totalorder %s411, %s425
      %p427 = scmp.eq.s32.totalorder %s187, 0
      %p428 = por %p426, %p427
      %s430 = sadd.s32 %s429, 1
      %p433 = scmp.eq.s32.totalorder %s181, 1
      %p434 = scmp.ne.s32.totalorder %s429, %s431
      %p435 = scmp.eq.s32.totalorder %s181, 0
      %p436 = por %p434, %p435
      %p437 = scmp.ne.s32.totalorder %s429, %s431
      %p438 = scmp.eq.s32.totalorder %s186, 1
      %p439 = por %p437, %p438
      %p440 = scmp.ne.s32.totalorder %s431, %s432
      %p441 = scmp.eq.s32.totalorder %s186, 0
      %p442 = por %p440, %p441
      %p443 = scmp.ne.s32.totalorder %s431, %s432
      %p444 = scmp.eq.s32.totalorder %s187, 1
      %p445 = por %p443, %p444
      %p447 = scmp.ne.s32.totalorder %s432, %s446
      %p448 = scmp.eq.s32.totalorder %s187, 0
      %p449 = por %p447, %p448
      %s451 = sadd.s32 %s450, 1
      %p454 = scmp.eq.s32.totalorder %s181, 1
      %p455 = scmp.ne.s32.totalorder %s450, %s452
      %p456 = scmp.eq.s32.totalorder %s181, 0
      %p457 = por %p455, %p456
      %p458 = scmp.ne.s32.totalorder %s450, %s452
      %p459 = scmp.eq.s32.totalorder %s186, 1
      %p460 = por %p458, %p459
      %p461 = scmp.ne.s32.totalorder %s452, %s453
      %p462 = scmp.eq.s32.totalorder %s186, 0
      %p463 = por %p461, %p462
      %p464 = scmp.ne.s32.totalorder %s452, %s453
      %p465 = scmp.eq.s32.totalorder %s187, 1
      %p466 = por %p464, %p465
      %p468 = scmp.ne.s32.totalorder %s453, %s467
      %p469 = scmp.eq.s32.totalorder %s187, 0
      %p470 = por %p468, %p469
      %s472 = sadd.s32 %s471, 1
      %p475 = scmp.eq.s32.totalorder %s181, 1
      %p476 = scmp.ne.s32.totalorder %s471, %s473
      %p477 = scmp.eq.s32.totalorder %s181, 0
      %p478 = por %p476, %p477
      %p479 = scmp.ne.s32.totalorder %s471, %s473
      %p480 = scmp.eq.s32.totalorder %s186, 1
      %p481 = por %p479, %p480
      %p482 = scmp.ne.s32.totalorder %s473, %s474
      %p483 = scmp.eq.s32.totalorder %s186, 0
      %p484 = por %p482, %p483
      %p485 = scmp.ne.s32.totalorder %s473, %s474
      %p486 = scmp.eq.s32.totalorder %s187, 1
      %p487 = por %p485, %p486
      %p489 = scmp.ne.s32.totalorder %s474, %s488
      %p490 = scmp.eq.s32.totalorder %s187, 0
      %p491 = por %p489, %p490
      %s493 = sadd.s32 %s492, 1
      %p496 = scmp.eq.s32.totalorder %s181, 1
      %p497 = scmp.ne.s32.totalorder %s492, %s494
      %p498 = scmp.eq.s32.totalorder %s181, 0
      %p499 = por %p497, %p498
      %p500 = scmp.ne.s32.totalorder %s492, %s494
      %p501 = scmp.eq.s32.totalorder %s186, 1
      %p502 = por %p500, %p501
      %p503 = scmp.ne.s32.totalorder %s494, %s495
      %p504 = scmp.eq.s32.totalorder %s186, 0
      %p505 = por %p503, %p504
      %p506 = scmp.ne.s32.totalorder %s494, %s495
      %p507 = scmp.eq.s32.totalorder %s187, 1
      %p508 = por %p506, %p507
      %p510 = scmp.ne.s32.totalorder %s495, %s509
      %p511 = scmp.eq.s32.totalorder %s187, 0
      %p512 = por %p510, %p511
      %s514 = sadd.s32 %s513, 1
      %p517 = scmp.eq.s32.totalorder %s181, 1
      %p518 = scmp.ne.s32.totalorder %s513, %s515
      %p519 = scmp.eq.s32.totalorder %s181, 0
      %p520 = por %p518, %p519
      %p521 = scmp.ne.s32.totalorder %s513, %s515
      %p522 = scmp.eq.s32.totalorder %s186, 1
      %p523 = por %p521, %p522
      %p524 = scmp.ne.s32.totalorder %s515, %s516
      %p525 = scmp.eq.s32.totalorder %s186, 0
      %p526 = por %p524, %p525
      %p527 = scmp.ne.s32.totalorder %s515, %s516
      %p528 = scmp.eq.s32.totalorder %s187, 1
      %p529 = por %p527, %p528
      %p531 = scmp.ne.s32.totalorder %s516, %s530
      %p532 = scmp.eq.s32.totalorder %s187, 0
      %p533 = por %p531, %p532
      %s535 = sadd.s32 %s534, 1
      %p538 = scmp.eq.s32.totalorder %s181, 1
      %p539 = scmp.ne.s32.totalorder %s534, %s536
      %p540 = scmp.eq.s32.totalorder %s181, 0
      %p541 = por %p539, %p540
      %p542 = scmp.ne.s32.totalorder %s534, %s536
      %p543 = scmp.eq.s32.totalorder %s186, 1
      %p544 = por %p542, %p543
      %p545 = scmp.ne.s32.totalorder %s536, %s537
      %p546 = scmp.eq.s32.totalorder %s186, 0
      %p547 = por %p545, %p546
      %p548 = scmp.ne.s32.totalorder %s536, %s537
      %p549 = scmp.eq.s32.totalorder %s187, 1
      %p550 = por %p548, %p549
      %p552 = scmp.ne.s32.totalorder %s537, %s551
      %p553 = scmp.eq.s32.totalorder %s187, 0
      %p554 = por %p552, %p553
      %s556 = sadd.s32 %s555, 1
      %p559 = scmp.eq.s32.totalorder %s181, 1
      %p560 = scmp.ne.s32.totalorder %s555, %s557
      %p561 = scmp.eq.s32.totalorder %s181, 0
      %p562 = por %p560, %p561
      %p563 = scmp.ne.s32.totalorder %s555, %s557
      %p564 = scmp.eq.s32.totalorder %s186, 1
      %p565 = por %p563, %p564
      %p566 = scmp.ne.s32.totalorder %s557, %s558
      %p567 = scmp.eq.s32.totalorder %s186, 0
      %p568 = por %p566, %p567
      %p569 = scmp.ne.s32.totalorder %s557, %s558
      %p570 = scmp.eq.s32.totalorder %s187, 1
      %p571 = por %p569, %p570
      %p573 = scmp.ne.s32.totalorder %s558, %s572
      %p574 = scmp.eq.s32.totalorder %s187, 0
      %p575 = por %p573, %p574
      %s577 = sadd.s32 %s576, 1
      %p580 = scmp.eq.s32.totalorder %s181, 1
      %p581 = scmp.ne.s32.totalorder %s576, %s578
      %p582 = scmp.eq.s32.totalorder %s181, 0
      %p583 = por %p581, %p582
      %p584 = scmp.ne.s32.totalorder %s576, %s578
      %p585 = scmp.eq.s32.totalorder %s186, 1
      %p586 = por %p584, %p585
      %p587 = scmp.ne.s32.totalorder %s578, %s579
      %p588 = scmp.eq.s32.totalorder %s186, 0
      %p589 = por %p587, %p588
      %p590 = scmp.ne.s32.totalorder %s578, %s579
      %p591 = scmp.eq.s32.totalorder %s187, 1
      %p592 = por %p590, %p591
      %p594 = scmp.ne.s32.totalorder %s579, %s593
      %p595 = scmp.eq.s32.totalorder %s187, 0
      %p596 = por %p594, %p595
      %s598 = sadd.s32 %s597, 1
      %p601 = scmp.eq.s32.totalorder %s181, 1
      %p602 = scmp.ne.s32.totalorder %s597, %s599
      %p603 = scmp.eq.s32.totalorder %s181, 0
      %p604 = por %p602, %p603
      %p605 = scmp.ne.s32.totalorder %s597, %s599
      %p606 = scmp.eq.s32.totalorder %s186, 1
      %p607 = por %p605, %p606
      %p608 = scmp.ne.s32.totalorder %s599, %s600
      %p609 = scmp.eq.s32.totalorder %s186, 0
      %p610 = por %p608, %p609
      %p611 = scmp.ne.s32.totalorder %s599, %s600
      %p612 = scmp.eq.s32.totalorder %s187, 1
      %p613 = por %p611, %p612
      %p615 = scmp.ne.s32.totalorder %s600, %s614
      %p616 = scmp.eq.s32.totalorder %s187, 0
      %p617 = por %p615, %p616
      %s619 = sadd.s32 %s618, 1
      %p622 = scmp.eq.s32.totalorder %s181, 1
      %p623 = scmp.ne.s32.totalorder %s618, %s620
      %p624 = scmp.eq.s32.totalorder %s181, 0
      %p625 = por %p623, %p624
      %p626 = scmp.ne.s32.totalorder %s618, %s620
      %p627 = scmp.eq.s32.totalorder %s186, 1
      %p628 = por %p626, %p627
      %p629 = scmp.ne.s32.totalorder %s620, %s621
      %p630 = scmp.eq.s32.totalorder %s186, 0
      %p631 = por %p629, %p630
      %p632 = scmp.ne.s32.totalorder %s620, %s621
      %p633 = scmp.eq.s32.totalorder %s187, 1
      %p634 = por %p632, %p633
      %p636 = scmp.ne.s32.totalorder %s621, %s635
      %p637 = scmp.eq.s32.totalorder %s187, 0
      %p638 = por %p636, %p637
      %s640 = sadd.s32 %s639, 1
      %p643 = scmp.eq.s32.totalorder %s181, 1
      %p644 = scmp.ne.s32.totalorder %s639, %s641
      %p645 = scmp.eq.s32.totalorder %s181, 0
      %p646 = por %p644, %p645
      %p647 = scmp.ne.s32.totalorder %s639, %s641
      %p648 = scmp.eq.s32.totalorder %s186, 1
      %p649 = por %p647, %p648
      %p650 = scmp.ne.s32.totalorder %s641, %s642
      %p651 = scmp.eq.s32.totalorder %s186, 0
      %p652 = por %p650, %p651
      %p653 = scmp.ne.s32.totalorder %s641, %s642
      %p654 = scmp.eq.s32.totalorder %s187, 1
      %p655 = por %p653, %p654
      %p657 = scmp.ne.s32.totalorder %s642, %s656
      %p658 = scmp.eq.s32.totalorder %s187, 0
      %p659 = por %p657, %p658
      %s661 = sadd.s32 %s660, 1
      %p664 = scmp.eq.s32.totalorder %s181, 1
      %p665 = scmp.ne.s32.totalorder %s660, %s662
      %p666 = scmp.eq.s32.totalorder %s181, 0
      %p667 = por %p665, %p666
      %p668 = scmp.ne.s32.totalorder %s660, %s662
      %p669 = scmp.eq.s32.totalorder %s186, 1
      %p670 = por %p668, %p669
      %p671 = scmp.ne.s32.totalorder %s662, %s663
      %p672 = scmp.eq.s32.totalorder %s186, 0
      %p673 = por %p671, %p672
      %p674 = scmp.ne.s32.totalorder %s662, %s663
      %p675 = scmp.eq.s32.totalorder %s187, 1
      %p676 = por %p674, %p675
      %p678 = scmp.ne.s32.totalorder %s663, %s677
      %p679 = scmp.eq.s32.totalorder %s187, 0
      %p680 = por %p678, %p679
      %s682 = sadd.s32 %s681, 1
      %p685 = scmp.eq.s32.totalorder %s181, 1
      %p686 = scmp.ne.s32.totalorder %s681, %s683
      %p687 = scmp.eq.s32.totalorder %s181, 0
      %p688 = por %p686, %p687
      %p689 = scmp.ne.s32.totalorder %s681, %s683
      %p690 = scmp.eq.s32.totalorder %s186, 1
      %p691 = por %p689, %p690
      %p692 = scmp.ne.s32.totalorder %s683, %s684
      %p693 = scmp.eq.s32.totalorder %s186, 0
      %p694 = por %p692, %p693
      %p695 = scmp.ne.s32.totalorder %s683, %s684
      %p696 = scmp.eq.s32.totalorder %s187, 1
      %p697 = por %p695, %p696
      %p699 = scmp.ne.s32.totalorder %s684, %s698
      %p700 = scmp.eq.s32.totalorder %s187, 0
      %p701 = por %p699, %p700
      %s703 = sadd.s32 %s702, 1
      %p706 = scmp.eq.s32.totalorder %s181, 1
      %p707 = scmp.ne.s32.totalorder %s702, %s704
      %p708 = scmp.eq.s32.totalorder %s181, 0
      %p709 = por %p707, %p708
      %p710 = scmp.ne.s32.totalorder %s702, %s704
      %p711 = scmp.eq.s32.totalorder %s186, 1
      %p712 = por %p710, %p711
      %p713 = scmp.ne.s32.totalorder %s704, %s705
      %p714 = scmp.eq.s32.totalorder %s186, 0
      %p715 = por %p713, %p714
      %p716 = scmp.ne.s32.totalorder %s704, %s705
      %p717 = scmp.eq.s32.totalorder %s187, 1
      %p718 = por %p716, %p717
      %p720 = scmp.ne.s32.totalorder %s705, %s719
      %p721 = scmp.eq.s32.totalorder %s187, 0
      %p722 = por %p720, %p721
      %s724 = sadd.s32 %s723, 1
      %p727 = scmp.eq.s32.totalorder %s181, 1
      %p728 = scmp.ne.s32.totalorder %s723, %s725
      %p729 = scmp.eq.s32.totalorder %s181, 0
      %p730 = por %p728, %p729
      %p731 = scmp.ne.s32.totalorder %s723, %s725
      %p732 = scmp.eq.s32.totalorder %s186, 1
      %p733 = por %p731, %p732
      %p734 = scmp.ne.s32.totalorder %s725, %s726
      %p735 = scmp.eq.s32.totalorder %s186, 0
      %p736 = por %p734, %p735
      %p737 = scmp.ne.s32.totalorder %s725, %s726
      %p738 = scmp.eq.s32.totalorder %s187, 1
      %p739 = por %p737, %p738
      %p741 = scmp.ne.s32.totalorder %s726, %s740
      %p742 = scmp.eq.s32.totalorder %s187, 0
      %p743 = por %p741, %p742
      %s745 = sadd.s32 %s744, 1
      %p748 = scmp.eq.s32.totalorder %s181, 1
      %p749 = scmp.ne.s32.totalorder %s744, %s746
      %p750 = scmp.eq.s32.totalorder %s181, 0
      %p751 = por %p749, %p750
      %p752 = scmp.ne.s32.totalorder %s744, %s746
      %p753 = scmp.eq.s32.totalorder %s186, 1
      %p754 = por %p752, %p753
      %p755 = scmp.ne.s32.totalorder %s746, %s747
      %p756 = scmp.eq.s32.totalorder %s186, 0
      %p757 = por %p755, %p756
      %p758 = scmp.ne.s32.totalorder %s746, %s747
      %p759 = scmp.eq.s32.totalorder %s187, 1
      %p760 = por %p758, %p759
      %p762 = scmp.ne.s32.totalorder %s747, %s761
      %p763 = scmp.eq.s32.totalorder %s187, 0
      %p764 = por %p762, %p763
      %s766 = sadd.s32 %s765, 1
      %p769 = scmp.eq.s32.totalorder %s181, 1
      %p770 = scmp.ne.s32.totalorder %s765, %s767
      %p771 = scmp.eq.s32.totalorder %s181, 0
      %p772 = por %p770, %p771
      %p773 = scmp.ne.s32.totalorder %s765, %s767
      %p774 = scmp.eq.s32.totalorder %s186, 1
      %p775 = por %p773, %p774
      %p776 = scmp.ne.s32.totalorder %s767, %s768
      %p777 = scmp.eq.s32.totalorder %s186, 0
      %p778 = por %p776, %p777
      %p779 = scmp.ne.s32.totalorder %s767, %s768
      %p780 = scmp.eq.s32.totalorder %s187, 1
      %p781 = por %p779, %p780
      %p783 = scmp.ne.s32.totalorder %s768, %s782
      %p784 = scmp.eq.s32.totalorder %s187, 0
      %p785 = por %p783, %p784
      %s787 = sadd.s32 %s786, 1
      %p790 = scmp.eq.s32.totalorder %s181, 1
      %p791 = scmp.ne.s32.totalorder %s786, %s788
      %p792 = scmp.eq.s32.totalorder %s181, 0
      %p793 = por %p791, %p792
      %p794 = scmp.ne.s32.totalorder %s786, %s788
      %p795 = scmp.eq.s32.totalorder %s186, 1
      %p796 = por %p794, %p795
      %p797 = scmp.ne.s32.totalorder %s788, %s789
      %p798 = scmp.eq.s32.totalorder %s186, 0
      %p799 = por %p797, %p798
      %p800 = scmp.ne.s32.totalorder %s788, %s789
      %p801 = scmp.eq.s32.totalorder %s187, 1
      %p802 = por %p800, %p801
      %p804 = scmp.ne.s32.totalorder %s789, %s803
      %p805 = scmp.eq.s32.totalorder %s187, 0
      %p806 = por %p804, %p805
      %s808 = sadd.s32 %s807, 1
      %p811 = scmp.eq.s32.totalorder %s181, 1
      %p812 = scmp.ne.s32.totalorder %s807, %s809
      %p813 = scmp.eq.s32.totalorder %s181, 0
      %p814 = por %p812, %p813
      %p815 = scmp.ne.s32.totalorder %s807, %s809
      %p816 = scmp.eq.s32.totalorder %s186, 1
      %p817 = por %p815, %p816
      %p818 = scmp.ne.s32.totalorder %s809, %s810
      %p819 = scmp.eq.s32.totalorder %s186, 0
      %p820 = por %p818, %p819
      %p821 = scmp.ne.s32.totalorder %s809, %s810
      %p822 = scmp.eq.s32.totalorder %s187, 1
      %p823 = por %p821, %p822
      %p825 = scmp.ne.s32.totalorder %s810, %s824
      %p826 = scmp.eq.s32.totalorder %s187, 0
      %p827 = por %p825, %p826
      %s829 = sadd.s32 %s828, 1
      %p832 = scmp.eq.s32.totalorder %s181, 1
      %p833 = scmp.ne.s32.totalorder %s828, %s830
      %p834 = scmp.eq.s32.totalorder %s181, 0
      %p835 = por %p833, %p834
      %p836 = scmp.ne.s32.totalorder %s828, %s830
      %p837 = scmp.eq.s32.totalorder %s186, 1
      %p838 = por %p836, %p837
      %p839 = scmp.ne.s32.totalorder %s830, %s831
      %p840 = scmp.eq.s32.totalorder %s186, 0
      %p841 = por %p839, %p840
      %p842 = scmp.ne.s32.totalorder %s830, %s831
      %p843 = scmp.eq.s32.totalorder %s187, 1
      %p844 = por %p842, %p843
      %p846 = scmp.ne.s32.totalorder %s831, %s845
      %p847 = scmp.eq.s32.totalorder %s187, 0
      %p848 = por %p846, %p847
      %s850 = sadd.s32 %s849, 1
      %p853 = scmp.eq.s32.totalorder %s181, 1
      %p854 = scmp.ne.s32.totalorder %s849, %s851
      %p855 = scmp.eq.s32.totalorder %s181, 0
      %p856 = por %p854, %p855
      %p857 = scmp.ne.s32.totalorder %s849, %s851
      %p858 = scmp.eq.s32.totalorder %s186, 1
      %p859 = por %p857, %p858
      %p860 = scmp.ne.s32.totalorder %s851, %s852
      %p861 = scmp.eq.s32.totalorder %s186, 0
      %p862 = por %p860, %p861
      %p863 = scmp.ne.s32.totalorder %s851, %s852
      %p864 = scmp.eq.s32.totalorder %s187, 1
      %p865 = por %p863, %p864
      %p867 = scmp.ne.s32.totalorder %s852, %s866
      %p868 = scmp.eq.s32.totalorder %s187, 0
      %p869 = por %p867, %p868
      %s871 = sadd.s32 %s870, 1
      %p874 = scmp.eq.s32.totalorder %s181, 1
      %p875 = scmp.ne.s32.totalorder %s870, %s872
      %p876 = scmp.eq.s32.totalorder %s181, 0
      %p877 = por %p875, %p876
      %p878 = scmp.ne.s32.totalorder %s870, %s872
      %p879 = scmp.eq.s32.totalorder %s186, 1
      %p880 = por %p878, %p879
      %p881 = scmp.ne.s32.totalorder %s872, %s873
      %p882 = scmp.eq.s32.totalorder %s186, 0
      %p883 = por %p881, %p882
      %p884 = scmp.ne.s32.totalorder %s872, %s873
      %p885 = scmp.eq.s32.totalorder %s187, 1
      %p886 = por %p884, %p885
      %p888 = scmp.ne.s32.totalorder %s873, %s887
      %p889 = scmp.eq.s32.totalorder %s187, 0
      %p890 = por %p888, %p889
      %s892 = sadd.s32 %s891, 1
      %p895 = scmp.eq.s32.totalorder %s181, 1
      %p896 = scmp.ne.s32.totalorder %s891, %s893
      %p897 = scmp.eq.s32.totalorder %s181, 0
      %p898 = por %p896, %p897
      %p899 = scmp.ne.s32.totalorder %s891, %s893
      %p900 = scmp.eq.s32.totalorder %s186, 1
      %p901 = por %p899, %p900
      %p902 = scmp.ne.s32.totalorder %s893, %s894
      %p903 = scmp.eq.s32.totalorder %s186, 0
      %p904 = por %p902, %p903
      %p905 = scmp.ne.s32.totalorder %s893, %s894
      %p906 = scmp.eq.s32.totalorder %s187, 1
      %p907 = por %p905, %p906
      %p909 = scmp.ne.s32.totalorder %s894, %s908
      %p910 = scmp.eq.s32.totalorder %s187, 0
      %p911 = por %p909, %p910
      %s913 = sadd.s32 %s912, 1
      %p916 = scmp.eq.s32.totalorder %s181, 1
      %p917 = scmp.ne.s32.totalorder %s912, %s914
      %p918 = scmp.eq.s32.totalorder %s181, 0
      %p919 = por %p917, %p918
      %p920 = scmp.ne.s32.totalorder %s912, %s914
      %p921 = scmp.eq.s32.totalorder %s186, 1
      %p922 = por %p920, %p921
      %p923 = scmp.ne.s32.totalorder %s914, %s915
      %p924 = scmp.eq.s32.totalorder %s186, 0
      %p925 = por %p923, %p924
      %p926 = scmp.ne.s32.totalorder %s914, %s915
      %p927 = scmp.eq.s32.totalorder %s187, 1
      %p928 = por %p926, %p927
      %p930 = scmp.ne.s32.totalorder %s915, %s929
      %p931 = scmp.eq.s32.totalorder %s187, 0
      %p932 = por %p930, %p931
      %s934 = sadd.s32 %s933, 1
      %p937 = scmp.eq.s32.totalorder %s181, 1
      %p938 = scmp.ne.s32.totalorder %s933, %s935
      %p939 = scmp.eq.s32.totalorder %s181, 0
      %p940 = por %p938, %p939
      %p941 = scmp.ne.s32.totalorder %s933, %s935
      %p942 = scmp.eq.s32.totalorder %s186, 1
      %p943 = por %p941, %p942
      %p944 = scmp.ne.s32.totalorder %s935, %s936
      %p945 = scmp.eq.s32.totalorder %s186, 0
      %p946 = por %p944, %p945
      %p947 = scmp.ne.s32.totalorder %s935, %s936
      %p948 = scmp.eq.s32.totalorder %s187, 1
      %p949 = por %p947, %p948
      %p951 = scmp.ne.s32.totalorder %s936, %s950
      %p952 = scmp.eq.s32.totalorder %s187, 0
      %p953 = por %p951, %p952
      %s955 = sadd.s32 %s954, 1
      %p958 = scmp.eq.s32.totalorder %s181, 1
      %p959 = scmp.ne.s32.totalorder %s954, %s956
      %p960 = scmp.eq.s32.totalorder %s181, 0
      %p961 = por %p959, %p960
      %p962 = scmp.ne.s32.totalorder %s954, %s956
      %p963 = scmp.eq.s32.totalorder %s186, 1
      %p964 = por %p962, %p963
      %p965 = scmp.ne.s32.totalorder %s956, %s957
      %p966 = scmp.eq.s32.totalorder %s186, 0
      %p967 = por %p965, %p966
      %p968 = scmp.ne.s32.totalorder %s956, %s957
      %p969 = scmp.eq.s32.totalorder %s187, 1
      %p970 = por %p968, %p969
      %p972 = scmp.ne.s32.totalorder %s957, %s971
      %p973 = scmp.eq.s32.totalorder %s187, 0
      %p974 = por %p972, %p973
      %s976 = sadd.s32 %s975, 1
      %p979 = scmp.eq.s32.totalorder %s181, 1
      %p980 = scmp.ne.s32.totalorder %s975, %s977
      %p981 = scmp.eq.s32.totalorder %s181, 0
      %p982 = por %p980, %p981
      %p983 = scmp.ne.s32.totalorder %s975, %s977
      %p984 = scmp.eq.s32.totalorder %s186, 1
      %p985 = por %p983, %p984
      %p986 = scmp.ne.s32.totalorder %s977, %s978
      %p987 = scmp.eq.s32.totalorder %s186, 0
      %p988 = por %p986, %p987
      %p989 = scmp.ne.s32.totalorder %s977, %s978
      %p990 = scmp.eq.s32.totalorder %s187, 1
      %p991 = por %p989, %p990
      %p993 = scmp.ne.s32.totalorder %s978, %s992
      %p994 = scmp.eq.s32.totalorder %s187, 0
      %p995 = por %p993, %p994
      %s997 = sadd.s32 %s996, 1
      %p1000 = scmp.eq.s32.totalorder %s181, 1
      %p1001 = scmp.ne.s32.totalorder %s996, %s998
      %p1002 = scmp.eq.s32.totalorder %s181, 0
      %p1003 = por %p1001, %p1002
      %p1004 = scmp.ne.s32.totalorder %s996, %s998
      %p1005 = scmp.eq.s32.totalorder %s186, 1
      %p1006 = por %p1004, %p1005
      %p1007 = scmp.ne.s32.totalorder %s998, %s999
      %p1008 = scmp.eq.s32.totalorder %s186, 0
      %p1009 = por %p1007, %p1008
      %p1010 = scmp.ne.s32.totalorder %s998, %s999
      %p1011 = scmp.eq.s32.totalorder %s187, 1
      %p1012 = por %p1010, %p1011
      %p1014 = scmp.ne.s32.totalorder %s999, %s1013
      %p1015 = scmp.eq.s32.totalorder %s187, 0
      %p1016 = por %p1014, %p1015
      %s1018 = sadd.s32 %s1017, 1
      %p1021 = scmp.eq.s32.totalorder %s181, 1
      %p1022 = scmp.ne.s32.totalorder %s1017, %s1019
      %p1023 = scmp.eq.s32.totalorder %s181, 0
      %p1024 = por %p1022, %p1023
      %p1025 = scmp.ne.s32.totalorder %s1017, %s1019
      %p1026 = scmp.eq.s32.totalorder %s186, 1
      %p1027 = por %p1025, %p1026
      %p1028 = scmp.ne.s32.totalorder %s1019, %s1020
      %p1029 = scmp.eq.s32.totalorder %s186, 0
      %p1030 = por %p1028, %p1029
      %p1031 = scmp.ne.s32.totalorder %s1019, %s1020
      %p1032 = scmp.eq.s32.totalorder %s187, 1
      %p1033 = por %p1031, %p1032
      %p1035 = scmp.ne.s32.totalorder %s1020, %s1034
      %p1036 = scmp.eq.s32.totalorder %s187, 0
      %p1037 = por %p1035, %p1036
      %s1039 = sadd.s32 %s1038, 1
      %p1042 = scmp.eq.s32.totalorder %s181, 1
      %p1043 = scmp.ne.s32.totalorder %s1038, %s1040
      %p1044 = scmp.eq.s32.totalorder %s181, 0
      %p1045 = por %p1043, %p1044
      %p1046 = scmp.ne.s32.totalorder %s1038, %s1040
      %p1047 = scmp.eq.s32.totalorder %s186, 1
      %p1048 = por %p1046, %p1047
      %p1049 = scmp.ne.s32.totalorder %s1040, %s1041
      %p1050 = scmp.eq.s32.totalorder %s186, 0
      %p1051 = por %p1049, %p1050
      %p1052 = scmp.ne.s32.totalorder %s1040, %s1041
      %p1053 = scmp.eq.s32.totalorder %s187, 1
      %p1054 = por %p1052, %p1053
      %p1056 = scmp.ne.s32.totalorder %s1041, %s1055
      %p1057 = scmp.eq.s32.totalorder %s187, 0
      %p1058 = por %p1056, %p1057
      %s1060 = sadd.s32 %s1059, 1
      %p1063 = scmp.eq.s32.totalorder %s181, 1
      %p1064 = scmp.ne.s32.totalorder %s1059, %s1061
      %p1065 = scmp.eq.s32.totalorder %s181, 0
      %p1066 = por %p1064, %p1065
      %p1067 = scmp.ne.s32.totalorder %s1059, %s1061
      %p1068 = scmp.eq.s32.totalorder %s186, 1
      %p1069 = por %p1067, %p1068
      %p1070 = scmp.ne.s32.totalorder %s1061, %s1062
      %p1071 = scmp.eq.s32.totalorder %s186, 0
      %p1072 = por %p1070, %p1071
      %p1073 = scmp.ne.s32.totalorder %s1061, %s1062
      %p1074 = scmp.eq.s32.totalorder %s187, 1
      %p1075 = por %p1073, %p1074
      %p1077 = scmp.ne.s32.totalorder %s1062, %s1076
      %p1078 = scmp.eq.s32.totalorder %s187, 0
      %p1079 = por %p1077, %p1078
      %s1081 = sadd.s32 %s1080, 1
      %p1084 = scmp.eq.s32.totalorder %s181, 1
      %p1085 = scmp.ne.s32.totalorder %s1080, %s1082
      %p1086 = scmp.eq.s32.totalorder %s181, 0
      %p1087 = por %p1085, %p1086
      %p1088 = scmp.ne.s32.totalorder %s1080, %s1082
      %p1089 = scmp.eq.s32.totalorder %s186, 1
      %p1090 = por %p1088, %p1089
      %p1091 = scmp.ne.s32.totalorder %s1082, %s1083
      %p1092 = scmp.eq.s32.totalorder %s186, 0
      %p1093 = por %p1091, %p1092
      %p1094 = scmp.ne.s32.totalorder %s1082, %s1083
      %p1095 = scmp.eq.s32.totalorder %s187, 1
      %p1096 = por %p1094, %p1095
      %p1098 = scmp.ne.s32.totalorder %s1083, %s1097
      %p1099 = scmp.eq.s32.totalorder %s187, 0
      %p1100 = por %p1098, %p1099
      %s1102 = sadd.s32 %s1101, 1
      %p1105 = scmp.eq.s32.totalorder %s181, 1
      %p1106 = scmp.ne.s32.totalorder %s1101, %s1103
      %p1107 = scmp.eq.s32.totalorder %s181, 0
      %p1108 = por %p1106, %p1107
      %p1109 = scmp.ne.s32.totalorder %s1101, %s1103
      %p1110 = scmp.eq.s32.totalorder %s186, 1
      %p1111 = por %p1109, %p1110
      %p1112 = scmp.ne.s32.totalorder %s1103, %s1104
      %p1113 = scmp.eq.s32.totalorder %s186, 0
      %p1114 = por %p1112, %p1113
      %p1115 = scmp.ne.s32.totalorder %s1103, %s1104
      %p1116 = scmp.eq.s32.totalorder %s187, 1
      %p1117 = por %p1115, %p1116
      %p1119 = scmp.ne.s32.totalorder %s1104, %s1118
      %p1120 = scmp.eq.s32.totalorder %s187, 0
      %p1121 = por %p1119, %p1120
      %s1123 = sadd.s32 %s1122, 1
      %p1126 = scmp.eq.s32.totalorder %s181, 1
      %p1127 = scmp.ne.s32.totalorder %s1122, %s1124
      %p1128 = scmp.eq.s32.totalorder %s181, 0
      %p1129 = por %p1127, %p1128
      %p1130 = scmp.ne.s32.totalorder %s1122, %s1124
      %p1131 = scmp.eq.s32.totalorder %s186, 1
      %p1132 = por %p1130, %p1131
      %p1133 = scmp.ne.s32.totalorder %s1124, %s1125
      %p1134 = scmp.eq.s32.totalorder %s186, 0
      %p1135 = por %p1133, %p1134
      %p1136 = scmp.ne.s32.totalorder %s1124, %s1125
      %p1137 = scmp.eq.s32.totalorder %s187, 1
      %p1138 = por %p1136, %p1137
      %p1140 = scmp.ne.s32.totalorder %s1125, %s1139
      %p1141 = scmp.eq.s32.totalorder %s187, 0
      %p1142 = por %p1140, %p1141
      %s1144 = sadd.s32 %s1143, 1
      %p1147 = scmp.eq.s32.totalorder %s181, 1
      %p1148 = scmp.ne.s32.totalorder %s1143, %s1145
      %p1149 = scmp.eq.s32.totalorder %s181, 0
      %p1150 = por %p1148, %p1149
      %p1151 = scmp.ne.s32.totalorder %s1143, %s1145
      %p1152 = scmp.eq.s32.totalorder %s186, 1
      %p1153 = por %p1151, %p1152
      %p1154 = scmp.ne.s32.totalorder %s1145, %s1146
      %p1155 = scmp.eq.s32.totalorder %s186, 0
      %p1156 = por %p1154, %p1155
      %p1157 = scmp.ne.s32.totalorder %s1145, %s1146
      %p1158 = scmp.eq.s32.totalorder %s187, 1
      %p1159 = por %p1157, %p1158
      %p1161 = scmp.ne.s32.totalorder %s1146, %s1160
      %p1162 = scmp.eq.s32.totalorder %s187, 0
      %p1163 = por %p1161, %p1162
      %s1165 = sadd.s32 %s1164, 1
      %p1168 = scmp.eq.s32.totalorder %s181, 1
      %p1169 = scmp.ne.s32.totalorder %s1164, %s1166
      %p1170 = scmp.eq.s32.totalorder %s181, 0
      %p1171 = por %p1169, %p1170
      %p1172 = scmp.ne.s32.totalorder %s1164, %s1166
      %p1173 = scmp.eq.s32.totalorder %s186, 1
      %p1174 = por %p1172, %p1173
      %p1175 = scmp.ne.s32.totalorder %s1166, %s1167
      %p1176 = scmp.eq.s32.totalorder %s186, 0
      %p1177 = por %p1175, %p1176
      %p1178 = scmp.ne.s32.totalorder %s1166, %s1167
      %p1179 = scmp.eq.s32.totalorder %s187, 1
      %p1180 = por %p1178, %p1179
      %p1182 = scmp.ne.s32.totalorder %s1167, %s1181
      %p1183 = scmp.eq.s32.totalorder %s187, 0
      %p1184 = por %p1182, %p1183
      %s1186 = sadd.s32 %s1185, 1
      %p1189 = scmp.eq.s32.totalorder %s181, 1
      %p1190 = scmp.ne.s32.totalorder %s1185, %s1187
      %p1191 = scmp.eq.s32.totalorder %s181, 0
      %p1192 = por %p1190, %p1191
      %p1193 = scmp.ne.s32.totalorder %s1185, %s1187
      %p1194 = scmp.eq.s32.totalorder %s186, 1
      %p1195 = por %p1193, %p1194
      %p1196 = scmp.ne.s32.totalorder %s1187, %s1188
      %p1197 = scmp.eq.s32.totalorder %s186, 0
      %p1198 = por %p1196, %p1197
      %p1199 = scmp.ne.s32.totalorder %s1187, %s1188
      %p1200 = scmp.eq.s32.totalorder %s187, 1
      %p1201 = por %p1199, %p1200
      %p1203 = scmp.ne.s32.totalorder %s1188, %s1202
      %p1204 = scmp.eq.s32.totalorder %s187, 0
      %p1205 = por %p1203, %p1204
      %s1207 = sadd.s32 %s1206, 1
      %p1210 = scmp.eq.s32.totalorder %s181, 1
      %p1211 = scmp.ne.s32.totalorder %s1206, %s1208
      %p1212 = scmp.eq.s32.totalorder %s181, 0
      %p1213 = por %p1211, %p1212
      %p1214 = scmp.ne.s32.totalorder %s1206, %s1208
      %p1215 = scmp.eq.s32.totalorder %s186, 1
      %p1216 = por %p1214, %p1215
      %p1217 = scmp.ne.s32.totalorder %s1208, %s1209
      %p1218 = scmp.eq.s32.totalorder %s186, 0
      %p1219 = por %p1217, %p1218
      %p1220 = scmp.ne.s32.totalorder %s1208, %s1209
      %p1221 = scmp.eq.s32.totalorder %s187, 1
      %p1222 = por %p1220, %p1221
      %p1224 = scmp.ne.s32.totalorder %s1209, %s1223
      %p1225 = scmp.eq.s32.totalorder %s187, 0
      %p1226 = por %p1224, %p1225
      %s1228 = sadd.s32 %s1227, 1
      %p1231 = scmp.eq.s32.totalorder %s181, 1
      %p1232 = scmp.ne.s32.totalorder %s1227, %s1229
      %p1233 = scmp.eq.s32.totalorder %s181, 0
      %p1234 = por %p1232, %p1233
      %p1235 = scmp.ne.s32.totalorder %s1227, %s1229
      %p1236 = scmp.eq.s32.totalorder %s186, 1
      %p1237 = por %p1235, %p1236
      %p1238 = scmp.ne.s32.totalorder %s1229, %s1230
      %p1239 = scmp.eq.s32.totalorder %s186, 0
      %p1240 = por %p1238, %p1239
      %p1241 = scmp.ne.s32.totalorder %s1229, %s1230
      %p1242 = scmp.eq.s32.totalorder %s187, 1
      %p1243 = por %p1241, %p1242
      %p1245 = scmp.ne.s32.totalorder %s1230, %s1244
      %p1246 = scmp.eq.s32.totalorder %s187, 0
      %p1247 = por %p1245, %p1246
      %s1249 = sadd.s32 %s1248, 1
      %p1252 = scmp.eq.s32.totalorder %s181, 1
      %p1253 = scmp.ne.s32.totalorder %s1248, %s1250
      %p1254 = scmp.eq.s32.totalorder %s181, 0
      %p1255 = por %p1253, %p1254
      %p1256 = scmp.ne.s32.totalorder %s1248, %s1250
      %p1257 = scmp.eq.s32.totalorder %s186, 1
      %p1258 = por %p1256, %p1257
      %p1259 = scmp.ne.s32.totalorder %s1250, %s1251
      %p1260 = scmp.eq.s32.totalorder %s186, 0
      %p1261 = por %p1259, %p1260
      %p1262 = scmp.ne.s32.totalorder %s1250, %s1251
      %p1263 = scmp.eq.s32.totalorder %s187, 1
      %p1264 = por %p1262, %p1263
      %p1266 = scmp.ne.s32.totalorder %s1251, %s1265
      %p1267 = scmp.eq.s32.totalorder %s187, 0
      %p1268 = por %p1266, %p1267
      %s1270 = sadd.s32 %s1269, 1
      %p1273 = scmp.eq.s32.totalorder %s181, 1
      %p1274 = scmp.ne.s32.totalorder %s1269, %s1271
      %p1275 = scmp.eq.s32.totalorder %s181, 0
      %p1276 = por %p1274, %p1275
      %p1277 = scmp.ne.s32.totalorder %s1269, %s1271
      %p1278 = scmp.eq.s32.totalorder %s186, 1
      %p1279 = por %p1277, %p1278
      %p1280 = scmp.ne.s32.totalorder %s1271, %s1272
      %p1281 = scmp.eq.s32.totalorder %s186, 0
      %p1282 = por %p1280, %p1281
      %p1283 = scmp.ne.s32.totalorder %s1271, %s1272
      %p1284 = scmp.eq.s32.totalorder %s187, 1
      %p1285 = por %p1283, %p1284
      %p1287 = scmp.ne.s32.totalorder %s1272, %s1286
      %p1288 = scmp.eq.s32.totalorder %s187, 0
      %p1289 = por %p1287, %p1288
      %s1291 = sadd.s32 %s1290, 1
      %p1294 = scmp.eq.s32.totalorder %s181, 1
      %p1295 = scmp.ne.s32.totalorder %s1290, %s1292
      %p1296 = scmp.eq.s32.totalorder %s181, 0
      %p1297 = por %p1295, %p1296
      %p1298 = scmp.ne.s32.totalorder %s1290, %s1292
      %p1299 = scmp.eq.s32.totalorder %s186, 1
      %p1300 = por %p1298, %p1299
      %p1301 = scmp.ne.s32.totalorder %s1292, %s1293
      %p1302 = scmp.eq.s32.totalorder %s186, 0
      %p1303 = por %p1301, %p1302
      %p1304 = scmp.ne.s32.totalorder %s1292, %s1293
      %p1305 = scmp.eq.s32.totalorder %s187, 1
      %p1306 = por %p1304, %p1305
      %p1308 = scmp.ne.s32.totalorder %s1293, %s1307
      %p1309 = scmp.eq.s32.totalorder %s187, 0
      %p1310 = por %p1308, %p1309
      %s1312 = sadd.s32 %s1311, 1
      %p1315 = scmp.eq.s32.totalorder %s181, 1
      %p1316 = scmp.ne.s32.totalorder %s1311, %s1313
      %p1317 = scmp.eq.s32.totalorder %s181, 0
      %p1318 = por %p1316, %p1317
      %p1319 = scmp.ne.s32.totalorder %s1311, %s1313
      %p1320 = scmp.eq.s32.totalorder %s186, 1
      %p1321 = por %p1319, %p1320
      %p1322 = scmp.ne.s32.totalorder %s1313, %s1314
      %p1323 = scmp.eq.s32.totalorder %s186, 0
      %p1324 = por %p1322, %p1323
      %p1325 = scmp.ne.s32.totalorder %s1313, %s1314
      %p1326 = scmp.eq.s32.totalorder %s187, 1
      %p1327 = por %p1325, %p1326
      %p1329 = scmp.ne.s32.totalorder %s1314, %s1328
      %p1330 = scmp.eq.s32.totalorder %s187, 0
      %p1331 = por %p1329, %p1330
      %s1333 = sadd.s32 %s1332, 1
      %p1336 = scmp.eq.s32.totalorder %s181, 1
      %p1337 = scmp.ne.s32.totalorder %s1332, %s1334
      %p1338 = scmp.eq.s32.totalorder %s181, 0
      %p1339 = por %p1337, %p1338
      %p1340 = scmp.ne.s32.totalorder %s1332, %s1334
      %p1341 = scmp.eq.s32.totalorder %s186, 1
      %p1342 = por %p1340, %p1341
      %p1343 = scmp.ne.s32.totalorder %s1334, %s1335
      %p1344 = scmp.eq.s32.totalorder %s186, 0
      %p1345 = por %p1343, %p1344
      %p1346 = scmp.ne.s32.totalorder %s1334, %s1335
      %p1347 = scmp.eq.s32.totalorder %s187, 1
      %p1348 = por %p1346, %p1347
      %p1350 = scmp.ne.s32.totalorder %s1335, %s1349
      %p1351 = scmp.eq.s32.totalorder %s187, 0
      %p1352 = por %p1350, %p1351
      %s1354 = sadd.s32 %s1353, 1
      %p1357 = scmp.eq.s32.totalorder %s181, 1
      %p1358 = scmp.ne.s32.totalorder %s1353, %s1355
      %p1359 = scmp.eq.s32.totalorder %s181, 0
      %p1360 = por %p1358, %p1359
      %p1361 = scmp.ne.s32.totalorder %s1353, %s1355
      %p1362 = scmp.eq.s32.totalorder %s186, 1
      %p1363 = por %p1361, %p1362
      %p1364 = scmp.ne.s32.totalorder %s1355, %s1356
      %p1365 = scmp.eq.s32.totalorder %s186, 0
      %p1366 = por %p1364, %p1365
      %p1367 = scmp.ne.s32.totalorder %s1355, %s1356
      %p1368 = scmp.eq.s32.totalorder %s187, 1
      %p1369 = por %p1367, %p1368
      %p1371 = scmp.ne.s32.totalorder %s1356, %s1370
      %p1372 = scmp.eq.s32.totalorder %s187, 0
      %p1373 = por %p1371, %p1372
      %s1375 = sadd.s32 %s1374, 1
      %p1378 = scmp.eq.s32.totalorder %s181, 1
      %p1379 = scmp.ne.s32.totalorder %s1374, %s1376
      %p1380 = scmp.eq.s32.totalorder %s181, 0
      %p1381 = por %p1379, %p1380
      %p1382 = scmp.ne.s32.totalorder %s1374, %s1376
      %p1383 = scmp.eq.s32.totalorder %s186, 1
      %p1384 = por %p1382, %p1383
      %p1385 = scmp.ne.s32.totalorder %s1376, %s1377
      %p1386 = scmp.eq.s32.totalorder %s186, 0
      %p1387 = por %p1385, %p1386
      %p1388 = scmp.ne.s32.totalorder %s1376, %s1377
      %p1389 = scmp.eq.s32.totalorder %s187, 1
      %p1390 = por %p1388, %p1389
      %p1392 = scmp.ne.s32.totalorder %s1377, %s1391
      %p1393 = scmp.eq.s32.totalorder %s187, 0
      %p1394 = por %p1392, %p1393
      %s1396 = sadd.s32 %s1395, 1
      %p1399 = scmp.eq.s32.totalorder %s181, 1
      %p1400 = scmp.ne.s32.totalorder %s1395, %s1397
      %p1401 = scmp.eq.s32.totalorder %s181, 0
      %p1402 = por %p1400, %p1401
      %p1403 = scmp.ne.s32.totalorder %s1395, %s1397
      %p1404 = scmp.eq.s32.totalorder %s186, 1
      %p1405 = por %p1403, %p1404
      %p1406 = scmp.ne.s32.totalorder %s1397, %s1398
      %p1407 = scmp.eq.s32.totalorder %s186, 0
      %p1408 = por %p1406, %p1407
      %p1409 = scmp.ne.s32.totalorder %s1397, %s1398
      %p1410 = scmp.eq.s32.totalorder %s187, 1
      %p1411 = por %p1409, %p1410
      %p1413 = scmp.ne.s32.totalorder %s1398, %s1412
      %p1414 = scmp.eq.s32.totalorder %s187, 0
      %p1415 = por %p1413, %p1414
      %s1417 = sadd.s32 %s1416, 1
      %p1420 = scmp.eq.s32.totalorder %s181, 1
      %p1421 = scmp.ne.s32.totalorder %s1416, %s1418
      %p1422 = scmp.eq.s32.totalorder %s181, 0
      %p1423 = por %p1421, %p1422
      %p1424 = scmp.ne.s32.totalorder %s1416, %s1418
      %p1425 = scmp.eq.s32.totalorder %s186, 1
      %p1426 = por %p1424, %p1425
      %p1427 = scmp.ne.s32.totalorder %s1418, %s1419
      %p1428 = scmp.eq.s32.totalorder %s186, 0
      %p1429 = por %p1427, %p1428
      %p1430 = scmp.ne.s32.totalorder %s1418, %s1419
      %p1431 = scmp.eq.s32.totalorder %s187, 1
      %p1432 = por %p1430, %p1431
      %p1434 = scmp.ne.s32.totalorder %s1419, %s1433
      %p1435 = scmp.eq.s32.totalorder %s187, 0
      %p1436 = por %p1434, %p1435
      %s1438 = sadd.s32 %s1437, 1
      %p1441 = scmp.eq.s32.totalorder %s181, 1
      %p1442 = scmp.ne.s32.totalorder %s1437, %s1439
      %p1443 = scmp.eq.s32.totalorder %s181, 0
      %p1444 = por %p1442, %p1443
      %p1445 = scmp.ne.s32.totalorder %s1437, %s1439
      %p1446 = scmp.eq.s32.totalorder %s186, 1
      %p1447 = por %p1445, %p1446
      %p1448 = scmp.ne.s32.totalorder %s1439, %s1440
      %p1449 = scmp.eq.s32.totalorder %s186, 0
      %p1450 = por %p1448, %p1449
      %p1451 = scmp.ne.s32.totalorder %s1439, %s1440
      %p1452 = scmp.eq.s32.totalorder %s187, 1
      %p1453 = por %p1451, %p1452
      %p1455 = scmp.ne.s32.totalorder %s1440, %s1454
      %p1456 = scmp.eq.s32.totalorder %s187, 0
      %p1457 = por %p1455, %p1456
      %s1459 = sadd.s32 %s1458, 1
      %p1462 = scmp.eq.s32.totalorder %s181, 1
      %p1463 = scmp.ne.s32.totalorder %s1458, %s1460
      %p1464 = scmp.eq.s32.totalorder %s181, 0
      %p1465 = por %p1463, %p1464
      %p1466 = scmp.ne.s32.totalorder %s1458, %s1460
      %p1467 = scmp.eq.s32.totalorder %s186, 1
      %p1468 = por %p1466, %p1467
      %p1469 = scmp.ne.s32.totalorder %s1460, %s1461
      %p1470 = scmp.eq.s32.totalorder %s186, 0
      %p1471 = por %p1469, %p1470
      %p1472 = scmp.ne.s32.totalorder %s1460, %s1461
      %p1473 = scmp.eq.s32.totalorder %s187, 1
      %p1474 = por %p1472, %p1473
      %p1476 = scmp.ne.s32.totalorder %s1461, %s1475
      %p1477 = scmp.eq.s32.totalorder %s187, 0
      %p1478 = por %p1476, %p1477
      %s1480 = sadd.s32 %s1479, 1
      %p1483 = scmp.eq.s32.totalorder %s181, 1
      %p1484 = scmp.ne.s32.totalorder %s1479, %s1481
      %p1485 = scmp.eq.s32.totalorder %s181, 0
      %p1486 = por %p1484, %p1485
      %p1487 = scmp.ne.s32.totalorder %s1479, %s1481
      %p1488 = scmp.eq.s32.totalorder %s186, 1
      %p1489 = por %p1487, %p1488
      %p1490 = scmp.ne.s32.totalorder %s1481, %s1482
      %p1491 = scmp.eq.s32.totalorder %s186, 0
      %p1492 = por %p1490, %p1491
      %p1493 = scmp.ne.s32.totalorder %s1481, %s1482
      %p1494 = scmp.eq.s32.totalorder %s187, 1
      %p1495 = por %p1493, %p1494
      %p1497 = scmp.ne.s32.totalorder %s1482, %s1496
      %p1498 = scmp.eq.s32.totalorder %s187, 0
      %p1499 = por %p1497, %p1498
      %s1501 = sadd.s32 %s1500, 1
      %p1504 = scmp.eq.s32.totalorder %s181, 1
      %p1505 = scmp.ne.s32.totalorder %s1500, %s1502
      %p1506 = scmp.eq.s32.totalorder %s181, 0
      %p1507 = por %p1505, %p1506
      %p1508 = scmp.ne.s32.totalorder %s1500, %s1502
      %p1509 = scmp.eq.s32.totalorder %s186, 1
      %p1510 = por %p1508, %p1509
      %p1511 = scmp.ne.s32.totalorder %s1502, %s1503
      %p1512 = scmp.eq.s32.totalorder %s186, 0
      %p1513 = por %p1511, %p1512
      %p1514 = scmp.ne.s32.totalorder %s1502, %s1503
      %p1515 = scmp.eq.s32.totalorder %s187, 1
      %p1516 = por %p1514, %p1515
      %p1518 = scmp.ne.s32.totalorder %s1503, %s1517
      %p1519 = scmp.eq.s32.totalorder %s187, 0
      %p1520 = por %p1518, %p1519
      %s1522 = sadd.s32 %s1521, 1
      %p1525 = scmp.eq.s32.totalorder %s181, 1
      %p1526 = scmp.ne.s32.totalorder %s1521, %s1523
      %p1527 = scmp.eq.s32.totalorder %s181, 0
      %p1528 = por %p1526, %p1527
      %p1529 = scmp.ne.s32.totalorder %s1521, %s1523
      %p1530 = scmp.eq.s32.totalorder %s186, 1
      %p1531 = por %p1529, %p1530
      %p1532 = scmp.ne.s32.totalorder %s1523, %s1524
      %p1533 = scmp.eq.s32.totalorder %s186, 0
      %p1534 = por %p1532, %p1533
      %p1535 = scmp.ne.s32.totalorder %s1523, %s1524
      %p1536 = scmp.eq.s32.totalorder %s187, 1
      %p1537 = por %p1535, %p1536
      %p1539 = scmp.ne.s32.totalorder %s1524, %s1538
      %p1540 = scmp.eq.s32.totalorder %s187, 0
      %p1541 = por %p1539, %p1540
      %s1543 = sadd.s32 %s1542, 1
      %p1546 = scmp.eq.s32.totalorder %s181, 1
      %p1547 = scmp.ne.s32.totalorder %s1542, %s1544
      %p1548 = scmp.eq.s32.totalorder %s181, 0
      %p1549 = por %p1547, %p1548
      %p1550 = scmp.ne.s32.totalorder %s1542, %s1544
      %p1551 = scmp.eq.s32.totalorder %s186, 1
      %p1552 = por %p1550, %p1551
      %p1553 = scmp.ne.s32.totalorder %s1544, %s1545
      %p1554 = scmp.eq.s32.totalorder %s186, 0
      %p1555 = por %p1553, %p1554
      %p1556 = scmp.ne.s32.totalorder %s1544, %s1545
      %p1557 = scmp.eq.s32.totalorder %s187, 1
      %p1558 = por %p1556, %p1557
      %p1560 = scmp.ne.s32.totalorder %s1545, %s1559
      %p1561 = scmp.eq.s32.totalorder %s187, 0
      %p1562 = por %p1560, %p1561
      %s1564 = sadd.s32 %s1563, 1
      %p1567 = scmp.eq.s32.totalorder %s181, 1
      %p1568 = scmp.ne.s32.totalorder %s1563, %s1565
      %p1569 = scmp.eq.s32.totalorder %s181, 0
      %p1570 = por %p1568, %p1569
      %p1571 = scmp.ne.s32.totalorder %s1563, %s1565
      %p1572 = scmp.eq.s32.totalorder %s186, 1
      %p1573 = por %p1571, %p1572
      %p1574 = scmp.ne.s32.totalorder %s1565, %s1566
      %p1575 = scmp.eq.s32.totalorder %s186, 0
      %p1576 = por %p1574, %p1575
      %p1577 = scmp.ne.s32.totalorder %s1565, %s1566
      %p1578 = scmp.eq.s32.totalorder %s187, 1
      %p1579 = por %p1577, %p1578
      %p1581 = scmp.ne.s32.totalorder %s1566, %s1580
      %p1582 = scmp.eq.s32.totalorder %s187, 0
      %p1583 = por %p1581, %p1582
      %s1585 = sadd.s32 %s1584, 1
      %p1588 = scmp.eq.s32.totalorder %s181, 1
      %p1589 = scmp.ne.s32.totalorder %s1584, %s1586
      %p1590 = scmp.eq.s32.totalorder %s181, 0
      %p1591 = por %p1589, %p1590
      %p1592 = scmp.ne.s32.totalorder %s1584, %s1586
      %p1593 = scmp.eq.s32.totalorder %s186, 1
      %p1594 = por %p1592, %p1593
      %p1595 = scmp.ne.s32.totalorder %s1586, %s1587
      %p1596 = scmp.eq.s32.totalorder %s186, 0
      %p1597 = por %p1595, %p1596
      %p1598 = scmp.ne.s32.totalorder %s1586, %s1587
      %p1599 = scmp.eq.s32.totalorder %s187, 1
      %p1600 = por %p1598, %p1599
      %p1602 = scmp.ne.s32.totalorder %s1587, %s1601
      %p1603 = scmp.eq.s32.totalorder %s187, 0
      %p1604 = por %p1602, %p1603
      %s1606 = sadd.s32 %s1605, 1
      %p1609 = scmp.eq.s32.totalorder %s181, 1
      %p1610 = scmp.ne.s32.totalorder %s1605, %s1607
      %p1611 = scmp.eq.s32.totalorder %s181, 0
      %p1612 = por %p1610, %p1611
      %p1613 = scmp.ne.s32.totalorder %s1605, %s1607
      %p1614 = scmp.eq.s32.totalorder %s186, 1
      %p1615 = por %p1613, %p1614
      %p1616 = scmp.ne.s32.totalorder %s1607, %s1608
      %p1617 = scmp.eq.s32.totalorder %s186, 0
      %p1618 = por %p1616, %p1617
      %p1619 = scmp.ne.s32.totalorder %s1607, %s1608
      %p1620 = scmp.eq.s32.totalorder %s187, 1
      %p1621 = por %p1619, %p1620
      %p1623 = scmp.ne.s32.totalorder %s1608, %s1622
      %p1624 = scmp.eq.s32.totalorder %s187, 0
      %p1625 = por %p1623, %p1624
      %s1627 = sadd.s32 %s1626, 1
      %p1630 = scmp.eq.s32.totalorder %s181, 1
      %p1631 = scmp.ne.s32.totalorder %s1626, %s1628
      %p1632 = scmp.eq.s32.totalorder %s181, 0
      %p1633 = por %p1631, %p1632
      %p1634 = scmp.ne.s32.totalorder %s1626, %s1628
      %p1635 = scmp.eq.s32.totalorder %s186, 1
      %p1636 = por %p1634, %p1635
      %p1637 = scmp.ne.s32.totalorder %s1628, %s1629
      %p1638 = scmp.eq.s32.totalorder %s186, 0
      %p1639 = por %p1637, %p1638
      %p1640 = scmp.ne.s32.totalorder %s1628, %s1629
      %p1641 = scmp.eq.s32.totalorder %s187, 1
      %p1642 = por %p1640, %p1641
      %p1644 = scmp.ne.s32.totalorder %s1629, %s1643
      %p1645 = scmp.eq.s32.totalorder %s187, 0
      %p1646 = por %p1644, %p1645
      %s1648 = sadd.s32 %s1647, 1
      %p1651 = scmp.eq.s32.totalorder %s181, 1
      %p1652 = scmp.ne.s32.totalorder %s1647, %s1649
      %p1653 = scmp.eq.s32.totalorder %s181, 0
      %p1654 = por %p1652, %p1653
      %p1655 = scmp.ne.s32.totalorder %s1647, %s1649
      %p1656 = scmp.eq.s32.totalorder %s186, 1
      %p1657 = por %p1655, %p1656
      %p1658 = scmp.ne.s32.totalorder %s1649, %s1650
      %p1659 = scmp.eq.s32.totalorder %s186, 0
      %p1660 = por %p1658, %p1659
      %p1661 = scmp.ne.s32.totalorder %s1649, %s1650
      %p1662 = scmp.eq.s32.totalorder %s187, 1
      %p1663 = por %p1661, %p1662
      %p1665 = scmp.ne.s32.totalorder %s1650, %s1664
      %p1666 = scmp.eq.s32.totalorder %s187, 0
      %p1667 = por %p1665, %p1666
      %s1669 = sadd.s32 %s1668, 1
      %p1672 = scmp.eq.s32.totalorder %s181, 1
      %p1673 = scmp.ne.s32.totalorder %s1668, %s1670
      %p1674 = scmp.eq.s32.totalorder %s181, 0
      %p1675 = por %p1673, %p1674
      %p1676 = scmp.ne.s32.totalorder %s1668, %s1670
      %p1677 = scmp.eq.s32.totalorder %s186, 1
      %p1678 = por %p1676, %p1677
      %p1679 = scmp.ne.s32.totalorder %s1670, %s1671
      %p1680 = scmp.eq.s32.totalorder %s186, 0
      %p1681 = por %p1679, %p1680
      %p1682 = scmp.ne.s32.totalorder %s1670, %s1671
      %p1683 = scmp.eq.s32.totalorder %s187, 1
      %p1684 = por %p1682, %p1683
      %p1686 = scmp.ne.s32.totalorder %s1671, %s1685
      %p1687 = scmp.eq.s32.totalorder %s187, 0
      %p1688 = por %p1686, %p1687
      %s1690 = sadd.s32 %s1689, 1
      %p1693 = scmp.eq.s32.totalorder %s181, 1
      %p1694 = scmp.ne.s32.totalorder %s1689, %s1691
      %p1695 = scmp.eq.s32.totalorder %s181, 0
      %p1696 = por %p1694, %p1695
      %p1697 = scmp.ne.s32.totalorder %s1689, %s1691
      %p1698 = scmp.eq.s32.totalorder %s186, 1
      %p1699 = por %p1697, %p1698
      %p1700 = scmp.ne.s32.totalorder %s1691, %s1692
      %p1701 = scmp.eq.s32.totalorder %s186, 0
      %p1702 = por %p1700, %p1701
      %p1703 = scmp.ne.s32.totalorder %s1691, %s1692
      %p1704 = scmp.eq.s32.totalorder %s187, 1
      %p1705 = por %p1703, %p1704
      %p1707 = scmp.ne.s32.totalorder %s1692, %s1706
      %p1708 = scmp.eq.s32.totalorder %s187, 0
      %p1709 = por %p1707, %p1708
      %s1711 = sadd.s32 %s1710, 1
      %p1714 = scmp.eq.s32.totalorder %s181, 1
      %p1715 = scmp.ne.s32.totalorder %s1710, %s1712
      %p1716 = scmp.eq.s32.totalorder %s181, 0
      %p1717 = por %p1715, %p1716
      %p1718 = scmp.ne.s32.totalorder %s1710, %s1712
      %p1719 = scmp.eq.s32.totalorder %s186, 1
      %p1720 = por %p1718, %p1719
      %p1721 = scmp.ne.s32.totalorder %s1712, %s1713
      %p1722 = scmp.eq.s32.totalorder %s186, 0
      %p1723 = por %p1721, %p1722
      %p1724 = scmp.ne.s32.totalorder %s1712, %s1713
      %p1725 = scmp.eq.s32.totalorder %s187, 1
      %p1726 = por %p1724, %p1725
      %p1728 = scmp.ne.s32.totalorder %s1713, %s1727
      %p1729 = scmp.eq.s32.totalorder %s187, 0
      %p1730 = por %p1728, %p1729
      %s1732 = sadd.s32 %s1731, 1
      %p1735 = scmp.eq.s32.totalorder %s181, 1
      %p1736 = scmp.ne.s32.totalorder %s1731, %s1733
      %p1737 = scmp.eq.s32.totalorder %s181, 0
      %p1738 = por %p1736, %p1737
      %p1739 = scmp.ne.s32.totalorder %s1731, %s1733
      %p1740 = scmp.eq.s32.totalorder %s186, 1
      %p1741 = por %p1739, %p1740
      %p1742 = scmp.ne.s32.totalorder %s1733, %s1734
      %p1743 = scmp.eq.s32.totalorder %s186, 0
      %p1744 = por %p1742, %p1743
      %p1745 = scmp.ne.s32.totalorder %s1733, %s1734
      %p1746 = scmp.eq.s32.totalorder %s187, 1
      %p1747 = por %p1745, %p1746
      %p1749 = scmp.ne.s32.totalorder %s1734, %s1748
      %p1750 = scmp.eq.s32.totalorder %s187, 0
      %p1751 = por %p1749, %p1750
      %s1753 = sadd.s32 %s1752, 1
      %p1756 = scmp.eq.s32.totalorder %s181, 1
      %p1757 = scmp.ne.s32.totalorder %s1752, %s1754
      %p1758 = scmp.eq.s32.totalorder %s181, 0
      %p1759 = por %p1757, %p1758
      %p1760 = scmp.ne.s32.totalorder %s1752, %s1754
      %p1761 = scmp.eq.s32.totalorder %s186, 1
      %p1762 = por %p1760, %p1761
      %p1763 = scmp.ne.s32.totalorder %s1754, %s1755
      %p1764 = scmp.eq.s32.totalorder %s186, 0
      %p1765 = por %p1763, %p1764
      %p1766 = scmp.ne.s32.totalorder %s1754, %s1755
      %p1767 = scmp.eq.s32.totalorder %s187, 1
      %p1768 = por %p1766, %p1767
      %p1770 = scmp.ne.s32.totalorder %s1755, %s1769
      %p1771 = scmp.eq.s32.totalorder %s187, 0
      %p1772 = por %p1770, %p1771
      %s1774 = sadd.s32 %s1773, 1
      %p1777 = scmp.eq.s32.totalorder %s181, 1
      %p1778 = scmp.ne.s32.totalorder %s1773, %s1775
      %p1779 = scmp.eq.s32.totalorder %s181, 0
      %p1780 = por %p1778, %p1779
      %p1781 = scmp.ne.s32.totalorder %s1773, %s1775
      %p1782 = scmp.eq.s32.totalorder %s186, 1
      %p1783 = por %p1781, %p1782
      %p1784 = scmp.ne.s32.totalorder %s1775, %s1776
      %p1785 = scmp.eq.s32.totalorder %s186, 0
      %p1786 = por %p1784, %p1785
      %p1787 = scmp.ne.s32.totalorder %s1775, %s1776
      %p1788 = scmp.eq.s32.totalorder %s187, 1
      %p1789 = por %p1787, %p1788
      %p1791 = scmp.ne.s32.totalorder %s1776, %s1790
      %p1792 = scmp.eq.s32.totalorder %s187, 0
      %p1793 = por %p1791, %p1792
      %s1795 = sadd.s32 %s1794, 1
      %p1798 = scmp.eq.s32.totalorder %s181, 1
      %p1799 = scmp.ne.s32.totalorder %s1794, %s1796
      %p1800 = scmp.eq.s32.totalorder %s181, 0
      %p1801 = por %p1799, %p1800
      %p1802 = scmp.ne.s32.totalorder %s1794, %s1796
      %p1803 = scmp.eq.s32.totalorder %s186, 1
      %p1804 = por %p1802, %p1803
      %p1805 = scmp.ne.s32.totalorder %s1796, %s1797
      %p1806 = scmp.eq.s32.totalorder %s186, 0
      %p1807 = por %p1805, %p1806
      %p1808 = scmp.ne.s32.totalorder %s1796, %s1797
      %p1809 = scmp.eq.s32.totalorder %s187, 1
      %p1810 = por %p1808, %p1809
      %p1812 = scmp.ne.s32.totalorder %s1797, %s1811
      %p1813 = scmp.eq.s32.totalorder %s187, 0
      %p1814 = por %p1812, %p1813
      %s1816 = sadd.s32 %s1815, 1
      %p1819 = scmp.eq.s32.totalorder %s181, 1
      %p1820 = scmp.ne.s32.totalorder %s1815, %s1817
      %p1821 = scmp.eq.s32.totalorder %s181, 0
      %p1822 = por %p1820, %p1821
      %p1823 = scmp.ne.s32.totalorder %s1815, %s1817
      %p1824 = scmp.eq.s32.totalorder %s186, 1
      %p1825 = por %p1823, %p1824
      %p1826 = scmp.ne.s32.totalorder %s1817, %s1818
      %p1827 = scmp.eq.s32.totalorder %s186, 0
      %p1828 = por %p1826, %p1827
      %p1829 = scmp.ne.s32.totalorder %s1817, %s1818
      %p1830 = scmp.eq.s32.totalorder %s187, 1
      %p1831 = por %p1829, %p1830
      %p1833 = scmp.ne.s32.totalorder %s1818, %s1832
      %p1834 = scmp.eq.s32.totalorder %s187, 0
      %p1835 = por %p1833, %p1834
      %s1837 = sadd.s32 %s1836, 1
      %p1840 = scmp.eq.s32.totalorder %s181, 1
      %p1841 = scmp.ne.s32.totalorder %s1836, %s1838
      %p1842 = scmp.eq.s32.totalorder %s181, 0
      %p1843 = por %p1841, %p1842
      %p1844 = scmp.ne.s32.totalorder %s1836, %s1838
      %p1845 = scmp.eq.s32.totalorder %s186, 1
      %p1846 = por %p1844, %p1845
      %p1847 = scmp.ne.s32.totalorder %s1838, %s1839
      %p1848 = scmp.eq.s32.totalorder %s186, 0
      %p1849 = por %p1847, %p1848
      %p1850 = scmp.ne.s32.totalorder %s1838, %s1839
      %p1851 = scmp.eq.s32.totalorder %s187, 1
      %p1852 = por %p1850, %p1851
      %p1854 = scmp.ne.s32.totalorder %s1839, %s1853
      %p1855 = scmp.eq.s32.totalorder %s187, 0
      %p1856 = por %p1854, %p1855
      %s1857 = ssub.s32 %s181, %s188
      %p1858 = scmp.eq.s32.totalorder %s1857, 0
      %s1860 = sadd.s32 %s1859, 1
      %s1861 = scalar_select %p1858, %s1859, %s1860
      %p1864 = pneg %p1858
      %p1865 = scmp.eq.s32.totalorder %s181, 1
      %p1866 = por %p1864, %p1865
      %p1867 = scmp.ne.s32.totalorder %s1859, %s1862
      %p1868 = scmp.eq.s32.totalorder %s181, 0
      %p1869 = por %p1867, %p1868
      %p1870 = scmp.ne.s32.totalorder %s1859, %s1862
      %p1871 = scmp.eq.s32.totalorder %s186, 1
      %p1872 = por %p1870, %p1871
      %p1873 = scmp.ne.s32.totalorder %s1862, %s1863
      %p1874 = scmp.eq.s32.totalorder %s186, 0
      %p1875 = por %p1873, %p1874
      %p1876 = scmp.ne.s32.totalorder %s1862, %s1863
      %p1877 = scmp.eq.s32.totalorder %s187, 1
      %p1878 = por %p1876, %p1877
      %p1880 = scmp.ne.s32.totalorder %s1863, %s1879
      %p1881 = scmp.eq.s32.totalorder %s187, 0
      %p1882 = por %p1880, %p1881
      %p1883 = scmp.le.s32.totalorder 1, %s181
      %p1884 = scmp.lt.s32.totalorder %s181, 3
      %p1885 = pnand %p1883, %p1884
      %p1886 = pneg %p1885
      // Predicated region
      $region9: #{prose_2to1_fwd.1} parent=5 // pred_check
        _
      $region10: #{prose_2to1_fwd.1} parent=5 // pred_check_branch
        %1888 = sbr.rel (%p1885) target = $region12
      $region11: #{prose_2to1_fwd.1} parent=5 // pred_region
        %s1889 = ssub.s32 %s181, 1
        // Predicated region
        $region13: #{prose_2to1_fwd.1} parent=11 // pred_check
          %p1890 = pneg %p358
        $region14: #{prose_2to1_fwd.1} parent=11 // pred_check_branch
          %1892 = sbr.rel (%p1890) target = $region16
        $region15: #{prose_2to1_fwd.1} parent=11 // pred_region
          _
        $region16: #{prose_2to1_fwd.1} parent=11 // pred_fallthru
          _
        // Predicated region
        $region17: #{prose_2to1_fwd.1} parent=11 // pred_check
          %p1893 = pneg %p379
        $region18: #{prose_2to1_fwd.1} parent=11 // pred_check_branch
          %1895 = sbr.rel (%p1893) target = $region20
        $region19: #{prose_2to1_fwd.1} parent=11 // pred_region
          _
        $region20: #{prose_2to1_fwd.1} parent=11 // pred_fallthru
          _
        // Predicated region
        $region21: #{prose_2to1_fwd.1} parent=11 // pred_check
          %p1896 = pneg %p400
        $region22: #{prose_2to1_fwd.1} parent=11 // pred_check_branch
          %1898 = sbr.rel (%p1896) target = $region24
        $region23: #{prose_2to1_fwd.1} parent=11 // pred_region
          _
        $region24: #{prose_2to1_fwd.1} parent=11 // pred_fallthru
          _
        // Predicated region
        $region25: #{prose_2to1_fwd.1} parent=11 // pred_check
          %p1899 = pneg %p421
        $region26: #{prose_2to1_fwd.1} parent=11 // pred_check_branch
          %1901 = sbr.rel (%p1899) target = $region28
        $region27: #{prose_2to1_fwd.1} parent=11 // pred_region
          _
        $region28: #{prose_2to1_fwd.1} parent=11 // pred_fallthru
          _
        // Predicated region
        $region29: #{prose_2to1_fwd.1} parent=11 // pred_check
          %p1902 = pneg %p442
        $region30: #{prose_2to1_fwd.1} parent=11 // pred_check_branch
          %1904 = sbr.rel (%p1902) target = $region32
        $region31: #{prose_2to1_fwd.1} parent=11 // pred_region
          _
        $region32: #{prose_2to1_fwd.1} parent=11 // pred_fallthru
          _
        // Predicated region
        $region33: #{prose_2to1_fwd.1} parent=11 // pred_check
          %p1905 = pneg %p463
        $region34: #{prose_2to1_fwd.1} parent=11 // pred_check_branch
          %1907 = sbr.rel (%p1905) target = $region36
        $region35: #{prose_2to1_fwd.1} parent=11 // pred_region
          _
        $region36: #{prose_2to1_fwd.1} parent=11 // pred_fallthru
          _
        // Predicated region
        $region37: #{prose_2to1_fwd.1} parent=11 // pred_check
          %p1908 = pneg %p484
        $region38: #{prose_2to1_fwd.1} parent=11 // pred_check_branch
          %1910 = sbr.rel (%p1908) target = $region40
        $region39: #{prose_2to1_fwd.1} parent=11 // pred_region
          _
        $region40: #{prose_2to1_fwd.1} parent=11 // pred_fallthru
          _
        // Predicated region
        $region41: #{prose_2to1_fwd.1} parent=11 // pred_check
          %p1911 = pneg %p505
        $region42: #{prose_2to1_fwd.1} parent=11 // pred_check_branch
          %1913 = sbr.rel (%p1911) target = $region44
        $region43: #{prose_2to1_fwd.1} parent=11 // pred_region
          _
        $region44: #{prose_2to1_fwd.1} parent=11 // pred_fallthru
          _
        // Predicated region
        $region45: #{prose_2to1_fwd.1} parent=11 // pred_check
          %p1914 = pneg %p526
        $region46: #{prose_2to1_fwd.1} parent=11 // pred_check_branch
          %1916 = sbr.rel (%p1914) target = $region48
        $region47: #{prose_2to1_fwd.1} parent=11 // pred_region
          _
        $region48: #{prose_2to1_fwd.1} parent=11 // pred_fallthru
          _
        // Predicated region
        $region49: #{prose_2to1_fwd.1} parent=11 // pred_check
          %p1917 = pneg %p547
        $region50: #{prose_2to1_fwd.1} parent=11 // pred_check_branch
          %1919 = sbr.rel (%p1917) target = $region52
        $region51: #{prose_2to1_fwd.1} parent=11 // pred_region
          _
        $region52: #{prose_2to1_fwd.1} parent=11 // pred_fallthru
          _
        // Predicated region
        $region53: #{prose_2to1_fwd.1} parent=11 // pred_check
          %p1920 = pneg %p568
        $region54: #{prose_2to1_fwd.1} parent=11 // pred_check_branch
          %1922 = sbr.rel (%p1920) target = $region56
        $region55: #{prose_2to1_fwd.1} parent=11 // pred_region
          _
        $region56: #{prose_2to1_fwd.1} parent=11 // pred_fallthru
          _
        // Predicated region
        $region57: #{prose_2to1_fwd.1} parent=11 // pred_check
          %p1923 = pneg %p589
        $region58: #{prose_2to1_fwd.1} parent=11 // pred_check_branch
          %1925 = sbr.rel (%p1923) target = $region60
        $region59: #{prose_2to1_fwd.1} parent=11 // pred_region
          _
        $region60: #{prose_2to1_fwd.1} parent=11 // pred_fallthru
          _
        // Predicated region
        $region61: #{prose_2to1_fwd.1} parent=11 // pred_check
          %p1926 = pneg %p610
        $region62: #{prose_2to1_fwd.1} parent=11 // pred_check_branch
          %1928 = sbr.rel (%p1926) target = $region64
        $region63: #{prose_2to1_fwd.1} parent=11 // pred_region
          _
        $region64: #{prose_2to1_fwd.1} parent=11 // pred_fallthru
          _
        // Predicated region
        $region65: #{prose_2to1_fwd.1} parent=11 // pred_check
          %p1929 = pneg %p631
        $region66: #{prose_2to1_fwd.1} parent=11 // pred_check_branch
          %1931 = sbr.rel (%p1929) target = $region68
        $region67: #{prose_2to1_fwd.1} parent=11 // pred_region
          _
        $region68: #{prose_2to1_fwd.1} parent=11 // pred_fallthru
          _
        // Predicated region
        $region69: #{prose_2to1_fwd.1} parent=11 // pred_check
          %p1932 = pneg %p652
        $region70: #{prose_2to1_fwd.1} parent=11 // pred_check_branch
          %1934 = sbr.rel (%p1932) target = $region72
        $region71: #{prose_2to1_fwd.1} parent=11 // pred_region
          _
        $region72: #{prose_2to1_fwd.1} parent=11 // pred_fallthru
          _
        // Predicated region
        $region73: #{prose_2to1_fwd.1} parent=11 // pred_check
          %p1935 = pneg %p673
        $region74: #{prose_2to1_fwd.1} parent=11 // pred_check_branch
          %1937 = sbr.rel (%p1935) target = $region76
        $region75: #{prose_2to1_fwd.1} parent=11 // pred_region
          _
        $region76: #{prose_2to1_fwd.1} parent=11 // pred_fallthru
          _
        // Predicated region
        $region77: #{prose_2to1_fwd.1} parent=11 // pred_check
          %p1938 = pneg %p694
        $region78: #{prose_2to1_fwd.1} parent=11 // pred_check_branch
          %1940 = sbr.rel (%p1938) target = $region80
        $region79: #{prose_2to1_fwd.1} parent=11 // pred_region
          _
        $region80: #{prose_2to1_fwd.1} parent=11 // pred_fallthru
          _
        // Predicated region
        $region81: #{prose_2to1_fwd.1} parent=11 // pred_check
          %p1941 = pneg %p715
        $region82: #{prose_2to1_fwd.1} parent=11 // pred_check_branch
          %1943 = sbr.rel (%p1941) target = $region84
        $region83: #{prose_2to1_fwd.1} parent=11 // pred_region
          _
        $region84: #{prose_2to1_fwd.1} parent=11 // pred_fallthru
          _
        // Predicated region
        $region85: #{prose_2to1_fwd.1} parent=11 // pred_check
          %p1944 = pneg %p736
        $region86: #{prose_2to1_fwd.1} parent=11 // pred_check_branch
          %1946 = sbr.rel (%p1944) target = $region88
        $region87: #{prose_2to1_fwd.1} parent=11 // pred_region
          %1948 = vsyncadd [#allocation3], 0
          %s1950 = sshll.u32 %s49, 4
          %s1951 = int_to_ptr.hbm [resolvable:$true] %s1950
          %s1952 = sshll.u32 [#allocation2], 4
          %s1953 = int_to_ptr.vmem [resolvable:$true] %s1952
          %1955 = dma.hbm_to_vmem [thread:$0]  %s1951, 16, %s1953, [#allocation3]
        $region88: #{prose_2to1_fwd.1} parent=11 // pred_fallthru
          _
        // Predicated region
        $region89: #{prose_2to1_fwd.1} parent=11 // pred_check
          %p1956 = pneg %p757
        $region90: #{prose_2to1_fwd.1} parent=11 // pred_check_branch
          %1958 = sbr.rel (%p1956) target = $region92
        $region91: #{prose_2to1_fwd.1} parent=11 // pred_region
          %1960 = vsyncadd [#allocation5], 0
          %s1962 = sshll.u32 %s51, 4
          %s1963 = int_to_ptr.hbm [resolvable:$true] %s1962
          %s1964 = sshll.u32 [#allocation4], 4
          %s1965 = int_to_ptr.vmem [resolvable:$true] %s1964
          %1967 = dma.hbm_to_vmem [thread:$0]  %s1963, 16, %s1965, [#allocation5]
        $region92: #{prose_2to1_fwd.1} parent=11 // pred_fallthru
          _
        // Predicated region
        $region93: #{prose_2to1_fwd.1} parent=11 // pred_check
          %p1968 = pneg %p778
        $region94: #{prose_2to1_fwd.1} parent=11 // pred_check_branch
          %1970 = sbr.rel (%p1968) target = $region96
        $region95: #{prose_2to1_fwd.1} parent=11 // pred_region
          _
        $region96: #{prose_2to1_fwd.1} parent=11 // pred_fallthru
          _
        // Predicated region
        $region97: #{prose_2to1_fwd.1} parent=11 // pred_check
          %p1971 = pneg %p799
        $region98: #{prose_2to1_fwd.1} parent=11 // pred_check_branch
          %1973 = sbr.rel (%p1971) target = $region100
        $region99: #{prose_2to1_fwd.1} parent=11 // pred_region
          _
        $region100: #{prose_2to1_fwd.1} parent=11 // pred_fallthru
          _
        // Predicated region
        $region101: #{prose_2to1_fwd.1} parent=11 // pred_check
          %p1974 = pneg %p820
        $region102: #{prose_2to1_fwd.1} parent=11 // pred_check_branch
          %1976 = sbr.rel (%p1974) target = $region104
        $region103: #{prose_2to1_fwd.1} parent=11 // pred_region
          %1978 = vsyncadd [#allocation5], 0
          %s1980 = sshll.u32 %s57, 4
          %s1981 = int_to_ptr.hbm [resolvable:$true] %s1980
          %s1982 = sshll.u32 [#allocation6], 4
          %s1983 = int_to_ptr.vmem [resolvable:$true] %s1982
          %1985 = dma.hbm_to_vmem [thread:$0]  %s1981, 16, %s1983, [#allocation5]
        $region104: #{prose_2to1_fwd.1} parent=11 // pred_fallthru
          _
        // Predicated region
        $region105: #{prose_2to1_fwd.1} parent=11 // pred_check
          %p1986 = pneg %p841
        $region106: #{prose_2to1_fwd.1} parent=11 // pred_check_branch
          %1988 = sbr.rel (%p1986) target = $region108
        $region107: #{prose_2to1_fwd.1} parent=11 // pred_region
          %1990 = vsyncadd [#allocation8], 0
          %s1992 = sshll.u32 %s59, 4
          %s1993 = int_to_ptr.hbm [resolvable:$true] %s1992
          %s1994 = sshll.u32 [#allocation7], 4
          %s1995 = int_to_ptr.vmem [resolvable:$true] %s1994
          %1997 = dma.hbm_to_vmem [thread:$0]  %s1993, 16, %s1995, [#allocation8]
        $region108: #{prose_2to1_fwd.1} parent=11 // pred_fallthru
          _
        // Predicated region
        $region109: #{prose_2to1_fwd.1} parent=11 // pred_check
          %p1998 = pneg %p862
        $region110: #{prose_2to1_fwd.1} parent=11 // pred_check_branch
          %2000 = sbr.rel (%p1998) target = $region112
        $region111: #{prose_2to1_fwd.1} parent=11 // pred_region
          %2002 = vsyncadd [#allocation8], 0
          %s2004 = sshll.u32 %s61, 4
          %s2005 = int_to_ptr.hbm [resolvable:$true] %s2004
          %s2006 = sshll.u32 [#allocation9], 4
          %s2007 = int_to_ptr.vmem [resolvable:$true] %s2006
          %2009 = dma.hbm_to_vmem [thread:$0]  %s2005, 16, %s2007, [#allocation8]
        $region112: #{prose_2to1_fwd.1} parent=11 // pred_fallthru
          _
        // Predicated region
        $region113: #{prose_2to1_fwd.1} parent=11 // pred_check
          %p2010 = pneg %p883
        $region114: #{prose_2to1_fwd.1} parent=11 // pred_check_branch
          %2012 = sbr.rel (%p2010) target = $region116
        $region115: #{prose_2to1_fwd.1} parent=11 // pred_region
          %2014 = vsyncadd [#allocation11], 0
          %s2016 = sshll.u32 %s63, 4
          %s2017 = int_to_ptr.hbm [resolvable:$true] %s2016
          %s2018 = sshll.u32 [#allocation10], 4
          %s2019 = int_to_ptr.vmem [resolvable:$true] %s2018
          %2021 = dma.hbm_to_vmem [thread:$0]  %s2017, 16, %s2019, [#allocation11]
        $region116: #{prose_2to1_fwd.1} parent=11 // pred_fallthru
          _
        // Predicated region
        $region117: #{prose_2to1_fwd.1} parent=11 // pred_check
          %p2022 = pneg %p904
        $region118: #{prose_2to1_fwd.1} parent=11 // pred_check_branch
          %2024 = sbr.rel (%p2022) target = $region120
        $region119: #{prose_2to1_fwd.1} parent=11 // pred_region
          %2026 = vsyncadd [#allocation11], 0
          %s2028 = sshll.u32 %s65, 4
          %s2029 = int_to_ptr.hbm [resolvable:$true] %s2028
          %s2030 = sshll.u32 [#allocation12], 4
          %s2031 = int_to_ptr.vmem [resolvable:$true] %s2030
          %2033 = dma.hbm_to_vmem [thread:$0]  %s2029, 16, %s2031, [#allocation11]
        $region120: #{prose_2to1_fwd.1} parent=11 // pred_fallthru
          _
        // Predicated region
        $region121: #{prose_2to1_fwd.1} parent=11 // pred_check
          %p2034 = pneg %p925
        $region122: #{prose_2to1_fwd.1} parent=11 // pred_check_branch
          %2036 = sbr.rel (%p2034) target = $region124
        $region123: #{prose_2to1_fwd.1} parent=11 // pred_region
          %2038 = vsyncadd [#allocation14], 0
          %s2040 = sshll.u32 %s67, 4
          %s2041 = int_to_ptr.hbm [resolvable:$true] %s2040
          %s2042 = sshll.u32 [#allocation13], 4
          %s2043 = int_to_ptr.vmem [resolvable:$true] %s2042
          %2045 = dma.hbm_to_vmem [thread:$0]  %s2041, 16, %s2043, [#allocation14]
        $region124: #{prose_2to1_fwd.1} parent=11 // pred_fallthru
          _
        // Predicated region
        $region125: #{prose_2to1_fwd.1} parent=11 // pred_check
          %p2046 = pneg %p946
        $region126: #{prose_2to1_fwd.1} parent=11 // pred_check_branch
          %2048 = sbr.rel (%p2046) target = $region128
        $region127: #{prose_2to1_fwd.1} parent=11 // pred_region
          %2050 = vsyncadd [#allocation14], 0
          %s2052 = sshll.u32 %s69, 4
          %s2053 = int_to_ptr.hbm [resolvable:$true] %s2052
          %s2054 = sshll.u32 [#allocation15], 4
          %s2055 = int_to_ptr.vmem [resolvable:$true] %s2054
          %2057 = dma.hbm_to_vmem [thread:$0]  %s2053, 16, %s2055, [#allocation14]
        $region128: #{prose_2to1_fwd.1} parent=11 // pred_fallthru
          _
        // Predicated region
        $region129: #{prose_2to1_fwd.1} parent=11 // pred_check
          %p2058 = pneg %p967
        $region130: #{prose_2to1_fwd.1} parent=11 // pred_check_branch
          %2060 = sbr.rel (%p2058) target = $region132
        $region131: #{prose_2to1_fwd.1} parent=11 // pred_region
          %2062 = vsyncadd [#allocation17], 0
          %s2064 = sshll.u32 %s71, 4
          %s2065 = int_to_ptr.hbm [resolvable:$true] %s2064
          %s2066 = sshll.u32 [#allocation16], 4
          %s2067 = int_to_ptr.vmem [resolvable:$true] %s2066
          %2069 = dma.hbm_to_vmem [thread:$0]  %s2065, 16, %s2067, [#allocation17]
        $region132: #{prose_2to1_fwd.1} parent=11 // pred_fallthru
          _
        // Predicated region
        $region133: #{prose_2to1_fwd.1} parent=11 // pred_check
          %p2070 = pneg %p988
        $region134: #{prose_2to1_fwd.1} parent=11 // pred_check_branch
          %2072 = sbr.rel (%p2070) target = $region136
        $region135: #{prose_2to1_fwd.1} parent=11 // pred_region
          _
        $region136: #{prose_2to1_fwd.1} parent=11 // pred_fallthru
          _
        // Predicated region
        $region137: #{prose_2to1_fwd.1} parent=11 // pred_check
          %p2073 = pneg %p1009
        $region138: #{prose_2to1_fwd.1} parent=11 // pred_check_branch
          %2075 = sbr.rel (%p2073) target = $region140
        $region139: #{prose_2to1_fwd.1} parent=11 // pred_region
          _
        $region140: #{prose_2to1_fwd.1} parent=11 // pred_fallthru
          _
        // Predicated region
        $region141: #{prose_2to1_fwd.1} parent=11 // pred_check
          %p2076 = pneg %p1030
        $region142: #{prose_2to1_fwd.1} parent=11 // pred_check_branch
          %2078 = sbr.rel (%p2076) target = $region144
        $region143: #{prose_2to1_fwd.1} parent=11 // pred_region
          %2080 = vsyncadd [#allocation17], 0
          %s2082 = sshll.u32 %s77, 4
          %s2083 = int_to_ptr.hbm [resolvable:$true] %s2082
          %s2084 = sshll.u32 [#allocation18], 4
          %s2085 = int_to_ptr.vmem [resolvable:$true] %s2084
          %2087 = dma.hbm_to_vmem [thread:$0]  %s2083, 16, %s2085, [#allocation17]
        $region144: #{prose_2to1_fwd.1} parent=11 // pred_fallthru
          _
        // Predicated region
        $region145: #{prose_2to1_fwd.1} parent=11 // pred_check
          %p2088 = pneg %p1051
        $region146: #{prose_2to1_fwd.1} parent=11 // pred_check_branch
          %2090 = sbr.rel (%p2088) target = $region148
        $region147: #{prose_2to1_fwd.1} parent=11 // pred_region
          %2092 = vsyncadd [#allocation20], 0
          %s2094 = sshll.u32 %s79, 4
          %s2095 = int_to_ptr.hbm [resolvable:$true] %s2094
          %s2096 = sshll.u32 [#allocation19], 4
          %s2097 = int_to_ptr.vmem [resolvable:$true] %s2096
          %2099 = dma.hbm_to_vmem [thread:$0]  %s2095, 16, %s2097, [#allocation20]
        $region148: #{prose_2to1_fwd.1} parent=11 // pred_fallthru
          _
        // Predicated region
        $region149: #{prose_2to1_fwd.1} parent=11 // pred_check
          %p2100 = pneg %p1072
        $region150: #{prose_2to1_fwd.1} parent=11 // pred_check_branch
          %2102 = sbr.rel (%p2100) target = $region152
        $region151: #{prose_2to1_fwd.1} parent=11 // pred_region
          _
        $region152: #{prose_2to1_fwd.1} parent=11 // pred_fallthru
          _
        // Predicated region
        $region153: #{prose_2to1_fwd.1} parent=11 // pred_check
          %p2103 = pneg %p1093
        $region154: #{prose_2to1_fwd.1} parent=11 // pred_check_branch
          %2105 = sbr.rel (%p2103) target = $region156
        $region155: #{prose_2to1_fwd.1} parent=11 // pred_region
          %2107 = vsyncadd [#allocation20], 0
          %s2109 = sshll.u32 %s83, 4
          %s2110 = int_to_ptr.hbm [resolvable:$true] %s2109
          %s2111 = sshll.u32 [#allocation21], 4
          %s2112 = int_to_ptr.vmem [resolvable:$true] %s2111
          %2114 = dma.hbm_to_vmem [thread:$0]  %s2110, 16, %s2112, [#allocation20]
        $region156: #{prose_2to1_fwd.1} parent=11 // pred_fallthru
          _
        // Predicated region
        $region157: #{prose_2to1_fwd.1} parent=11 // pred_check
          %p2115 = pneg %p1114
        $region158: #{prose_2to1_fwd.1} parent=11 // pred_check_branch
          %2117 = sbr.rel (%p2115) target = $region160
        $region159: #{prose_2to1_fwd.1} parent=11 // pred_region
          %2119 = vsyncadd [#allocation23], 0
          %s2121 = sshll.u32 %s85, 4
          %s2122 = int_to_ptr.hbm [resolvable:$true] %s2121
          %s2123 = sshll.u32 [#allocation22], 4
          %s2124 = int_to_ptr.vmem [resolvable:$true] %s2123
          %2126 = dma.hbm_to_vmem [thread:$0]  %s2122, 16, %s2124, [#allocation23]
        $region160: #{prose_2to1_fwd.1} parent=11 // pred_fallthru
          _
        // Predicated region
        $region161: #{prose_2to1_fwd.1} parent=11 // pred_check
          %p2127 = pneg %p1135
        $region162: #{prose_2to1_fwd.1} parent=11 // pred_check_branch
          %2129 = sbr.rel (%p2127) target = $region164
        $region163: #{prose_2to1_fwd.1} parent=11 // pred_region
          %2131 = vsyncadd [#allocation23], 0
          %s2133 = sshll.u32 %s87, 4
          %s2134 = int_to_ptr.hbm [resolvable:$true] %s2133
          %s2135 = sshll.u32 [#allocation24], 4
          %s2136 = int_to_ptr.vmem [resolvable:$true] %s2135
          %2138 = dma.hbm_to_vmem [thread:$0]  %s2134, 16, %s2136, [#allocation23]
        $region164: #{prose_2to1_fwd.1} parent=11 // pred_fallthru
          _
        // Predicated region
        $region165: #{prose_2to1_fwd.1} parent=11 // pred_check
          %p2139 = pneg %p1156
        $region166: #{prose_2to1_fwd.1} parent=11 // pred_check_branch
          %2141 = sbr.rel (%p2139) target = $region168
        $region167: #{prose_2to1_fwd.1} parent=11 // pred_region
          _
        $region168: #{prose_2to1_fwd.1} parent=11 // pred_fallthru
          _
        // Predicated region
        $region169: #{prose_2to1_fwd.1} parent=11 // pred_check
          %p2142 = pneg %p1177
        $region170: #{prose_2to1_fwd.1} parent=11 // pred_check_branch
          %2144 = sbr.rel (%p2142) target = $region172
        $region171: #{prose_2to1_fwd.1} parent=11 // pred_region
          _
        $region172: #{prose_2to1_fwd.1} parent=11 // pred_fallthru
          _
        // Predicated region
        $region173: #{prose_2to1_fwd.1} parent=11 // pred_check
          %p2145 = pneg %p1198
        $region174: #{prose_2to1_fwd.1} parent=11 // pred_check_branch
          %2147 = sbr.rel (%p2145) target = $region176
        $region175: #{prose_2to1_fwd.1} parent=11 // pred_region
          _
        $region176: #{prose_2to1_fwd.1} parent=11 // pred_fallthru
          _
        // Predicated region
        $region177: #{prose_2to1_fwd.1} parent=11 // pred_check
          %p2148 = pneg %p1219
        $region178: #{prose_2to1_fwd.1} parent=11 // pred_check_branch
          %2150 = sbr.rel (%p2148) target = $region180
        $region179: #{prose_2to1_fwd.1} parent=11 // pred_region
          _
        $region180: #{prose_2to1_fwd.1} parent=11 // pred_fallthru
          _
        // Predicated region
        $region181: #{prose_2to1_fwd.1} parent=11 // pred_check
          %p2151 = pneg %p1240
        $region182: #{prose_2to1_fwd.1} parent=11 // pred_check_branch
          %2153 = sbr.rel (%p2151) target = $region184
        $region183: #{prose_2to1_fwd.1} parent=11 // pred_region
          %2155 = vsyncadd [#allocation26], 0
          %s2157 = sshll.u32 %s97, 4
          %s2158 = int_to_ptr.hbm [resolvable:$true] %s2157
          %s2159 = sshll.u32 [#allocation25], 4
          %s2160 = int_to_ptr.vmem [resolvable:$true] %s2159
          %2162 = dma.hbm_to_vmem [thread:$0]  %s2158, 16, %s2160, [#allocation26]
        $region184: #{prose_2to1_fwd.1} parent=11 // pred_fallthru
          _
        // Predicated region
        $region185: #{prose_2to1_fwd.1} parent=11 // pred_check
          %p2163 = pneg %p1261
        $region186: #{prose_2to1_fwd.1} parent=11 // pred_check_branch
          %2165 = sbr.rel (%p2163) target = $region188
        $region187: #{prose_2to1_fwd.1} parent=11 // pred_region
          _
        $region188: #{prose_2to1_fwd.1} parent=11 // pred_fallthru
          _
        // Predicated region
        $region189: #{prose_2to1_fwd.1} parent=11 // pred_check
          %p2166 = pneg %p1282
        $region190: #{prose_2to1_fwd.1} parent=11 // pred_check_branch
          %2168 = sbr.rel (%p2166) target = $region192
        $region191: #{prose_2to1_fwd.1} parent=11 // pred_region
          %2170 = vsyncadd [#allocation26], 0
          %s2172 = sshll.u32 %s101, 4
          %s2173 = int_to_ptr.hbm [resolvable:$true] %s2172
          %s2174 = sshll.u32 [#allocation27], 4
          %s2175 = int_to_ptr.vmem [resolvable:$true] %s2174
          %2177 = dma.hbm_to_vmem [thread:$0]  %s2173, 16, %s2175, [#allocation26]
        $region192: #{prose_2to1_fwd.1} parent=11 // pred_fallthru
          _
        // Predicated region
        $region193: #{prose_2to1_fwd.1} parent=11 // pred_check
          %p2178 = pneg %p1303
        $region194: #{prose_2to1_fwd.1} parent=11 // pred_check_branch
          %2180 = sbr.rel (%p2178) target = $region196
        $region195: #{prose_2to1_fwd.1} parent=11 // pred_region
          %2182 = vsyncadd [#allocation29], 0
          %s2184 = sshll.u32 %s103, 4
          %s2185 = int_to_ptr.hbm [resolvable:$true] %s2184
          %s2186 = sshll.u32 [#allocation28], 4
          %s2187 = int_to_ptr.vmem [resolvable:$true] %s2186
          %2189 = dma.hbm_to_vmem [thread:$0]  %s2185, 16, %s2187, [#allocation29]
        $region196: #{prose_2to1_fwd.1} parent=11 // pred_fallthru
          _
        // Predicated region
        $region197: #{prose_2to1_fwd.1} parent=11 // pred_check
          %p2190 = pneg %p1324
        $region198: #{prose_2to1_fwd.1} parent=11 // pred_check_branch
          %2192 = sbr.rel (%p2190) target = $region200
        $region199: #{prose_2to1_fwd.1} parent=11 // pred_region
          %2194 = vsyncadd [#allocation29], 0
          %s2196 = sshll.u32 %s105, 4
          %s2197 = int_to_ptr.hbm [resolvable:$true] %s2196
          %s2198 = sshll.u32 [#allocation30], 4
          %s2199 = int_to_ptr.vmem [resolvable:$true] %s2198
          %2201 = dma.hbm_to_vmem [thread:$0]  %s2197, 16, %s2199, [#allocation29]
        $region200: #{prose_2to1_fwd.1} parent=11 // pred_fallthru
          _
        // Predicated region
        $region201: #{prose_2to1_fwd.1} parent=11 // pred_check
          %p2202 = pneg %p1345
        $region202: #{prose_2to1_fwd.1} parent=11 // pred_check_branch
          %2204 = sbr.rel (%p2202) target = $region204
        $region203: #{prose_2to1_fwd.1} parent=11 // pred_region
          _
        $region204: #{prose_2to1_fwd.1} parent=11 // pred_fallthru
          _
        // Predicated region
        $region205: #{prose_2to1_fwd.1} parent=11 // pred_check
          %p2205 = pneg %p1366
        $region206: #{prose_2to1_fwd.1} parent=11 // pred_check_branch
          %2207 = sbr.rel (%p2205) target = $region208
        $region207: #{prose_2to1_fwd.1} parent=11 // pred_region
          %2209 = vsyncadd [#allocation32], 0
          %s2211 = sshll.u32 %s109, 4
          %s2212 = int_to_ptr.hbm [resolvable:$true] %s2211
          %s2213 = sshll.u32 [#allocation31], 4
          %s2214 = int_to_ptr.vmem [resolvable:$true] %s2213
          %2216 = dma.hbm_to_vmem [thread:$0]  %s2212, 16, %s2214, [#allocation32]
        $region208: #{prose_2to1_fwd.1} parent=11 // pred_fallthru
          _
        // Predicated region
        $region209: #{prose_2to1_fwd.1} parent=11 // pred_check
          %p2217 = pneg %p1387
        $region210: #{prose_2to1_fwd.1} parent=11 // pred_check_branch
          %2219 = sbr.rel (%p2217) target = $region212
        $region211: #{prose_2to1_fwd.1} parent=11 // pred_region
          %2221 = vsyncadd [#allocation32], 0
          %s2223 = sshll.u32 %s111, 4
          %s2224 = int_to_ptr.hbm [resolvable:$true] %s2223
          %s2225 = sshll.u32 [#allocation33], 4
          %s2226 = int_to_ptr.vmem [resolvable:$true] %s2225
          %2228 = dma.hbm_to_vmem [thread:$0]  %s2224, 16, %s2226, [#allocation32]
        $region212: #{prose_2to1_fwd.1} parent=11 // pred_fallthru
          _
        // Predicated region
        $region213: #{prose_2to1_fwd.1} parent=11 // pred_check
          %p2229 = pneg %p1408
        $region214: #{prose_2to1_fwd.1} parent=11 // pred_check_branch
          %2231 = sbr.rel (%p2229) target = $region216
        $region215: #{prose_2to1_fwd.1} parent=11 // pred_region
          _
        $region216: #{prose_2to1_fwd.1} parent=11 // pred_fallthru
          _
        // Predicated region
        $region217: #{prose_2to1_fwd.1} parent=11 // pred_check
          %p2232 = pneg %p1429
        $region218: #{prose_2to1_fwd.1} parent=11 // pred_check_branch
          %2234 = sbr.rel (%p2232) target = $region220
        $region219: #{prose_2to1_fwd.1} parent=11 // pred_region
          _
        $region220: #{prose_2to1_fwd.1} parent=11 // pred_fallthru
          _
        // Predicated region
        $region221: #{prose_2to1_fwd.1} parent=11 // pred_check
          %p2235 = pneg %p1450
        $region222: #{prose_2to1_fwd.1} parent=11 // pred_check_branch
          %2237 = sbr.rel (%p2235) target = $region224
        $region223: #{prose_2to1_fwd.1} parent=11 // pred_region
          %2239 = vsyncadd [#allocation35], 0
          %s2241 = sshll.u32 %s117, 4
          %s2242 = int_to_ptr.hbm [resolvable:$true] %s2241
          %s2243 = sshll.u32 [#allocation34], 4
          %s2244 = int_to_ptr.vmem [resolvable:$true] %s2243
          %2246 = dma.hbm_to_vmem [thread:$0]  %s2242, 16, %s2244, [#allocation35]
        $region224: #{prose_2to1_fwd.1} parent=11 // pred_fallthru
          _
        // Predicated region
        $region225: #{prose_2to1_fwd.1} parent=11 // pred_check
          %p2247 = pneg %p1471
        $region226: #{prose_2to1_fwd.1} parent=11 // pred_check_branch
          %2249 = sbr.rel (%p2247) target = $region228
        $region227: #{prose_2to1_fwd.1} parent=11 // pred_region
          %2251 = vsyncadd [#allocation35], 0
          %s2253 = sshll.u32 %s119, 4
          %s2254 = int_to_ptr.hbm [resolvable:$true] %s2253
          %s2255 = sshll.u32 [#allocation36], 4
          %s2256 = int_to_ptr.vmem [resolvable:$true] %s2255
          %2258 = dma.hbm_to_vmem [thread:$0]  %s2254, 16, %s2256, [#allocation35]
        $region228: #{prose_2to1_fwd.1} parent=11 // pred_fallthru
          _
        // Predicated region
        $region229: #{prose_2to1_fwd.1} parent=11 // pred_check
          %p2259 = pneg %p1492
        $region230: #{prose_2to1_fwd.1} parent=11 // pred_check_branch
          %2261 = sbr.rel (%p2259) target = $region232
        $region231: #{prose_2to1_fwd.1} parent=11 // pred_region
          _
        $region232: #{prose_2to1_fwd.1} parent=11 // pred_fallthru
          _
        // Predicated region
        $region233: #{prose_2to1_fwd.1} parent=11 // pred_check
          %p2262 = pneg %p1513
        $region234: #{prose_2to1_fwd.1} parent=11 // pred_check_branch
          %2264 = sbr.rel (%p2262) target = $region236
        $region235: #{prose_2to1_fwd.1} parent=11 // pred_region
          _
        $region236: #{prose_2to1_fwd.1} parent=11 // pred_fallthru
          _
        // Predicated region
        $region237: #{prose_2to1_fwd.1} parent=11 // pred_check
          %p2265 = pneg %p1534
        $region238: #{prose_2to1_fwd.1} parent=11 // pred_check_branch
          %2267 = sbr.rel (%p2265) target = $region240
        $region239: #{prose_2to1_fwd.1} parent=11 // pred_region
          %2269 = vsyncadd [#allocation38], 0
          %s2271 = sshll.u32 %s125, 4
          %s2272 = int_to_ptr.hbm [resolvable:$true] %s2271
          %s2273 = sshll.u32 [#allocation37], 4
          %s2274 = int_to_ptr.vmem [resolvable:$true] %s2273
          %2276 = dma.hbm_to_vmem [thread:$0]  %s2272, 16, %s2274, [#allocation38]
        $region240: #{prose_2to1_fwd.1} parent=11 // pred_fallthru
          _
        // Predicated region
        $region241: #{prose_2to1_fwd.1} parent=11 // pred_check
          %p2277 = pneg %p1555
        $region242: #{prose_2to1_fwd.1} parent=11 // pred_check_branch
          %2279 = sbr.rel (%p2277) target = $region244
        $region243: #{prose_2to1_fwd.1} parent=11 // pred_region
          %2281 = vsyncadd [#allocation38], 0
          %s2283 = sshll.u32 %s127, 4
          %s2284 = int_to_ptr.hbm [resolvable:$true] %s2283
          %s2285 = sshll.u32 [#allocation39], 4
          %s2286 = int_to_ptr.vmem [resolvable:$true] %s2285
          %2288 = dma.hbm_to_vmem [thread:$0]  %s2284, 16, %s2286, [#allocation38]
        $region244: #{prose_2to1_fwd.1} parent=11 // pred_fallthru
          _
        // Predicated region
        $region245: #{prose_2to1_fwd.1} parent=11 // pred_check
          %p2289 = pneg %p1576
        $region246: #{prose_2to1_fwd.1} parent=11 // pred_check_branch
          %2291 = sbr.rel (%p2289) target = $region248
        $region247: #{prose_2to1_fwd.1} parent=11 // pred_region
          %2293 = vsyncadd [#allocation41], 0
          %s2295 = sshll.u32 %s129, 4
          %s2296 = int_to_ptr.hbm [resolvable:$true] %s2295
          %s2297 = sshll.u32 [#allocation40], 4
          %s2298 = int_to_ptr.vmem [resolvable:$true] %s2297
          %2300 = dma.hbm_to_vmem [thread:$0]  %s2296, 16, %s2298, [#allocation41]
        $region248: #{prose_2to1_fwd.1} parent=11 // pred_fallthru
          _
        // Predicated region
        $region249: #{prose_2to1_fwd.1} parent=11 // pred_check
          %p2301 = pneg %p1597
        $region250: #{prose_2to1_fwd.1} parent=11 // pred_check_branch
          %2303 = sbr.rel (%p2301) target = $region252
        $region251: #{prose_2to1_fwd.1} parent=11 // pred_region
          %2305 = vsyncadd [#allocation41], 0
          %s2307 = sshll.u32 %s131, 4
          %s2308 = int_to_ptr.hbm [resolvable:$true] %s2307
          %s2309 = sshll.u32 [#allocation42], 4
          %s2310 = int_to_ptr.vmem [resolvable:$true] %s2309
          %2312 = dma.hbm_to_vmem [thread:$0]  %s2308, 16, %s2310, [#allocation41]
        $region252: #{prose_2to1_fwd.1} parent=11 // pred_fallthru
          _
        // Predicated region
        $region253: #{prose_2to1_fwd.1} parent=11 // pred_check
          %p2313 = pneg %p1618
        $region254: #{prose_2to1_fwd.1} parent=11 // pred_check_branch
          %2315 = sbr.rel (%p2313) target = $region256
        $region255: #{prose_2to1_fwd.1} parent=11 // pred_region
          %2317 = vsyncadd [#allocation44], 0
          %s2319 = sshll.u32 %s133, 4
          %s2320 = int_to_ptr.hbm [resolvable:$true] %s2319
          %s2321 = sshll.u32 [#allocation43], 4
          %s2322 = int_to_ptr.vmem [resolvable:$true] %s2321
          %2324 = dma.hbm_to_vmem [thread:$0]  %s2320, 16, %s2322, [#allocation44]
        $region256: #{prose_2to1_fwd.1} parent=11 // pred_fallthru
          _
        // Predicated region
        $region257: #{prose_2to1_fwd.1} parent=11 // pred_check
          %p2325 = pneg %p1639
        $region258: #{prose_2to1_fwd.1} parent=11 // pred_check_branch
          %2327 = sbr.rel (%p2325) target = $region260
        $region259: #{prose_2to1_fwd.1} parent=11 // pred_region
          %2329 = vsyncadd [#allocation44], 0
          %s2331 = sshll.u32 %s135, 4
          %s2332 = int_to_ptr.hbm [resolvable:$true] %s2331
          %s2333 = sshll.u32 [#allocation45], 4
          %s2334 = int_to_ptr.vmem [resolvable:$true] %s2333
          %2336 = dma.hbm_to_vmem [thread:$0]  %s2332, 16, %s2334, [#allocation44]
        $region260: #{prose_2to1_fwd.1} parent=11 // pred_fallthru
          _
        // Predicated region
        $region261: #{prose_2to1_fwd.1} parent=11 // pred_check
          %p2337 = pneg %p1660
        $region262: #{prose_2to1_fwd.1} parent=11 // pred_check_branch
          %2339 = sbr.rel (%p2337) target = $region264
        $region263: #{prose_2to1_fwd.1} parent=11 // pred_region
          _
        $region264: #{prose_2to1_fwd.1} parent=11 // pred_fallthru
          _
        // Predicated region
        $region265: #{prose_2to1_fwd.1} parent=11 // pred_check
          %p2340 = pneg %p1681
        $region266: #{prose_2to1_fwd.1} parent=11 // pred_check_branch
          %2342 = sbr.rel (%p2340) target = $region268
        $region267: #{prose_2to1_fwd.1} parent=11 // pred_region
          _
        $region268: #{prose_2to1_fwd.1} parent=11 // pred_fallthru
          _
        // Predicated region
        $region269: #{prose_2to1_fwd.1} parent=11 // pred_check
          %p2343 = pneg %p1702
        $region270: #{prose_2to1_fwd.1} parent=11 // pred_check_branch
          %2345 = sbr.rel (%p2343) target = $region272
        $region271: #{prose_2to1_fwd.1} parent=11 // pred_region
          %2347 = vsyncadd [#allocation47], 0
          %s2349 = sshll.u32 %s141, 4
          %s2350 = int_to_ptr.hbm [resolvable:$true] %s2349
          %s2351 = sshll.u32 [#allocation46], 4
          %s2352 = int_to_ptr.vmem [resolvable:$true] %s2351
          %2354 = dma.hbm_to_vmem [thread:$0]  %s2350, 16, %s2352, [#allocation47]
        $region272: #{prose_2to1_fwd.1} parent=11 // pred_fallthru
          _
        // Predicated region
        $region273: #{prose_2to1_fwd.1} parent=11 // pred_check
          %p2355 = pneg %p1723
        $region274: #{prose_2to1_fwd.1} parent=11 // pred_check_branch
          %2357 = sbr.rel (%p2355) target = $region276
        $region275: #{prose_2to1_fwd.1} parent=11 // pred_region
          %2359 = vsyncadd [#allocation47], 0
          %s2361 = sshll.u32 %s143, 4
          %s2362 = int_to_ptr.hbm [resolvable:$true] %s2361
          %s2363 = sshll.u32 [#allocation48], 4
          %s2364 = int_to_ptr.vmem [resolvable:$true] %s2363
          %2366 = dma.hbm_to_vmem [thread:$0]  %s2362, 16, %s2364, [#allocation47]
        $region276: #{prose_2to1_fwd.1} parent=11 // pred_fallthru
          _
        // Predicated region
        $region277: #{prose_2to1_fwd.1} parent=11 // pred_check
          %p2367 = pneg %p1744
        $region278: #{prose_2to1_fwd.1} parent=11 // pred_check_branch
          %2369 = sbr.rel (%p2367) target = $region280
        $region279: #{prose_2to1_fwd.1} parent=11 // pred_region
          _
        $region280: #{prose_2to1_fwd.1} parent=11 // pred_fallthru
          _
        // Predicated region
        $region281: #{prose_2to1_fwd.1} parent=11 // pred_check
          %p2370 = pneg %p1765
        $region282: #{prose_2to1_fwd.1} parent=11 // pred_check_branch
          %2372 = sbr.rel (%p2370) target = $region284
        $region283: #{prose_2to1_fwd.1} parent=11 // pred_region
          _
        $region284: #{prose_2to1_fwd.1} parent=11 // pred_fallthru
          _
        // Predicated region
        $region285: #{prose_2to1_fwd.1} parent=11 // pred_check
          %p2373 = pneg %p1786
        $region286: #{prose_2to1_fwd.1} parent=11 // pred_check_branch
          %2375 = sbr.rel (%p2373) target = $region288
        $region287: #{prose_2to1_fwd.1} parent=11 // pred_region
          %2377 = vsyncadd [#allocation50], 0
          %s2379 = sshll.u32 %s149, 4
          %s2380 = int_to_ptr.hbm [resolvable:$true] %s2379
          %s2381 = sshll.u32 [#allocation49], 4
          %s2382 = int_to_ptr.vmem [resolvable:$true] %s2381
          %2384 = dma.hbm_to_vmem [thread:$0]  %s2380, 16, %s2382, [#allocation50]
        $region288: #{prose_2to1_fwd.1} parent=11 // pred_fallthru
          _
        // Predicated region
        $region289: #{prose_2to1_fwd.1} parent=11 // pred_check
          %p2385 = pneg %p1807
        $region290: #{prose_2to1_fwd.1} parent=11 // pred_check_branch
          %2387 = sbr.rel (%p2385) target = $region292
        $region291: #{prose_2to1_fwd.1} parent=11 // pred_region
          %2389 = vsyncadd [#allocation50], 0
          %s2391 = sshll.u32 %s151, 4
          %s2392 = int_to_ptr.hbm [resolvable:$true] %s2391
          %s2393 = sshll.u32 [#allocation51], 4
          %s2394 = int_to_ptr.vmem [resolvable:$true] %s2393
          %2396 = dma.hbm_to_vmem [thread:$0]  %s2392, 16, %s2394, [#allocation50]
        $region292: #{prose_2to1_fwd.1} parent=11 // pred_fallthru
          _
        // Predicated region
        $region293: #{prose_2to1_fwd.1} parent=11 // pred_check
          %p2397 = pneg %p1828
        $region294: #{prose_2to1_fwd.1} parent=11 // pred_check_branch
          %2399 = sbr.rel (%p2397) target = $region296
        $region295: #{prose_2to1_fwd.1} parent=11 // pred_region
          %2401 = vsyncadd [#allocation53], 0
          %s2403 = sshll.u32 %s153, 4
          %s2404 = int_to_ptr.hbm [resolvable:$true] %s2403
          %s2405 = sshll.u32 [#allocation52], 4
          %s2406 = int_to_ptr.vmem [resolvable:$true] %s2405
          %2408 = dma.hbm_to_vmem [thread:$0]  %s2404, 16, %s2406, [#allocation53]
        $region296: #{prose_2to1_fwd.1} parent=11 // pred_fallthru
          _
        // Predicated region
        $region297: #{prose_2to1_fwd.1} parent=11 // pred_check
          %p2409 = pneg %p1849
        $region298: #{prose_2to1_fwd.1} parent=11 // pred_check_branch
          %2411 = sbr.rel (%p2409) target = $region300
        $region299: #{prose_2to1_fwd.1} parent=11 // pred_region
          %2413 = vsyncadd [#allocation53], 0
          %s2415 = sshll.u32 %s155, 4
          %s2416 = int_to_ptr.hbm [resolvable:$true] %s2415
          %s2417 = sshll.u32 [#allocation54], 4
          %s2418 = int_to_ptr.vmem [resolvable:$true] %s2417
          %2420 = dma.hbm_to_vmem [thread:$0]  %s2416, 16, %s2418, [#allocation53]
        $region300: #{prose_2to1_fwd.1} parent=11 // pred_fallthru
          _
      $region12: #{prose_2to1_fwd.1} parent=5 // pred_fallthru
        _
      %p2421 = scmp.lt.s32.totalorder %s181, 2
      // Predicated region
      $region301: #{prose_2to1_fwd.1} parent=5 // pred_check
        %p2422 = pneg %p2421
      $region302: #{prose_2to1_fwd.1} parent=5 // pred_check_branch
        %2424 = sbr.rel (%p2422) target = $region304
      $region303: #{prose_2to1_fwd.1} parent=5 // pred_region
        // Predicated region
        $region305: #{prose_2to1_fwd.1} parent=303 // pred_check
          %p2425 = pneg %p201
        $region306: #{prose_2to1_fwd.1} parent=303 // pred_check_branch
          %2427 = sbr.rel (%p2425) target = $region308
        $region307: #{prose_2to1_fwd.1} parent=303 // pred_region
          %p2428 = scmp.lt.s32.totalorder %s181, 1
          %s2429 = scalar_select %p2428, %s181, 1
          %s2430 = smul.addr %s2429, 2
          %s2431 = smul.addr %s2430, 8
          %s2432 = scalar_lea.vmem %s1, %s2431
        $region308: #{prose_2to1_fwd.1} parent=303 // pred_fallthru
          _
        // Predicated region
        $region309: #{prose_2to1_fwd.1} parent=303 // pred_check
          %p2433 = pneg %p227
        $region310: #{prose_2to1_fwd.1} parent=303 // pred_check_branch
          %2435 = sbr.rel (%p2433) target = $region312
        $region311: #{prose_2to1_fwd.1} parent=303 // pred_region
          %p2436 = scmp.lt.s32.totalorder %s181, 1
          %s2437 = scalar_select %p2436, %s181, 1
          %s2438 = smul.addr %s2437, 8
          %s2439 = scalar_lea.vmem %s3, %s2438
        $region312: #{prose_2to1_fwd.1} parent=303 // pred_fallthru
          _
        // Predicated region
        $region313: #{prose_2to1_fwd.1} parent=303 // pred_check
          %p2440 = pneg %p253
        $region314: #{prose_2to1_fwd.1} parent=303 // pred_check_branch
          %2442 = sbr.rel (%p2440) target = $region316
        $region315: #{prose_2to1_fwd.1} parent=303 // pred_region
          %p2443 = scmp.lt.s32.totalorder %s181, 1
          %s2444 = scalar_select %p2443, %s181, 1
          %s2445 = scalar_lea.vmem %s5, %s2444
        $region316: #{prose_2to1_fwd.1} parent=303 // pred_fallthru
          _
        // Predicated region
        $region317: #{prose_2to1_fwd.1} parent=303 // pred_check
          %p2446 = pneg %p279
        $region318: #{prose_2to1_fwd.1} parent=303 // pred_check_branch
          %2448 = sbr.rel (%p2446) target = $region320
        $region319: #{prose_2to1_fwd.1} parent=303 // pred_region
          %p2449 = scmp.lt.s32.totalorder %s181, 1
          %s2450 = scalar_select %p2449, %s181, 1
          %s2451 = scalar_lea.vmem %s7, %s2450
        $region320: #{prose_2to1_fwd.1} parent=303 // pred_fallthru
          _
        // Predicated region
        $region321: #{prose_2to1_fwd.1} parent=303 // pred_check
          %p2452 = pneg %p305
        $region322: #{prose_2to1_fwd.1} parent=303 // pred_check_branch
          %2454 = sbr.rel (%p2452) target = $region324
        $region323: #{prose_2to1_fwd.1} parent=303 // pred_region
          %p2455 = scmp.lt.s32.totalorder %s181, 1
          %s2456 = scalar_select %p2455, %s181, 1
          %s2457 = smul.addr %s2456, 2
          %s2458 = scalar_lea.vmem %s9, %s2457
        $region324: #{prose_2to1_fwd.1} parent=303 // pred_fallthru
          _
        // Predicated region
        $region325: #{prose_2to1_fwd.1} parent=303 // pred_check
          %p2459 = pneg %p331
        $region326: #{prose_2to1_fwd.1} parent=303 // pred_check_branch
          %2461 = sbr.rel (%p2459) target = $region328
        $region327: #{prose_2to1_fwd.1} parent=303 // pred_region
          %p2462 = scmp.lt.s32.totalorder %s181, 1
          %s2463 = scalar_select %p2462, %s181, 1
          %s2464 = scalar_lea.vmem %s11, %s2463
        $region328: #{prose_2to1_fwd.1} parent=303 // pred_fallthru
          _
      $region304: #{prose_2to1_fwd.1} parent=5 // pred_fallthru
        _
      %p2465 = scmp.le.s32.totalorder 1, %s181
      %p2466 = scmp.lt.s32.totalorder %s181, 3
      %p2467 = pnand %p2465, %p2466
      %p2468 = pneg %p2467
      // Predicated region
      $region329: #{prose_2to1_fwd.1} parent=5 // pred_check
        _
      $region330: #{prose_2to1_fwd.1} parent=5 // pred_check_branch
        %2470 = sbr.rel (%p2467) target = $region332
      $region331: #{prose_2to1_fwd.1} parent=5 // pred_region
        %s2471 = ssub.s32 %s181, 1
        // Predicated region
        $region333: #{prose_2to1_fwd.1} parent=331 // pred_check
          %p2472 = pneg %p736
        $region334: #{prose_2to1_fwd.1} parent=331 // pred_check_branch
          %2474 = sbr.rel (%p2472) target = $region336
        $region335: #{prose_2to1_fwd.1} parent=331 // pred_region
          %2476 = dma.done [#allocation3], 16
        $region336: #{prose_2to1_fwd.1} parent=331 // pred_fallthru
          _
        // Predicated region
        $region337: #{prose_2to1_fwd.1} parent=331 // pred_check
          %p2477 = pneg %p757
        $region338: #{prose_2to1_fwd.1} parent=331 // pred_check_branch
          %2479 = sbr.rel (%p2477) target = $region340
        $region339: #{prose_2to1_fwd.1} parent=331 // pred_region
          %2481 = dma.done [#allocation5], 16
        $region340: #{prose_2to1_fwd.1} parent=331 // pred_fallthru
          _
        // Predicated region
        $region341: #{prose_2to1_fwd.1} parent=331 // pred_check
          %p2482 = pneg %p820
        $region342: #{prose_2to1_fwd.1} parent=331 // pred_check_branch
          %2484 = sbr.rel (%p2482) target = $region344
        $region343: #{prose_2to1_fwd.1} parent=331 // pred_region
          %2486 = dma.done [#allocation5], 16
        $region344: #{prose_2to1_fwd.1} parent=331 // pred_fallthru
          _
        // Predicated region
        $region345: #{prose_2to1_fwd.1} parent=331 // pred_check
          %p2487 = pneg %p841
        $region346: #{prose_2to1_fwd.1} parent=331 // pred_check_branch
          %2489 = sbr.rel (%p2487) target = $region348
        $region347: #{prose_2to1_fwd.1} parent=331 // pred_region
          %2491 = dma.done [#allocation8], 16
        $region348: #{prose_2to1_fwd.1} parent=331 // pred_fallthru
          _
        // Predicated region
        $region349: #{prose_2to1_fwd.1} parent=331 // pred_check
          %p2492 = pneg %p862
        $region350: #{prose_2to1_fwd.1} parent=331 // pred_check_branch
          %2494 = sbr.rel (%p2492) target = $region352
        $region351: #{prose_2to1_fwd.1} parent=331 // pred_region
          %2496 = dma.done [#allocation8], 16
        $region352: #{prose_2to1_fwd.1} parent=331 // pred_fallthru
          _
        // Predicated region
        $region353: #{prose_2to1_fwd.1} parent=331 // pred_check
          %p2497 = pneg %p883
        $region354: #{prose_2to1_fwd.1} parent=331 // pred_check_branch
          %2499 = sbr.rel (%p2497) target = $region356
        $region355: #{prose_2to1_fwd.1} parent=331 // pred_region
          %2501 = dma.done [#allocation11], 16
        $region356: #{prose_2to1_fwd.1} parent=331 // pred_fallthru
          _
        // Predicated region
        $region357: #{prose_2to1_fwd.1} parent=331 // pred_check
          %p2502 = pneg %p904
        $region358: #{prose_2to1_fwd.1} parent=331 // pred_check_branch
          %2504 = sbr.rel (%p2502) target = $region360
        $region359: #{prose_2to1_fwd.1} parent=331 // pred_region
          %2506 = dma.done [#allocation11], 16
        $region360: #{prose_2to1_fwd.1} parent=331 // pred_fallthru
          _
        // Predicated region
        $region361: #{prose_2to1_fwd.1} parent=331 // pred_check
          %p2507 = pneg %p925
        $region362: #{prose_2to1_fwd.1} parent=331 // pred_check_branch
          %2509 = sbr.rel (%p2507) target = $region364
        $region363: #{prose_2to1_fwd.1} parent=331 // pred_region
          %2511 = dma.done [#allocation14], 16
        $region364: #{prose_2to1_fwd.1} parent=331 // pred_fallthru
          _
        // Predicated region
        $region365: #{prose_2to1_fwd.1} parent=331 // pred_check
          %p2512 = pneg %p946
        $region366: #{prose_2to1_fwd.1} parent=331 // pred_check_branch
          %2514 = sbr.rel (%p2512) target = $region368
        $region367: #{prose_2to1_fwd.1} parent=331 // pred_region
          %2516 = dma.done [#allocation14], 16
        $region368: #{prose_2to1_fwd.1} parent=331 // pred_fallthru
          _
        // Predicated region
        $region369: #{prose_2to1_fwd.1} parent=331 // pred_check
          %p2517 = pneg %p967
        $region370: #{prose_2to1_fwd.1} parent=331 // pred_check_branch
          %2519 = sbr.rel (%p2517) target = $region372
        $region371: #{prose_2to1_fwd.1} parent=331 // pred_region
          %2521 = dma.done [#allocation17], 16
        $region372: #{prose_2to1_fwd.1} parent=331 // pred_fallthru
          _
        // Predicated region
        $region373: #{prose_2to1_fwd.1} parent=331 // pred_check
          %p2522 = pneg %p1030
        $region374: #{prose_2to1_fwd.1} parent=331 // pred_check_branch
          %2524 = sbr.rel (%p2522) target = $region376
        $region375: #{prose_2to1_fwd.1} parent=331 // pred_region
          %2526 = dma.done [#allocation17], 16
        $region376: #{prose_2to1_fwd.1} parent=331 // pred_fallthru
          _
        // Predicated region
        $region377: #{prose_2to1_fwd.1} parent=331 // pred_check
          %p2527 = pneg %p1051
        $region378: #{prose_2to1_fwd.1} parent=331 // pred_check_branch
          %2529 = sbr.rel (%p2527) target = $region380
        $region379: #{prose_2to1_fwd.1} parent=331 // pred_region
          %2531 = dma.done [#allocation20], 16
        $region380: #{prose_2to1_fwd.1} parent=331 // pred_fallthru
          _
        // Predicated region
        $region381: #{prose_2to1_fwd.1} parent=331 // pred_check
          %p2532 = pneg %p1093
        $region382: #{prose_2to1_fwd.1} parent=331 // pred_check_branch
          %2534 = sbr.rel (%p2532) target = $region384
        $region383: #{prose_2to1_fwd.1} parent=331 // pred_region
          %2536 = dma.done [#allocation20], 16
        $region384: #{prose_2to1_fwd.1} parent=331 // pred_fallthru
          _
        // Predicated region
        $region385: #{prose_2to1_fwd.1} parent=331 // pred_check
          %p2537 = pneg %p1114
        $region386: #{prose_2to1_fwd.1} parent=331 // pred_check_branch
          %2539 = sbr.rel (%p2537) target = $region388
        $region387: #{prose_2to1_fwd.1} parent=331 // pred_region
          %2541 = dma.done [#allocation23], 16
        $region388: #{prose_2to1_fwd.1} parent=331 // pred_fallthru
          _
        // Predicated region
        $region389: #{prose_2to1_fwd.1} parent=331 // pred_check
          %p2542 = pneg %p1135
        $region390: #{prose_2to1_fwd.1} parent=331 // pred_check_branch
          %2544 = sbr.rel (%p2542) target = $region392
        $region391: #{prose_2to1_fwd.1} parent=331 // pred_region
          %2546 = dma.done [#allocation23], 16
        $region392: #{prose_2to1_fwd.1} parent=331 // pred_fallthru
          _
        // Predicated region
        $region393: #{prose_2to1_fwd.1} parent=331 // pred_check
          %p2547 = pneg %p1240
        $region394: #{prose_2to1_fwd.1} parent=331 // pred_check_branch
          %2549 = sbr.rel (%p2547) target = $region396
        $region395: #{prose_2to1_fwd.1} parent=331 // pred_region
          %2551 = dma.done [#allocation26], 16
        $region396: #{prose_2to1_fwd.1} parent=331 // pred_fallthru
          _
        // Predicated region
        $region397: #{prose_2to1_fwd.1} parent=331 // pred_check
          %p2552 = pneg %p1282
        $region398: #{prose_2to1_fwd.1} parent=331 // pred_check_branch
          %2554 = sbr.rel (%p2552) target = $region400
        $region399: #{prose_2to1_fwd.1} parent=331 // pred_region
          %2556 = dma.done [#allocation26], 16
        $region400: #{prose_2to1_fwd.1} parent=331 // pred_fallthru
          _
        // Predicated region
        $region401: #{prose_2to1_fwd.1} parent=331 // pred_check
          %p2557 = pneg %p1303
        $region402: #{prose_2to1_fwd.1} parent=331 // pred_check_branch
          %2559 = sbr.rel (%p2557) target = $region404
        $region403: #{prose_2to1_fwd.1} parent=331 // pred_region
          %2561 = dma.done [#allocation29], 16
        $region404: #{prose_2to1_fwd.1} parent=331 // pred_fallthru
          _
        // Predicated region
        $region405: #{prose_2to1_fwd.1} parent=331 // pred_check
          %p2562 = pneg %p1324
        $region406: #{prose_2to1_fwd.1} parent=331 // pred_check_branch
          %2564 = sbr.rel (%p2562) target = $region408
        $region407: #{prose_2to1_fwd.1} parent=331 // pred_region
          %2566 = dma.done [#allocation29], 16
        $region408: #{prose_2to1_fwd.1} parent=331 // pred_fallthru
          _
        // Predicated region
        $region409: #{prose_2to1_fwd.1} parent=331 // pred_check
          %p2567 = pneg %p1366
        $region410: #{prose_2to1_fwd.1} parent=331 // pred_check_branch
          %2569 = sbr.rel (%p2567) target = $region412
        $region411: #{prose_2to1_fwd.1} parent=331 // pred_region
          %2571 = dma.done [#allocation32], 16
        $region412: #{prose_2to1_fwd.1} parent=331 // pred_fallthru
          _
        // Predicated region
        $region413: #{prose_2to1_fwd.1} parent=331 // pred_check
          %p2572 = pneg %p1387
        $region414: #{prose_2to1_fwd.1} parent=331 // pred_check_branch
          %2574 = sbr.rel (%p2572) target = $region416
        $region415: #{prose_2to1_fwd.1} parent=331 // pred_region
          %2576 = dma.done [#allocation32], 16
        $region416: #{prose_2to1_fwd.1} parent=331 // pred_fallthru
          _
        // Predicated region
        $region417: #{prose_2to1_fwd.1} parent=331 // pred_check
          %p2577 = pneg %p1450
        $region418: #{prose_2to1_fwd.1} parent=331 // pred_check_branch
          %2579 = sbr.rel (%p2577) target = $region420
        $region419: #{prose_2to1_fwd.1} parent=331 // pred_region
          %2581 = dma.done [#allocation35], 16
        $region420: #{prose_2to1_fwd.1} parent=331 // pred_fallthru
          _
        // Predicated region
        $region421: #{prose_2to1_fwd.1} parent=331 // pred_check
          %p2582 = pneg %p1471
        $region422: #{prose_2to1_fwd.1} parent=331 // pred_check_branch
          %2584 = sbr.rel (%p2582) target = $region424
        $region423: #{prose_2to1_fwd.1} parent=331 // pred_region
          %2586 = dma.done [#allocation35], 16
        $region424: #{prose_2to1_fwd.1} parent=331 // pred_fallthru
          _
        // Predicated region
        $region425: #{prose_2to1_fwd.1} parent=331 // pred_check
          %p2587 = pneg %p1534
        $region426: #{prose_2to1_fwd.1} parent=331 // pred_check_branch
          %2589 = sbr.rel (%p2587) target = $region428
        $region427: #{prose_2to1_fwd.1} parent=331 // pred_region
          %2591 = dma.done [#allocation38], 16
        $region428: #{prose_2to1_fwd.1} parent=331 // pred_fallthru
          _
        // Predicated region
        $region429: #{prose_2to1_fwd.1} parent=331 // pred_check
          %p2592 = pneg %p1555
        $region430: #{prose_2to1_fwd.1} parent=331 // pred_check_branch
          %2594 = sbr.rel (%p2592) target = $region432
        $region431: #{prose_2to1_fwd.1} parent=331 // pred_region
          %2596 = dma.done [#allocation38], 16
        $region432: #{prose_2to1_fwd.1} parent=331 // pred_fallthru
          _
        // Predicated region
        $region433: #{prose_2to1_fwd.1} parent=331 // pred_check
          %p2597 = pneg %p1576
        $region434: #{prose_2to1_fwd.1} parent=331 // pred_check_branch
          %2599 = sbr.rel (%p2597) target = $region436
        $region435: #{prose_2to1_fwd.1} parent=331 // pred_region
          %2601 = dma.done [#allocation41], 16
        $region436: #{prose_2to1_fwd.1} parent=331 // pred_fallthru
          _
        // Predicated region
        $region437: #{prose_2to1_fwd.1} parent=331 // pred_check
          %p2602 = pneg %p1597
        $region438: #{prose_2to1_fwd.1} parent=331 // pred_check_branch
          %2604 = sbr.rel (%p2602) target = $region440
        $region439: #{prose_2to1_fwd.1} parent=331 // pred_region
          %2606 = dma.done [#allocation41], 16
        $region440: #{prose_2to1_fwd.1} parent=331 // pred_fallthru
          _
        // Predicated region
        $region441: #{prose_2to1_fwd.1} parent=331 // pred_check
          %p2607 = pneg %p1618
        $region442: #{prose_2to1_fwd.1} parent=331 // pred_check_branch
          %2609 = sbr.rel (%p2607) target = $region444
        $region443: #{prose_2to1_fwd.1} parent=331 // pred_region
          %2611 = dma.done [#allocation44], 16
        $region444: #{prose_2to1_fwd.1} parent=331 // pred_fallthru
          _
        // Predicated region
        $region445: #{prose_2to1_fwd.1} parent=331 // pred_check
          %p2612 = pneg %p1639
        $region446: #{prose_2to1_fwd.1} parent=331 // pred_check_branch
          %2614 = sbr.rel (%p2612) target = $region448
        $region447: #{prose_2to1_fwd.1} parent=331 // pred_region
          %2616 = dma.done [#allocation44], 16
        $region448: #{prose_2to1_fwd.1} parent=331 // pred_fallthru
          _
        // Predicated region
        $region449: #{prose_2to1_fwd.1} parent=331 // pred_check
          %p2617 = pneg %p1702
        $region450: #{prose_2to1_fwd.1} parent=331 // pred_check_branch
          %2619 = sbr.rel (%p2617) target = $region452
        $region451: #{prose_2to1_fwd.1} parent=331 // pred_region
          %2621 = dma.done [#allocation47], 16
        $region452: #{prose_2to1_fwd.1} parent=331 // pred_fallthru
          _
        // Predicated region
        $region453: #{prose_2to1_fwd.1} parent=331 // pred_check
          %p2622 = pneg %p1723
        $region454: #{prose_2to1_fwd.1} parent=331 // pred_check_branch
          %2624 = sbr.rel (%p2622) target = $region456
        $region455: #{prose_2to1_fwd.1} parent=331 // pred_region
          %2626 = dma.done [#allocation47], 16
        $region456: #{prose_2to1_fwd.1} parent=331 // pred_fallthru
          _
        // Predicated region
        $region457: #{prose_2to1_fwd.1} parent=331 // pred_check
          %p2627 = pneg %p1786
        $region458: #{prose_2to1_fwd.1} parent=331 // pred_check_branch
          %2629 = sbr.rel (%p2627) target = $region460
        $region459: #{prose_2to1_fwd.1} parent=331 // pred_region
          %2631 = dma.done [#allocation50], 16
        $region460: #{prose_2to1_fwd.1} parent=331 // pred_fallthru
          _
        // Predicated region
        $region461: #{prose_2to1_fwd.1} parent=331 // pred_check
          %p2632 = pneg %p1807
        $region462: #{prose_2to1_fwd.1} parent=331 // pred_check_branch
          %2634 = sbr.rel (%p2632) target = $region464
        $region463: #{prose_2to1_fwd.1} parent=331 // pred_region
          %2636 = dma.done [#allocation50], 16
        $region464: #{prose_2to1_fwd.1} parent=331 // pred_fallthru
          _
        // Predicated region
        $region465: #{prose_2to1_fwd.1} parent=331 // pred_check
          %p2637 = pneg %p1828
        $region466: #{prose_2to1_fwd.1} parent=331 // pred_check_branch
          %2639 = sbr.rel (%p2637) target = $region468
        $region467: #{prose_2to1_fwd.1} parent=331 // pred_region
          %2641 = dma.done [#allocation53], 16
        $region468: #{prose_2to1_fwd.1} parent=331 // pred_fallthru
          _
        // Predicated region
        $region469: #{prose_2to1_fwd.1} parent=331 // pred_check
          %p2642 = pneg %p1849
        $region470: #{prose_2to1_fwd.1} parent=331 // pred_check_branch
          %2644 = sbr.rel (%p2642) target = $region472
        $region471: #{prose_2to1_fwd.1} parent=331 // pred_region
          %2646 = dma.done [#allocation53], 16
        $region472: #{prose_2to1_fwd.1} parent=331 // pred_fallthru
          _
        %p2647 = scmp.lt.s32.totalorder %s186, 1
        %s2648 = scalar_select %p2647, %s186, 1
        %s2649 = smul.addr %s2648, 2
        %s2650 = smul.addr %s2649, 8
        %s2651 = scalar_lea.vmem %s1, %s2650
        %p2652 = pneg %p207
        %p2653 = pneg %p204
        %p2654 = scmp.lt.s32.totalorder %s186, 1
        %s2655 = scalar_select %p2654, %s186, 1
        %s2656 = smul.addr %s2655, 8
        %s2657 = scalar_lea.vmem %s3, %s2656
        %p2658 = pneg %p233
        %p2659 = pneg %p230
        %p2660 = scmp.lt.s32.totalorder %s186, 1
        %s2661 = scalar_select %p2660, %s186, 1
        %s2662 = scalar_lea.vmem %s5, %s2661
        %p2663 = pneg %p259
        %p2664 = pneg %p256
        %p2665 = scmp.lt.s32.totalorder %s186, 1
        %s2666 = scalar_select %p2665, %s186, 1
        %s2667 = scalar_lea.vmem %s7, %s2666
        %p2668 = pneg %p285
        %p2669 = pneg %p282
        %p2670 = scmp.lt.s32.totalorder %s186, 1
        %s2671 = scalar_select %p2670, %s186, 1
        %s2672 = smul.addr %s2671, 2
        %s2673 = scalar_lea.vmem %s9, %s2672
        %p2674 = pneg %p311
        %p2675 = pneg %p308
        %p2676 = scmp.lt.s32.totalorder %s186, 1
        %s2677 = scalar_select %p2676, %s186, 1
        %s2678 = scalar_lea.vmem %s11, %s2677
        %p2679 = pneg %p337
        %p2680 = pneg %p334
        %p2681 = pneg %p358
        %p2682 = pneg %p355
        %p2683 = pneg %p379
        %p2684 = pneg %p376
        %p2685 = pneg %p400
        %p2686 = pneg %p397
        %p2687 = pneg %p421
        %p2688 = pneg %p418
        %p2689 = pneg %p442
        %p2690 = pneg %p439
        %p2691 = pneg %p463
        %p2692 = pneg %p460
        %p2693 = pneg %p484
        %p2694 = pneg %p481
        %p2695 = pneg %p505
        %p2696 = pneg %p502
        %p2697 = pneg %p526
        %p2698 = pneg %p523
        %p2699 = pneg %p547
        %p2700 = pneg %p544
        %p2701 = pneg %p568
        %p2702 = pneg %p565
        %p2703 = pneg %p589
        %p2704 = pneg %p586
        %p2705 = pneg %p610
        %p2706 = pneg %p607
        %p2707 = pneg %p631
        %p2708 = pneg %p628
        %p2709 = pneg %p652
        %p2710 = pneg %p649
        %p2711 = pneg %p673
        %p2712 = pneg %p670
        %p2713 = pneg %p694
        %p2714 = pneg %p691
        %p2715 = pneg %p715
        %p2716 = pneg %p712
        %p2717 = pneg %p736
        %p2718 = pneg %p733
        %p2719 = pneg %p757
        %p2720 = pneg %p754
        %p2721 = pneg %p778
        %p2722 = pneg %p775
        %p2723 = pneg %p799
        %p2724 = pneg %p796
        %p2725 = pneg %p820
        %p2726 = pneg %p817
        %p2727 = pneg %p841
        %p2728 = pneg %p838
        %p2729 = pneg %p862
        %p2730 = pneg %p859
        %p2731 = pneg %p883
        %p2732 = pneg %p880
        %p2733 = pneg %p904
        %p2734 = pneg %p901
        %p2735 = pneg %p925
        %p2736 = pneg %p922
        %p2737 = pneg %p946
        %p2738 = pneg %p943
        %p2739 = pneg %p967
        %p2740 = pneg %p964
        %p2741 = pneg %p988
        %p2742 = pneg %p985
        %p2743 = pneg %p1009
        %p2744 = pneg %p1006
        %p2745 = pneg %p1030
        %p2746 = pneg %p1027
        %p2747 = pneg %p1051
        %p2748 = pneg %p1048
        %p2749 = pneg %p1072
        %p2750 = pneg %p1069
        %p2751 = pneg %p1093
        %p2752 = pneg %p1090
        %p2753 = pneg %p1114
        %p2754 = pneg %p1111
        %p2755 = pneg %p1135
        %p2756 = pneg %p1132
        %p2757 = pneg %p1156
        %p2758 = pneg %p1153
        %p2759 = pneg %p1177
        %p2760 = pneg %p1174
        %p2761 = pneg %p1198
        %p2762 = pneg %p1195
        %p2763 = pneg %p1219
        %p2764 = pneg %p1216
        %p2765 = pneg %p1240
        %p2766 = pneg %p1237
        %p2767 = pneg %p1261
        %p2768 = pneg %p1258
        %p2769 = pneg %p1282
        %p2770 = pneg %p1279
        %p2771 = pneg %p1303
        %p2772 = pneg %p1300
        %p2773 = pneg %p1324
        %p2774 = pneg %p1321
        %p2775 = pneg %p1345
        %p2776 = pneg %p1342
        %p2777 = pneg %p1366
        %p2778 = pneg %p1363
        %p2779 = pneg %p1387
        %p2780 = pneg %p1384
        %p2781 = pneg %p1408
        %p2782 = pneg %p1405
        %p2783 = pneg %p1429
        %p2784 = pneg %p1426
        %p2785 = pneg %p1450
        %p2786 = pneg %p1447
        %p2787 = pneg %p1471
        %p2788 = pneg %p1468
        %p2789 = pneg %p1492
        %p2790 = pneg %p1489
        %p2791 = pneg %p1513
        %p2792 = pneg %p1510
        %p2793 = pneg %p1534
        %p2794 = pneg %p1531
        %p2795 = pneg %p1555
        %p2796 = pneg %p1552
        %p2797 = pneg %p1576
        %p2798 = pneg %p1573
        %p2799 = pneg %p1597
        %p2800 = pneg %p1594
        %p2801 = pneg %p1618
        %p2802 = pneg %p1615
        %p2803 = pneg %p1639
        %p2804 = pneg %p1636
        %p2805 = pneg %p1660
        %p2806 = pneg %p1657
        %p2807 = pneg %p1681
        %p2808 = pneg %p1678
        %p2809 = pneg %p1702
        %p2810 = pneg %p1699
        %p2811 = pneg %p1723
        %p2812 = pneg %p1720
        %p2813 = pneg %p1744
        %p2814 = pneg %p1741
        %p2815 = pneg %p1765
        %p2816 = pneg %p1762
        %p2817 = pneg %p1786
        %p2818 = pneg %p1783
        %p2819 = pneg %p1807
        %p2820 = pneg %p1804
        %p2821 = pneg %p1828
        %p2822 = pneg %p1825
        %p2823 = pneg %p1849
        %p2824 = pneg %p1846
        %p2825 = pneg %p1875
        %p2826 = pneg %p1872
        %p2827 = scmp.lt.s32.totalorder %s186, 1
        %s2828 = scalar_select %p2827, %s186, 1
        %s2829 = smul.addr %s2828, 2
        %s2830 = smul.addr %s2829, 4
        %s2831 = scalar_lea.vmem %s157, %s2830
        %p2832 = scmp.lt.s32.totalorder %s186, 1
        %s2833 = scalar_select %p2832, %s186, 1
        %s2834 = smul.addr %s2833, 2
        %s2835 = smul.addr %s2834, 8
        %s2836 = scalar_lea.vmem %s1, %s2835
        %p2837 = scmp.lt.s32.totalorder %s186, 1
        %s2838 = scalar_select %p2837, %s186, 1
        %s2839 = smul.addr %s2838, 8
        %s2840 = scalar_lea.vmem %s3, %s2839
        %p2841 = scmp.lt.s32.totalorder %s186, 1
        %s2842 = scalar_select %p2841, %s186, 1
        %s2843 = scalar_lea.vmem %s5, %s2842
        %p2844 = scmp.lt.s32.totalorder %s186, 1
        %s2845 = scalar_select %p2844, %s186, 1
        %s2846 = scalar_lea.vmem %s7, %s2845
        %p2847 = scmp.lt.s32.totalorder %s186, 1
        %s2848 = scalar_select %p2847, %s186, 1
        %s2849 = smul.addr %s2848, 2
        %s2850 = scalar_lea.vmem %s9, %s2849
        %p2851 = scmp.lt.s32.totalorder %s186, 1
        %s2852 = scalar_select %p2851, %s186, 1
        %s2853 = scalar_lea.vmem %s11, %s2852
        %p2854 = scmp.lt.s32.totalorder %s186, 1
        %s2855 = scalar_select %p2854, %s186, 1
        %s2856 = smul.addr %s2855, 2
        %s2857 = smul.addr %s2856, 4
        %s2858 = scalar_lea.vmem %s157, %s2857
        %v2859 = vld [vmem:[%s13] sm:$0x1]
        %v2860 = vld [vmem:[%s15] sm:$0x1]
        %v2861 = vld [vmem:[%s17] sm:$0xff]
        %v2862 = vld [vmem:[%s17 + $0x8] sm:$0xff]
        %v2863 = vld [vmem:[%s17 + $0x10] sm:$0xff]
        %v2864 = vld [vmem:[%s17 + $0x18] sm:$0xff]
        %v2865 = vld [vmem:[%s19] sm:$0xff]
        %v2866 = vld [vmem:[%s19 + $0x8] sm:$0xff]
        %v2867 = vld [vmem:[%s19 + $0x10] sm:$0xff]
        %v2868 = vld [vmem:[%s19 + $0x18] sm:$0xff]
        %v2869 = vld [vmem:[%s21] sm:$0x1]
        %v2870 = vld [vmem:[%s23] sm:$0x1]
        %v2871 = vld [vmem:[%s25] sm:$0xff]
        %v2872 = vld [vmem:[%s25 + $0x8] sm:$0xff]
        %v2873 = vld [vmem:[%s25 + $0x10] sm:$0xff]
        %v2874 = vld [vmem:[%s25 + $0x18] sm:$0xff]
        %v2875 = vld [vmem:[%s27] sm:$0xff]
        %v2876 = vld [vmem:[%s27 + $0x8] sm:$0xff]
        %v2877 = vld [vmem:[%s27 + $0x10] sm:$0xff]
        %v2878 = vld [vmem:[%s27 + $0x18] sm:$0xff]
        %v2879 = vld [vmem:[%s27 + $0x20] sm:$0xff]
        %v2880 = vld [vmem:[%s27 + $0x28] sm:$0xff]
        %v2881 = vld [vmem:[%s27 + $0x30] sm:$0xff]
        %v2882 = vld [vmem:[%s27 + $0x38] sm:$0xff]
        %v2883 = vld [vmem:[%s29] sm:$0x1]
        %v2884 = vld [vmem:[%s31] sm:$0x1]
        %v2885 = vld [vmem:[%s33] sm:$0x1]
        %v2886 = vld [vmem:[%s35] sm:$0x1]
        %v2887 = vld [vmem:[%s37] sm:$0x1]
        %v2888 = vld [vmem:[%s39] sm:$0x1]
        %v2889 = vld [vmem:[%s41] sm:$0x1]
        %v2890 = vld [vmem:[%s43] sm:$0xff]
        %v2891 = vld [vmem:[%s43 + $0x8] sm:$0xff]
        %v2892 = vld [vmem:[%s43 + $0x10] sm:$0xff]
        %v2893 = vld [vmem:[%s43 + $0x18] sm:$0xff]
        %v2894 = vld [vmem:[%s45] sm:$0xff]
        %v2895 = vld [vmem:[%s45 + $0x8] sm:$0xff]
        %v2896 = vld [vmem:[%s45 + $0x10] sm:$0xff]
        %v2897 = vld [vmem:[%s45 + $0x18] sm:$0xff]
        %v2898 = vld [vmem:[%s47] sm:$0xff]
        %v2899 = vld [vmem:[%s47 + $0x8] sm:$0xff]
        %v2900 = vld [vmem:[%s47 + $0x10] sm:$0xff]
        %v2901 = vld [vmem:[%s47 + $0x18] sm:$0xff]
        %v2902 = vld [vmem:[#allocation2] sm:$0x1]
        %v2903 = vld [vmem:[#allocation4] sm:$0x1]
        %v2904 = vld [vmem:[%s53] sm:$0xff]
        %v2905 = vld [vmem:[%s53 + $0x8] sm:$0xff]
        %v2906 = vld [vmem:[%s53 + $0x10] sm:$0xff]
        %v2907 = vld [vmem:[%s53 + $0x18] sm:$0xff]
        %v2908 = vld [vmem:[%s55] sm:$0xff]
        %v2909 = vld [vmem:[%s55 + $0x8] sm:$0xff]
        %v2910 = vld [vmem:[%s55 + $0x10] sm:$0xff]
        %v2911 = vld [vmem:[%s55 + $0x18] sm:$0xff]
        %v2912 = vld [vmem:[%s55 + $0x20] sm:$0xff]
        %v2913 = vld [vmem:[%s55 + $0x28] sm:$0xff]
        %v2914 = vld [vmem:[%s55 + $0x30] sm:$0xff]
        %v2915 = vld [vmem:[%s55 + $0x38] sm:$0xff]
        %v2916 = vld [vmem:[#allocation6] sm:$0x1]
        %v2917 = vld [vmem:[#allocation7] sm:$0x1]
        %v2918 = vld [vmem:[#allocation9] sm:$0x1]
        %v2919 = vld [vmem:[#allocation10] sm:$0x1]
        %v2920 = vld [vmem:[#allocation12] sm:$0x1]
        %v2921 = vld [vmem:[#allocation13] sm:$0x1]
        %v2922 = vld [vmem:[#allocation15] sm:$0x1]
        %v2923 = vld [vmem:[#allocation16] sm:$0x1]
        %v2924 = vld [vmem:[%s73] sm:$0xff]
        %v2925 = vld [vmem:[%s73 + $0x8] sm:$0xff]
        %v2926 = vld [vmem:[%s73 + $0x10] sm:$0xff]
        %v2927 = vld [vmem:[%s73 + $0x18] sm:$0xff]
        %v2928 = vld [vmem:[%s75] sm:$0xff]
        %v2929 = vld [vmem:[%s75 + $0x8] sm:$0xff]
        %v2930 = vld [vmem:[%s75 + $0x10] sm:$0xff]
        %v2931 = vld [vmem:[%s75 + $0x18] sm:$0xff]
        %v2932 = vld [vmem:[#allocation18] sm:$0x1]
        %v2933 = vld [vmem:[#allocation19] sm:$0x1]
        %v2934 = vld [vmem:[%s81] sm:$0xf]
        %v2935 = vld [vmem:[#allocation21] sm:$0x1]
        %v2936 = vld [vmem:[#allocation22] sm:$0x1]
        %v2937 = vld [vmem:[#allocation24] sm:$0x1]
        %v2938 = vld [vmem:[%s89] sm:$0xff]
        %v2939 = vld [vmem:[%s89 + $0x8] sm:$0xff]
        %v2940 = vld [vmem:[%s89 + $0x10] sm:$0xff]
        %v2941 = vld [vmem:[%s89 + $0x18] sm:$0xff]
        %v2942 = vld [vmem:[%s91] sm:$0x3]
        %v2943 = vld [vmem:[%s93] sm:$0xff]
        %v2944 = vld [vmem:[%s93 + $0x8] sm:$0xff]
        %v2945 = vld [vmem:[%s93 + $0x10] sm:$0xff]
        %v2946 = vld [vmem:[%s93 + $0x18] sm:$0xff]
        %v2947 = vld [vmem:[%s93 + $0x20] sm:$0xff]
        %v2948 = vld [vmem:[%s93 + $0x28] sm:$0xff]
        %v2949 = vld [vmem:[%s93 + $0x30] sm:$0xff]
        %v2950 = vld [vmem:[%s93 + $0x38] sm:$0xff]
        %v2951 = vld [vmem:[%s95] sm:$0xf]
        %v2952 = vld [vmem:[#allocation25] sm:$0x1]
        %v2953 = vld [vmem:[%s99] sm:$0xff]
        %v2954 = vld [vmem:[%s99 + $0x8] sm:$0xff]
        %v2955 = vld [vmem:[%s99 + $0x10] sm:$0xff]
        %v2956 = vld [vmem:[%s99 + $0x18] sm:$0xff]
        %v2957 = vld [vmem:[%s99 + $0x20] sm:$0xff]
        %v2958 = vld [vmem:[%s99 + $0x28] sm:$0xff]
        %v2959 = vld [vmem:[%s99 + $0x30] sm:$0xff]
        %v2960 = vld [vmem:[%s99 + $0x38] sm:$0xff]
        %v2961 = vld [vmem:[%s99 + $0x40] sm:$0xff]
        %v2962 = vld [vmem:[%s99 + $0x48] sm:$0xff]
        %v2963 = vld [vmem:[%s99 + $0x50] sm:$0xff]
        %v2964 = vld [vmem:[%s99 + $0x58] sm:$0xff]
        %v2965 = vld [vmem:[%s99 + $0x60] sm:$0xff]
        %v2966 = vld [vmem:[%s99 + $0x68] sm:$0xff]
        %v2967 = vld [vmem:[%s99 + $0x70] sm:$0xff]
        %v2968 = vld [vmem:[%s99 + $0x78] sm:$0xff]
        %v2969 = vld [vmem:[%s99 + $0x80] sm:$0xff]
        %v2970 = vld [vmem:[%s99 + $0x88] sm:$0xff]
        %v2971 = vld [vmem:[%s99 + $0x90] sm:$0xff]
        %v2972 = vld [vmem:[%s99 + $0x98] sm:$0xff]
        %v2973 = vld [vmem:[%s99 + $0xa0] sm:$0xff]
        %v2974 = vld [vmem:[%s99 + $0xa8] sm:$0xff]
        %v2975 = vld [vmem:[%s99 + $0xb0] sm:$0xff]
        %v2976 = vld [vmem:[%s99 + $0xb8] sm:$0xff]
        %v2977 = vld [vmem:[%s99 + $0xc0] sm:$0xff]
        %v2978 = vld [vmem:[%s99 + $0xc8] sm:$0xff]
        %v2979 = vld [vmem:[%s99 + $0xd0] sm:$0xff]
        %v2980 = vld [vmem:[%s99 + $0xd8] sm:$0xff]
        %v2981 = vld [vmem:[%s99 + $0xe0] sm:$0xff]
        %v2982 = vld [vmem:[%s99 + $0xe8] sm:$0xff]
        %v2983 = vld [vmem:[%s99 + $0xf0] sm:$0xff]
        %v2984 = vld [vmem:[%s99 + $0xf8] sm:$0xff]
        %v2985 = vld [vmem:[#allocation27] sm:$0x1]
        %v2986 = vld [vmem:[#allocation28] sm:$0x1]
        %v2987 = vld [vmem:[#allocation30] sm:$0x1]
        %v2988 = vld [vmem:[%s107] sm:$0xff]
        %v2989 = vld [vmem:[%s107 + $0x8] sm:$0xff]
        %v2990 = vld [vmem:[%s107 + $0x10] sm:$0xff]
        %v2991 = vld [vmem:[%s107 + $0x18] sm:$0xff]
        %v2992 = vld [vmem:[#allocation31] sm:$0x1]
        %v2993 = vld [vmem:[#allocation33] sm:$0x1]
        %v2994 = vld [vmem:[%s113] sm:$0xff]
        %v2995 = vld [vmem:[%s113 + $0x8] sm:$0xff]
        %v2996 = vld [vmem:[%s113 + $0x10] sm:$0xff]
        %v2997 = vld [vmem:[%s113 + $0x18] sm:$0xff]
        %v2998 = vld [vmem:[%s115] sm:$0xff]
        %v2999 = vld [vmem:[%s115 + $0x8] sm:$0xff]
        %v3000 = vld [vmem:[%s115 + $0x10] sm:$0xff]
        %v3001 = vld [vmem:[%s115 + $0x18] sm:$0xff]
        %v3002 = vld [vmem:[#allocation34] sm:$0x1]
        %v3003 = vld [vmem:[#allocation36] sm:$0x1]
        %v3004 = vld [vmem:[%s121] sm:$0xff]
        %v3005 = vld [vmem:[%s121 + $0x8] sm:$0xff]
        %v3006 = vld [vmem:[%s121 + $0x10] sm:$0xff]
        %v3007 = vld [vmem:[%s121 + $0x18] sm:$0xff]
        %v3008 = vld [vmem:[%s123] sm:$0xff]
        %v3009 = vld [vmem:[%s123 + $0x8] sm:$0xff]
        %v3010 = vld [vmem:[%s123 + $0x10] sm:$0xff]
        %v3011 = vld [vmem:[%s123 + $0x18] sm:$0xff]
        %v3012 = vld [vmem:[%s123 + $0x20] sm:$0xff]
        %v3013 = vld [vmem:[%s123 + $0x28] sm:$0xff]
        %v3014 = vld [vmem:[%s123 + $0x30] sm:$0xff]
        %v3015 = vld [vmem:[%s123 + $0x38] sm:$0xff]
        %v3016 = vld [vmem:[#allocation37] sm:$0x1]
        %v3017 = vld [vmem:[#allocation39] sm:$0x1]
        %v3018 = vld [vmem:[#allocation40] sm:$0x1]
        %v3019 = vld [vmem:[#allocation42] sm:$0x1]
        %v3020 = vld [vmem:[#allocation43] sm:$0x1]
        %v3021 = vld [vmem:[#allocation45] sm:$0x1]
        %v3022 = vld [vmem:[%s137] sm:$0xff]
        %v3023 = vld [vmem:[%s137 + $0x8] sm:$0xff]
        %v3024 = vld [vmem:[%s137 + $0x10] sm:$0xff]
        %v3025 = vld [vmem:[%s137 + $0x18] sm:$0xff]
        %v3026 = vld [vmem:[%s139] sm:$0xff]
        %v3027 = vld [vmem:[%s139 + $0x8] sm:$0xff]
        %v3028 = vld [vmem:[%s139 + $0x10] sm:$0xff]
        %v3029 = vld [vmem:[%s139 + $0x18] sm:$0xff]
        %v3030 = vld [vmem:[#allocation46] sm:$0x1]
        %v3031 = vld [vmem:[#allocation48] sm:$0x1]
        %v3032 = vld [vmem:[%s145] sm:$0xff]
        %v3033 = vld [vmem:[%s145 + $0x8] sm:$0xff]
        %v3034 = vld [vmem:[%s145 + $0x10] sm:$0xff]
        %v3035 = vld [vmem:[%s145 + $0x18] sm:$0xff]
        %v3036 = vld [vmem:[%s147] sm:$0xff]
        %v3037 = vld [vmem:[%s147 + $0x8] sm:$0xff]
        %v3038 = vld [vmem:[%s147 + $0x10] sm:$0xff]
        %v3039 = vld [vmem:[%s147 + $0x18] sm:$0xff]
        %v3040 = vld [vmem:[%s147 + $0x20] sm:$0xff]
        %v3041 = vld [vmem:[%s147 + $0x28] sm:$0xff]
        %v3042 = vld [vmem:[%s147 + $0x30] sm:$0xff]
        %v3043 = vld [vmem:[%s147 + $0x38] sm:$0xff]
        %v3044 = vld [vmem:[#allocation49] sm:$0x1]
        %v3045 = vld [vmem:[#allocation51] sm:$0x1]
        %v3046 = vld [vmem:[#allocation52] sm:$0x1]
        %v3047 = vld [vmem:[#allocation54] sm:$0x1]
        %v3048 = vld [vmem:[%s2836] sm:$0xff]
        %v3049 = vld [vmem:[%s2836 + $0x8] sm:$0xff]
        %v3051 = vperm.slane %v2952, 0
        %3053 = vmatpush.msra.mxu0 %v2968
        %3054 = vmatpush.msra.mxu0 %v2967
        %3055 = vmatpush.msra.mxu0 %v2966
        %3056 = vmatpush.msra.mxu0 %v2965
        %3057 = vmatpush.msra.mxu0 %v2964
        %3058 = vmatpush.msra.mxu0 %v2963
        %3059 = vmatpush.msra.mxu0 %v2962
        %3060 = vmatpush.msra.mxu0 %v2961
        %3061 = vmatpush.msra.mxu0 %v2960
        %3062 = vmatpush.msra.mxu0 %v2959
        %3063 = vmatpush.msra.mxu0 %v2958
        %3064 = vmatpush.msra.mxu0 %v2957
        %3065 = vmatpush.msra.mxu0 %v2956
        %3066 = vmatpush.msra.mxu0 %v2955
        %3067 = vmatpush.msra.mxu0 %v2954
        %3068 = vmatpush.msra.mxu0 %v2953
        %3069 = vmatmul.f32.gmra.mxu0 %v3048
        %v3070 = vpop.f32.mrf.mxu0
        %v3071 = vadd.f32 %v3051, %v3070
        %3072 = vdwg.mxu0
        %3073 = vmatpush.msra.mxu0 %v2984
        %3074 = vmatpush.msra.mxu0 %v2983
        %3075 = vmatpush.msra.mxu0 %v2982
        %3076 = vmatpush.msra.mxu0 %v2981
        %3077 = vmatpush.msra.mxu0 %v2980
        %3078 = vmatpush.msra.mxu0 %v2979
        %3079 = vmatpush.msra.mxu0 %v2978
        %3080 = vmatpush.msra.mxu0 %v2977
        %3081 = vmatpush.msra.mxu0 %v2976
        %3082 = vmatpush.msra.mxu0 %v2975
        %3083 = vmatpush.msra.mxu0 %v2974
        %3084 = vmatpush.msra.mxu0 %v2973
        %3085 = vmatpush.msra.mxu0 %v2972
        %3086 = vmatpush.msra.mxu0 %v2971
        %3087 = vmatpush.msra.mxu0 %v2970
        %3088 = vmatpush.msra.mxu0 %v2969
        %3089 = vmatmul.f32.gmra.mxu0 %v3049
        %v3090 = vpop.f32.mrf.mxu0
        %v3091 = vadd.f32 %v3071, %v3090
        %3092 = vdwg.mxu0
        %v3093 = vld [vmem:[%s2850] sm:$0x3]
        %3095 = vset.pattern.permute.xlu0 0
        %3096 = vperm.xlu0 %3095, %v3093
        %v3097 = vpop.permute.xlu0 %3096
        %v3100 = vperm.slane %v2987, 0
        %v3102 = vmul.f32 %v3097, %v3100
        %v3104 = vperm.slane %v2985, 0
        %v3106 = vadd.f32 %v3102, %v3104
        %v3107 = vmul.f32 %v3106, 0.5
        %v3108 = vmul.f32 %v3106, 0.70710677
        %vm3109 = vcmp.ge.f32.partialorder %v3108, 0.0
        %v3110 = vsel %vm3109, 1.0, -1.0
        %v3111 = vand.u32 2147483647, %v3108
        %v3112 = vmul.f32 %v3111, 0.3275911
        %v3113 = vadd.f32 %v3112, 1.0
        %v3114 = vrcp.pop %v3113
        %v3115 = vmul.f32 %v3113, %v3114
        %v3116 = vsub.f32 1.0, %v3115
        %v3117 = vmul.f32 %v3114, %v3116
        %v3118 = vadd.f32 %v3114, %v3117
        %vm3119 = vweird.f32 %v3113
        %vm3120 = vweird.f32 %v3114
        %vm3121 = vmor %vm3119, %vm3120
        %v3122 = vsel %vm3121, %v3114, %v3118
        %v3123 = vand.u32 2147483647, %v3113
        %vm3124 = vcmp.eq.f32.partialorder %v3123, 8.507059e+37
        %v3125 = vand.u32 %v3113, 2147483648
        %v3126 = vor.u32 1.1754944e-38, %v3125
        %v3127 = vsel %vm3124, %v3126, %v3122
        %v3128 = vmul.f32 1.0, %v3127
        %v3129 = vmul.f32 %v3128, 1.0614054
        %v3130 = vadd.f32 %v3129, -1.4531521
        %v3131 = vmul.f32 %v3130, %v3128
        %v3132 = vadd.f32 %v3131, 1.4214138
        %v3133 = vmul.f32 %v3132, %v3128
        %v3134 = vadd.f32 %v3133, -0.28449672
        %v3135 = vmul.f32 %v3134, %v3128
        %v3136 = vadd.f32 %v3135, 0.2548296
        %v3137 = vmul.f32 %v3136, %v3128
        %v3138 = vsub.f32 0.0, %v3111
        %v3139 = vmul.f32 %v3138, %v3111
        %v3140 = vmul.f32 %v3139, 1.442695
        %v3141 = vpow.pop %v3140
        %v3142 = vmul.f32 %v3137, %v3141
        %v3143 = vsub.f32 1.0, %v3142
        %v3144 = vmul.f32 %v3110, %v3143
        %v3145 = vadd.f32 %v3144, 1.0
        %v3146 = vmul.f32 %v3107, %v3145
        %v3148 = vperm.slane %v2986, 0
        %vm3150 = vcmask 261120
        %v3152 = vsel %vm3150, %v3146, 0
        %3154 = vmatpush.msra.mxu0 0.0
        %3155 = vmatpush.msra.mxu0 0.0
        %3156 = vmatpush.msra.mxu0 0.0
        %3157 = vmatpush.msra.mxu0 0.0
        %3158 = vmatpush.msra.mxu0 0.0
        %3159 = vmatpush.msra.mxu0 0.0
        %3160 = vmatpush.msra.mxu0 0.0
        %3161 = vmatpush.msra.mxu0 0.0
        %3162 = vmatpush.msra.mxu0 0.0
        %3163 = vmatpush.msra.mxu0 0.0
        %3164 = vmatpush.msra.mxu0 0.0
        %3165 = vmatpush.msra.mxu0 0.0
        %3166 = vmatpush.msra.mxu0 %v2991
        %3167 = vmatpush.msra.mxu0 %v2990
        %3168 = vmatpush.msra.mxu0 %v2989
        %3169 = vmatpush.msra.mxu0 %v2988
        %3170 = vmatmul.f32.gmra.mxu0 %v3152
        %v3171 = vpop.f32.mrf.mxu0
        %v3172 = vadd.f32 %v3148, %v3171
        %3173 = vdwg.mxu0
        %v3174 = vperm.slane %v3172, 0
        %v3175 = vadd.f32 %v3091, %v3174
        %v3176 = vadd.f32 %v3175, %v2951
        %v3177 = vperm.slane %v3172, 1
        %v3178 = vadd.f32 %v3091, %v3177
        %v3180 = vrot.slane %v2951, 4
        %v3182 = vadd.f32 %v3178, %v3180
        %vm3183 = vcmask 1043456
        %v3184 = vsel %vm3183, %v3176, %v3182
        %v3185 = vsel %vm3150, %v3184, 0.0
        %3186 = vadd.xlane.f32.xlu0 %v3185
        %v3187 = vpop.xlane.xlu0 %3186
        %v3188 = vrcp.pop 32.0
        %v3189 = vmul.f32 32.0, %v3188
        %v3190 = vsub.f32 1.0, %v3189
        %v3191 = vmul.f32 %v3188, %v3190
        %v3192 = vadd.f32 %v3188, %v3191
        %vm3193 = vweird.f32 %v3188
        %v3194 = vsel %vm3193, %v3188, %v3192
        %v3195 = vmul.f32 %v3187, %v3194
        %v3196 = vsub.f32 %v3184, %v3195
        %v3197 = vmul.f32 %v3196, %v3196
        %v3198 = vsel %vm3150, %v3197, 0.0
        %3199 = vadd.xlane.f32.xlu0 %v3198
        %v3200 = vpop.xlane.xlu0 %3199
        %v3201 = vmul.f32 %v3200, %v3194
        %v3202 = vadd.f32 %v3201, 1e-05
        %v3203 = vrsqrt.pop %v3202
        %v3204 = vmul.f32 %v3203, %v3202
        %v3205 = vmul.f32 %v3204, %v3203
        %v3206 = vmul.f32 0.5, %v3205
        %v3207 = vsub.f32 1.5, %v3206
        %v3208 = vmul.f32 %v3203, %v3207
        %vm3209 = vweird.f32 %v3202
        %vm3210 = vweird.f32 %v3203
        %vm3211 = vmor %vm3209, %vm3210
        %v3212 = vsel %vm3211, %v3203, %v3208
        %v3213 = vmul.f32 %v3196, %v3212
        %v3215 = vperm.slane %v2884, 0
        %v3217 = vmul.f32 %v3213, %v3215
        %v3219 = vperm.slane %v2883, 0
        %v3221 = vadd.f32 %v3217, %v3219
        %v3223 = vperm.slane %v2860, 0
        %v3226 = vsel %vm3150, %v3221, 0
        %3228 = vmatpush.msra.mxu0 0.0
        %3229 = vmatpush.msra.mxu0 0.0
        %3230 = vmatpush.msra.mxu0 0.0
        %3231 = vmatpush.msra.mxu0 0.0
        %3232 = vmatpush.msra.mxu0 0.0
        %3233 = vmatpush.msra.mxu0 0.0
        %3234 = vmatpush.msra.mxu0 0.0
        %3235 = vmatpush.msra.mxu0 0.0
        %3236 = vmatpush.msra.mxu0 0.0
        %3237 = vmatpush.msra.mxu0 0.0
        %3238 = vmatpush.msra.mxu0 0.0
        %3239 = vmatpush.msra.mxu0 0.0
        %3240 = vmatpush.msra.mxu0 %v2868
        %3241 = vmatpush.msra.mxu0 %v2867
        %3242 = vmatpush.msra.mxu0 %v2866
        %3243 = vmatpush.msra.mxu0 %v2865
        %3244 = vmatmul.f32.gmra.mxu0 %v3226
        %v3245 = vpop.f32.mrf.mxu0
        %v3246 = vadd.f32 %v3223, %v3245
        %3247 = vdwg.mxu0
        %3249 = vrot.lane.b32.xlu0 %v3246, 96
        %v3250 = vpop.permute.xlu0 %3249
        %vm3251 = vcmask 64512
        %v3252 = vsel %vm3251, %v3246, 0
        %v3254 = vsel %vm3251, %v3250, 0
        %3256 = vmatpush.xpose.msra.mxu0 0.0
        %3257 = vmatpush.xpose.msra.mxu0 0.0
        %3258 = vmatpush.xpose.msra.mxu0 0.0
        %3259 = vmatpush.xpose.msra.mxu0 0.0
        %3260 = vmatpush.xpose.msra.mxu0 0.0
        %3261 = vmatpush.xpose.msra.mxu0 0.0
        %3262 = vmatpush.xpose.msra.mxu0 0.0
        %3263 = vmatpush.xpose.msra.mxu0 0.0
        %3264 = vmatpush.xpose.msra.mxu0 0.0
        %3265 = vmatpush.xpose.msra.mxu0 0.0
        %3266 = vmatpush.xpose.msra.mxu0 0.0
        %3267 = vmatpush.xpose.msra.mxu0 0.0
        %3268 = vmatpush.xpose.msra.mxu0 0.0
        %3269 = vmatpush.xpose.msra.mxu0 0.0
        %3270 = vmatpush.xpose.msra.mxu0 0.0
        %3271 = vmatpush.xpose.msra.mxu0 %v3254
        %3272 = vmatmul.f32.gmra.mxu0 %v3252
        %v3273 = vpop.f32.mrf.mxu0
        %v3274 = vadd.f32 0.0, %v3273
        %3275 = vdwg.mxu0
        %v3276 = vmul.f32 %v3274, 0.35355338
        %v3277 = vsel %vm3251, %v3276, -inf
        %3278 = vmax.xlane.f32.xlu0 %v3277
        %v3279 = vpop.xlane.xlu0 %3278
        %v3280 = vsub.f32 %v3276, %v3279
        %v3281 = vmul.f32 %v3280, 1.442695
        %v3282 = vpow.pop %v3281
        %v3283 = vsel %vm3251, %v3282, 0.0
        %3284 = vadd.xlane.f32.xlu0 %v3283
        %v3285 = vpop.xlane.xlu0 %3284
        %v3286 = vrcp.pop %v3285
        %v3287 = vmul.f32 %v3285, %v3286
        %v3288 = vsub.f32 1.0, %v3287
        %v3289 = vmul.f32 %v3286, %v3288
        %v3290 = vadd.f32 %v3286, %v3289
        %vm3291 = vweird.f32 %v3285
        %vm3292 = vweird.f32 %v3286
        %vm3293 = vmor %vm3291, %vm3292
        %v3294 = vsel %vm3293, %v3286, %v3290
        %v3295 = vand.u32 2147483647, %v3285
        %vm3296 = vcmp.eq.f32.partialorder %v3295, 8.507059e+37
        %v3297 = vand.u32 %v3285, 2147483648
        %v3298 = vor.u32 1.1754944e-38, %v3297
        %v3299 = vsel %vm3296, %v3298, %v3294
        %v3300 = vmul.f32 %v3282, %v3299
        %3301 = vrot.lane.b32.xlu0 %v3246, 64
        %v3302 = vpop.permute.xlu0 %3301
        %v3305 = vsel %vm3251, %v3300, 0
        %3307 = vmatpush.msra.mxu0 0.0
        %3308 = vmatpush.msra.mxu0 0.0
        %3309 = vmatpush.msra.mxu0 0.0
        %3310 = vmatpush.msra.mxu0 0.0
        %3311 = vmatpush.msra.mxu0 0.0
        %3312 = vmatpush.msra.mxu0 0.0
        %3313 = vmatpush.msra.mxu0 0.0
        %3314 = vmatpush.msra.mxu0 0.0
        %3315 = vmatpush.msra.mxu0 0.0
        %3316 = vmatpush.msra.mxu0 0.0
        %3317 = vmatpush.msra.mxu0 0.0
        %3318 = vmatpush.msra.mxu0 0.0
        %3319 = vmatpush.msra.mxu0 0.0
        %3320 = vmatpush.msra.mxu0 0.0
        %3321 = vmatpush.msra.mxu0 0.0
        %3322 = vmatpush.msra.mxu0 %v3302
        %3323 = vmatmul.f32.gmra.mxu0 %v3305
        %v3324 = vpop.f32.mrf.mxu0
        %v3325 = vadd.f32 0.0, %v3324
        %3326 = vdwg.mxu0
        %3327 = vrot.lane.b32.xlu0 %v3246, 120
        %v3328 = vpop.permute.xlu0 %3327
        %3329 = vrot.lane.b32.xlu0 %v3246, 88
        %v3330 = vpop.permute.xlu0 %3329
        %v3331 = vsel %vm3251, %v3328, 0
        %v3333 = vsel %vm3251, %v3330, 0
        %3335 = vmatpush.xpose.msra.mxu0 0.0
        %3336 = vmatpush.xpose.msra.mxu0 0.0
        %3337 = vmatpush.xpose.msra.mxu0 0.0
        %3338 = vmatpush.xpose.msra.mxu0 0.0
        %3339 = vmatpush.xpose.msra.mxu0 0.0
        %3340 = vmatpush.xpose.msra.mxu0 0.0
        %3341 = vmatpush.xpose.msra.mxu0 0.0
        %3342 = vmatpush.xpose.msra.mxu0 0.0
        %3343 = vmatpush.xpose.msra.mxu0 0.0
        %3344 = vmatpush.xpose.msra.mxu0 0.0
        %3345 = vmatpush.xpose.msra.mxu0 0.0
        %3346 = vmatpush.xpose.msra.mxu0 0.0
        %3347 = vmatpush.xpose.msra.mxu0 0.0
        %3348 = vmatpush.xpose.msra.mxu0 0.0
        %3349 = vmatpush.xpose.msra.mxu0 0.0
        %3350 = vmatpush.xpose.msra.mxu0 %v3333
        %3351 = vmatmul.f32.gmra.mxu0 %v3331
        %v3352 = vpop.f32.mrf.mxu0
        %v3353 = vadd.f32 0.0, %v3352
        %3354 = vdwg.mxu0
        %v3355 = vmul.f32 %v3353, 0.35355338
        %v3356 = vsel %vm3251, %v3355, -inf
        %3357 = vmax.xlane.f32.xlu0 %v3356
        %v3358 = vpop.xlane.xlu0 %3357
        %v3359 = vsub.f32 %v3355, %v3358
        %v3360 = vmul.f32 %v3359, 1.442695
        %v3361 = vpow.pop %v3360
        %v3362 = vsel %vm3251, %v3361, 0.0
        %3363 = vadd.xlane.f32.xlu0 %v3362
        %v3364 = vpop.xlane.xlu0 %3363
        %v3365 = vrcp.pop %v3364
        %v3366 = vmul.f32 %v3364, %v3365
        %v3367 = vsub.f32 1.0, %v3366
        %v3368 = vmul.f32 %v3365, %v3367
        %v3369 = vadd.f32 %v3365, %v3368
        %vm3370 = vweird.f32 %v3364
        %vm3371 = vweird.f32 %v3365
        %vm3372 = vmor %vm3370, %vm3371
        %v3373 = vsel %vm3372, %v3365, %v3369
        %v3374 = vand.u32 2147483647, %v3364
        %vm3375 = vcmp.eq.f32.partialorder %v3374, 8.507059e+37
        %v3376 = vand.u32 %v3364, 2147483648
        %v3377 = vor.u32 1.1754944e-38, %v3376
        %v3378 = vsel %vm3375, %v3377, %v3373
        %v3379 = vmul.f32 %v3361, %v3378
        %3380 = vrot.lane.b32.xlu0 %v3246, 56
        %v3381 = vpop.permute.xlu0 %3380
        %v3384 = vsel %vm3251, %v3379, 0
        %3386 = vmatpush.msra.mxu0 0.0
        %3387 = vmatpush.msra.mxu0 0.0
        %3388 = vmatpush.msra.mxu0 0.0
        %3389 = vmatpush.msra.mxu0 0.0
        %3390 = vmatpush.msra.mxu0 0.0
        %3391 = vmatpush.msra.mxu0 0.0
        %3392 = vmatpush.msra.mxu0 0.0
        %3393 = vmatpush.msra.mxu0 0.0
        %3394 = vmatpush.msra.mxu0 0.0
        %3395 = vmatpush.msra.mxu0 0.0
        %3396 = vmatpush.msra.mxu0 0.0
        %3397 = vmatpush.msra.mxu0 0.0
        %3398 = vmatpush.msra.mxu0 0.0
        %3399 = vmatpush.msra.mxu0 0.0
        %3400 = vmatpush.msra.mxu0 0.0
        %3401 = vmatpush.msra.mxu0 %v3381
        %3402 = vmatmul.f32.gmra.mxu0 %v3384
        %v3403 = vpop.f32.mrf.mxu0
        %v3404 = vadd.f32 0.0, %v3403
        %3405 = vdwg.mxu0
        %3406 = vrot.lane.b32.xlu0 %v3246, 112
        %v3407 = vpop.permute.xlu0 %3406
        %3408 = vrot.lane.b32.xlu0 %v3246, 80
        %v3409 = vpop.permute.xlu0 %3408
        %v3410 = vsel %vm3251, %v3407, 0
        %v3412 = vsel %vm3251, %v3409, 0
        %3414 = vmatpush.xpose.msra.mxu0 0.0
        %3415 = vmatpush.xpose.msra.mxu0 0.0
        %3416 = vmatpush.xpose.msra.mxu0 0.0
        %3417 = vmatpush.xpose.msra.mxu0 0.0
        %3418 = vmatpush.xpose.msra.mxu0 0.0
        %3419 = vmatpush.xpose.msra.mxu0 0.0
        %3420 = vmatpush.xpose.msra.mxu0 0.0
        %3421 = vmatpush.xpose.msra.mxu0 0.0
        %3422 = vmatpush.xpose.msra.mxu0 0.0
        %3423 = vmatpush.xpose.msra.mxu0 0.0
        %3424 = vmatpush.xpose.msra.mxu0 0.0
        %3425 = vmatpush.xpose.msra.mxu0 0.0
        %3426 = vmatpush.xpose.msra.mxu0 0.0
        %3427 = vmatpush.xpose.msra.mxu0 0.0
        %3428 = vmatpush.xpose.msra.mxu0 0.0
        %3429 = vmatpush.xpose.msra.mxu0 %v3412
        %3430 = vmatmul.f32.gmra.mxu0 %v3410
        %v3431 = vpop.f32.mrf.mxu0
        %v3432 = vadd.f32 0.0, %v3431
        %3433 = vdwg.mxu0
        %v3434 = vmul.f32 %v3432, 0.35355338
        %v3435 = vsel %vm3251, %v3434, -inf
        %3436 = vmax.xlane.f32.xlu0 %v3435
        %v3437 = vpop.xlane.xlu0 %3436
        %v3438 = vsub.f32 %v3434, %v3437
        %v3439 = vmul.f32 %v3438, 1.442695
        %v3440 = vpow.pop %v3439
        %v3441 = vsel %vm3251, %v3440, 0.0
        %3442 = vadd.xlane.f32.xlu0 %v3441
        %v3443 = vpop.xlane.xlu0 %3442
        %v3444 = vrcp.pop %v3443
        %v3445 = vmul.f32 %v3443, %v3444
        %v3446 = vsub.f32 1.0, %v3445
        %v3447 = vmul.f32 %v3444, %v3446
        %v3448 = vadd.f32 %v3444, %v3447
        %vm3449 = vweird.f32 %v3443
        %vm3450 = vweird.f32 %v3444
        %vm3451 = vmor %vm3449, %vm3450
        %v3452 = vsel %vm3451, %v3444, %v3448
        %v3453 = vand.u32 2147483647, %v3443
        %vm3454 = vcmp.eq.f32.partialorder %v3453, 8.507059e+37
        %v3455 = vand.u32 %v3443, 2147483648
        %v3456 = vor.u32 1.1754944e-38, %v3455
        %v3457 = vsel %vm3454, %v3456, %v3452
        %v3458 = vmul.f32 %v3440, %v3457
        %3459 = vrot.lane.b32.xlu0 %v3246, 48
        %v3460 = vpop.permute.xlu0 %3459
        %v3463 = vsel %vm3251, %v3458, 0
        %3465 = vmatpush.msra.mxu0 0.0
        %3466 = vmatpush.msra.mxu0 0.0
        %3467 = vmatpush.msra.mxu0 0.0
        %3468 = vmatpush.msra.mxu0 0.0
        %3469 = vmatpush.msra.mxu0 0.0
        %3470 = vmatpush.msra.mxu0 0.0
        %3471 = vmatpush.msra.mxu0 0.0
        %3472 = vmatpush.msra.mxu0 0.0
        %3473 = vmatpush.msra.mxu0 0.0
        %3474 = vmatpush.msra.mxu0 0.0
        %3475 = vmatpush.msra.mxu0 0.0
        %3476 = vmatpush.msra.mxu0 0.0
        %3477 = vmatpush.msra.mxu0 0.0
        %3478 = vmatpush.msra.mxu0 0.0
        %3479 = vmatpush.msra.mxu0 0.0
        %3480 = vmatpush.msra.mxu0 %v3460
        %3481 = vmatmul.f32.gmra.mxu0 %v3463
        %v3482 = vpop.f32.mrf.mxu0
        %v3483 = vadd.f32 0.0, %v3482
        %3484 = vdwg.mxu0
        %3485 = vrot.lane.b32.xlu0 %v3246, 104
        %v3486 = vpop.permute.xlu0 %3485
        %3487 = vrot.lane.b32.xlu0 %v3246, 72
        %v3488 = vpop.permute.xlu0 %3487
        %v3489 = vsel %vm3251, %v3486, 0
        %v3491 = vsel %vm3251, %v3488, 0
        %3493 = vmatpush.xpose.msra.mxu0 0.0
        %3494 = vmatpush.xpose.msra.mxu0 0.0
        %3495 = vmatpush.xpose.msra.mxu0 0.0
        %3496 = vmatpush.xpose.msra.mxu0 0.0
        %3497 = vmatpush.xpose.msra.mxu0 0.0
        %3498 = vmatpush.xpose.msra.mxu0 0.0
        %3499 = vmatpush.xpose.msra.mxu0 0.0
        %3500 = vmatpush.xpose.msra.mxu0 0.0
        %3501 = vmatpush.xpose.msra.mxu0 0.0
        %3502 = vmatpush.xpose.msra.mxu0 0.0
        %3503 = vmatpush.xpose.msra.mxu0 0.0
        %3504 = vmatpush.xpose.msra.mxu0 0.0
        %3505 = vmatpush.xpose.msra.mxu0 0.0
        %3506 = vmatpush.xpose.msra.mxu0 0.0
        %3507 = vmatpush.xpose.msra.mxu0 0.0
        %3508 = vmatpush.xpose.msra.mxu0 %v3491
        %3509 = vmatmul.f32.gmra.mxu0 %v3489
        %v3510 = vpop.f32.mrf.mxu0
        %v3511 = vadd.f32 0.0, %v3510
        %3512 = vdwg.mxu0
        %v3513 = vmul.f32 %v3511, 0.35355338
        %v3514 = vsel %vm3251, %v3513, -inf
        %3515 = vmax.xlane.f32.xlu0 %v3514
        %v3516 = vpop.xlane.xlu0 %3515
        %v3517 = vsub.f32 %v3513, %v3516
        %v3518 = vmul.f32 %v3517, 1.442695
        %v3519 = vpow.pop %v3518
        %v3520 = vsel %vm3251, %v3519, 0.0
        %3521 = vadd.xlane.f32.xlu0 %v3520
        %v3522 = vpop.xlane.xlu0 %3521
        %v3523 = vrcp.pop %v3522
        %v3524 = vmul.f32 %v3522, %v3523
        %v3525 = vsub.f32 1.0, %v3524
        %v3526 = vmul.f32 %v3523, %v3525
        %v3527 = vadd.f32 %v3523, %v3526
        %vm3528 = vweird.f32 %v3522
        %vm3529 = vweird.f32 %v3523
        %vm3530 = vmor %vm3528, %vm3529
        %v3531 = vsel %vm3530, %v3523, %v3527
        %v3532 = vand.u32 2147483647, %v3522
        %vm3533 = vcmp.eq.f32.partialorder %v3532, 8.507059e+37
        %v3534 = vand.u32 %v3522, 2147483648
        %v3535 = vor.u32 1.1754944e-38, %v3534
        %v3536 = vsel %vm3533, %v3535, %v3531
        %v3537 = vmul.f32 %v3519, %v3536
        %3538 = vrot.lane.b32.xlu0 %v3246, 40
        %v3539 = vpop.permute.xlu0 %3538
        %v3542 = vsel %vm3251, %v3537, 0
        %3544 = vmatpush.msra.mxu0 0.0
        %3545 = vmatpush.msra.mxu0 0.0
        %3546 = vmatpush.msra.mxu0 0.0
        %3547 = vmatpush.msra.mxu0 0.0
        %3548 = vmatpush.msra.mxu0 0.0
        %3549 = vmatpush.msra.mxu0 0.0
        %3550 = vmatpush.msra.mxu0 0.0
        %3551 = vmatpush.msra.mxu0 0.0
        %3552 = vmatpush.msra.mxu0 0.0
        %3553 = vmatpush.msra.mxu0 0.0
        %3554 = vmatpush.msra.mxu0 0.0
        %3555 = vmatpush.msra.mxu0 0.0
        %3556 = vmatpush.msra.mxu0 0.0
        %3557 = vmatpush.msra.mxu0 0.0
        %3558 = vmatpush.msra.mxu0 0.0
        %3559 = vmatpush.msra.mxu0 %v3539
        %3560 = vmatmul.f32.gmra.mxu0 %v3542
        %v3561 = vpop.f32.mrf.mxu0
        %v3562 = vadd.f32 0.0, %v3561
        %3563 = vdwg.mxu0
        %3565 = vrot.lane.b32.xlu0 %v3404, 8
        %v3566 = vpop.permute.xlu0 %3565
        %3569 = vrot.lane.b32.xlu0 %v3483, 16
        %v3570 = vpop.permute.xlu0 %3569
        %3573 = vrot.lane.b32.xlu0 %v3562, 24
        %v3574 = vpop.permute.xlu0 %3573
        %v3576 = vsel %vm3251, %v3325, %v3566
        %vm3577 = vcmask 130048
        %v3578 = vsel %vm3577, %v3576, %v3570
        %vm3579 = vcmask 195584
        %v3580 = vsel %vm3579, %v3578, %v3574
        %v3582 = vsel %vm3150, %v3580, 0
        %3584 = vmatpush.msra.mxu0 0.0
        %3585 = vmatpush.msra.mxu0 0.0
        %3586 = vmatpush.msra.mxu0 0.0
        %3587 = vmatpush.msra.mxu0 0.0
        %3588 = vmatpush.msra.mxu0 0.0
        %3589 = vmatpush.msra.mxu0 0.0
        %3590 = vmatpush.msra.mxu0 0.0
        %3591 = vmatpush.msra.mxu0 0.0
        %3592 = vmatpush.msra.mxu0 0.0
        %3593 = vmatpush.msra.mxu0 0.0
        %3594 = vmatpush.msra.mxu0 0.0
        %3595 = vmatpush.msra.mxu0 0.0
        %3596 = vmatpush.msra.mxu0 %v2864
        %3597 = vmatpush.msra.mxu0 %v2863
        %3598 = vmatpush.msra.mxu0 %v2862
        %3599 = vmatpush.msra.mxu0 %v2861
        %3600 = vmatmul.f32.gmra.mxu0 %v3582
        %v3601 = vpop.f32.mrf.mxu0
        %v3602 = vadd.f32 0.0, %v3601
        %3603 = vdwg.mxu0
        %v3604 = vadd.f32 %v3184, %v3602
        %v3606 = vperm.slane %v2859, 0
        %v3608 = vadd.f32 %v3604, %v3606
        %v3609 = vsel %vm3150, %v3608, 0.0
        %3610 = vadd.xlane.f32.xlu0 %v3609
        %v3611 = vpop.xlane.xlu0 %3610
        %v3612 = vmul.f32 %v3611, %v3194
        %v3613 = vsub.f32 %v3608, %v3612
        %v3614 = vmul.f32 %v3613, %v3613
        %v3615 = vsel %vm3150, %v3614, 0.0
        %3616 = vadd.xlane.f32.xlu0 %v3615
        %v3617 = vpop.xlane.xlu0 %3616
        %v3618 = vmul.f32 %v3617, %v3194
        %v3619 = vadd.f32 %v3618, 1e-05
        %v3620 = vrsqrt.pop %v3619
        %v3621 = vmul.f32 %v3620, %v3619
        %v3622 = vmul.f32 %v3621, %v3620
        %v3623 = vmul.f32 0.5, %v3622
        %v3624 = vsub.f32 1.5, %v3623
        %v3625 = vmul.f32 %v3620, %v3624
        %vm3626 = vweird.f32 %v3619
        %vm3627 = vweird.f32 %v3620
        %vm3628 = vmor %vm3626, %vm3627
        %v3629 = vsel %vm3628, %v3620, %v3625
        %v3630 = vmul.f32 %v3613, %v3629
        %v3632 = vperm.slane %v2886, 0
        %v3634 = vmul.f32 %v3630, %v3632
        %v3636 = vperm.slane %v2885, 0
        %v3638 = vadd.f32 %v3634, %v3636
        %v3640 = vperm.slane %v2869, 0
        %v3643 = vsel %vm3150, %v3638, 0
        %3645 = vmatpush.msra.mxu0 0.0
        %3646 = vmatpush.msra.mxu0 0.0
        %3647 = vmatpush.msra.mxu0 0.0
        %3648 = vmatpush.msra.mxu0 0.0
        %3649 = vmatpush.msra.mxu0 0.0
        %3650 = vmatpush.msra.mxu0 0.0
        %3651 = vmatpush.msra.mxu0 0.0
        %3652 = vmatpush.msra.mxu0 0.0
        %3653 = vmatpush.msra.mxu0 0.0
        %3654 = vmatpush.msra.mxu0 0.0
        %3655 = vmatpush.msra.mxu0 0.0
        %3656 = vmatpush.msra.mxu0 0.0
        %3657 = vmatpush.msra.mxu0 %v2874
        %3658 = vmatpush.msra.mxu0 %v2873
        %3659 = vmatpush.msra.mxu0 %v2872
        %3660 = vmatpush.msra.mxu0 %v2871
        %3661 = vmatmul.f32.gmra.mxu0 %v3643
        %v3662 = vpop.f32.mrf.mxu0
        %v3663 = vadd.f32 %v3640, %v3662
        %3664 = vdwg.mxu0
        %v3665 = vmul.f32 %v3663, 0.5
        %v3666 = vmul.f32 %v3663, 0.70710677
        %vm3667 = vcmp.ge.f32.partialorder %v3666, 0.0
        %v3668 = vsel %vm3667, 1.0, -1.0
        %v3669 = vand.u32 2147483647, %v3666
        %v3670 = vmul.f32 %v3669, 0.3275911
        %v3671 = vadd.f32 %v3670, 1.0
        %v3672 = vrcp.pop %v3671
        %v3673 = vmul.f32 %v3671, %v3672
        %v3674 = vsub.f32 1.0, %v3673
        %v3675 = vmul.f32 %v3672, %v3674
        %v3676 = vadd.f32 %v3672, %v3675
        %vm3677 = vweird.f32 %v3671
        %vm3678 = vweird.f32 %v3672
        %vm3679 = vmor %vm3677, %vm3678
        %v3680 = vsel %vm3679, %v3672, %v3676
        %v3681 = vand.u32 2147483647, %v3671
        %vm3682 = vcmp.eq.f32.partialorder %v3681, 8.507059e+37
        %v3683 = vand.u32 %v3671, 2147483648
        %v3684 = vor.u32 1.1754944e-38, %v3683
        %v3685 = vsel %vm3682, %v3684, %v3680
        %v3686 = vmul.f32 1.0, %v3685
        %v3687 = vmul.f32 %v3686, 1.0614054
        %v3688 = vadd.f32 %v3687, -1.4531521
        %v3689 = vmul.f32 %v3688, %v3686
        %v3690 = vadd.f32 %v3689, 1.4214138
        %v3691 = vmul.f32 %v3690, %v3686
        %v3692 = vadd.f32 %v3691, -0.28449672
        %v3693 = vmul.f32 %v3692, %v3686
        %v3694 = vadd.f32 %v3693, 0.2548296
        %v3695 = vmul.f32 %v3694, %v3686
        %v3696 = vsub.f32 0.0, %v3669
        %v3697 = vmul.f32 %v3696, %v3669
        %v3698 = vmul.f32 %v3697, 1.442695
        %v3699 = vpow.pop %v3698
        %v3700 = vmul.f32 %v3695, %v3699
        %v3701 = vsub.f32 1.0, %v3700
        %v3702 = vmul.f32 %v3668, %v3701
        %v3703 = vadd.f32 %v3702, 1.0
        %v3704 = vmul.f32 %v3665, %v3703
        %vm3705 = vcmask 523264
        %v3707 = vsel %vm3705, %v3704, 0
        %3709 = vmatpush.msra.mxu0 0.0
        %3710 = vmatpush.msra.mxu0 0.0
        %3711 = vmatpush.msra.mxu0 0.0
        %3712 = vmatpush.msra.mxu0 0.0
        %3713 = vmatpush.msra.mxu0 0.0
        %3714 = vmatpush.msra.mxu0 0.0
        %3715 = vmatpush.msra.mxu0 0.0
        %3716 = vmatpush.msra.mxu0 0.0
        %3717 = vmatpush.msra.mxu0 %v2882
        %3718 = vmatpush.msra.mxu0 %v2881
        %3719 = vmatpush.msra.mxu0 %v2880
        %3720 = vmatpush.msra.mxu0 %v2879
        %3721 = vmatpush.msra.mxu0 %v2878
        %3722 = vmatpush.msra.mxu0 %v2877
        %3723 = vmatpush.msra.mxu0 %v2876
        %3724 = vmatpush.msra.mxu0 %v2875
        %3725 = vmatmul.f32.gmra.mxu0 %v3707
        %v3726 = vpop.f32.mrf.mxu0
        %v3727 = vadd.f32 0.0, %v3726
        %3728 = vdwg.mxu0
        %v3729 = vadd.f32 %v3608, %v3727
        %v3731 = vperm.slane %v2870, 0
        %v3733 = vadd.f32 %v3729, %v3731
        %v3734 = vld [vmem:[%s2840] sm:$0xff]
        %v3735 = vld [vmem:[%s2843] sm:$0x1]
        %v3736 = vsel %vm3150, %v3734, 0.0
        %3737 = vadd.xlane.f32.xlu0 %v3736
        %v3738 = vpop.xlane.xlu0 %3737
        %v3739 = vmul.f32 %v3738, %v3194
        %v3740 = vsub.f32 %v3734, %v3739
        %v3741 = vmul.f32 %v3740, %v3740
        %v3742 = vsel %vm3150, %v3741, 0.0
        %3743 = vadd.xlane.f32.xlu0 %v3742
        %v3744 = vpop.xlane.xlu0 %3743
        %v3745 = vmul.f32 %v3744, %v3194
        %v3746 = vadd.f32 %v3745, 1e-05
        %v3747 = vrsqrt.pop %v3746
        %v3748 = vmul.f32 %v3747, %v3746
        %v3749 = vmul.f32 %v3748, %v3747
        %v3750 = vmul.f32 0.5, %v3749
        %v3751 = vsub.f32 1.5, %v3750
        %v3752 = vmul.f32 %v3747, %v3751
        %vm3753 = vweird.f32 %v3746
        %vm3754 = vweird.f32 %v3747
        %vm3755 = vmor %vm3753, %vm3754
        %v3756 = vsel %vm3755, %v3747, %v3752
        %v3757 = vmul.f32 %v3740, %v3756
        %v3759 = vperm.slane %v3045, 0
        %v3761 = vmul.f32 %v3757, %v3759
        %v3763 = vperm.slane %v3044, 0
        %v3765 = vadd.f32 %v3761, %v3763
        %v3767 = vperm.slane %v3021, 0
        %v3770 = vsel %vm3150, %v3765, 0
        %3772 = vmatpush.msra.mxu0 0.0
        %3773 = vmatpush.msra.mxu0 0.0
        %3774 = vmatpush.msra.mxu0 0.0
        %3775 = vmatpush.msra.mxu0 0.0
        %3776 = vmatpush.msra.mxu0 0.0
        %3777 = vmatpush.msra.mxu0 0.0
        %3778 = vmatpush.msra.mxu0 0.0
        %3779 = vmatpush.msra.mxu0 0.0
        %3780 = vmatpush.msra.mxu0 0.0
        %3781 = vmatpush.msra.mxu0 0.0
        %3782 = vmatpush.msra.mxu0 0.0
        %3783 = vmatpush.msra.mxu0 0.0
        %3784 = vmatpush.msra.mxu0 %v3029
        %3785 = vmatpush.msra.mxu0 %v3028
        %3786 = vmatpush.msra.mxu0 %v3027
        %3787 = vmatpush.msra.mxu0 %v3026
        %3788 = vmatmul.f32.gmra.mxu0 %v3770
        %v3789 = vpop.f32.mrf.mxu0
        %v3790 = vadd.f32 %v3767, %v3789
        %3791 = vdwg.mxu0
        %3793 = vrot.lane.b32.xlu0 %v3790, 96
        %v3794 = vpop.permute.xlu0 %3793
        %v3795 = vsel %vm3251, %v3790, 0
        %v3797 = vsel %vm3251, %v3794, 0
        %3799 = vmatpush.xpose.msra.mxu0 0.0
        %3800 = vmatpush.xpose.msra.mxu0 0.0
        %3801 = vmatpush.xpose.msra.mxu0 0.0
        %3802 = vmatpush.xpose.msra.mxu0 0.0
        %3803 = vmatpush.xpose.msra.mxu0 0.0
        %3804 = vmatpush.xpose.msra.mxu0 0.0
        %3805 = vmatpush.xpose.msra.mxu0 0.0
        %3806 = vmatpush.xpose.msra.mxu0 0.0
        %3807 = vmatpush.xpose.msra.mxu0 0.0
        %3808 = vmatpush.xpose.msra.mxu0 0.0
        %3809 = vmatpush.xpose.msra.mxu0 0.0
        %3810 = vmatpush.xpose.msra.mxu0 0.0
        %3811 = vmatpush.xpose.msra.mxu0 0.0
        %3812 = vmatpush.xpose.msra.mxu0 0.0
        %3813 = vmatpush.xpose.msra.mxu0 0.0
        %3814 = vmatpush.xpose.msra.mxu0 %v3797
        %3815 = vmatmul.f32.gmra.mxu0 %v3795
        %v3816 = vpop.f32.mrf.mxu0
        %v3817 = vadd.f32 0.0, %v3816
        %3818 = vdwg.mxu0
        %v3819 = vmul.f32 %v3817, 0.35355338
        %v3821 = vperm.slane %v3735, 0
        %v3823 = vadd.f32 %v3819, %v3821
        %v3824 = vsel %vm3251, %v3823, -inf
        %3825 = vmax.xlane.f32.xlu0 %v3824
        %v3826 = vpop.xlane.xlu0 %3825
        %v3827 = vsub.f32 %v3823, %v3826
        %v3828 = vmul.f32 %v3827, 1.442695
        %v3829 = vpow.pop %v3828
        %v3830 = vsel %vm3251, %v3829, 0.0
        %3831 = vadd.xlane.f32.xlu0 %v3830
        %v3832 = vpop.xlane.xlu0 %3831
        %v3833 = vrcp.pop %v3832
        %v3834 = vmul.f32 %v3832, %v3833
        %v3835 = vsub.f32 1.0, %v3834
        %v3836 = vmul.f32 %v3833, %v3835
        %v3837 = vadd.f32 %v3833, %v3836
        %vm3838 = vweird.f32 %v3832
        %vm3839 = vweird.f32 %v3833
        %vm3840 = vmor %vm3838, %vm3839
        %v3841 = vsel %vm3840, %v3833, %v3837
        %v3842 = vand.u32 2147483647, %v3832
        %vm3843 = vcmp.eq.f32.partialorder %v3842, 8.507059e+37
        %v3844 = vand.u32 %v3832, 2147483648
        %v3845 = vor.u32 1.1754944e-38, %v3844
        %v3846 = vsel %vm3843, %v3845, %v3841
        %v3847 = vmul.f32 %v3829, %v3846
        %3848 = vrot.lane.b32.xlu0 %v3790, 64
        %v3849 = vpop.permute.xlu0 %3848
        %v3852 = vsel %vm3251, %v3847, 0
        %3854 = vmatpush.msra.mxu0 0.0
        %3855 = vmatpush.msra.mxu0 0.0
        %3856 = vmatpush.msra.mxu0 0.0
        %3857 = vmatpush.msra.mxu0 0.0
        %3858 = vmatpush.msra.mxu0 0.0
        %3859 = vmatpush.msra.mxu0 0.0
        %3860 = vmatpush.msra.mxu0 0.0
        %3861 = vmatpush.msra.mxu0 0.0
        %3862 = vmatpush.msra.mxu0 0.0
        %3863 = vmatpush.msra.mxu0 0.0
        %3864 = vmatpush.msra.mxu0 0.0
        %3865 = vmatpush.msra.mxu0 0.0
        %3866 = vmatpush.msra.mxu0 0.0
        %3867 = vmatpush.msra.mxu0 0.0
        %3868 = vmatpush.msra.mxu0 0.0
        %3869 = vmatpush.msra.mxu0 %v3849
        %3870 = vmatmul.f32.gmra.mxu0 %v3852
        %v3871 = vpop.f32.mrf.mxu0
        %v3872 = vadd.f32 0.0, %v3871
        %3873 = vdwg.mxu0
        %3874 = vrot.lane.b32.xlu0 %v3790, 120
        %v3875 = vpop.permute.xlu0 %3874
        %3876 = vrot.lane.b32.xlu0 %v3790, 88
        %v3877 = vpop.permute.xlu0 %3876
        %v3878 = vsel %vm3251, %v3875, 0
        %v3880 = vsel %vm3251, %v3877, 0
        %3882 = vmatpush.xpose.msra.mxu0 0.0
        %3883 = vmatpush.xpose.msra.mxu0 0.0
        %3884 = vmatpush.xpose.msra.mxu0 0.0
        %3885 = vmatpush.xpose.msra.mxu0 0.0
        %3886 = vmatpush.xpose.msra.mxu0 0.0
        %3887 = vmatpush.xpose.msra.mxu0 0.0
        %3888 = vmatpush.xpose.msra.mxu0 0.0
        %3889 = vmatpush.xpose.msra.mxu0 0.0
        %3890 = vmatpush.xpose.msra.mxu0 0.0
        %3891 = vmatpush.xpose.msra.mxu0 0.0
        %3892 = vmatpush.xpose.msra.mxu0 0.0
        %3893 = vmatpush.xpose.msra.mxu0 0.0
        %3894 = vmatpush.xpose.msra.mxu0 0.0
        %3895 = vmatpush.xpose.msra.mxu0 0.0
        %3896 = vmatpush.xpose.msra.mxu0 0.0
        %3897 = vmatpush.xpose.msra.mxu0 %v3880
        %3898 = vmatmul.f32.gmra.mxu0 %v3878
        %v3899 = vpop.f32.mrf.mxu0
        %v3900 = vadd.f32 0.0, %v3899
        %3901 = vdwg.mxu0
        %v3902 = vmul.f32 %v3900, 0.35355338
        %v3903 = vadd.f32 %v3902, %v3821
        %v3904 = vsel %vm3251, %v3903, -inf
        %3905 = vmax.xlane.f32.xlu0 %v3904
        %v3906 = vpop.xlane.xlu0 %3905
        %v3907 = vsub.f32 %v3903, %v3906
        %v3908 = vmul.f32 %v3907, 1.442695
        %v3909 = vpow.pop %v3908
        %v3910 = vsel %vm3251, %v3909, 0.0
        %3911 = vadd.xlane.f32.xlu0 %v3910
        %v3912 = vpop.xlane.xlu0 %3911
        %v3913 = vrcp.pop %v3912
        %v3914 = vmul.f32 %v3912, %v3913
        %v3915 = vsub.f32 1.0, %v3914
        %v3916 = vmul.f32 %v3913, %v3915
        %v3917 = vadd.f32 %v3913, %v3916
        %vm3918 = vweird.f32 %v3912
        %vm3919 = vweird.f32 %v3913
        %vm3920 = vmor %vm3918, %vm3919
        %v3921 = vsel %vm3920, %v3913, %v3917
        %v3922 = vand.u32 2147483647, %v3912
        %vm3923 = vcmp.eq.f32.partialorder %v3922, 8.507059e+37
        %v3924 = vand.u32 %v3912, 2147483648
        %v3925 = vor.u32 1.1754944e-38, %v3924
        %v3926 = vsel %vm3923, %v3925, %v3921
        %v3927 = vmul.f32 %v3909, %v3926
        %3928 = vrot.lane.b32.xlu0 %v3790, 56
        %v3929 = vpop.permute.xlu0 %3928
        %v3932 = vsel %vm3251, %v3927, 0
        %3934 = vmatpush.msra.mxu0 0.0
        %3935 = vmatpush.msra.mxu0 0.0
        %3936 = vmatpush.msra.mxu0 0.0
        %3937 = vmatpush.msra.mxu0 0.0
        %3938 = vmatpush.msra.mxu0 0.0
        %3939 = vmatpush.msra.mxu0 0.0
        %3940 = vmatpush.msra.mxu0 0.0
        %3941 = vmatpush.msra.mxu0 0.0
        %3942 = vmatpush.msra.mxu0 0.0
        %3943 = vmatpush.msra.mxu0 0.0
        %3944 = vmatpush.msra.mxu0 0.0
        %3945 = vmatpush.msra.mxu0 0.0
        %3946 = vmatpush.msra.mxu0 0.0
        %3947 = vmatpush.msra.mxu0 0.0
        %3948 = vmatpush.msra.mxu0 0.0
        %3949 = vmatpush.msra.mxu0 %v3929
        %3950 = vmatmul.f32.gmra.mxu0 %v3932
        %v3951 = vpop.f32.mrf.mxu0
        %v3952 = vadd.f32 0.0, %v3951
        %3953 = vdwg.mxu0
        %3954 = vrot.lane.b32.xlu0 %v3790, 112
        %v3955 = vpop.permute.xlu0 %3954
        %3956 = vrot.lane.b32.xlu0 %v3790, 80
        %v3957 = vpop.permute.xlu0 %3956
        %v3958 = vsel %vm3251, %v3955, 0
        %v3960 = vsel %vm3251, %v3957, 0
        %3962 = vmatpush.xpose.msra.mxu0 0.0
        %3963 = vmatpush.xpose.msra.mxu0 0.0
        %3964 = vmatpush.xpose.msra.mxu0 0.0
        %3965 = vmatpush.xpose.msra.mxu0 0.0
        %3966 = vmatpush.xpose.msra.mxu0 0.0
        %3967 = vmatpush.xpose.msra.mxu0 0.0
        %3968 = vmatpush.xpose.msra.mxu0 0.0
        %3969 = vmatpush.xpose.msra.mxu0 0.0
        %3970 = vmatpush.xpose.msra.mxu0 0.0
        %3971 = vmatpush.xpose.msra.mxu0 0.0
        %3972 = vmatpush.xpose.msra.mxu0 0.0
        %3973 = vmatpush.xpose.msra.mxu0 0.0
        %3974 = vmatpush.xpose.msra.mxu0 0.0
        %3975 = vmatpush.xpose.msra.mxu0 0.0
        %3976 = vmatpush.xpose.msra.mxu0 0.0
        %3977 = vmatpush.xpose.msra.mxu0 %v3960
        %3978 = vmatmul.f32.gmra.mxu0 %v3958
        %v3979 = vpop.f32.mrf.mxu0
        %v3980 = vadd.f32 0.0, %v3979
        %3981 = vdwg.mxu0
        %v3982 = vmul.f32 %v3980, 0.35355338
        %v3983 = vadd.f32 %v3982, %v3821
        %v3984 = vsel %vm3251, %v3983, -inf
        %3985 = vmax.xlane.f32.xlu0 %v3984
        %v3986 = vpop.xlane.xlu0 %3985
        %v3987 = vsub.f32 %v3983, %v3986
        %v3988 = vmul.f32 %v3987, 1.442695
        %v3989 = vpow.pop %v3988
        %v3990 = vsel %vm3251, %v3989, 0.0
        %3991 = vadd.xlane.f32.xlu0 %v3990
        %v3992 = vpop.xlane.xlu0 %3991
        %v3993 = vrcp.pop %v3992
        %v3994 = vmul.f32 %v3992, %v3993
        %v3995 = vsub.f32 1.0, %v3994
        %v3996 = vmul.f32 %v3993, %v3995
        %v3997 = vadd.f32 %v3993, %v3996
        %vm3998 = vweird.f32 %v3992
        %vm3999 = vweird.f32 %v3993
        %vm4000 = vmor %vm3998, %vm3999
        %v4001 = vsel %vm4000, %v3993, %v3997
        %v4002 = vand.u32 2147483647, %v3992
        %vm4003 = vcmp.eq.f32.partialorder %v4002, 8.507059e+37
        %v4004 = vand.u32 %v3992, 2147483648
        %v4005 = vor.u32 1.1754944e-38, %v4004
        %v4006 = vsel %vm4003, %v4005, %v4001
        %v4007 = vmul.f32 %v3989, %v4006
        %4008 = vrot.lane.b32.xlu0 %v3790, 48
        %v4009 = vpop.permute.xlu0 %4008
        %v4012 = vsel %vm3251, %v4007, 0
        %4014 = vmatpush.msra.mxu0 0.0
        %4015 = vmatpush.msra.mxu0 0.0
        %4016 = vmatpush.msra.mxu0 0.0
        %4017 = vmatpush.msra.mxu0 0.0
        %4018 = vmatpush.msra.mxu0 0.0
        %4019 = vmatpush.msra.mxu0 0.0
        %4020 = vmatpush.msra.mxu0 0.0
        %4021 = vmatpush.msra.mxu0 0.0
        %4022 = vmatpush.msra.mxu0 0.0
        %4023 = vmatpush.msra.mxu0 0.0
        %4024 = vmatpush.msra.mxu0 0.0
        %4025 = vmatpush.msra.mxu0 0.0
        %4026 = vmatpush.msra.mxu0 0.0
        %4027 = vmatpush.msra.mxu0 0.0
        %4028 = vmatpush.msra.mxu0 0.0
        %4029 = vmatpush.msra.mxu0 %v4009
        %4030 = vmatmul.f32.gmra.mxu0 %v4012
        %v4031 = vpop.f32.mrf.mxu0
        %v4032 = vadd.f32 0.0, %v4031
        %4033 = vdwg.mxu0
        %4034 = vrot.lane.b32.xlu0 %v3790, 104
        %v4035 = vpop.permute.xlu0 %4034
        %4036 = vrot.lane.b32.xlu0 %v3790, 72
        %v4037 = vpop.permute.xlu0 %4036
        %v4038 = vsel %vm3251, %v4035, 0
        %v4040 = vsel %vm3251, %v4037, 0
        %4042 = vmatpush.xpose.msra.mxu0 0.0
        %4043 = vmatpush.xpose.msra.mxu0 0.0
        %4044 = vmatpush.xpose.msra.mxu0 0.0
        %4045 = vmatpush.xpose.msra.mxu0 0.0
        %4046 = vmatpush.xpose.msra.mxu0 0.0
        %4047 = vmatpush.xpose.msra.mxu0 0.0
        %4048 = vmatpush.xpose.msra.mxu0 0.0
        %4049 = vmatpush.xpose.msra.mxu0 0.0
        %4050 = vmatpush.xpose.msra.mxu0 0.0
        %4051 = vmatpush.xpose.msra.mxu0 0.0
        %4052 = vmatpush.xpose.msra.mxu0 0.0
        %4053 = vmatpush.xpose.msra.mxu0 0.0
        %4054 = vmatpush.xpose.msra.mxu0 0.0
        %4055 = vmatpush.xpose.msra.mxu0 0.0
        %4056 = vmatpush.xpose.msra.mxu0 0.0
        %4057 = vmatpush.xpose.msra.mxu0 %v4040
        %4058 = vmatmul.f32.gmra.mxu0 %v4038
        %v4059 = vpop.f32.mrf.mxu0
        %v4060 = vadd.f32 0.0, %v4059
        %4061 = vdwg.mxu0
        %v4062 = vmul.f32 %v4060, 0.35355338
        %v4063 = vadd.f32 %v4062, %v3821
        %v4064 = vsel %vm3251, %v4063, -inf
        %4065 = vmax.xlane.f32.xlu0 %v4064
        %v4066 = vpop.xlane.xlu0 %4065
        %v4067 = vsub.f32 %v4063, %v4066
        %v4068 = vmul.f32 %v4067, 1.442695
        %v4069 = vpow.pop %v4068
        %v4070 = vsel %vm3251, %v4069, 0.0
        %4071 = vadd.xlane.f32.xlu0 %v4070
        %v4072 = vpop.xlane.xlu0 %4071
        %v4073 = vrcp.pop %v4072
        %v4074 = vmul.f32 %v4072, %v4073
        %v4075 = vsub.f32 1.0, %v4074
        %v4076 = vmul.f32 %v4073, %v4075
        %v4077 = vadd.f32 %v4073, %v4076
        %vm4078 = vweird.f32 %v4072
        %vm4079 = vweird.f32 %v4073
        %vm4080 = vmor %vm4078, %vm4079
        %v4081 = vsel %vm4080, %v4073, %v4077
        %v4082 = vand.u32 2147483647, %v4072
        %vm4083 = vcmp.eq.f32.partialorder %v4082, 8.507059e+37
        %v4084 = vand.u32 %v4072, 2147483648
        %v4085 = vor.u32 1.1754944e-38, %v4084
        %v4086 = vsel %vm4083, %v4085, %v4081
        %v4087 = vmul.f32 %v4069, %v4086
        %4088 = vrot.lane.b32.xlu0 %v3790, 40
        %v4089 = vpop.permute.xlu0 %4088
        %v4092 = vsel %vm3251, %v4087, 0
        %4094 = vmatpush.msra.mxu0 0.0
        %4095 = vmatpush.msra.mxu0 0.0
        %4096 = vmatpush.msra.mxu0 0.0
        %4097 = vmatpush.msra.mxu0 0.0
        %4098 = vmatpush.msra.mxu0 0.0
        %4099 = vmatpush.msra.mxu0 0.0
        %4100 = vmatpush.msra.mxu0 0.0
        %4101 = vmatpush.msra.mxu0 0.0
        %4102 = vmatpush.msra.mxu0 0.0
        %4103 = vmatpush.msra.mxu0 0.0
        %4104 = vmatpush.msra.mxu0 0.0
        %4105 = vmatpush.msra.mxu0 0.0
        %4106 = vmatpush.msra.mxu0 0.0
        %4107 = vmatpush.msra.mxu0 0.0
        %4108 = vmatpush.msra.mxu0 0.0
        %4109 = vmatpush.msra.mxu0 %v4089
        %4110 = vmatmul.f32.gmra.mxu0 %v4092
        %v4111 = vpop.f32.mrf.mxu0
        %v4112 = vadd.f32 0.0, %v4111
        %4113 = vdwg.mxu0
        %4115 = vrot.lane.b32.xlu0 %v3952, 8
        %v4116 = vpop.permute.xlu0 %4115
        %4119 = vrot.lane.b32.xlu0 %v4032, 16
        %v4120 = vpop.permute.xlu0 %4119
        %4123 = vrot.lane.b32.xlu0 %v4112, 24
        %v4124 = vpop.permute.xlu0 %4123
        %v4126 = vsel %vm3251, %v3872, %v4116
        %v4127 = vsel %vm3577, %v4126, %v4120
        %v4128 = vsel %vm3579, %v4127, %v4124
        %v4130 = vsel %vm3150, %v4128, 0
        %4132 = vmatpush.msra.mxu0 0.0
        %4133 = vmatpush.msra.mxu0 0.0
        %4134 = vmatpush.msra.mxu0 0.0
        %4135 = vmatpush.msra.mxu0 0.0
        %4136 = vmatpush.msra.mxu0 0.0
        %4137 = vmatpush.msra.mxu0 0.0
        %4138 = vmatpush.msra.mxu0 0.0
        %4139 = vmatpush.msra.mxu0 0.0
        %4140 = vmatpush.msra.mxu0 0.0
        %4141 = vmatpush.msra.mxu0 0.0
        %4142 = vmatpush.msra.mxu0 0.0
        %4143 = vmatpush.msra.mxu0 0.0
        %4144 = vmatpush.msra.mxu0 %v3025
        %4145 = vmatpush.msra.mxu0 %v3024
        %4146 = vmatpush.msra.mxu0 %v3023
        %4147 = vmatpush.msra.mxu0 %v3022
        %4148 = vmatmul.f32.gmra.mxu0 %v4130
        %v4149 = vpop.f32.mrf.mxu0
        %v4150 = vadd.f32 0.0, %v4149
        %4151 = vdwg.mxu0
        %v4152 = vadd.f32 %v3734, %v4150
        %v4154 = vperm.slane %v3020, 0
        %v4156 = vadd.f32 %v4152, %v4154
        %v4157 = vsel %vm3150, %v4156, 0.0
        %4158 = vadd.xlane.f32.xlu0 %v4157
        %v4159 = vpop.xlane.xlu0 %4158
        %v4160 = vmul.f32 %v4159, %v3194
        %v4161 = vsub.f32 %v4156, %v4160
        %v4162 = vmul.f32 %v4161, %v4161
        %v4163 = vsel %vm3150, %v4162, 0.0
        %4164 = vadd.xlane.f32.xlu0 %v4163
        %v4165 = vpop.xlane.xlu0 %4164
        %v4166 = vmul.f32 %v4165, %v3194
        %v4167 = vadd.f32 %v4166, 1e-05
        %v4168 = vrsqrt.pop %v4167
        %v4169 = vmul.f32 %v4168, %v4167
        %v4170 = vmul.f32 %v4169, %v4168
        %v4171 = vmul.f32 0.5, %v4170
        %v4172 = vsub.f32 1.5, %v4171
        %v4173 = vmul.f32 %v4168, %v4172
        %vm4174 = vweird.f32 %v4167
        %vm4175 = vweird.f32 %v4168
        %vm4176 = vmor %vm4174, %vm4175
        %v4177 = vsel %vm4176, %v4168, %v4173
        %v4178 = vmul.f32 %v4161, %v4177
        %v4180 = vperm.slane %v3047, 0
        %v4182 = vmul.f32 %v4178, %v4180
        %v4184 = vperm.slane %v3046, 0
        %v4186 = vadd.f32 %v4182, %v4184
        %v4188 = vperm.slane %v3030, 0
        %v4191 = vsel %vm3150, %v4186, 0
        %4193 = vmatpush.msra.mxu0 0.0
        %4194 = vmatpush.msra.mxu0 0.0
        %4195 = vmatpush.msra.mxu0 0.0
        %4196 = vmatpush.msra.mxu0 0.0
        %4197 = vmatpush.msra.mxu0 0.0
        %4198 = vmatpush.msra.mxu0 0.0
        %4199 = vmatpush.msra.mxu0 0.0
        %4200 = vmatpush.msra.mxu0 0.0
        %4201 = vmatpush.msra.mxu0 0.0
        %4202 = vmatpush.msra.mxu0 0.0
        %4203 = vmatpush.msra.mxu0 0.0
        %4204 = vmatpush.msra.mxu0 0.0
        %4205 = vmatpush.msra.mxu0 %v3035
        %4206 = vmatpush.msra.mxu0 %v3034
        %4207 = vmatpush.msra.mxu0 %v3033
        %4208 = vmatpush.msra.mxu0 %v3032
        %4209 = vmatmul.f32.gmra.mxu0 %v4191
        %v4210 = vpop.f32.mrf.mxu0
        %v4211 = vadd.f32 %v4188, %v4210
        %4212 = vdwg.mxu0
        %v4213 = vmul.f32 %v4211, 0.5
        %v4214 = vmul.f32 %v4211, 0.70710677
        %vm4215 = vcmp.ge.f32.partialorder %v4214, 0.0
        %v4216 = vsel %vm4215, 1.0, -1.0
        %v4217 = vand.u32 2147483647, %v4214
        %v4218 = vmul.f32 %v4217, 0.3275911
        %v4219 = vadd.f32 %v4218, 1.0
        %v4220 = vrcp.pop %v4219
        %v4221 = vmul.f32 %v4219, %v4220
        %v4222 = vsub.f32 1.0, %v4221
        %v4223 = vmul.f32 %v4220, %v4222
        %v4224 = vadd.f32 %v4220, %v4223
        %vm4225 = vweird.f32 %v4219
        %vm4226 = vweird.f32 %v4220
        %vm4227 = vmor %vm4225, %vm4226
        %v4228 = vsel %vm4227, %v4220, %v4224
        %v4229 = vand.u32 2147483647, %v4219
        %vm4230 = vcmp.eq.f32.partialorder %v4229, 8.507059e+37
        %v4231 = vand.u32 %v4219, 2147483648
        %v4232 = vor.u32 1.1754944e-38, %v4231
        %v4233 = vsel %vm4230, %v4232, %v4228
        %v4234 = vmul.f32 1.0, %v4233
        %v4235 = vmul.f32 %v4234, 1.0614054
        %v4236 = vadd.f32 %v4235, -1.4531521
        %v4237 = vmul.f32 %v4236, %v4234
        %v4238 = vadd.f32 %v4237, 1.4214138
        %v4239 = vmul.f32 %v4238, %v4234
        %v4240 = vadd.f32 %v4239, -0.28449672
        %v4241 = vmul.f32 %v4240, %v4234
        %v4242 = vadd.f32 %v4241, 0.2548296
        %v4243 = vmul.f32 %v4242, %v4234
        %v4244 = vsub.f32 0.0, %v4217
        %v4245 = vmul.f32 %v4244, %v4217
        %v4246 = vmul.f32 %v4245, 1.442695
        %v4247 = vpow.pop %v4246
        %v4248 = vmul.f32 %v4243, %v4247
        %v4249 = vsub.f32 1.0, %v4248
        %v4250 = vmul.f32 %v4216, %v4249
        %v4251 = vadd.f32 %v4250, 1.0
        %v4252 = vmul.f32 %v4213, %v4251
        %v4254 = vsel %vm3705, %v4252, 0
        %4256 = vmatpush.msra.mxu0 0.0
        %4257 = vmatpush.msra.mxu0 0.0
        %4258 = vmatpush.msra.mxu0 0.0
        %4259 = vmatpush.msra.mxu0 0.0
        %4260 = vmatpush.msra.mxu0 0.0
        %4261 = vmatpush.msra.mxu0 0.0
        %4262 = vmatpush.msra.mxu0 0.0
        %4263 = vmatpush.msra.mxu0 0.0
        %4264 = vmatpush.msra.mxu0 %v3043
        %4265 = vmatpush.msra.mxu0 %v3042
        %4266 = vmatpush.msra.mxu0 %v3041
        %4267 = vmatpush.msra.mxu0 %v3040
        %4268 = vmatpush.msra.mxu0 %v3039
        %4269 = vmatpush.msra.mxu0 %v3038
        %4270 = vmatpush.msra.mxu0 %v3037
        %4271 = vmatpush.msra.mxu0 %v3036
        %4272 = vmatmul.f32.gmra.mxu0 %v4254
        %v4273 = vpop.f32.mrf.mxu0
        %v4274 = vadd.f32 0.0, %v4273
        %4275 = vdwg.mxu0
        %v4276 = vadd.f32 %v4156, %v4274
        %v4278 = vperm.slane %v3031, 0
        %v4280 = vadd.f32 %v4276, %v4278
        %v4281 = vld [vmem:[%s2846] sm:$0x1]
        %v4282 = vsel %vm3150, %v3733, 0.0
        %4283 = vadd.xlane.f32.xlu0 %v4282
        %v4284 = vpop.xlane.xlu0 %4283
        %v4285 = vsel %vm3150, %v4280, 0.0
        %4286 = vadd.xlane.f32.xlu0 %v4285
        %v4287 = vpop.xlane.xlu0 %4286
        %v4288 = vmul.f32 %v4284, %v3194
        %v4289 = vmul.f32 %v4287, %v3194
        %v4290 = vsub.f32 %v3733, %v4288
        %v4291 = vsub.f32 %v4280, %v4289
        %v4292 = vmul.f32 %v4290, %v4290
        %v4293 = vmul.f32 %v4291, %v4291
        %v4294 = vsel %vm3150, %v4292, 0.0
        %4295 = vadd.xlane.f32.xlu0 %v4294
        %v4296 = vpop.xlane.xlu0 %4295
        %v4297 = vsel %vm3150, %v4293, 0.0
        %4298 = vadd.xlane.f32.xlu0 %v4297
        %v4299 = vpop.xlane.xlu0 %4298
        %v4300 = vmul.f32 %v4296, %v3194
        %v4301 = vmul.f32 %v4299, %v3194
        %v4302 = vadd.f32 %v4300, 1e-05
        %v4303 = vadd.f32 %v4301, 1e-05
        %v4304 = vrsqrt.pop %v4302
        %v4305 = vmul.f32 %v4304, %v4302
        %v4306 = vmul.f32 %v4305, %v4304
        %v4307 = vmul.f32 0.5, %v4306
        %v4308 = vsub.f32 1.5, %v4307
        %v4309 = vmul.f32 %v4304, %v4308
        %vm4310 = vweird.f32 %v4302
        %vm4311 = vweird.f32 %v4304
        %vm4312 = vmor %vm4310, %vm4311
        %v4313 = vsel %vm4312, %v4304, %v4309
        %v4314 = vrsqrt.pop %v4303
        %v4315 = vmul.f32 %v4314, %v4303
        %v4316 = vmul.f32 %v4315, %v4314
        %v4317 = vmul.f32 0.5, %v4316
        %v4318 = vsub.f32 1.5, %v4317
        %v4319 = vmul.f32 %v4314, %v4318
        %vm4320 = vweird.f32 %v4303
        %vm4321 = vweird.f32 %v4314
        %vm4322 = vmor %vm4320, %vm4321
        %v4323 = vsel %vm4322, %v4314, %v4319
        %v4324 = vmul.f32 %v4290, %v4313
        %v4325 = vmul.f32 %v4291, %v4323
        %v4327 = vperm.slane %v3017, 0
        %v4329 = vmul.f32 %v4324, %v4327
        %v4330 = vmul.f32 %v4325, %v4327
        %v4332 = vperm.slane %v3016, 0
        %v4334 = vadd.f32 %v4329, %v4332
        %v4335 = vadd.f32 %v4330, %v4332
        %v4337 = vperm.slane %v2993, 0
        %v4340 = vsel %vm3150, %v4334, 0
        %v4343 = vsel %vm3150, %v4335, 0
        %4345 = vmatpush.msra.mxu0 0.0
        %4346 = vmatpush.msra.mxu0 0.0
        %4347 = vmatpush.msra.mxu0 0.0
        %4348 = vmatpush.msra.mxu0 0.0
        %4349 = vmatpush.msra.mxu0 0.0
        %4350 = vmatpush.msra.mxu0 0.0
        %4351 = vmatpush.msra.mxu0 0.0
        %4352 = vmatpush.msra.mxu0 0.0
        %4353 = vmatpush.msra.mxu0 0.0
        %4354 = vmatpush.msra.mxu0 0.0
        %4355 = vmatpush.msra.mxu0 0.0
        %4356 = vmatpush.msra.mxu0 0.0
        %4357 = vmatpush.msra.mxu0 %v3001
        %4358 = vmatpush.msra.mxu0 %v3000
        %4359 = vmatpush.msra.mxu0 %v2999
        %4360 = vmatpush.msra.mxu0 %v2998
        %4361 = vmatmul.f32.gmra.mxu0 %v4340
        %v4362 = vpop.f32.mrf.mxu0
        %v4363 = vadd.f32 %v4337, %v4362
        %4364 = vmatmul.f32.gmra.mxu0 %v4343
        %v4365 = vpop.f32.mrf.mxu0
        %v4366 = vadd.f32 %v4337, %v4365
        %4367 = vdwg.mxu0
        %4370 = vrot.lane.b32.xlu0 %v4363, 96
        %v4371 = vpop.permute.xlu0 %4370
        %4372 = vrot.lane.b32.xlu0 %v4366, 96
        %v4373 = vpop.permute.xlu0 %4372
        %v4374 = vsel %vm3251, %v4363, 0
        %v4376 = vsel %vm3251, %v4366, 0
        %v4378 = vsel %vm3251, %v4371, 0
        %v4380 = vsel %vm3251, %v4373, 0
        %4382 = vmatpush.xpose.msra.mxu0 0.0
        %4383 = vmatpush.xpose.msra.mxu0 0.0
        %4384 = vmatpush.xpose.msra.mxu0 0.0
        %4385 = vmatpush.xpose.msra.mxu0 0.0
        %4386 = vmatpush.xpose.msra.mxu0 0.0
        %4387 = vmatpush.xpose.msra.mxu0 0.0
        %4388 = vmatpush.xpose.msra.mxu0 0.0
        %4389 = vmatpush.xpose.msra.mxu0 0.0
        %4390 = vmatpush.xpose.msra.mxu0 0.0
        %4391 = vmatpush.xpose.msra.mxu0 0.0
        %4392 = vmatpush.xpose.msra.mxu0 0.0
        %4393 = vmatpush.xpose.msra.mxu0 0.0
        %4394 = vmatpush.xpose.msra.mxu0 0.0
        %4395 = vmatpush.xpose.msra.mxu0 0.0
        %4396 = vmatpush.xpose.msra.mxu0 %v4380
        %4397 = vmatpush.xpose.msra.mxu0 %v4378
        %4398 = vmatmul.f32.gmra.mxu0 %v4374
        %v4399 = vpop.f32.mrf.mxu0
        %v4400 = vadd.f32 0.0, %v4399
        %4401 = vmatmul.f32.gmra.mxu0 %v4376
        %v4402 = vpop.f32.mrf.mxu0
        %v4403 = vadd.f32 0.0, %v4402
        %4404 = vdwg.mxu0
        %v4405 = vmul.f32 %v4400, 0.35355338
        %v4406 = vmul.f32 %v4403, 0.35355338
        %v4408 = vperm.slane %v4281, 0
        %v4410 = vadd.f32 %v4405, %v4408
        %v4411 = vadd.f32 %v4406, %v4408
        %v4412 = vsel %vm3577, %v4410, -inf
        %4413 = vmax.xlane.f32.xlu0 %v4412
        %v4414 = vpop.xlane.xlu0 %4413
        %v4415 = vsel %vm3577, %v4411, -inf
        %4416 = vmax.xlane.f32.xlu0 %v4415
        %v4417 = vpop.xlane.xlu0 %4416
        %v4418 = vsub.f32 %v4410, %v4414
        %v4419 = vsub.f32 %v4411, %v4417
        %v4420 = vmul.f32 %v4418, 1.442695
        %v4421 = vpow.pop %v4420
        %v4422 = vmul.f32 %v4419, 1.442695
        %v4423 = vpow.pop %v4422
        %v4424 = vsel %vm3577, %v4421, 0.0
        %4425 = vadd.xlane.f32.xlu0 %v4424
        %v4426 = vpop.xlane.xlu0 %4425
        %v4427 = vsel %vm3577, %v4423, 0.0
        %4428 = vadd.xlane.f32.xlu0 %v4427
        %v4429 = vpop.xlane.xlu0 %4428
        %v4430 = vrcp.pop %v4426
        %v4431 = vmul.f32 %v4426, %v4430
        %v4432 = vsub.f32 1.0, %v4431
        %v4433 = vmul.f32 %v4430, %v4432
        %v4434 = vadd.f32 %v4430, %v4433
        %vm4435 = vweird.f32 %v4426
        %vm4436 = vweird.f32 %v4430
        %vm4437 = vmor %vm4435, %vm4436
        %v4438 = vsel %vm4437, %v4430, %v4434
        %v4439 = vand.u32 2147483647, %v4426
        %vm4440 = vcmp.eq.f32.partialorder %v4439, 8.507059e+37
        %v4441 = vand.u32 %v4426, 2147483648
        %v4442 = vor.u32 1.1754944e-38, %v4441
        %v4443 = vsel %vm4440, %v4442, %v4438
        %v4444 = vmul.f32 %v4421, %v4443
        %v4445 = vrcp.pop %v4429
        %v4446 = vmul.f32 %v4429, %v4445
        %v4447 = vsub.f32 1.0, %v4446
        %v4448 = vmul.f32 %v4445, %v4447
        %v4449 = vadd.f32 %v4445, %v4448
        %vm4450 = vweird.f32 %v4429
        %vm4451 = vweird.f32 %v4445
        %vm4452 = vmor %vm4450, %vm4451
        %v4453 = vsel %vm4452, %v4445, %v4449
        %v4454 = vand.u32 2147483647, %v4429
        %vm4455 = vcmp.eq.f32.partialorder %v4454, 8.507059e+37
        %v4456 = vand.u32 %v4429, 2147483648
        %v4457 = vor.u32 1.1754944e-38, %v4456
        %v4458 = vsel %vm4455, %v4457, %v4453
        %v4459 = vmul.f32 %v4423, %v4458
        %4460 = vrot.lane.b32.xlu0 %v4363, 64
        %v4461 = vpop.permute.xlu0 %4460
        %4462 = vrot.lane.b32.xlu0 %v4366, 64
        %v4463 = vpop.permute.xlu0 %4462
        %v4467 = vsel %vm3577, %v4444, 0
        %v4470 = vsel %vm3577, %v4459, 0
        %4472 = vmatpush.msra.mxu0 0.0
        %4473 = vmatpush.msra.mxu0 0.0
        %4474 = vmatpush.msra.mxu0 0.0
        %4475 = vmatpush.msra.mxu0 0.0
        %4476 = vmatpush.msra.mxu0 0.0
        %4477 = vmatpush.msra.mxu0 0.0
        %4478 = vmatpush.msra.mxu0 0.0
        %4479 = vmatpush.msra.mxu0 0.0
        %4480 = vmatpush.msra.mxu0 0.0
        %4481 = vmatpush.msra.mxu0 0.0
        %4482 = vmatpush.msra.mxu0 0.0
        %4483 = vmatpush.msra.mxu0 0.0
        %4484 = vmatpush.msra.mxu0 0.0
        %4485 = vmatpush.msra.mxu0 0.0
        %4486 = vmatpush.msra.mxu0 %v4463
        %4487 = vmatpush.msra.mxu0 %v4461
        %4488 = vmatmul.f32.gmra.mxu0 %v4467
        %v4489 = vpop.f32.mrf.mxu0
        %v4490 = vadd.f32 0.0, %v4489
        %4491 = vmatmul.f32.gmra.mxu0 %v4470
        %v4492 = vpop.f32.mrf.mxu0
        %v4493 = vadd.f32 0.0, %v4492
        %4494 = vdwg.mxu0
        %4495 = vrot.lane.b32.xlu0 %v4363, 120
        %v4496 = vpop.permute.xlu0 %4495
        %4497 = vrot.lane.b32.xlu0 %v4366, 120
        %v4498 = vpop.permute.xlu0 %4497
        %4499 = vrot.lane.b32.xlu0 %v4363, 88
        %v4500 = vpop.permute.xlu0 %4499
        %4501 = vrot.lane.b32.xlu0 %v4366, 88
        %v4502 = vpop.permute.xlu0 %4501
        %v4503 = vsel %vm3251, %v4496, 0
        %v4505 = vsel %vm3251, %v4498, 0
        %v4507 = vsel %vm3251, %v4500, 0
        %v4509 = vsel %vm3251, %v4502, 0
        %4511 = vmatpush.xpose.msra.mxu0 0.0
        %4512 = vmatpush.xpose.msra.mxu0 0.0
        %4513 = vmatpush.xpose.msra.mxu0 0.0
        %4514 = vmatpush.xpose.msra.mxu0 0.0
        %4515 = vmatpush.xpose.msra.mxu0 0.0
        %4516 = vmatpush.xpose.msra.mxu0 0.0
        %4517 = vmatpush.xpose.msra.mxu0 0.0
        %4518 = vmatpush.xpose.msra.mxu0 0.0
        %4519 = vmatpush.xpose.msra.mxu0 0.0
        %4520 = vmatpush.xpose.msra.mxu0 0.0
        %4521 = vmatpush.xpose.msra.mxu0 0.0
        %4522 = vmatpush.xpose.msra.mxu0 0.0
        %4523 = vmatpush.xpose.msra.mxu0 0.0
        %4524 = vmatpush.xpose.msra.mxu0 0.0
        %4525 = vmatpush.xpose.msra.mxu0 %v4509
        %4526 = vmatpush.xpose.msra.mxu0 %v4507
        %4527 = vmatmul.f32.gmra.mxu0 %v4503
        %v4528 = vpop.f32.mrf.mxu0
        %v4529 = vadd.f32 0.0, %v4528
        %4530 = vmatmul.f32.gmra.mxu0 %v4505
        %v4531 = vpop.f32.mrf.mxu0
        %v4532 = vadd.f32 0.0, %v4531
        %4533 = vdwg.mxu0
        %v4534 = vmul.f32 %v4529, 0.35355338
        %v4535 = vmul.f32 %v4532, 0.35355338
        %v4536 = vadd.f32 %v4534, %v4408
        %v4537 = vadd.f32 %v4535, %v4408
        %v4538 = vsel %vm3577, %v4536, -inf
        %4539 = vmax.xlane.f32.xlu0 %v4538
        %v4540 = vpop.xlane.xlu0 %4539
        %v4541 = vsel %vm3577, %v4537, -inf
        %4542 = vmax.xlane.f32.xlu0 %v4541
        %v4543 = vpop.xlane.xlu0 %4542
        %v4544 = vsub.f32 %v4536, %v4540
        %v4545 = vsub.f32 %v4537, %v4543
        %v4546 = vmul.f32 %v4544, 1.442695
        %v4547 = vpow.pop %v4546
        %v4548 = vmul.f32 %v4545, 1.442695
        %v4549 = vpow.pop %v4548
        %v4550 = vsel %vm3577, %v4547, 0.0
        %4551 = vadd.xlane.f32.xlu0 %v4550
        %v4552 = vpop.xlane.xlu0 %4551
        %v4553 = vsel %vm3577, %v4549, 0.0
        %4554 = vadd.xlane.f32.xlu0 %v4553
        %v4555 = vpop.xlane.xlu0 %4554
        %v4556 = vrcp.pop %v4552
        %v4557 = vmul.f32 %v4552, %v4556
        %v4558 = vsub.f32 1.0, %v4557
        %v4559 = vmul.f32 %v4556, %v4558
        %v4560 = vadd.f32 %v4556, %v4559
        %vm4561 = vweird.f32 %v4552
        %vm4562 = vweird.f32 %v4556
        %vm4563 = vmor %vm4561, %vm4562
        %v4564 = vsel %vm4563, %v4556, %v4560
        %v4565 = vand.u32 2147483647, %v4552
        %vm4566 = vcmp.eq.f32.partialorder %v4565, 8.507059e+37
        %v4567 = vand.u32 %v4552, 2147483648
        %v4568 = vor.u32 1.1754944e-38, %v4567
        %v4569 = vsel %vm4566, %v4568, %v4564
        %v4570 = vmul.f32 %v4547, %v4569
        %v4571 = vrcp.pop %v4555
        %v4572 = vmul.f32 %v4555, %v4571
        %v4573 = vsub.f32 1.0, %v4572
        %v4574 = vmul.f32 %v4571, %v4573
        %v4575 = vadd.f32 %v4571, %v4574
        %vm4576 = vweird.f32 %v4555
        %vm4577 = vweird.f32 %v4571
        %vm4578 = vmor %vm4576, %vm4577
        %v4579 = vsel %vm4578, %v4571, %v4575
        %v4580 = vand.u32 2147483647, %v4555
        %vm4581 = vcmp.eq.f32.partialorder %v4580, 8.507059e+37
        %v4582 = vand.u32 %v4555, 2147483648
        %v4583 = vor.u32 1.1754944e-38, %v4582
        %v4584 = vsel %vm4581, %v4583, %v4579
        %v4585 = vmul.f32 %v4549, %v4584
        %4586 = vrot.lane.b32.xlu0 %v4363, 56
        %v4587 = vpop.permute.xlu0 %4586
        %4588 = vrot.lane.b32.xlu0 %v4366, 56
        %v4589 = vpop.permute.xlu0 %4588
        %v4593 = vsel %vm3577, %v4570, 0
        %v4596 = vsel %vm3577, %v4585, 0
        %4598 = vmatpush.msra.mxu0 0.0
        %4599 = vmatpush.msra.mxu0 0.0
        %4600 = vmatpush.msra.mxu0 0.0
        %4601 = vmatpush.msra.mxu0 0.0
        %4602 = vmatpush.msra.mxu0 0.0
        %4603 = vmatpush.msra.mxu0 0.0
        %4604 = vmatpush.msra.mxu0 0.0
        %4605 = vmatpush.msra.mxu0 0.0
        %4606 = vmatpush.msra.mxu0 0.0
        %4607 = vmatpush.msra.mxu0 0.0
        %4608 = vmatpush.msra.mxu0 0.0
        %4609 = vmatpush.msra.mxu0 0.0
        %4610 = vmatpush.msra.mxu0 0.0
        %4611 = vmatpush.msra.mxu0 0.0
        %4612 = vmatpush.msra.mxu0 %v4589
        %4613 = vmatpush.msra.mxu0 %v4587
        %4614 = vmatmul.f32.gmra.mxu0 %v4593
        %v4615 = vpop.f32.mrf.mxu0
        %v4616 = vadd.f32 0.0, %v4615
        %4617 = vmatmul.f32.gmra.mxu0 %v4596
        %v4618 = vpop.f32.mrf.mxu0
        %v4619 = vadd.f32 0.0, %v4618
        %4620 = vdwg.mxu0
        %4621 = vrot.lane.b32.xlu0 %v4363, 112
        %v4622 = vpop.permute.xlu0 %4621
        %4623 = vrot.lane.b32.xlu0 %v4366, 112
        %v4624 = vpop.permute.xlu0 %4623
        %4625 = vrot.lane.b32.xlu0 %v4363, 80
        %v4626 = vpop.permute.xlu0 %4625
        %4627 = vrot.lane.b32.xlu0 %v4366, 80
        %v4628 = vpop.permute.xlu0 %4627
        %v4629 = vsel %vm3251, %v4622, 0
        %v4631 = vsel %vm3251, %v4624, 0
        %v4633 = vsel %vm3251, %v4626, 0
        %v4635 = vsel %vm3251, %v4628, 0
        %4637 = vmatpush.xpose.msra.mxu0 0.0
        %4638 = vmatpush.xpose.msra.mxu0 0.0
        %4639 = vmatpush.xpose.msra.mxu0 0.0
        %4640 = vmatpush.xpose.msra.mxu0 0.0
        %4641 = vmatpush.xpose.msra.mxu0 0.0
        %4642 = vmatpush.xpose.msra.mxu0 0.0
        %4643 = vmatpush.xpose.msra.mxu0 0.0
        %4644 = vmatpush.xpose.msra.mxu0 0.0
        %4645 = vmatpush.xpose.msra.mxu0 0.0
        %4646 = vmatpush.xpose.msra.mxu0 0.0
        %4647 = vmatpush.xpose.msra.mxu0 0.0
        %4648 = vmatpush.xpose.msra.mxu0 0.0
        %4649 = vmatpush.xpose.msra.mxu0 0.0
        %4650 = vmatpush.xpose.msra.mxu0 0.0
        %4651 = vmatpush.xpose.msra.mxu0 %v4635
        %4652 = vmatpush.xpose.msra.mxu0 %v4633
        %4653 = vmatmul.f32.gmra.mxu0 %v4629
        %v4654 = vpop.f32.mrf.mxu0
        %v4655 = vadd.f32 0.0, %v4654
        %4656 = vmatmul.f32.gmra.mxu0 %v4631
        %v4657 = vpop.f32.mrf.mxu0
        %v4658 = vadd.f32 0.0, %v4657
        %4659 = vdwg.mxu0
        %v4660 = vmul.f32 %v4655, 0.35355338
        %v4661 = vmul.f32 %v4658, 0.35355338
        %v4662 = vadd.f32 %v4660, %v4408
        %v4663 = vadd.f32 %v4661, %v4408
        %v4664 = vsel %vm3577, %v4662, -inf
        %4665 = vmax.xlane.f32.xlu0 %v4664
        %v4666 = vpop.xlane.xlu0 %4665
        %v4667 = vsel %vm3577, %v4663, -inf
        %4668 = vmax.xlane.f32.xlu0 %v4667
        %v4669 = vpop.xlane.xlu0 %4668
        %v4670 = vsub.f32 %v4662, %v4666
        %v4671 = vsub.f32 %v4663, %v4669
        %v4672 = vmul.f32 %v4670, 1.442695
        %v4673 = vpow.pop %v4672
        %v4674 = vmul.f32 %v4671, 1.442695
        %v4675 = vpow.pop %v4674
        %v4676 = vsel %vm3577, %v4673, 0.0
        %4677 = vadd.xlane.f32.xlu0 %v4676
        %v4678 = vpop.xlane.xlu0 %4677
        %v4679 = vsel %vm3577, %v4675, 0.0
        %4680 = vadd.xlane.f32.xlu0 %v4679
        %v4681 = vpop.xlane.xlu0 %4680
        %v4682 = vrcp.pop %v4678
        %v4683 = vmul.f32 %v4678, %v4682
        %v4684 = vsub.f32 1.0, %v4683
        %v4685 = vmul.f32 %v4682, %v4684
        %v4686 = vadd.f32 %v4682, %v4685
        %vm4687 = vweird.f32 %v4678
        %vm4688 = vweird.f32 %v4682
        %vm4689 = vmor %vm4687, %vm4688
        %v4690 = vsel %vm4689, %v4682, %v4686
        %v4691 = vand.u32 2147483647, %v4678
        %vm4692 = vcmp.eq.f32.partialorder %v4691, 8.507059e+37
        %v4693 = vand.u32 %v4678, 2147483648
        %v4694 = vor.u32 1.1754944e-38, %v4693
        %v4695 = vsel %vm4692, %v4694, %v4690
        %v4696 = vmul.f32 %v4673, %v4695
        %v4697 = vrcp.pop %v4681
        %v4698 = vmul.f32 %v4681, %v4697
        %v4699 = vsub.f32 1.0, %v4698
        %v4700 = vmul.f32 %v4697, %v4699
        %v4701 = vadd.f32 %v4697, %v4700
        %vm4702 = vweird.f32 %v4681
        %vm4703 = vweird.f32 %v4697
        %vm4704 = vmor %vm4702, %vm4703
        %v4705 = vsel %vm4704, %v4697, %v4701
        %v4706 = vand.u32 2147483647, %v4681
        %vm4707 = vcmp.eq.f32.partialorder %v4706, 8.507059e+37
        %v4708 = vand.u32 %v4681, 2147483648
        %v4709 = vor.u32 1.1754944e-38, %v4708
        %v4710 = vsel %vm4707, %v4709, %v4705
        %v4711 = vmul.f32 %v4675, %v4710
        %4712 = vrot.lane.b32.xlu0 %v4363, 48
        %v4713 = vpop.permute.xlu0 %4712
        %4714 = vrot.lane.b32.xlu0 %v4366, 48
        %v4715 = vpop.permute.xlu0 %4714
        %v4719 = vsel %vm3577, %v4696, 0
        %v4722 = vsel %vm3577, %v4711, 0
        %4724 = vmatpush.msra.mxu0 0.0
        %4725 = vmatpush.msra.mxu0 0.0
        %4726 = vmatpush.msra.mxu0 0.0
        %4727 = vmatpush.msra.mxu0 0.0
        %4728 = vmatpush.msra.mxu0 0.0
        %4729 = vmatpush.msra.mxu0 0.0
        %4730 = vmatpush.msra.mxu0 0.0
        %4731 = vmatpush.msra.mxu0 0.0
        %4732 = vmatpush.msra.mxu0 0.0
        %4733 = vmatpush.msra.mxu0 0.0
        %4734 = vmatpush.msra.mxu0 0.0
        %4735 = vmatpush.msra.mxu0 0.0
        %4736 = vmatpush.msra.mxu0 0.0
        %4737 = vmatpush.msra.mxu0 0.0
        %4738 = vmatpush.msra.mxu0 %v4715
        %4739 = vmatpush.msra.mxu0 %v4713
        %4740 = vmatmul.f32.gmra.mxu0 %v4719
        %v4741 = vpop.f32.mrf.mxu0
        %v4742 = vadd.f32 0.0, %v4741
        %4743 = vmatmul.f32.gmra.mxu0 %v4722
        %v4744 = vpop.f32.mrf.mxu0
        %v4745 = vadd.f32 0.0, %v4744
        %4746 = vdwg.mxu0
        %4747 = vrot.lane.b32.xlu0 %v4363, 104
        %v4748 = vpop.permute.xlu0 %4747
        %4749 = vrot.lane.b32.xlu0 %v4366, 104
        %v4750 = vpop.permute.xlu0 %4749
        %4751 = vrot.lane.b32.xlu0 %v4363, 72
        %v4752 = vpop.permute.xlu0 %4751
        %4753 = vrot.lane.b32.xlu0 %v4366, 72
        %v4754 = vpop.permute.xlu0 %4753
        %v4755 = vsel %vm3251, %v4748, 0
        %v4757 = vsel %vm3251, %v4750, 0
        %v4759 = vsel %vm3251, %v4752, 0
        %v4761 = vsel %vm3251, %v4754, 0
        %4763 = vmatpush.xpose.msra.mxu0 0.0
        %4764 = vmatpush.xpose.msra.mxu0 0.0
        %4765 = vmatpush.xpose.msra.mxu0 0.0
        %4766 = vmatpush.xpose.msra.mxu0 0.0
        %4767 = vmatpush.xpose.msra.mxu0 0.0
        %4768 = vmatpush.xpose.msra.mxu0 0.0
        %4769 = vmatpush.xpose.msra.mxu0 0.0
        %4770 = vmatpush.xpose.msra.mxu0 0.0
        %4771 = vmatpush.xpose.msra.mxu0 0.0
        %4772 = vmatpush.xpose.msra.mxu0 0.0
        %4773 = vmatpush.xpose.msra.mxu0 0.0
        %4774 = vmatpush.xpose.msra.mxu0 0.0
        %4775 = vmatpush.xpose.msra.mxu0 0.0
        %4776 = vmatpush.xpose.msra.mxu0 0.0
        %4777 = vmatpush.xpose.msra.mxu0 %v4761
        %4778 = vmatpush.xpose.msra.mxu0 %v4759
        %4779 = vmatmul.f32.gmra.mxu0 %v4755
        %v4780 = vpop.f32.mrf.mxu0
        %v4781 = vadd.f32 0.0, %v4780
        %4782 = vmatmul.f32.gmra.mxu0 %v4757
        %v4783 = vpop.f32.mrf.mxu0
        %v4784 = vadd.f32 0.0, %v4783
        %4785 = vdwg.mxu0
        %v4786 = vmul.f32 %v4781, 0.35355338
        %v4787 = vmul.f32 %v4784, 0.35355338
        %v4788 = vadd.f32 %v4786, %v4408
        %v4789 = vadd.f32 %v4787, %v4408
        %v4790 = vsel %vm3577, %v4788, -inf
        %4791 = vmax.xlane.f32.xlu0 %v4790
        %v4792 = vpop.xlane.xlu0 %4791
        %v4793 = vsel %vm3577, %v4789, -inf
        %4794 = vmax.xlane.f32.xlu0 %v4793
        %v4795 = vpop.xlane.xlu0 %4794
        %v4796 = vsub.f32 %v4788, %v4792
        %v4797 = vsub.f32 %v4789, %v4795
        %v4798 = vmul.f32 %v4796, 1.442695
        %v4799 = vpow.pop %v4798
        %v4800 = vmul.f32 %v4797, 1.442695
        %v4801 = vpow.pop %v4800
        %v4802 = vsel %vm3577, %v4799, 0.0
        %4803 = vadd.xlane.f32.xlu0 %v4802
        %v4804 = vpop.xlane.xlu0 %4803
        %v4805 = vsel %vm3577, %v4801, 0.0
        %4806 = vadd.xlane.f32.xlu0 %v4805
        %v4807 = vpop.xlane.xlu0 %4806
        %v4808 = vrcp.pop %v4804
        %v4809 = vmul.f32 %v4804, %v4808
        %v4810 = vsub.f32 1.0, %v4809
        %v4811 = vmul.f32 %v4808, %v4810
        %v4812 = vadd.f32 %v4808, %v4811
        %vm4813 = vweird.f32 %v4804
        %vm4814 = vweird.f32 %v4808
        %vm4815 = vmor %vm4813, %vm4814
        %v4816 = vsel %vm4815, %v4808, %v4812
        %v4817 = vand.u32 2147483647, %v4804
        %vm4818 = vcmp.eq.f32.partialorder %v4817, 8.507059e+37
        %v4819 = vand.u32 %v4804, 2147483648
        %v4820 = vor.u32 1.1754944e-38, %v4819
        %v4821 = vsel %vm4818, %v4820, %v4816
        %v4822 = vmul.f32 %v4799, %v4821
        %v4823 = vrcp.pop %v4807
        %v4824 = vmul.f32 %v4807, %v4823
        %v4825 = vsub.f32 1.0, %v4824
        %v4826 = vmul.f32 %v4823, %v4825
        %v4827 = vadd.f32 %v4823, %v4826
        %vm4828 = vweird.f32 %v4807
        %vm4829 = vweird.f32 %v4823
        %vm4830 = vmor %vm4828, %vm4829
        %v4831 = vsel %vm4830, %v4823, %v4827
        %v4832 = vand.u32 2147483647, %v4807
        %vm4833 = vcmp.eq.f32.partialorder %v4832, 8.507059e+37
        %v4834 = vand.u32 %v4807, 2147483648
        %v4835 = vor.u32 1.1754944e-38, %v4834
        %v4836 = vsel %vm4833, %v4835, %v4831
        %v4837 = vmul.f32 %v4801, %v4836
        %4838 = vrot.lane.b32.xlu0 %v4363, 40
        %v4839 = vpop.permute.xlu0 %4838
        %4840 = vrot.lane.b32.xlu0 %v4366, 40
        %v4841 = vpop.permute.xlu0 %4840
        %v4845 = vsel %vm3577, %v4822, 0
        %v4848 = vsel %vm3577, %v4837, 0
        %4850 = vmatpush.msra.mxu0 0.0
        %4851 = vmatpush.msra.mxu0 0.0
        %4852 = vmatpush.msra.mxu0 0.0
        %4853 = vmatpush.msra.mxu0 0.0
        %4854 = vmatpush.msra.mxu0 0.0
        %4855 = vmatpush.msra.mxu0 0.0
        %4856 = vmatpush.msra.mxu0 0.0
        %4857 = vmatpush.msra.mxu0 0.0
        %4858 = vmatpush.msra.mxu0 0.0
        %4859 = vmatpush.msra.mxu0 0.0
        %4860 = vmatpush.msra.mxu0 0.0
        %4861 = vmatpush.msra.mxu0 0.0
        %4862 = vmatpush.msra.mxu0 0.0
        %4863 = vmatpush.msra.mxu0 0.0
        %4864 = vmatpush.msra.mxu0 %v4841
        %4865 = vmatpush.msra.mxu0 %v4839
        %4866 = vmatmul.f32.gmra.mxu0 %v4845
        %v4867 = vpop.f32.mrf.mxu0
        %v4868 = vadd.f32 0.0, %v4867
        %4869 = vmatmul.f32.gmra.mxu0 %v4848
        %v4870 = vpop.f32.mrf.mxu0
        %v4871 = vadd.f32 0.0, %v4870
        %4872 = vdwg.mxu0
        %4875 = vrot.lane.b32.xlu0 %v4616, 8
        %v4876 = vpop.permute.xlu0 %4875
        %4877 = vrot.lane.b32.xlu0 %v4619, 8
        %v4878 = vpop.permute.xlu0 %4877
        %4883 = vrot.lane.b32.xlu0 %v4742, 16
        %v4884 = vpop.permute.xlu0 %4883
        %4885 = vrot.lane.b32.xlu0 %v4745, 16
        %v4886 = vpop.permute.xlu0 %4885
        %4891 = vrot.lane.b32.xlu0 %v4868, 24
        %v4892 = vpop.permute.xlu0 %4891
        %4893 = vrot.lane.b32.xlu0 %v4871, 24
        %v4894 = vpop.permute.xlu0 %4893
        %v4897 = vsel %vm3251, %v4490, %v4876
        %v4898 = vsel %vm3251, %v4493, %v4878
        %v4899 = vsel %vm3577, %v4897, %v4884
        %v4900 = vsel %vm3577, %v4898, %v4886
        %v4901 = vsel %vm3579, %v4899, %v4892
        %v4902 = vsel %vm3579, %v4900, %v4894
        %v4904 = vsel %vm3150, %v4901, 0
        %v4907 = vsel %vm3150, %v4902, 0
        %4909 = vmatpush.msra.mxu0 0.0
        %4910 = vmatpush.msra.mxu0 0.0
        %4911 = vmatpush.msra.mxu0 0.0
        %4912 = vmatpush.msra.mxu0 0.0
        %4913 = vmatpush.msra.mxu0 0.0
        %4914 = vmatpush.msra.mxu0 0.0
        %4915 = vmatpush.msra.mxu0 0.0
        %4916 = vmatpush.msra.mxu0 0.0
        %4917 = vmatpush.msra.mxu0 0.0
        %4918 = vmatpush.msra.mxu0 0.0
        %4919 = vmatpush.msra.mxu0 0.0
        %4920 = vmatpush.msra.mxu0 0.0
        %4921 = vmatpush.msra.mxu0 %v2997
        %4922 = vmatpush.msra.mxu0 %v2996
        %4923 = vmatpush.msra.mxu0 %v2995
        %4924 = vmatpush.msra.mxu0 %v2994
        %4925 = vmatmul.f32.gmra.mxu0 %v4904
        %v4926 = vpop.f32.mrf.mxu0
        %v4927 = vadd.f32 0.0, %v4926
        %4928 = vmatmul.f32.gmra.mxu0 %v4907
        %v4929 = vpop.f32.mrf.mxu0
        %v4930 = vadd.f32 0.0, %v4929
        %4931 = vdwg.mxu0
        %v4932 = vadd.f32 %v3733, %v4927
        %v4933 = vadd.f32 %v4280, %v4930
        %v4935 = vperm.slane %v2992, 0
        %v4937 = vadd.f32 %v4932, %v4935
        %v4938 = vadd.f32 %v4933, %v4935
        %v4939 = vsel %vm3150, %v4937, 0.0
        %4940 = vadd.xlane.f32.xlu0 %v4939
        %v4941 = vpop.xlane.xlu0 %4940
        %v4942 = vsel %vm3150, %v4938, 0.0
        %4943 = vadd.xlane.f32.xlu0 %v4942
        %v4944 = vpop.xlane.xlu0 %4943
        %v4945 = vmul.f32 %v4941, %v3194
        %v4946 = vmul.f32 %v4944, %v3194
        %v4947 = vsub.f32 %v4937, %v4945
        %v4948 = vsub.f32 %v4938, %v4946
        %v4949 = vmul.f32 %v4947, %v4947
        %v4950 = vmul.f32 %v4948, %v4948
        %v4951 = vsel %vm3150, %v4949, 0.0
        %4952 = vadd.xlane.f32.xlu0 %v4951
        %v4953 = vpop.xlane.xlu0 %4952
        %v4954 = vsel %vm3150, %v4950, 0.0
        %4955 = vadd.xlane.f32.xlu0 %v4954
        %v4956 = vpop.xlane.xlu0 %4955
        %v4957 = vmul.f32 %v4953, %v3194
        %v4958 = vmul.f32 %v4956, %v3194
        %v4959 = vadd.f32 %v4957, 1e-05
        %v4960 = vadd.f32 %v4958, 1e-05
        %v4961 = vrsqrt.pop %v4959
        %v4962 = vmul.f32 %v4961, %v4959
        %v4963 = vmul.f32 %v4962, %v4961
        %v4964 = vmul.f32 0.5, %v4963
        %v4965 = vsub.f32 1.5, %v4964
        %v4966 = vmul.f32 %v4961, %v4965
        %vm4967 = vweird.f32 %v4959
        %vm4968 = vweird.f32 %v4961
        %vm4969 = vmor %vm4967, %vm4968
        %v4970 = vsel %vm4969, %v4961, %v4966
        %v4971 = vrsqrt.pop %v4960
        %v4972 = vmul.f32 %v4971, %v4960
        %v4973 = vmul.f32 %v4972, %v4971
        %v4974 = vmul.f32 0.5, %v4973
        %v4975 = vsub.f32 1.5, %v4974
        %v4976 = vmul.f32 %v4971, %v4975
        %vm4977 = vweird.f32 %v4960
        %vm4978 = vweird.f32 %v4971
        %vm4979 = vmor %vm4977, %vm4978
        %v4980 = vsel %vm4979, %v4971, %v4976
        %v4981 = vmul.f32 %v4947, %v4970
        %v4982 = vmul.f32 %v4948, %v4980
        %v4984 = vperm.slane %v3019, 0
        %v4986 = vmul.f32 %v4981, %v4984
        %v4987 = vmul.f32 %v4982, %v4984
        %v4989 = vperm.slane %v3018, 0
        %v4991 = vadd.f32 %v4986, %v4989
        %v4992 = vadd.f32 %v4987, %v4989
        %v4994 = vperm.slane %v3002, 0
        %v4997 = vsel %vm3150, %v4991, 0
        %v5000 = vsel %vm3150, %v4992, 0
        %5002 = vmatpush.msra.mxu0 0.0
        %5003 = vmatpush.msra.mxu0 0.0
        %5004 = vmatpush.msra.mxu0 0.0
        %5005 = vmatpush.msra.mxu0 0.0
        %5006 = vmatpush.msra.mxu0 0.0
        %5007 = vmatpush.msra.mxu0 0.0
        %5008 = vmatpush.msra.mxu0 0.0
        %5009 = vmatpush.msra.mxu0 0.0
        %5010 = vmatpush.msra.mxu0 0.0
        %5011 = vmatpush.msra.mxu0 0.0
        %5012 = vmatpush.msra.mxu0 0.0
        %5013 = vmatpush.msra.mxu0 0.0
        %5014 = vmatpush.msra.mxu0 %v3007
        %5015 = vmatpush.msra.mxu0 %v3006
        %5016 = vmatpush.msra.mxu0 %v3005
        %5017 = vmatpush.msra.mxu0 %v3004
        %5018 = vmatmul.f32.gmra.mxu0 %v4997
        %v5019 = vpop.f32.mrf.mxu0
        %v5020 = vadd.f32 %v4994, %v5019
        %5021 = vmatmul.f32.gmra.mxu0 %v5000
        %v5022 = vpop.f32.mrf.mxu0
        %v5023 = vadd.f32 %v4994, %v5022
        %5024 = vdwg.mxu0
        %v5025 = vmul.f32 %v5020, 0.5
        %v5026 = vmul.f32 %v5023, 0.5
        %v5027 = vmul.f32 %v5020, 0.70710677
        %v5028 = vmul.f32 %v5023, 0.70710677
        %vm5029 = vcmp.ge.f32.partialorder %v5027, 0.0
        %vm5030 = vcmp.ge.f32.partialorder %v5028, 0.0
        %v5031 = vsel %vm5029, 1.0, -1.0
        %v5032 = vsel %vm5030, 1.0, -1.0
        %v5033 = vand.u32 2147483647, %v5027
        %v5034 = vand.u32 2147483647, %v5028
        %v5035 = vmul.f32 %v5033, 0.3275911
        %v5036 = vmul.f32 %v5034, 0.3275911
        %v5037 = vadd.f32 %v5035, 1.0
        %v5038 = vadd.f32 %v5036, 1.0
        %v5039 = vrcp.pop %v5037
        %v5040 = vmul.f32 %v5037, %v5039
        %v5041 = vsub.f32 1.0, %v5040
        %v5042 = vmul.f32 %v5039, %v5041
        %v5043 = vadd.f32 %v5039, %v5042
        %vm5044 = vweird.f32 %v5037
        %vm5045 = vweird.f32 %v5039
        %vm5046 = vmor %vm5044, %vm5045
        %v5047 = vsel %vm5046, %v5039, %v5043
        %v5048 = vand.u32 2147483647, %v5037
        %vm5049 = vcmp.eq.f32.partialorder %v5048, 8.507059e+37
        %v5050 = vand.u32 %v5037, 2147483648
        %v5051 = vor.u32 1.1754944e-38, %v5050
        %v5052 = vsel %vm5049, %v5051, %v5047
        %v5053 = vmul.f32 1.0, %v5052
        %v5054 = vrcp.pop %v5038
        %v5055 = vmul.f32 %v5038, %v5054
        %v5056 = vsub.f32 1.0, %v5055
        %v5057 = vmul.f32 %v5054, %v5056
        %v5058 = vadd.f32 %v5054, %v5057
        %vm5059 = vweird.f32 %v5038
        %vm5060 = vweird.f32 %v5054
        %vm5061 = vmor %vm5059, %vm5060
        %v5062 = vsel %vm5061, %v5054, %v5058
        %v5063 = vand.u32 2147483647, %v5038
        %vm5064 = vcmp.eq.f32.partialorder %v5063, 8.507059e+37
        %v5065 = vand.u32 %v5038, 2147483648
        %v5066 = vor.u32 1.1754944e-38, %v5065
        %v5067 = vsel %vm5064, %v5066, %v5062
        %v5068 = vmul.f32 1.0, %v5067
        %v5069 = vmul.f32 %v5053, 1.0614054
        %v5070 = vmul.f32 %v5068, 1.0614054
        %v5071 = vadd.f32 %v5069, -1.4531521
        %v5072 = vadd.f32 %v5070, -1.4531521
        %v5073 = vmul.f32 %v5071, %v5053
        %v5074 = vmul.f32 %v5072, %v5068
        %v5075 = vadd.f32 %v5073, 1.4214138
        %v5076 = vadd.f32 %v5074, 1.4214138
        %v5077 = vmul.f32 %v5075, %v5053
        %v5078 = vmul.f32 %v5076, %v5068
        %v5079 = vadd.f32 %v5077, -0.28449672
        %v5080 = vadd.f32 %v5078, -0.28449672
        %v5081 = vmul.f32 %v5079, %v5053
        %v5082 = vmul.f32 %v5080, %v5068
        %v5083 = vadd.f32 %v5081, 0.2548296
        %v5084 = vadd.f32 %v5082, 0.2548296
        %v5085 = vmul.f32 %v5083, %v5053
        %v5086 = vmul.f32 %v5084, %v5068
        %v5087 = vsub.f32 0.0, %v5033
        %v5088 = vsub.f32 0.0, %v5034
        %v5089 = vmul.f32 %v5087, %v5033
        %v5090 = vmul.f32 %v5088, %v5034
        %v5091 = vmul.f32 %v5089, 1.442695
        %v5092 = vpow.pop %v5091
        %v5093 = vmul.f32 %v5090, 1.442695
        %v5094 = vpow.pop %v5093
        %v5095 = vmul.f32 %v5085, %v5092
        %v5096 = vmul.f32 %v5086, %v5094
        %v5097 = vsub.f32 1.0, %v5095
        %v5098 = vsub.f32 1.0, %v5096
        %v5099 = vmul.f32 %v5031, %v5097
        %v5100 = vmul.f32 %v5032, %v5098
        %v5101 = vadd.f32 %v5099, 1.0
        %v5102 = vadd.f32 %v5100, 1.0
        %v5103 = vmul.f32 %v5025, %v5101
        %v5104 = vmul.f32 %v5026, %v5102
        %v5106 = vsel %vm3705, %v5103, 0
        %v5109 = vsel %vm3705, %v5104, 0
        %5111 = vmatpush.msra.mxu0 0.0
        %5112 = vmatpush.msra.mxu0 0.0
        %5113 = vmatpush.msra.mxu0 0.0
        %5114 = vmatpush.msra.mxu0 0.0
        %5115 = vmatpush.msra.mxu0 0.0
        %5116 = vmatpush.msra.mxu0 0.0
        %5117 = vmatpush.msra.mxu0 0.0
        %5118 = vmatpush.msra.mxu0 0.0
        %5119 = vmatpush.msra.mxu0 %v3015
        %5120 = vmatpush.msra.mxu0 %v3014
        %5121 = vmatpush.msra.mxu0 %v3013
        %5122 = vmatpush.msra.mxu0 %v3012
        %5123 = vmatpush.msra.mxu0 %v3011
        %5124 = vmatpush.msra.mxu0 %v3010
        %5125 = vmatpush.msra.mxu0 %v3009
        %5126 = vmatpush.msra.mxu0 %v3008
        %5127 = vmatmul.f32.gmra.mxu0 %v5106
        %v5128 = vpop.f32.mrf.mxu0
        %v5129 = vadd.f32 0.0, %v5128
        %5130 = vmatmul.f32.gmra.mxu0 %v5109
        %v5131 = vpop.f32.mrf.mxu0
        %v5132 = vadd.f32 0.0, %v5131
        %5133 = vdwg.mxu0
        %v5134 = vadd.f32 %v4937, %v5129
        %v5135 = vadd.f32 %v4938, %v5132
        %v5137 = vperm.slane %v3003, 0
        %v5139 = vadd.f32 %v5134, %v5137
        %v5140 = vadd.f32 %v5135, %v5137
        %v5141 = vld [vmem:[%s2853] sm:$0x1]
        %5143 = vset.pattern.permute.xlu0 0
        %5144 = vperm.xlu0 %5143, %v5141
        %v5145 = vpop.permute.xlu0 %5144
        %v5147 = vperm.slane %v5145, 0
        %v5148 = vmul.f32 %v5147, %v2937
        %v5149 = vadd.f32 %v5148, %v2935
        %v5150 = vmul.f32 %v5149, 0.5
        %v5151 = vmul.f32 %v5149, 0.70710677
        %vm5152 = vcmp.ge.f32.partialorder %v5151, 0.0
        %v5153 = vsel %vm5152, 1.0, -1.0
        %v5154 = vand.u32 2147483647, %v5151
        %v5155 = vmul.f32 %v5154, 0.3275911
        %v5156 = vadd.f32 %v5155, 1.0
        %v5157 = vrcp.pop %v5156
        %v5158 = vmul.f32 %v5156, %v5157
        %v5159 = vsub.f32 1.0, %v5158
        %v5160 = vmul.f32 %v5157, %v5159
        %v5161 = vadd.f32 %v5157, %v5160
        %vm5162 = vweird.f32 %v5156
        %vm5163 = vweird.f32 %v5157
        %vm5164 = vmor %vm5162, %vm5163
        %v5165 = vsel %vm5164, %v5157, %v5161
        %v5166 = vand.u32 2147483647, %v5156
        %vm5167 = vcmp.eq.f32.partialorder %v5166, 8.507059e+37
        %v5168 = vand.u32 %v5156, 2147483648
        %v5169 = vor.u32 1.1754944e-38, %v5168
        %v5170 = vsel %vm5167, %v5169, %v5165
        %v5171 = vmul.f32 1.0, %v5170
        %v5172 = vmul.f32 %v5171, 1.0614054
        %v5173 = vadd.f32 %v5172, -1.4531521
        %v5174 = vmul.f32 %v5173, %v5171
        %v5175 = vadd.f32 %v5174, 1.4214138
        %v5176 = vmul.f32 %v5175, %v5171
        %v5177 = vadd.f32 %v5176, -0.28449672
        %v5178 = vmul.f32 %v5177, %v5171
        %v5179 = vadd.f32 %v5178, 0.2548296
        %v5180 = vmul.f32 %v5179, %v5171
        %v5181 = vsub.f32 0.0, %v5154
        %v5182 = vmul.f32 %v5181, %v5154
        %v5183 = vmul.f32 %v5182, 1.442695
        %v5184 = vpow.pop %v5183
        %v5185 = vmul.f32 %v5180, %v5184
        %v5186 = vsub.f32 1.0, %v5185
        %v5187 = vmul.f32 %v5153, %v5186
        %v5188 = vadd.f32 %v5187, 1.0
        %v5189 = vmul.f32 %v5150, %v5188
        %v5191 = vsel %vm3150, %v5189, 0
        %5193 = vmatpush.msra.mxu0 0.0
        %5194 = vmatpush.msra.mxu0 0.0
        %5195 = vmatpush.msra.mxu0 0.0
        %5196 = vmatpush.msra.mxu0 0.0
        %5197 = vmatpush.msra.mxu0 0.0
        %5198 = vmatpush.msra.mxu0 0.0
        %5199 = vmatpush.msra.mxu0 0.0
        %5200 = vmatpush.msra.mxu0 0.0
        %5201 = vmatpush.msra.mxu0 0.0
        %5202 = vmatpush.msra.mxu0 0.0
        %5203 = vmatpush.msra.mxu0 0.0
        %5204 = vmatpush.msra.mxu0 0.0
        %5205 = vmatpush.msra.mxu0 %v2941
        %5206 = vmatpush.msra.mxu0 %v2940
        %5207 = vmatpush.msra.mxu0 %v2939
        %5208 = vmatpush.msra.mxu0 %v2938
        %5209 = vmatmul.f32.gmra.mxu0 %v5191
        %v5210 = vpop.f32.mrf.mxu0
        %v5211 = vadd.f32 %v2936, %v5210
        %5212 = vdwg.mxu0
        %v5213 = vperm.slane %v5211, 0
        %v5214 = vadd.f32 %v5213, %v2934
        %vm5215 = vcmask 257024
        %v5216 = vsel %vm5215, %v5214, 0.0
        %5217 = vadd.xlane.f32.xlu0 %v5216
        %v5218 = vpop.xlane.xlu0 %5217
        %v5219 = vmul.f32 %v5218, %v3194
        %v5220 = vsub.f32 %v5214, %v5219
        %v5221 = vmul.f32 %v5220, %v5220
        %v5222 = vsel %vm5215, %v5221, 0.0
        %5223 = vadd.xlane.f32.xlu0 %v5222
        %v5224 = vpop.xlane.xlu0 %5223
        %v5225 = vmul.f32 %v5224, %v3194
        %v5226 = vadd.f32 %v5225, 1e-05
        %v5227 = vrsqrt.pop %v5226
        %v5228 = vmul.f32 %v5227, %v5226
        %v5229 = vmul.f32 %v5228, %v5227
        %v5230 = vmul.f32 0.5, %v5229
        %v5231 = vsub.f32 1.5, %v5230
        %v5232 = vmul.f32 %v5227, %v5231
        %vm5233 = vweird.f32 %v5226
        %vm5234 = vweird.f32 %v5227
        %vm5235 = vmor %vm5233, %vm5234
        %v5236 = vsel %vm5235, %v5227, %v5232
        %v5237 = vmul.f32 %v5220, %v5236
        %v5239 = vperm.slane %v2917, 0
        %v5241 = vmul.f32 %v5237, %v5239
        %v5243 = vperm.slane %v2916, 0
        %v5245 = vadd.f32 %v5241, %v5243
        %v5247 = vperm.slane %v2923, 0
        %v5250 = vsel %vm3150, %v5245, 0
        %5252 = vmatpush.msra.mxu0 0.0
        %5253 = vmatpush.msra.mxu0 0.0
        %5254 = vmatpush.msra.mxu0 0.0
        %5255 = vmatpush.msra.mxu0 0.0
        %5256 = vmatpush.msra.mxu0 0.0
        %5257 = vmatpush.msra.mxu0 0.0
        %5258 = vmatpush.msra.mxu0 0.0
        %5259 = vmatpush.msra.mxu0 0.0
        %5260 = vmatpush.msra.mxu0 0.0
        %5261 = vmatpush.msra.mxu0 0.0
        %5262 = vmatpush.msra.mxu0 0.0
        %5263 = vmatpush.msra.mxu0 0.0
        %5264 = vmatpush.msra.mxu0 %v2931
        %5265 = vmatpush.msra.mxu0 %v2930
        %5266 = vmatpush.msra.mxu0 %v2929
        %5267 = vmatpush.msra.mxu0 %v2928
        %5268 = vmatmul.f32.gmra.mxu0 %v5250
        %v5269 = vpop.f32.mrf.mxu0
        %v5270 = vadd.f32 %v5247, %v5269
        %5271 = vdwg.mxu0
        %5273 = vrot.lane.b32.xlu0 %v5270, 96
        %v5274 = vpop.permute.xlu0 %5273
        %v5275 = vsel %vm3251, %v5270, 0
        %v5277 = vsel %vm3251, %v5274, 0
        %5279 = vmatpush.xpose.msra.mxu0 0.0
        %5280 = vmatpush.xpose.msra.mxu0 0.0
        %5281 = vmatpush.xpose.msra.mxu0 0.0
        %5282 = vmatpush.xpose.msra.mxu0 0.0
        %5283 = vmatpush.xpose.msra.mxu0 0.0
        %5284 = vmatpush.xpose.msra.mxu0 0.0
        %5285 = vmatpush.xpose.msra.mxu0 0.0
        %5286 = vmatpush.xpose.msra.mxu0 0.0
        %5287 = vmatpush.xpose.msra.mxu0 0.0
        %5288 = vmatpush.xpose.msra.mxu0 0.0
        %5289 = vmatpush.xpose.msra.mxu0 0.0
        %5290 = vmatpush.xpose.msra.mxu0 0.0
        %5291 = vmatpush.xpose.msra.mxu0 0.0
        %5292 = vmatpush.xpose.msra.mxu0 0.0
        %5293 = vmatpush.xpose.msra.mxu0 0.0
        %5294 = vmatpush.xpose.msra.mxu0 %v5277
        %5295 = vmatmul.f32.gmra.mxu0 %v5275
        %v5296 = vpop.f32.mrf.mxu0
        %v5297 = vadd.f32 0.0, %v5296
        %5298 = vdwg.mxu0
        %v5299 = vmul.f32 %v5297, 0.35355338
        %vm5300 = vcmask 27648
        %v5301 = vsel %vm5300, %v5299, -inf
        %5302 = vmax.xlane.f32.xlu0 %v5301
        %v5303 = vpop.xlane.xlu0 %5302
        %v5304 = vsub.f32 %v5299, %v5303
        %v5305 = vmul.f32 %v5304, 1.442695
        %v5306 = vpow.pop %v5305
        %v5307 = vsel %vm5300, %v5306, 0.0
        %5308 = vadd.xlane.f32.xlu0 %v5307
        %v5309 = vpop.xlane.xlu0 %5308
        %v5310 = vrcp.pop %v5309
        %v5311 = vmul.f32 %v5309, %v5310
        %v5312 = vsub.f32 1.0, %v5311
        %v5313 = vmul.f32 %v5310, %v5312
        %v5314 = vadd.f32 %v5310, %v5313
        %vm5315 = vweird.f32 %v5309
        %vm5316 = vweird.f32 %v5310
        %vm5317 = vmor %vm5315, %vm5316
        %v5318 = vsel %vm5317, %v5310, %v5314
        %v5319 = vand.u32 2147483647, %v5309
        %vm5320 = vcmp.eq.f32.partialorder %v5319, 8.507059e+37
        %v5321 = vand.u32 %v5309, 2147483648
        %v5322 = vor.u32 1.1754944e-38, %v5321
        %v5323 = vsel %vm5320, %v5322, %v5318
        %v5324 = vmul.f32 %v5306, %v5323
        %5325 = vrot.lane.b32.xlu0 %v5270, 64
        %v5326 = vpop.permute.xlu0 %5325
        %vm5327 = vcmask 31744
        %v5329 = vsel %vm5327, %v5324, 0
        %v5331 = vsel %vm3183, %v5326, 0
        %5333 = vmatpush.msra.mxu0 0.0
        %5334 = vmatpush.msra.mxu0 0.0
        %5335 = vmatpush.msra.mxu0 0.0
        %5336 = vmatpush.msra.mxu0 0.0
        %5337 = vmatpush.msra.mxu0 0.0
        %5338 = vmatpush.msra.mxu0 0.0
        %5339 = vmatpush.msra.mxu0 0.0
        %5340 = vmatpush.msra.mxu0 0.0
        %5341 = vmatpush.msra.mxu0 0.0
        %5342 = vmatpush.msra.mxu0 0.0
        %5343 = vmatpush.msra.mxu0 0.0
        %5344 = vmatpush.msra.mxu0 0.0
        %5345 = vmatpush.msra.mxu0 0.0
        %5346 = vmatpush.msra.mxu0 0.0
        %5347 = vmatpush.msra.mxu0 0.0
        %5348 = vmatpush.msra.mxu0 %v5331
        %5349 = vmatmul.f32.gmra.mxu0 %v5329
        %v5350 = vpop.f32.mrf.mxu0
        %v5351 = vadd.f32 0.0, %v5350
        %5352 = vdwg.mxu0
        %5353 = vrot.lane.b32.xlu0 %v5270, 120
        %v5354 = vpop.permute.xlu0 %5353
        %5355 = vrot.lane.b32.xlu0 %v5270, 88
        %v5356 = vpop.permute.xlu0 %5355
        %v5357 = vsel %vm3251, %v5354, 0
        %v5359 = vsel %vm3251, %v5356, 0
        %5361 = vmatpush.xpose.msra.mxu0 0.0
        %5362 = vmatpush.xpose.msra.mxu0 0.0
        %5363 = vmatpush.xpose.msra.mxu0 0.0
        %5364 = vmatpush.xpose.msra.mxu0 0.0
        %5365 = vmatpush.xpose.msra.mxu0 0.0
        %5366 = vmatpush.xpose.msra.mxu0 0.0
        %5367 = vmatpush.xpose.msra.mxu0 0.0
        %5368 = vmatpush.xpose.msra.mxu0 0.0
        %5369 = vmatpush.xpose.msra.mxu0 0.0
        %5370 = vmatpush.xpose.msra.mxu0 0.0
        %5371 = vmatpush.xpose.msra.mxu0 0.0
        %5372 = vmatpush.xpose.msra.mxu0 0.0
        %5373 = vmatpush.xpose.msra.mxu0 0.0
        %5374 = vmatpush.xpose.msra.mxu0 0.0
        %5375 = vmatpush.xpose.msra.mxu0 0.0
        %5376 = vmatpush.xpose.msra.mxu0 %v5359
        %5377 = vmatmul.f32.gmra.mxu0 %v5357
        %v5378 = vpop.f32.mrf.mxu0
        %v5379 = vadd.f32 0.0, %v5378
        %5380 = vdwg.mxu0
        %v5381 = vmul.f32 %v5379, 0.35355338
        %v5382 = vsel %vm5300, %v5381, -inf
        %5383 = vmax.xlane.f32.xlu0 %v5382
        %v5384 = vpop.xlane.xlu0 %5383
        %v5385 = vsub.f32 %v5381, %v5384
        %v5386 = vmul.f32 %v5385, 1.442695
        %v5387 = vpow.pop %v5386
        %v5388 = vsel %vm5300, %v5387, 0.0
        %5389 = vadd.xlane.f32.xlu0 %v5388
        %v5390 = vpop.xlane.xlu0 %5389
        %v5391 = vrcp.pop %v5390
        %v5392 = vmul.f32 %v5390, %v5391
        %v5393 = vsub.f32 1.0, %v5392
        %v5394 = vmul.f32 %v5391, %v5393
        %v5395 = vadd.f32 %v5391, %v5394
        %vm5396 = vweird.f32 %v5390
        %vm5397 = vweird.f32 %v5391
        %vm5398 = vmor %vm5396, %vm5397
        %v5399 = vsel %vm5398, %v5391, %v5395
        %v5400 = vand.u32 2147483647, %v5390
        %vm5401 = vcmp.eq.f32.partialorder %v5400, 8.507059e+37
        %v5402 = vand.u32 %v5390, 2147483648
        %v5403 = vor.u32 1.1754944e-38, %v5402
        %v5404 = vsel %vm5401, %v5403, %v5399
        %v5405 = vmul.f32 %v5387, %v5404
        %5406 = vrot.lane.b32.xlu0 %v5270, 56
        %v5407 = vpop.permute.xlu0 %5406
        %v5409 = vsel %vm5327, %v5405, 0
        %v5411 = vsel %vm3183, %v5407, 0
        %5413 = vmatpush.msra.mxu0 0.0
        %5414 = vmatpush.msra.mxu0 0.0
        %5415 = vmatpush.msra.mxu0 0.0
        %5416 = vmatpush.msra.mxu0 0.0
        %5417 = vmatpush.msra.mxu0 0.0
        %5418 = vmatpush.msra.mxu0 0.0
        %5419 = vmatpush.msra.mxu0 0.0
        %5420 = vmatpush.msra.mxu0 0.0
        %5421 = vmatpush.msra.mxu0 0.0
        %5422 = vmatpush.msra.mxu0 0.0
        %5423 = vmatpush.msra.mxu0 0.0
        %5424 = vmatpush.msra.mxu0 0.0
        %5425 = vmatpush.msra.mxu0 0.0
        %5426 = vmatpush.msra.mxu0 0.0
        %5427 = vmatpush.msra.mxu0 0.0
        %5428 = vmatpush.msra.mxu0 %v5411
        %5429 = vmatmul.f32.gmra.mxu0 %v5409
        %v5430 = vpop.f32.mrf.mxu0
        %v5431 = vadd.f32 0.0, %v5430
        %5432 = vdwg.mxu0
        %5433 = vrot.lane.b32.xlu0 %v5270, 112
        %v5434 = vpop.permute.xlu0 %5433
        %5435 = vrot.lane.b32.xlu0 %v5270, 80
        %v5436 = vpop.permute.xlu0 %5435
        %v5437 = vsel %vm3251, %v5434, 0
        %v5439 = vsel %vm3251, %v5436, 0
        %5441 = vmatpush.xpose.msra.mxu0 0.0
        %5442 = vmatpush.xpose.msra.mxu0 0.0
        %5443 = vmatpush.xpose.msra.mxu0 0.0
        %5444 = vmatpush.xpose.msra.mxu0 0.0
        %5445 = vmatpush.xpose.msra.mxu0 0.0
        %5446 = vmatpush.xpose.msra.mxu0 0.0
        %5447 = vmatpush.xpose.msra.mxu0 0.0
        %5448 = vmatpush.xpose.msra.mxu0 0.0
        %5449 = vmatpush.xpose.msra.mxu0 0.0
        %5450 = vmatpush.xpose.msra.mxu0 0.0
        %5451 = vmatpush.xpose.msra.mxu0 0.0
        %5452 = vmatpush.xpose.msra.mxu0 0.0
        %5453 = vmatpush.xpose.msra.mxu0 0.0
        %5454 = vmatpush.xpose.msra.mxu0 0.0
        %5455 = vmatpush.xpose.msra.mxu0 0.0
        %5456 = vmatpush.xpose.msra.mxu0 %v5439
        %5457 = vmatmul.f32.gmra.mxu0 %v5437
        %v5458 = vpop.f32.mrf.mxu0
        %v5459 = vadd.f32 0.0, %v5458
        %5460 = vdwg.mxu0
        %v5461 = vmul.f32 %v5459, 0.35355338
        %v5462 = vsel %vm5300, %v5461, -inf
        %5463 = vmax.xlane.f32.xlu0 %v5462
        %v5464 = vpop.xlane.xlu0 %5463
        %v5465 = vsub.f32 %v5461, %v5464
        %v5466 = vmul.f32 %v5465, 1.442695
        %v5467 = vpow.pop %v5466
        %v5468 = vsel %vm5300, %v5467, 0.0
        %5469 = vadd.xlane.f32.xlu0 %v5468
        %v5470 = vpop.xlane.xlu0 %5469
        %v5471 = vrcp.pop %v5470
        %v5472 = vmul.f32 %v5470, %v5471
        %v5473 = vsub.f32 1.0, %v5472
        %v5474 = vmul.f32 %v5471, %v5473
        %v5475 = vadd.f32 %v5471, %v5474
        %vm5476 = vweird.f32 %v5470
        %vm5477 = vweird.f32 %v5471
        %vm5478 = vmor %vm5476, %vm5477
        %v5479 = vsel %vm5478, %v5471, %v5475
        %v5480 = vand.u32 2147483647, %v5470
        %vm5481 = vcmp.eq.f32.partialorder %v5480, 8.507059e+37
        %v5482 = vand.u32 %v5470, 2147483648
        %v5483 = vor.u32 1.1754944e-38, %v5482
        %v5484 = vsel %vm5481, %v5483, %v5479
        %v5485 = vmul.f32 %v5467, %v5484
        %5486 = vrot.lane.b32.xlu0 %v5270, 48
        %v5487 = vpop.permute.xlu0 %5486
        %v5489 = vsel %vm5327, %v5485, 0
        %v5491 = vsel %vm3183, %v5487, 0
        %5493 = vmatpush.msra.mxu0 0.0
        %5494 = vmatpush.msra.mxu0 0.0
        %5495 = vmatpush.msra.mxu0 0.0
        %5496 = vmatpush.msra.mxu0 0.0
        %5497 = vmatpush.msra.mxu0 0.0
        %5498 = vmatpush.msra.mxu0 0.0
        %5499 = vmatpush.msra.mxu0 0.0
        %5500 = vmatpush.msra.mxu0 0.0
        %5501 = vmatpush.msra.mxu0 0.0
        %5502 = vmatpush.msra.mxu0 0.0
        %5503 = vmatpush.msra.mxu0 0.0
        %5504 = vmatpush.msra.mxu0 0.0
        %5505 = vmatpush.msra.mxu0 0.0
        %5506 = vmatpush.msra.mxu0 0.0
        %5507 = vmatpush.msra.mxu0 0.0
        %5508 = vmatpush.msra.mxu0 %v5491
        %5509 = vmatmul.f32.gmra.mxu0 %v5489
        %v5510 = vpop.f32.mrf.mxu0
        %v5511 = vadd.f32 0.0, %v5510
        %5512 = vdwg.mxu0
        %5513 = vrot.lane.b32.xlu0 %v5270, 104
        %v5514 = vpop.permute.xlu0 %5513
        %5515 = vrot.lane.b32.xlu0 %v5270, 72
        %v5516 = vpop.permute.xlu0 %5515
        %v5517 = vsel %vm3251, %v5514, 0
        %v5519 = vsel %vm3251, %v5516, 0
        %5521 = vmatpush.xpose.msra.mxu0 0.0
        %5522 = vmatpush.xpose.msra.mxu0 0.0
        %5523 = vmatpush.xpose.msra.mxu0 0.0
        %5524 = vmatpush.xpose.msra.mxu0 0.0
        %5525 = vmatpush.xpose.msra.mxu0 0.0
        %5526 = vmatpush.xpose.msra.mxu0 0.0
        %5527 = vmatpush.xpose.msra.mxu0 0.0
        %5528 = vmatpush.xpose.msra.mxu0 0.0
        %5529 = vmatpush.xpose.msra.mxu0 0.0
        %5530 = vmatpush.xpose.msra.mxu0 0.0
        %5531 = vmatpush.xpose.msra.mxu0 0.0
        %5532 = vmatpush.xpose.msra.mxu0 0.0
        %5533 = vmatpush.xpose.msra.mxu0 0.0
        %5534 = vmatpush.xpose.msra.mxu0 0.0
        %5535 = vmatpush.xpose.msra.mxu0 0.0
        %5536 = vmatpush.xpose.msra.mxu0 %v5519
        %5537 = vmatmul.f32.gmra.mxu0 %v5517
        %v5538 = vpop.f32.mrf.mxu0
        %v5539 = vadd.f32 0.0, %v5538
        %5540 = vdwg.mxu0
        %v5541 = vmul.f32 %v5539, 0.35355338
        %v5542 = vsel %vm5300, %v5541, -inf
        %5543 = vmax.xlane.f32.xlu0 %v5542
        %v5544 = vpop.xlane.xlu0 %5543
        %v5545 = vsub.f32 %v5541, %v5544
        %v5546 = vmul.f32 %v5545, 1.442695
        %v5547 = vpow.pop %v5546
        %v5548 = vsel %vm5300, %v5547, 0.0
        %5549 = vadd.xlane.f32.xlu0 %v5548
        %v5550 = vpop.xlane.xlu0 %5549
        %v5551 = vrcp.pop %v5550
        %v5552 = vmul.f32 %v5550, %v5551
        %v5553 = vsub.f32 1.0, %v5552
        %v5554 = vmul.f32 %v5551, %v5553
        %v5555 = vadd.f32 %v5551, %v5554
        %vm5556 = vweird.f32 %v5550
        %vm5557 = vweird.f32 %v5551
        %vm5558 = vmor %vm5556, %vm5557
        %v5559 = vsel %vm5558, %v5551, %v5555
        %v5560 = vand.u32 2147483647, %v5550
        %vm5561 = vcmp.eq.f32.partialorder %v5560, 8.507059e+37
        %v5562 = vand.u32 %v5550, 2147483648
        %v5563 = vor.u32 1.1754944e-38, %v5562
        %v5564 = vsel %vm5561, %v5563, %v5559
        %v5565 = vmul.f32 %v5547, %v5564
        %5566 = vrot.lane.b32.xlu0 %v5270, 40
        %v5567 = vpop.permute.xlu0 %5566
        %v5569 = vsel %vm5327, %v5565, 0
        %v5571 = vsel %vm3183, %v5567, 0
        %5573 = vmatpush.msra.mxu0 0.0
        %5574 = vmatpush.msra.mxu0 0.0
        %5575 = vmatpush.msra.mxu0 0.0
        %5576 = vmatpush.msra.mxu0 0.0
        %5577 = vmatpush.msra.mxu0 0.0
        %5578 = vmatpush.msra.mxu0 0.0
        %5579 = vmatpush.msra.mxu0 0.0
        %5580 = vmatpush.msra.mxu0 0.0
        %5581 = vmatpush.msra.mxu0 0.0
        %5582 = vmatpush.msra.mxu0 0.0
        %5583 = vmatpush.msra.mxu0 0.0
        %5584 = vmatpush.msra.mxu0 0.0
        %5585 = vmatpush.msra.mxu0 0.0
        %5586 = vmatpush.msra.mxu0 0.0
        %5587 = vmatpush.msra.mxu0 0.0
        %5588 = vmatpush.msra.mxu0 %v5571
        %5589 = vmatmul.f32.gmra.mxu0 %v5569
        %v5590 = vpop.f32.mrf.mxu0
        %v5591 = vadd.f32 0.0, %v5590
        %5592 = vdwg.mxu0
        %5594 = vrot.lane.b32.xlu0 %v5431, 8
        %v5595 = vpop.permute.xlu0 %5594
        %5598 = vrot.lane.b32.xlu0 %v5511, 16
        %v5599 = vpop.permute.xlu0 %5598
        %5602 = vrot.lane.b32.xlu0 %v5591, 24
        %v5603 = vpop.permute.xlu0 %5602
        %v5605 = vsel %vm3251, %v5351, %v5595
        %v5606 = vsel %vm3577, %v5605, %v5599
        %v5607 = vsel %vm3579, %v5606, %v5603
        %v5609 = vsel %vm3150, %v5607, 0
        %5611 = vmatpush.msra.mxu0 0.0
        %5612 = vmatpush.msra.mxu0 0.0
        %5613 = vmatpush.msra.mxu0 0.0
        %5614 = vmatpush.msra.mxu0 0.0
        %5615 = vmatpush.msra.mxu0 0.0
        %5616 = vmatpush.msra.mxu0 0.0
        %5617 = vmatpush.msra.mxu0 0.0
        %5618 = vmatpush.msra.mxu0 0.0
        %5619 = vmatpush.msra.mxu0 0.0
        %5620 = vmatpush.msra.mxu0 0.0
        %5621 = vmatpush.msra.mxu0 0.0
        %5622 = vmatpush.msra.mxu0 0.0
        %5623 = vmatpush.msra.mxu0 %v2927
        %5624 = vmatpush.msra.mxu0 %v2926
        %5625 = vmatpush.msra.mxu0 %v2925
        %5626 = vmatpush.msra.mxu0 %v2924
        %5627 = vmatmul.f32.gmra.mxu0 %v5609
        %v5628 = vpop.f32.mrf.mxu0
        %v5629 = vadd.f32 0.0, %v5628
        %5630 = vdwg.mxu0
        %v5631 = vadd.f32 %v5214, %v5629
        %v5633 = vperm.slane %v2922, 0
        %v5635 = vadd.f32 %v5631, %v5633
        %v5636 = vsel %vm5215, %v5635, 0.0
        %5637 = vadd.xlane.f32.xlu0 %v5636
        %v5638 = vpop.xlane.xlu0 %5637
        %v5639 = vmul.f32 %v5638, %v3194
        %v5640 = vsub.f32 %v5635, %v5639
        %v5641 = vmul.f32 %v5640, %v5640
        %v5642 = vsel %vm5215, %v5641, 0.0
        %5643 = vadd.xlane.f32.xlu0 %v5642
        %v5644 = vpop.xlane.xlu0 %5643
        %v5645 = vmul.f32 %v5644, %v3194
        %v5646 = vadd.f32 %v5645, 1e-05
        %v5647 = vrsqrt.pop %v5646
        %v5648 = vmul.f32 %v5647, %v5646
        %v5649 = vmul.f32 %v5648, %v5647
        %v5650 = vmul.f32 0.5, %v5649
        %v5651 = vsub.f32 1.5, %v5650
        %v5652 = vmul.f32 %v5647, %v5651
        %vm5653 = vweird.f32 %v5646
        %vm5654 = vweird.f32 %v5647
        %vm5655 = vmor %vm5653, %vm5654
        %v5656 = vsel %vm5655, %v5647, %v5652
        %v5657 = vmul.f32 %v5640, %v5656
        %v5659 = vperm.slane %v2919, 0
        %v5661 = vmul.f32 %v5657, %v5659
        %v5663 = vperm.slane %v2918, 0
        %v5665 = vadd.f32 %v5661, %v5663
        %v5667 = vperm.slane %v2889, 0
        %v5670 = vsel %vm3150, %v5665, 0
        %5672 = vmatpush.msra.mxu0 0.0
        %5673 = vmatpush.msra.mxu0 0.0
        %5674 = vmatpush.msra.mxu0 0.0
        %5675 = vmatpush.msra.mxu0 0.0
        %5676 = vmatpush.msra.mxu0 0.0
        %5677 = vmatpush.msra.mxu0 0.0
        %5678 = vmatpush.msra.mxu0 0.0
        %5679 = vmatpush.msra.mxu0 0.0
        %5680 = vmatpush.msra.mxu0 0.0
        %5681 = vmatpush.msra.mxu0 0.0
        %5682 = vmatpush.msra.mxu0 0.0
        %5683 = vmatpush.msra.mxu0 0.0
        %5684 = vmatpush.msra.mxu0 %v2901
        %5685 = vmatpush.msra.mxu0 %v2900
        %5686 = vmatpush.msra.mxu0 %v2899
        %5687 = vmatpush.msra.mxu0 %v2898
        %5688 = vmatmul.f32.gmra.mxu0 %v5670
        %v5689 = vpop.f32.mrf.mxu0
        %v5690 = vadd.f32 %v5667, %v5689
        %5691 = vdwg.mxu0
        %v5693 = vperm.slane %v2887, 0
        %v5696 = vsel %vm3150, %v5139, 0
        %v5699 = vsel %vm3150, %v5140, 0
        %5701 = vmatpush.msra.mxu0 0.0
        %5702 = vmatpush.msra.mxu0 0.0
        %5703 = vmatpush.msra.mxu0 0.0
        %5704 = vmatpush.msra.mxu0 0.0
        %5705 = vmatpush.msra.mxu0 0.0
        %5706 = vmatpush.msra.mxu0 0.0
        %5707 = vmatpush.msra.mxu0 0.0
        %5708 = vmatpush.msra.mxu0 0.0
        %5709 = vmatpush.msra.mxu0 0.0
        %5710 = vmatpush.msra.mxu0 0.0
        %5711 = vmatpush.msra.mxu0 0.0
        %5712 = vmatpush.msra.mxu0 0.0
        %5713 = vmatpush.msra.mxu0 %v2893
        %5714 = vmatpush.msra.mxu0 %v2892
        %5715 = vmatpush.msra.mxu0 %v2891
        %5716 = vmatpush.msra.mxu0 %v2890
        %5717 = vmatmul.f32.gmra.mxu0 %v5696
        %v5718 = vpop.f32.mrf.mxu0
        %v5719 = vadd.f32 %v5693, %v5718
        %5720 = vmatmul.f32.gmra.mxu0 %v5699
        %v5721 = vpop.f32.mrf.mxu0
        %v5722 = vadd.f32 %v5693, %v5721
        %5723 = vdwg.mxu0
        %v5725 = vsel %vm3251, %v5690, 0
        %v5728 = vsel %vm3251, %v5719, 0
        %v5731 = vsel %vm3251, %v5722, 0
        %5733 = vmatpush.xpose.msra.mxu0 0.0
        %5734 = vmatpush.xpose.msra.mxu0 0.0
        %5735 = vmatpush.xpose.msra.mxu0 0.0
        %5736 = vmatpush.xpose.msra.mxu0 0.0
        %5737 = vmatpush.xpose.msra.mxu0 0.0
        %5738 = vmatpush.xpose.msra.mxu0 0.0
        %5739 = vmatpush.xpose.msra.mxu0 0.0
        %5740 = vmatpush.xpose.msra.mxu0 0.0
        %5741 = vmatpush.xpose.msra.mxu0 0.0
        %5742 = vmatpush.xpose.msra.mxu0 0.0
        %5743 = vmatpush.xpose.msra.mxu0 0.0
        %5744 = vmatpush.xpose.msra.mxu0 0.0
        %5745 = vmatpush.xpose.msra.mxu0 0.0
        %5746 = vmatpush.xpose.msra.mxu0 0.0
        %5747 = vmatpush.xpose.msra.mxu0 %v5731
        %5748 = vmatpush.xpose.msra.mxu0 %v5728
        %5749 = vmatmul.f32.gmra.mxu0 %v5725
        %v5750 = vpop.f32.mrf.mxu0
        %v5751 = vadd.f32 0.0, %v5750
        %5752 = vdwg.mxu0
        %v5753 = vmul.f32 %v5751, 0.35355338
        %v5754 = vadd.f32 %v5753, %v4408
        %vm5755 = vcmask 125952
        %v5756 = vsel %vm5755, %v5754, -inf
        %5757 = vmax.xlane.f32.xlu0 %v5756
        %v5758 = vpop.xlane.xlu0 %5757
        %v5759 = vsub.f32 %v5754, %v5758
        %v5760 = vmul.f32 %v5759, 1.442695
        %v5761 = vpow.pop %v5760
        %v5762 = vsel %vm5755, %v5761, 0.0
        %5763 = vadd.xlane.f32.xlu0 %v5762
        %v5764 = vpop.xlane.xlu0 %5763
        %v5765 = vrcp.pop %v5764
        %v5766 = vmul.f32 %v5764, %v5765
        %v5767 = vsub.f32 1.0, %v5766
        %v5768 = vmul.f32 %v5765, %v5767
        %v5769 = vadd.f32 %v5765, %v5768
        %vm5770 = vweird.f32 %v5764
        %vm5771 = vweird.f32 %v5765
        %vm5772 = vmor %vm5770, %vm5771
        %v5773 = vsel %vm5772, %v5765, %v5769
        %v5774 = vand.u32 2147483647, %v5764
        %vm5775 = vcmp.eq.f32.partialorder %v5774, 8.507059e+37
        %v5776 = vand.u32 %v5764, 2147483648
        %v5777 = vor.u32 1.1754944e-38, %v5776
        %v5778 = vsel %vm5775, %v5777, %v5773
        %v5779 = vmul.f32 %v5761, %v5778
        %5780 = vrot.lane.b32.xlu0 %v5719, 96
        %v5781 = vpop.permute.xlu0 %5780
        %5782 = vrot.lane.b32.xlu0 %v5722, 96
        %v5783 = vpop.permute.xlu0 %5782
        %v5787 = vsel %vm3577, %v5779, 0
        %5789 = vmatpush.msra.mxu0 0.0
        %5790 = vmatpush.msra.mxu0 0.0
        %5791 = vmatpush.msra.mxu0 0.0
        %5792 = vmatpush.msra.mxu0 0.0
        %5793 = vmatpush.msra.mxu0 0.0
        %5794 = vmatpush.msra.mxu0 0.0
        %5795 = vmatpush.msra.mxu0 0.0
        %5796 = vmatpush.msra.mxu0 0.0
        %5797 = vmatpush.msra.mxu0 0.0
        %5798 = vmatpush.msra.mxu0 0.0
        %5799 = vmatpush.msra.mxu0 0.0
        %5800 = vmatpush.msra.mxu0 0.0
        %5801 = vmatpush.msra.mxu0 0.0
        %5802 = vmatpush.msra.mxu0 0.0
        %5803 = vmatpush.msra.mxu0 %v5783
        %5804 = vmatpush.msra.mxu0 %v5781
        %5805 = vmatmul.f32.gmra.mxu0 %v5787
        %v5806 = vpop.f32.mrf.mxu0
        %v5807 = vadd.f32 0.0, %v5806
        %5808 = vdwg.mxu0
        %5809 = vrot.lane.b32.xlu0 %v5690, 120
        %v5810 = vpop.permute.xlu0 %5809
        %5811 = vrot.lane.b32.xlu0 %v5719, 120
        %v5812 = vpop.permute.xlu0 %5811
        %5813 = vrot.lane.b32.xlu0 %v5722, 120
        %v5814 = vpop.permute.xlu0 %5813
        %v5815 = vsel %vm3251, %v5810, 0
        %v5817 = vsel %vm3251, %v5812, 0
        %v5819 = vsel %vm3251, %v5814, 0
        %5821 = vmatpush.xpose.msra.mxu0 0.0
        %5822 = vmatpush.xpose.msra.mxu0 0.0
        %5823 = vmatpush.xpose.msra.mxu0 0.0
        %5824 = vmatpush.xpose.msra.mxu0 0.0
        %5825 = vmatpush.xpose.msra.mxu0 0.0
        %5826 = vmatpush.xpose.msra.mxu0 0.0
        %5827 = vmatpush.xpose.msra.mxu0 0.0
        %5828 = vmatpush.xpose.msra.mxu0 0.0
        %5829 = vmatpush.xpose.msra.mxu0 0.0
        %5830 = vmatpush.xpose.msra.mxu0 0.0
        %5831 = vmatpush.xpose.msra.mxu0 0.0
        %5832 = vmatpush.xpose.msra.mxu0 0.0
        %5833 = vmatpush.xpose.msra.mxu0 0.0
        %5834 = vmatpush.xpose.msra.mxu0 0.0
        %5835 = vmatpush.xpose.msra.mxu0 %v5819
        %5836 = vmatpush.xpose.msra.mxu0 %v5817
        %5837 = vmatmul.f32.gmra.mxu0 %v5815
        %v5838 = vpop.f32.mrf.mxu0
        %v5839 = vadd.f32 0.0, %v5838
        %5840 = vdwg.mxu0
        %v5841 = vmul.f32 %v5839, 0.35355338
        %v5842 = vadd.f32 %v5841, %v4408
        %v5843 = vsel %vm5755, %v5842, -inf
        %5844 = vmax.xlane.f32.xlu0 %v5843
        %v5845 = vpop.xlane.xlu0 %5844
        %v5846 = vsub.f32 %v5842, %v5845
        %v5847 = vmul.f32 %v5846, 1.442695
        %v5848 = vpow.pop %v5847
        %v5849 = vsel %vm5755, %v5848, 0.0
        %5850 = vadd.xlane.f32.xlu0 %v5849
        %v5851 = vpop.xlane.xlu0 %5850
        %v5852 = vrcp.pop %v5851
        %v5853 = vmul.f32 %v5851, %v5852
        %v5854 = vsub.f32 1.0, %v5853
        %v5855 = vmul.f32 %v5852, %v5854
        %v5856 = vadd.f32 %v5852, %v5855
        %vm5857 = vweird.f32 %v5851
        %vm5858 = vweird.f32 %v5852
        %vm5859 = vmor %vm5857, %vm5858
        %v5860 = vsel %vm5859, %v5852, %v5856
        %v5861 = vand.u32 2147483647, %v5851
        %vm5862 = vcmp.eq.f32.partialorder %v5861, 8.507059e+37
        %v5863 = vand.u32 %v5851, 2147483648
        %v5864 = vor.u32 1.1754944e-38, %v5863
        %v5865 = vsel %vm5862, %v5864, %v5860
        %v5866 = vmul.f32 %v5848, %v5865
        %5867 = vrot.lane.b32.xlu0 %v5719, 88
        %v5868 = vpop.permute.xlu0 %5867
        %5869 = vrot.lane.b32.xlu0 %v5722, 88
        %v5870 = vpop.permute.xlu0 %5869
        %v5874 = vsel %vm3577, %v5866, 0
        %5876 = vmatpush.msra.mxu0 0.0
        %5877 = vmatpush.msra.mxu0 0.0
        %5878 = vmatpush.msra.mxu0 0.0
        %5879 = vmatpush.msra.mxu0 0.0
        %5880 = vmatpush.msra.mxu0 0.0
        %5881 = vmatpush.msra.mxu0 0.0
        %5882 = vmatpush.msra.mxu0 0.0
        %5883 = vmatpush.msra.mxu0 0.0
        %5884 = vmatpush.msra.mxu0 0.0
        %5885 = vmatpush.msra.mxu0 0.0
        %5886 = vmatpush.msra.mxu0 0.0
        %5887 = vmatpush.msra.mxu0 0.0
        %5888 = vmatpush.msra.mxu0 0.0
        %5889 = vmatpush.msra.mxu0 0.0
        %5890 = vmatpush.msra.mxu0 %v5870
        %5891 = vmatpush.msra.mxu0 %v5868
        %5892 = vmatmul.f32.gmra.mxu0 %v5874
        %v5893 = vpop.f32.mrf.mxu0
        %v5894 = vadd.f32 0.0, %v5893
        %5895 = vdwg.mxu0
        %5896 = vrot.lane.b32.xlu0 %v5690, 112
        %v5897 = vpop.permute.xlu0 %5896
        %5898 = vrot.lane.b32.xlu0 %v5719, 112
        %v5899 = vpop.permute.xlu0 %5898
        %5900 = vrot.lane.b32.xlu0 %v5722, 112
        %v5901 = vpop.permute.xlu0 %5900
        %v5902 = vsel %vm3251, %v5897, 0
        %v5904 = vsel %vm3251, %v5899, 0
        %v5906 = vsel %vm3251, %v5901, 0
        %5908 = vmatpush.xpose.msra.mxu0 0.0
        %5909 = vmatpush.xpose.msra.mxu0 0.0
        %5910 = vmatpush.xpose.msra.mxu0 0.0
        %5911 = vmatpush.xpose.msra.mxu0 0.0
        %5912 = vmatpush.xpose.msra.mxu0 0.0
        %5913 = vmatpush.xpose.msra.mxu0 0.0
        %5914 = vmatpush.xpose.msra.mxu0 0.0
        %5915 = vmatpush.xpose.msra.mxu0 0.0
        %5916 = vmatpush.xpose.msra.mxu0 0.0
        %5917 = vmatpush.xpose.msra.mxu0 0.0
        %5918 = vmatpush.xpose.msra.mxu0 0.0
        %5919 = vmatpush.xpose.msra.mxu0 0.0
        %5920 = vmatpush.xpose.msra.mxu0 0.0
        %5921 = vmatpush.xpose.msra.mxu0 0.0
        %5922 = vmatpush.xpose.msra.mxu0 %v5906
        %5923 = vmatpush.xpose.msra.mxu0 %v5904
        %5924 = vmatmul.f32.gmra.mxu0 %v5902
        %v5925 = vpop.f32.mrf.mxu0
        %v5926 = vadd.f32 0.0, %v5925
        %5927 = vdwg.mxu0
        %v5928 = vmul.f32 %v5926, 0.35355338
        %v5929 = vadd.f32 %v5928, %v4408
        %v5930 = vsel %vm5755, %v5929, -inf
        %5931 = vmax.xlane.f32.xlu0 %v5930
        %v5932 = vpop.xlane.xlu0 %5931
        %v5933 = vsub.f32 %v5929, %v5932
        %v5934 = vmul.f32 %v5933, 1.442695
        %v5935 = vpow.pop %v5934
        %v5936 = vsel %vm5755, %v5935, 0.0
        %5937 = vadd.xlane.f32.xlu0 %v5936
        %v5938 = vpop.xlane.xlu0 %5937
        %v5939 = vrcp.pop %v5938
        %v5940 = vmul.f32 %v5938, %v5939
        %v5941 = vsub.f32 1.0, %v5940
        %v5942 = vmul.f32 %v5939, %v5941
        %v5943 = vadd.f32 %v5939, %v5942
        %vm5944 = vweird.f32 %v5938
        %vm5945 = vweird.f32 %v5939
        %vm5946 = vmor %vm5944, %vm5945
        %v5947 = vsel %vm5946, %v5939, %v5943
        %v5948 = vand.u32 2147483647, %v5938
        %vm5949 = vcmp.eq.f32.partialorder %v5948, 8.507059e+37
        %v5950 = vand.u32 %v5938, 2147483648
        %v5951 = vor.u32 1.1754944e-38, %v5950
        %v5952 = vsel %vm5949, %v5951, %v5947
        %v5953 = vmul.f32 %v5935, %v5952
        %5954 = vrot.lane.b32.xlu0 %v5719, 80
        %v5955 = vpop.permute.xlu0 %5954
        %5956 = vrot.lane.b32.xlu0 %v5722, 80
        %v5957 = vpop.permute.xlu0 %5956
        %v5961 = vsel %vm3577, %v5953, 0
        %5963 = vmatpush.msra.mxu0 0.0
        %5964 = vmatpush.msra.mxu0 0.0
        %5965 = vmatpush.msra.mxu0 0.0
        %5966 = vmatpush.msra.mxu0 0.0
        %5967 = vmatpush.msra.mxu0 0.0
        %5968 = vmatpush.msra.mxu0 0.0
        %5969 = vmatpush.msra.mxu0 0.0
        %5970 = vmatpush.msra.mxu0 0.0
        %5971 = vmatpush.msra.mxu0 0.0
        %5972 = vmatpush.msra.mxu0 0.0
        %5973 = vmatpush.msra.mxu0 0.0
        %5974 = vmatpush.msra.mxu0 0.0
        %5975 = vmatpush.msra.mxu0 0.0
        %5976 = vmatpush.msra.mxu0 0.0
        %5977 = vmatpush.msra.mxu0 %v5957
        %5978 = vmatpush.msra.mxu0 %v5955
        %5979 = vmatmul.f32.gmra.mxu0 %v5961
        %v5980 = vpop.f32.mrf.mxu0
        %v5981 = vadd.f32 0.0, %v5980
        %5982 = vdwg.mxu0
        %5983 = vrot.lane.b32.xlu0 %v5690, 104
        %v5984 = vpop.permute.xlu0 %5983
        %5985 = vrot.lane.b32.xlu0 %v5719, 104
        %v5986 = vpop.permute.xlu0 %5985
        %5987 = vrot.lane.b32.xlu0 %v5722, 104
        %v5988 = vpop.permute.xlu0 %5987
        %v5989 = vsel %vm3251, %v5984, 0
        %v5991 = vsel %vm3251, %v5986, 0
        %v5993 = vsel %vm3251, %v5988, 0
        %5995 = vmatpush.xpose.msra.mxu0 0.0
        %5996 = vmatpush.xpose.msra.mxu0 0.0
        %5997 = vmatpush.xpose.msra.mxu0 0.0
        %5998 = vmatpush.xpose.msra.mxu0 0.0
        %5999 = vmatpush.xpose.msra.mxu0 0.0
        %6000 = vmatpush.xpose.msra.mxu0 0.0
        %6001 = vmatpush.xpose.msra.mxu0 0.0
        %6002 = vmatpush.xpose.msra.mxu0 0.0
        %6003 = vmatpush.xpose.msra.mxu0 0.0
        %6004 = vmatpush.xpose.msra.mxu0 0.0
        %6005 = vmatpush.xpose.msra.mxu0 0.0
        %6006 = vmatpush.xpose.msra.mxu0 0.0
        %6007 = vmatpush.xpose.msra.mxu0 0.0
        %6008 = vmatpush.xpose.msra.mxu0 0.0
        %6009 = vmatpush.xpose.msra.mxu0 %v5993
        %6010 = vmatpush.xpose.msra.mxu0 %v5991
        %6011 = vmatmul.f32.gmra.mxu0 %v5989
        %v6012 = vpop.f32.mrf.mxu0
        %v6013 = vadd.f32 0.0, %v6012
        %6014 = vdwg.mxu0
        %v6015 = vmul.f32 %v6013, 0.35355338
        %v6016 = vadd.f32 %v6015, %v4408
        %v6017 = vsel %vm5755, %v6016, -inf
        %6018 = vmax.xlane.f32.xlu0 %v6017
        %v6019 = vpop.xlane.xlu0 %6018
        %v6020 = vsub.f32 %v6016, %v6019
        %v6021 = vmul.f32 %v6020, 1.442695
        %v6022 = vpow.pop %v6021
        %v6023 = vsel %vm5755, %v6022, 0.0
        %6024 = vadd.xlane.f32.xlu0 %v6023
        %v6025 = vpop.xlane.xlu0 %6024
        %v6026 = vrcp.pop %v6025
        %v6027 = vmul.f32 %v6025, %v6026
        %v6028 = vsub.f32 1.0, %v6027
        %v6029 = vmul.f32 %v6026, %v6028
        %v6030 = vadd.f32 %v6026, %v6029
        %vm6031 = vweird.f32 %v6025
        %vm6032 = vweird.f32 %v6026
        %vm6033 = vmor %vm6031, %vm6032
        %v6034 = vsel %vm6033, %v6026, %v6030
        %v6035 = vand.u32 2147483647, %v6025
        %vm6036 = vcmp.eq.f32.partialorder %v6035, 8.507059e+37
        %v6037 = vand.u32 %v6025, 2147483648
        %v6038 = vor.u32 1.1754944e-38, %v6037
        %v6039 = vsel %vm6036, %v6038, %v6034
        %v6040 = vmul.f32 %v6022, %v6039
        %6041 = vrot.lane.b32.xlu0 %v5719, 72
        %v6042 = vpop.permute.xlu0 %6041
        %6043 = vrot.lane.b32.xlu0 %v5722, 72
        %v6044 = vpop.permute.xlu0 %6043
        %v6048 = vsel %vm3577, %v6040, 0
        %6050 = vmatpush.msra.mxu0 0.0
        %6051 = vmatpush.msra.mxu0 0.0
        %6052 = vmatpush.msra.mxu0 0.0
        %6053 = vmatpush.msra.mxu0 0.0
        %6054 = vmatpush.msra.mxu0 0.0
        %6055 = vmatpush.msra.mxu0 0.0
        %6056 = vmatpush.msra.mxu0 0.0
        %6057 = vmatpush.msra.mxu0 0.0
        %6058 = vmatpush.msra.mxu0 0.0
        %6059 = vmatpush.msra.mxu0 0.0
        %6060 = vmatpush.msra.mxu0 0.0
        %6061 = vmatpush.msra.mxu0 0.0
        %6062 = vmatpush.msra.mxu0 0.0
        %6063 = vmatpush.msra.mxu0 0.0
        %6064 = vmatpush.msra.mxu0 %v6044
        %6065 = vmatpush.msra.mxu0 %v6042
        %6066 = vmatmul.f32.gmra.mxu0 %v6048
        %v6067 = vpop.f32.mrf.mxu0
        %v6068 = vadd.f32 0.0, %v6067
        %6069 = vdwg.mxu0
        %6071 = vrot.lane.b32.xlu0 %v5894, 8
        %v6072 = vpop.permute.xlu0 %6071
        %6075 = vrot.lane.b32.xlu0 %v5981, 16
        %v6076 = vpop.permute.xlu0 %6075
        %6079 = vrot.lane.b32.xlu0 %v6068, 24
        %v6080 = vpop.permute.xlu0 %6079
        %v6082 = vsel %vm3251, %v5807, %v6072
        %v6083 = vsel %vm3577, %v6082, %v6076
        %v6084 = vsel %vm3579, %v6083, %v6080
        %v6086 = vsel %vm3150, %v6084, 0
        %6088 = vmatpush.msra.mxu0 0.0
        %6089 = vmatpush.msra.mxu0 0.0
        %6090 = vmatpush.msra.mxu0 0.0
        %6091 = vmatpush.msra.mxu0 0.0
        %6092 = vmatpush.msra.mxu0 0.0
        %6093 = vmatpush.msra.mxu0 0.0
        %6094 = vmatpush.msra.mxu0 0.0
        %6095 = vmatpush.msra.mxu0 0.0
        %6096 = vmatpush.msra.mxu0 0.0
        %6097 = vmatpush.msra.mxu0 0.0
        %6098 = vmatpush.msra.mxu0 0.0
        %6099 = vmatpush.msra.mxu0 0.0
        %6100 = vmatpush.msra.mxu0 %v2897
        %6101 = vmatpush.msra.mxu0 %v2896
        %6102 = vmatpush.msra.mxu0 %v2895
        %6103 = vmatpush.msra.mxu0 %v2894
        %6104 = vmatmul.f32.gmra.mxu0 %v6086
        %v6105 = vpop.f32.mrf.mxu0
        %v6106 = vadd.f32 0.0, %v6105
        %6107 = vdwg.mxu0
        %v6108 = vadd.f32 %v5635, %v6106
        %v6110 = vperm.slane %v2888, 0
        %v6112 = vadd.f32 %v6108, %v6110
        %v6113 = vsel %vm5215, %v6112, 0.0
        %6114 = vadd.xlane.f32.xlu0 %v6113
        %v6115 = vpop.xlane.xlu0 %6114
        %v6116 = vmul.f32 %v6115, %v3194
        %v6117 = vsub.f32 %v6112, %v6116
        %v6118 = vmul.f32 %v6117, %v6117
        %v6119 = vsel %vm5215, %v6118, 0.0
        %6120 = vadd.xlane.f32.xlu0 %v6119
        %v6121 = vpop.xlane.xlu0 %6120
        %v6122 = vmul.f32 %v6121, %v3194
        %v6123 = vadd.f32 %v6122, 1e-05
        %v6124 = vrsqrt.pop %v6123
        %v6125 = vmul.f32 %v6124, %v6123
        %v6126 = vmul.f32 %v6125, %v6124
        %v6127 = vmul.f32 0.5, %v6126
        %v6128 = vsub.f32 1.5, %v6127
        %v6129 = vmul.f32 %v6124, %v6128
        %vm6130 = vweird.f32 %v6123
        %vm6131 = vweird.f32 %v6124
        %vm6132 = vmor %vm6130, %vm6131
        %v6133 = vsel %vm6132, %v6124, %v6129
        %v6134 = vmul.f32 %v6117, %v6133
        %v6136 = vperm.slane %v2921, 0
        %v6138 = vmul.f32 %v6134, %v6136
        %v6140 = vperm.slane %v2920, 0
        %v6142 = vadd.f32 %v6138, %v6140
        %v6144 = vperm.slane %v2902, 0
        %v6147 = vsel %vm3150, %v6142, 0
        %6149 = vmatpush.msra.mxu0 0.0
        %6150 = vmatpush.msra.mxu0 0.0
        %6151 = vmatpush.msra.mxu0 0.0
        %6152 = vmatpush.msra.mxu0 0.0
        %6153 = vmatpush.msra.mxu0 0.0
        %6154 = vmatpush.msra.mxu0 0.0
        %6155 = vmatpush.msra.mxu0 0.0
        %6156 = vmatpush.msra.mxu0 0.0
        %6157 = vmatpush.msra.mxu0 0.0
        %6158 = vmatpush.msra.mxu0 0.0
        %6159 = vmatpush.msra.mxu0 0.0
        %6160 = vmatpush.msra.mxu0 0.0
        %6161 = vmatpush.msra.mxu0 %v2907
        %6162 = vmatpush.msra.mxu0 %v2906
        %6163 = vmatpush.msra.mxu0 %v2905
        %6164 = vmatpush.msra.mxu0 %v2904
        %6165 = vmatmul.f32.gmra.mxu0 %v6147
        %v6166 = vpop.f32.mrf.mxu0
        %v6167 = vadd.f32 %v6144, %v6166
        %6168 = vdwg.mxu0
        %v6169 = vmul.f32 %v6167, 0.5
        %v6170 = vmul.f32 %v6167, 0.70710677
        %vm6171 = vcmp.ge.f32.partialorder %v6170, 0.0
        %v6172 = vsel %vm6171, 1.0, -1.0
        %v6173 = vand.u32 2147483647, %v6170
        %v6174 = vmul.f32 %v6173, 0.3275911
        %v6175 = vadd.f32 %v6174, 1.0
        %v6176 = vrcp.pop %v6175
        %v6177 = vmul.f32 %v6175, %v6176
        %v6178 = vsub.f32 1.0, %v6177
        %v6179 = vmul.f32 %v6176, %v6178
        %v6180 = vadd.f32 %v6176, %v6179
        %vm6181 = vweird.f32 %v6175
        %vm6182 = vweird.f32 %v6176
        %vm6183 = vmor %vm6181, %vm6182
        %v6184 = vsel %vm6183, %v6176, %v6180
        %v6185 = vand.u32 2147483647, %v6175
        %vm6186 = vcmp.eq.f32.partialorder %v6185, 8.507059e+37
        %v6187 = vand.u32 %v6175, 2147483648
        %v6188 = vor.u32 1.1754944e-38, %v6187
        %v6189 = vsel %vm6186, %v6188, %v6184
        %v6190 = vmul.f32 1.0, %v6189
        %v6191 = vmul.f32 %v6190, 1.0614054
        %v6192 = vadd.f32 %v6191, -1.4531521
        %v6193 = vmul.f32 %v6192, %v6190
        %v6194 = vadd.f32 %v6193, 1.4214138
        %v6195 = vmul.f32 %v6194, %v6190
        %v6196 = vadd.f32 %v6195, -0.28449672
        %v6197 = vmul.f32 %v6196, %v6190
        %v6198 = vadd.f32 %v6197, 0.2548296
        %v6199 = vmul.f32 %v6198, %v6190
        %v6200 = vsub.f32 0.0, %v6173
        %v6201 = vmul.f32 %v6200, %v6173
        %v6202 = vmul.f32 %v6201, 1.442695
        %v6203 = vpow.pop %v6202
        %v6204 = vmul.f32 %v6199, %v6203
        %v6205 = vsub.f32 1.0, %v6204
        %v6206 = vmul.f32 %v6172, %v6205
        %v6207 = vadd.f32 %v6206, 1.0
        %v6208 = vmul.f32 %v6169, %v6207
        %v6210 = vsel %vm3705, %v6208, 0
        %6212 = vmatpush.msra.mxu0 0.0
        %6213 = vmatpush.msra.mxu0 0.0
        %6214 = vmatpush.msra.mxu0 0.0
        %6215 = vmatpush.msra.mxu0 0.0
        %6216 = vmatpush.msra.mxu0 0.0
        %6217 = vmatpush.msra.mxu0 0.0
        %6218 = vmatpush.msra.mxu0 0.0
        %6219 = vmatpush.msra.mxu0 0.0
        %6220 = vmatpush.msra.mxu0 %v2915
        %6221 = vmatpush.msra.mxu0 %v2914
        %6222 = vmatpush.msra.mxu0 %v2913
        %6223 = vmatpush.msra.mxu0 %v2912
        %6224 = vmatpush.msra.mxu0 %v2911
        %6225 = vmatpush.msra.mxu0 %v2910
        %6226 = vmatpush.msra.mxu0 %v2909
        %6227 = vmatpush.msra.mxu0 %v2908
        %6228 = vmatmul.f32.gmra.mxu0 %v6210
        %v6229 = vpop.f32.mrf.mxu0
        %v6230 = vadd.f32 0.0, %v6229
        %6231 = vdwg.mxu0
        %v6232 = vadd.f32 %v6112, %v6230
        %v6234 = vperm.slane %v2903, 0
        %v6236 = vadd.f32 %v6232, %v6234
        %v6237 = vsel %vm5215, %v6236, 0.0
        %6238 = vadd.xlane.f32.xlu0 %v6237
        %v6239 = vpop.xlane.xlu0 %6238
        %v6240 = vmul.f32 %v6239, %v3194
        %v6241 = vsub.f32 %v6236, %v6240
        %v6242 = vmul.f32 %v6241, %v6241
        %v6243 = vsel %vm5215, %v6242, 0.0
        %6244 = vadd.xlane.f32.xlu0 %v6243
        %v6245 = vpop.xlane.xlu0 %6244
        %v6246 = vmul.f32 %v6245, %v3194
        %v6247 = vadd.f32 %v6246, 1e-05
        %v6248 = vrsqrt.pop %v6247
        %v6249 = vmul.f32 %v6248, %v6247
        %v6250 = vmul.f32 %v6249, %v6248
        %v6251 = vmul.f32 0.5, %v6250
        %v6252 = vsub.f32 1.5, %v6251
        %v6253 = vmul.f32 %v6248, %v6252
        %vm6254 = vweird.f32 %v6247
        %vm6255 = vweird.f32 %v6248
        %vm6256 = vmor %vm6254, %vm6255
        %v6257 = vsel %vm6256, %v6248, %v6253
        %v6258 = vmul.f32 %v6241, %v6257
        %v6260 = vperm.slane %v2933, 0
        %v6262 = vmul.f32 %v6258, %v6260
        %v6264 = vperm.slane %v2932, 0
        %v6266 = vadd.f32 %v6262, %v6264
        %v6268 = vperm.slane %v2942, 0
        %v6269 = vperm.slane %v2942, 1
        %v6273 = vsel %vm3150, %v6266, 0
        %6275 = vmatpush.msra.mxu0 0.0
        %6276 = vmatpush.msra.mxu0 0.0
        %6277 = vmatpush.msra.mxu0 0.0
        %6278 = vmatpush.msra.mxu0 0.0
        %6279 = vmatpush.msra.mxu0 0.0
        %6280 = vmatpush.msra.mxu0 0.0
        %6281 = vmatpush.msra.mxu0 0.0
        %6282 = vmatpush.msra.mxu0 0.0
        %6283 = vmatpush.msra.mxu0 0.0
        %6284 = vmatpush.msra.mxu0 0.0
        %6285 = vmatpush.msra.mxu0 0.0
        %6286 = vmatpush.msra.mxu0 0.0
        %6287 = vmatpush.msra.mxu0 %v2949
        %6288 = vmatpush.msra.mxu0 %v2947
        %6289 = vmatpush.msra.mxu0 %v2945
        %6290 = vmatpush.msra.mxu0 %v2943
        %6291 = vmatmul.f32.gmra.mxu0 %v6273
        %v6292 = vpop.f32.mrf.mxu0
        %v6293 = vadd.f32 %v6268, %v6292
        %6294 = vdwg.mxu0
        %6295 = vmatpush.msra.mxu0 0.0
        %6296 = vmatpush.msra.mxu0 0.0
        %6297 = vmatpush.msra.mxu0 0.0
        %6298 = vmatpush.msra.mxu0 0.0
        %6299 = vmatpush.msra.mxu0 0.0
        %6300 = vmatpush.msra.mxu0 0.0
        %6301 = vmatpush.msra.mxu0 0.0
        %6302 = vmatpush.msra.mxu0 0.0
        %6303 = vmatpush.msra.mxu0 0.0
        %6304 = vmatpush.msra.mxu0 0.0
        %6305 = vmatpush.msra.mxu0 0.0
        %6306 = vmatpush.msra.mxu0 0.0
        %6307 = vmatpush.msra.mxu0 %v2950
        %6308 = vmatpush.msra.mxu0 %v2948
        %6309 = vmatpush.msra.mxu0 %v2946
        %6310 = vmatpush.msra.mxu0 %v2944
        %6311 = vmatmul.f32.gmra.mxu0 %v6273
        %v6312 = vpop.f32.mrf.mxu0
        %v6313 = vadd.f32 %v6269, %v6312
        %6314 = vdwg.mxu0
        %v6317 = vrot.slane %v6313, 4
        %v6318 = vsel %vm3183, %v6293, %v6317
        %6320 = vst [vmem:[%s2858] sm:$0xff] %v6318
        %p6321 = scmp.lt.s32.totalorder %s186, 1
        %s6322 = scalar_select %p6321, %s186, 1
        %s6323 = smul.addr %s6322, 2
        %s6324 = smul.addr %s6323, 4
        %s6325 = scalar_lea.vmem %s157, %s6324
        // Predicated region
        $region473: #{prose_2to1_fwd.1} parent=331 // pred_check
          %p6326 = pneg %p1872
        $region474: #{prose_2to1_fwd.1} parent=331 // pred_check_branch
          %6328 = sbr.rel (%p6326) target = $region476
        $region475: #{prose_2to1_fwd.1} parent=331 // pred_region
          _
        $region476: #{prose_2to1_fwd.1} parent=331 // pred_fallthru
          _
      $region332: #{prose_2to1_fwd.1} parent=5 // pred_fallthru
        _
      %p6329 = scmp.le.s32.totalorder 2, %s181
      // Predicated region
      $region477: #{prose_2to1_fwd.1} parent=5 // pred_check
        %p6330 = pneg %p6329
      $region478: #{prose_2to1_fwd.1} parent=5 // pred_check_branch
        %6332 = sbr.rel (%p6330) target = $region480
      $region479: #{prose_2to1_fwd.1} parent=5 // pred_region
        %s6333 = ssub.s32 %s181, 2
        // Predicated region
        $region481: #{prose_2to1_fwd.1} parent=479 // pred_check
          %p6334 = pneg %p1878
        $region482: #{prose_2to1_fwd.1} parent=479 // pred_check_branch
          %6336 = sbr.rel (%p6334) target = $region484
        $region483: #{prose_2to1_fwd.1} parent=479 // pred_region
          %p6337 = scmp.lt.s32.totalorder %s187, 1
          %s6338 = scalar_select %p6337, %s187, 1
          %s6339 = smul.addr %s6338, 2
          %s6340 = smul.addr %s6339, 4
          %s6341 = scalar_lea.vmem %s157, %s6340
        $region484: #{prose_2to1_fwd.1} parent=479 // pred_fallthru
          _
      $region480: #{prose_2to1_fwd.1} parent=5 // pred_fallthru
        _
    $region6: #{prose_2to1_fwd.1} parent=1 // loop_footer
      %s185 = sadd.s32 1, %s181
    $region7: #{prose_2to1_fwd.1} parent=1 // loop_footer_branch
      %180 = sbr.rel target = $region3
    $region8: #{prose_2to1_fwd.1} parent=1 // loop_exit
      _
    %6342 = vsyncpa [#allocation3], 1
    %s6343 = scalar_lea.sflag [#allocation3], 1
    %6344 = vsyncpa %s6343, 1
    %6345 = vsyncpa [#allocation5], 1
    %6346 = vsyncpa [#allocation8], 1
    %6347 = vsyncpa [#allocation11], 1
    %6348 = vsyncpa [#allocation14], 1
    %6349 = vsyncpa [#allocation17], 1
    %6350 = vsyncpa [#allocation20], 1
    %6351 = vsyncpa [#allocation23], 1
    %6352 = vsyncpa [#allocation26], 1
    %6353 = vsyncpa [#allocation29], 1
    %6354 = vsyncpa [#allocation32], 1
    %6355 = vsyncpa [#allocation35], 1
    %6356 = vsyncpa [#allocation38], 1
    %6357 = vsyncpa [#allocation41], 1
    %6358 = vsyncpa [#allocation44], 1
    %6359 = vsyncpa [#allocation47], 1
    %6360 = vsyncpa [#allocation50], 1
    %6361 = vsyncpa [#allocation53], 1

</llo_original>
